<compile_context>
chip_gen: v5e
topology: v5e:2x2
jax: 0.10.0
libtpu: 0.0.40
codegen_flags: <defaults>
</compile_context>

<pallas_src>
import jax
import jax.numpy as jnp
from jax import lax
from jax.experimental import pallas as pl
from jax.experimental.pallas import tpu as pltpu

LANE = 128
OFF = 16          # interior column offset in the halo buffer (bf16-tile aligned)


def _round_up(x, m):
    return (x + m - 1) // m * m


def _basic_block_kernel(x_ref, w1_ref, b1_ref, w2_ref, b2_ref, o_ref, pad_ref):
    """Fused BasicBlock forward.

    Shapes (Cp = channels zero-padded to the 128-lane width):
      x_ref   : (1, H, W, Cp)          f32  input (also the residual)
      w1/w2   : (9*Cp, Cp)             bf16 BN-scale-folded weights, tap-major
      b1/b2   : (1, Cp)                f32  folded BN bias
      o_ref   : (1, H, W, Cp)          f32  output
      pad_ref : (H+2, OFF+W+16, Cp)    bf16 shared zero-halo activation scratch;
                                            interior rows [1,H+1), cols [OFF,OFF+W)
    """
    _, H, W, Cp = o_ref.shape

    # ---- Zero ONLY the halo border (taps read cols [OFF-1, OFF+W] and rows
    # [0, H+2)).  Done every grid step so each TensorCore's private scratch is
    # valid when the batch axis is sharded across cores.  ~tens of KiB total.
    zcol = jnp.zeros((H + 2, 8, Cp), jnp.bfloat16)
    pad_ref[:, OFF - 8:OFF, :] = zcol                  # covers left halo col OFF-1
    pad_ref[:, OFF + W:OFF + W + 8, :] = zcol          # covers right halo col OFF+W
    zrow = jnp.zeros((1, W, Cp), jnp.bfloat16)
    pad_ref[0:1, OFF:OFF + W, :] = zrow                # top halo row
    pad_ref[H + 1:H + 2, OFF:OFF + W, :] = zrow        # bottom halo row

    def conv3x3(w_ref):
        # 9 accumulated per-tap matmuls (bf16 in, f32 accumulate); no im2col
        # patch is ever materialized in VMEM.
        acc = jnp.zeros((H * W, Cp), jnp.float32)
        for kh in range(3):
            for kw in range(3):
                k = kh * 3 + kw
                a = pad_ref[kh:kh + H, OFF - 1 + kw:OFF - 1 + kw + W, :]
                acc = acc + jnp.dot(a.reshape(H * W, Cp),
                                    w_ref[k * Cp:(k + 1) * Cp, :],
                                    preferred_element_type=jnp.float32)
        return acc

    # ---- conv1 + bn1 + relu (intermediate stays resident in VMEM) ----
    # Dense (tile-aligned) interior store; single f32->bf16 cast of x.
    pad_ref[1:H + 1, OFF:OFF + W, :] = x_ref[0].astype(jnp.bfloat16)
    y1 = jnp.maximum(conv3x3(w1_ref) + b1_ref[0], 0.0)            # (H*W, Cp) f32

    # ---- conv2 + bn2 + residual add + relu ----
    pad_ref[1:H + 1, OFF:OFF + W, :] = y1.reshape(H, W, Cp).astype(jnp.bfloat16)
    y2 = conv3x3(w2_ref) + b2_ref[0]
    y2 = y2.reshape(H, W, Cp) + x_ref[0]                          # residual (f32)
    o_ref[...] = jnp.maximum(y2, 0.0).reshape(1, H, W, Cp).astype(o_ref.dtype)


def _fold_bn(gamma, beta, mean, var, eps=1e-5):
    scale = gamma / jnp.sqrt(var + eps)
    bias = beta - mean * scale
    return scale, bias


def _pack_conv_weights(w_hwio, scale, cp):
    """Fold BN scale into conv weights, pad channels to lane width, flatten to
    tap-major (9*Cp, Cp) layout, cast to bf16 for the MXU."""
    kh, kw, cin, cout = w_hwio.shape
    w = w_hwio * scale[None, None, None, :]
    w = jnp.pad(w, ((0, 0), (0, 0), (0, cp - cin), (0, cp - cout)))
    return w.reshape(kh * kw * cp, cp).astype(jnp.bfloat16)


def basic_block_forward(x_nchw, params):
    """BasicBlock forward (stride=1, dilation=1, no downsample). Input NCHW."""
    N, C, H, W = x_nchw.shape
    assert W % 8 == 0, "W must be a multiple of 8 for a sublane-clean layout"
    Cp = _round_up(C, LANE)

    # NCHW -> NHWC, channel zero-pad to the 128-lane width (single wrapper
    # pass; padded channels contribute exact zeros end-to-end).
    x = jnp.transpose(x_nchw, (0, 2, 3, 1)).astype(jnp.float32)
    x = jnp.pad(x, ((0, 0), (0, 0), (0, 0), (0, Cp - C)))

    s1, b1 = _fold_bn(*params["bn1"])
    s2, b2 = _fold_bn(*params["bn2"])
    w1 = _pack_conv_weights(params["w1"], s1, Cp)
    w2 = _pack_conv_weights(params["w2"], s2, Cp)
    b1 = jnp.pad(b1, (0, Cp - C))[None, :].astype(jnp.float32)
    b2 = jnp.pad(b2, (0, Cp - C))[None, :].astype(jnp.float32)

    x_spec = pl.BlockSpec((1, H, W, Cp), lambda n: (n, 0, 0, 0))
    w_spec = pl.BlockSpec((9 * Cp, Cp), lambda n: (0, 0))
    b_spec = pl.BlockSpec((1, Cp), lambda n: (0, 0))
    o_spec = pl.BlockSpec((1, H, W, Cp), lambda n: (n, 0, 0, 0))

    wh = OFF + W + 16   # halo buffer width: 16-col aligned left pad + W + slack

    out = pl.pallas_call(
        _basic_block_kernel,
        out_shape=jax.ShapeDtypeStruct((N, H, W, Cp), jnp.float32),
        grid=(N,),
        in_specs=[x_spec, w_spec, b_spec, w_spec, b_spec],
        out_specs=o_spec,
        scratch_shapes=[
            pltpu.VMEM((H + 2, wh, Cp), jnp.bfloat16),   # shared zero-halo buffer
        ],
        compiler_params=pltpu.CompilerParams(
            dimension_semantics=("parallel",)),
    )(x, w1, b1, w2, b2)

    out = out[..., :C]                        # drop lane-padding channels
    return jnp.transpose(out, (0, 3, 1, 2))   # NHWC -> NCHW


def _reference_forward(x_nchw, params):
    """Pure-JAX reference with identical quantization points (bf16 conv inputs,
    f32 accumulation, eval-mode folded BN) for verification."""
    x = jnp.transpose(x_nchw, (0, 2, 3, 1)).astype(jnp.float32)
    dn = ("NHWC", "HWIO", "NHWC")
    s1, b1 = _fold_bn(*params["bn1"])
    s2, b2 = _fold_bn(*params["bn2"])
    w1 = (params["w1"] * s1[None, None, None, :]).astype(jnp.bfloat16)
    w2 = (params["w2"] * s2[None, None, None, :]).astype(jnp.bfloat16)

    y = lax.conv_general_dilated(x.astype(jnp.bfloat16), w1, (1, 1), "SAME",
                                 dimension_numbers=dn,
                                 preferred_element_type=jnp.float32)
    y = jnp.maximum(y + b1[None, None, None, :], 0.0)
    y = lax.conv_general_dilated(y.astype(jnp.bfloat16), w2, (1, 1), "SAME",
                                 dimension_numbers=dn,
                                 preferred_element_type=jnp.float32)
    y = jnp.maximum(y + b2[None, None, None, :] + x, 0.0)
    return jnp.transpose(y, (0, 3, 1, 2))


if __name__ == "__main__":
    # BasicBlock(inplanes=8, planes=8, stride=1) -> no downsample needed.
    N, C, H, W = 2, 8, 16, 16
    key = jax.random.PRNGKey(0)
    ks = jax.random.split(key, 9)

    x = jax.random.normal(ks[0], (N, C, H, W), dtype=jnp.float32)

    params = {
        # conv weights stored HWIO (3, 3, Cin, Cout)
        "w1": jax.random.normal(ks[1], (3, 3, C, C), jnp.float32) * 0.1,
        "w2": jax.random.normal(ks[2], (3, 3, C, C), jnp.float32) * 0.1,
        # bn params: (gamma, beta, running_mean, running_var)
        "bn1": (1.0 + 0.1 * jax.random.normal(ks[3], (C,), jnp.float32),
                0.1 * jax.random.normal(ks[4], (C,), jnp.float32),
                0.1 * jax.random.normal(ks[5], (C,), jnp.float32),
                1.0 + 0.1 * jax.random.uniform(ks[6], (C,), jnp.float32)),
        "bn2": (1.0 + 0.1 * jax.random.normal(ks[7], (C,), jnp.float32),
                0.1 * jax.random.normal(ks[8], (C,), jnp.float32),
                jnp.zeros((C,), jnp.float32),
                jnp.ones((C,), jnp.float32)),
    }

    fwd = jax.jit(basic_block_forward)
    out = jax.block_until_ready(fwd(x, params))
    ref = jax.block_until_ready(_reference_forward(x, params))

    assert out.shape == (N, C, H, W), out.shape
    max_err = float(jnp.max(jnp.abs(out - ref)))
    assert jnp.allclose(out, ref, atol=2e-3, rtol=2e-3), max_err
    print("KERNEL_OK")
</pallas_src>

<mosaic_0001>
module attributes {stable_mosaic.version = 11 : i64} {
  func.func @_basic_block_kernel(%arg0: i32, %arg1: memref<1x16x16x128xf32, #tpu.memory_space<vmem>>, %arg2: memref<1152x128xbf16, #tpu.memory_space<vmem>>, %arg3: memref<1x128xf32, #tpu.memory_space<vmem>>, %arg4: memref<1152x128xbf16, #tpu.memory_space<vmem>>, %arg5: memref<1x128xf32, #tpu.memory_space<vmem>>, %arg6: memref<1x16x16x128xf32, #tpu.memory_space<vmem>>, %arg7: memref<18x48x128xbf16, #tpu.memory_space<vmem>>) attributes {dimension_semantics = [#tpu.dimension_semantics<parallel>], iteration_bounds = array<i64: 2>, scalar_prefetch = 0 : i64, scratch_operands = 1 : i64, tpu.core_type = #tpu.core_type<tc>, window_params = [{transform_indices = @transform_0, window_bounds = array<i64: 1, 16, 16, 128>}, {pipeline_mode = #tpu.pipeline_mode<synchronous>, transform_indices = @transform_1, window_bounds = array<i64: 1152, 128>}, {pipeline_mode = #tpu.pipeline_mode<synchronous>, transform_indices = @transform_2, window_bounds = array<i64: 1, 128>}, {pipeline_mode = #tpu.pipeline_mode<synchronous>, transform_indices = @transform_3, window_bounds = array<i64: 1152, 128>}, {pipeline_mode = #tpu.pipeline_mode<synchronous>, transform_indices = @transform_4, window_bounds = array<i64: 1, 128>}, {transform_indices = @transform_5, window_bounds = array<i64: 1, 16, 16, 128>}]} {
    %cst = arith.constant 0.000000e+00 : bf16
    %0 = vector.broadcast %cst : bf16 to vector<18x8x128xbf16>
    %c0 = arith.constant 0 : index
    %c8 = arith.constant 8 : index
    %c0_0 = arith.constant 0 : index
    %1 = vector.load %arg7[%c0, %c8, %c0_0] : memref<18x48x128xbf16, #tpu.memory_space<vmem>>, vector<18x8x128xbf16>
    tpu.vector_store %arg7[%c0, %c8, %c0_0], %0 {strides = array<i32>} : memref<18x48x128xbf16, #tpu.memory_space<vmem>>, vector<18x8x128xbf16>,
    %c0_1 = arith.constant 0 : index
    %c32 = arith.constant 32 : index
    %c0_2 = arith.constant 0 : index
    %2 = vector.load %arg7[%c0_1, %c32, %c0_2] : memref<18x48x128xbf16, #tpu.memory_space<vmem>>, vector<18x8x128xbf16>
    tpu.vector_store %arg7[%c0_1, %c32, %c0_2], %0 {strides = array<i32>} : memref<18x48x128xbf16, #tpu.memory_space<vmem>>, vector<18x8x128xbf16>,
    %cst_3 = arith.constant 0.000000e+00 : bf16
    %3 = vector.broadcast %cst_3 : bf16 to vector<1x16x128xbf16>
    %c0_4 = arith.constant 0 : index
    %c16 = arith.constant 16 : index
    %c0_5 = arith.constant 0 : index
    %4 = vector.load %arg7[%c0_4, %c16, %c0_5] : memref<18x48x128xbf16, #tpu.memory_space<vmem>>, vector<1x16x128xbf16>
    tpu.vector_store %arg7[%c0_4, %c16, %c0_5], %3 {strides = array<i32>} : memref<18x48x128xbf16, #tpu.memory_space<vmem>>, vector<1x16x128xbf16>,
    %c17 = arith.constant 17 : index
    %c16_6 = arith.constant 16 : index
    %c0_7 = arith.constant 0 : index
    %5 = vector.load %arg7[%c17, %c16_6, %c0_7] : memref<18x48x128xbf16, #tpu.memory_space<vmem>>, vector<1x16x128xbf16>
    tpu.vector_store %arg7[%c17, %c16_6, %c0_7], %3 {strides = array<i32>} : memref<18x48x128xbf16, #tpu.memory_space<vmem>>, vector<1x16x128xbf16>,
    %c0_8 = arith.constant 0 : index
    %c0_9 = arith.constant 0 : index
    %c0_10 = arith.constant 0 : index
    %c0_11 = arith.constant 0 : index
    %6 = vector.load %arg1[%c0_8, %c0_9, %c0_10, %c0_11] : memref<1x16x16x128xf32, #tpu.memory_space<vmem>>, vector<1x16x16x128xf32>
    %7 = vector.shape_cast %6 : vector<1x16x16x128xf32> to vector<16x16x128xf32>
    %8 = arith.truncf %7 : vector<16x16x128xf32> to vector<16x16x128xbf16>
    %c1 = arith.constant 1 : index
    %c16_12 = arith.constant 16 : index
    %c0_13 = arith.constant 0 : index
    %9 = vector.load %arg7[%c1, %c16_12, %c0_13] : memref<18x48x128xbf16, #tpu.memory_space<vmem>>, vector<16x16x128xbf16>
    tpu.vector_store %arg7[%c1, %c16_12, %c0_13], %8 {strides = array<i32>} : memref<18x48x128xbf16, #tpu.memory_space<vmem>>, vector<16x16x128xbf16>,
    %cst_14 = arith.constant 0.000000e+00 : f32
    %10 = vector.broadcast %cst_14 : f32 to vector<256x128xf32>
    %c0_15 = arith.constant 0 : index
    %c15 = arith.constant 15 : index
    %c0_16 = arith.constant 0 : index
    %11 = vector.load %arg7[%c0_15, %c15, %c0_16] : memref<18x48x128xbf16, #tpu.memory_space<vmem>>, vector<16x16x128xbf16>
    %12 = vector.shape_cast %11 : vector<16x16x128xbf16> to vector<256x128xbf16>
    %c0_17 = arith.constant 0 : index
    %c0_18 = arith.constant 0 : index
    %13 = vector.load %arg2[%c0_17, %c0_18] : memref<1152x128xbf16, #tpu.memory_space<vmem>>, vector<128x128xbf16>
    %cst_19 = arith.constant dense<0.000000e+00> : vector<256x128xf32>
    %14 = tpu.matmul %12, %13, %cst_19 {dimension_numbers = #tpu.dot_dimension_numbers<[1], [0], [0], [1], [0, 0, 1, 1], [], []>} : vector<256x128xbf16>, vector<128x128xbf16>, vector<256x128xf32> -> vector<256x128xf32>
    %15 = arith.addf %10, %14 : vector<256x128xf32>
    %c0_20 = arith.constant 0 : index
    %c16_21 = arith.constant 16 : index
    %c0_22 = arith.constant 0 : index
    %16 = vector.load %arg7[%c0_20, %c16_21, %c0_22] : memref<18x48x128xbf16, #tpu.memory_space<vmem>>, vector<16x16x128xbf16>
    %17 = vector.shape_cast %16 : vector<16x16x128xbf16> to vector<256x128xbf16>
    %c128 = arith.constant 128 : index
    %c0_23 = arith.constant 0 : index
    %18 = vector.load %arg2[%c128, %c0_23] : memref<1152x128xbf16, #tpu.memory_space<vmem>>, vector<128x128xbf16>
    %cst_24 = arith.constant dense<0.000000e+00> : vector<256x128xf32>
    %19 = tpu.matmul %17, %18, %cst_24 {dimension_numbers = #tpu.dot_dimension_numbers<[1], [0], [0], [1], [0, 0, 1, 1], [], []>} : vector<256x128xbf16>, vector<128x128xbf16>, vector<256x128xf32> -> vector<256x128xf32>
    %20 = arith.addf %15, %19 : vector<256x128xf32>
    %c0_25 = arith.constant 0 : index
    %c17_26 = arith.constant 17 : index
    %c0_27 = arith.constant 0 : index
    %21 = vector.load %arg7[%c0_25, %c17_26, %c0_27] : memref<18x48x128xbf16, #tpu.memory_space<vmem>>, vector<16x16x128xbf16>
    %22 = vector.shape_cast %21 : vector<16x16x128xbf16> to vector<256x128xbf16>
    %c256 = arith.constant 256 : index
    %c0_28 = arith.constant 0 : index
    %23 = vector.load %arg2[%c256, %c0_28] : memref<1152x128xbf16, #tpu.memory_space<vmem>>, vector<128x128xbf16>
    %cst_29 = arith.constant dense<0.000000e+00> : vector<256x128xf32>
    %24 = tpu.matmul %22, %23, %cst_29 {dimension_numbers = #tpu.dot_dimension_numbers<[1], [0], [0], [1], [0, 0, 1, 1], [], []>} : vector<256x128xbf16>, vector<128x128xbf16>, vector<256x128xf32> -> vector<256x128xf32>
    %25 = arith.addf %20, %24 : vector<256x128xf32>
    %c1_30 = arith.constant 1 : index
    %c15_31 = arith.constant 15 : index
    %c0_32 = arith.constant 0 : index
    %26 = vector.load %arg7[%c1_30, %c15_31, %c0_32] : memref<18x48x128xbf16, #tpu.memory_space<vmem>>, vector<16x16x128xbf16>
    %27 = vector.shape_cast %26 : vector<16x16x128xbf16> to vector<256x128xbf16>
    %c384 = arith.constant 384 : index
    %c0_33 = arith.constant 0 : index
    %28 = vector.load %arg2[%c384, %c0_33] : memref<1152x128xbf16, #tpu.memory_space<vmem>>, vector<128x128xbf16>
    %cst_34 = arith.constant dense<0.000000e+00> : vector<256x128xf32>
    %29 = tpu.matmul %27, %28, %cst_34 {dimension_numbers = #tpu.dot_dimension_numbers<[1], [0], [0], [1], [0, 0, 1, 1], [], []>} : vector<256x128xbf16>, vector<128x128xbf16>, vector<256x128xf32> -> vector<256x128xf32>
    %30 = arith.addf %25, %29 : vector<256x128xf32>
    %c1_35 = arith.constant 1 : index
    %c16_36 = arith.constant 16 : index
    %c0_37 = arith.constant 0 : index
    %31 = vector.load %arg7[%c1_35, %c16_36, %c0_37] : memref<18x48x128xbf16, #tpu.memory_space<vmem>>, vector<16x16x128xbf16>
    %32 = vector.shape_cast %31 : vector<16x16x128xbf16> to vector<256x128xbf16>
    %c512 = arith.constant 512 : index
    %c0_38 = arith.constant 0 : index
    %33 = vector.load %arg2[%c512, %c0_38] : memref<1152x128xbf16, #tpu.memory_space<vmem>>, vector<128x128xbf16>
    %cst_39 = arith.constant dense<0.000000e+00> : vector<256x128xf32>
    %34 = tpu.matmul %32, %33, %cst_39 {dimension_numbers = #tpu.dot_dimension_numbers<[1], [0], [0], [1], [0, 0, 1, 1], [], []>} : vector<256x128xbf16>, vector<128x128xbf16>, vector<256x128xf32> -> vector<256x128xf32>
    %35 = arith.addf %30, %34 : vector<256x128xf32>
    %c1_40 = arith.constant 1 : index
    %c17_41 = arith.constant 17 : index
    %c0_42 = arith.constant 0 : index
    %36 = vector.load %arg7[%c1_40, %c17_41, %c0_42] : memref<18x48x128xbf16, #tpu.memory_space<vmem>>, vector<16x16x128xbf16>
    %37 = vector.shape_cast %36 : vector<16x16x128xbf16> to vector<256x128xbf16>
    %c640 = arith.constant 640 : index
    %c0_43 = arith.constant 0 : index
    %38 = vector.load %arg2[%c640, %c0_43] : memref<1152x128xbf16, #tpu.memory_space<vmem>>, vector<128x128xbf16>
    %cst_44 = arith.constant dense<0.000000e+00> : vector<256x128xf32>
    %39 = tpu.matmul %37, %38, %cst_44 {dimension_numbers = #tpu.dot_dimension_numbers<[1], [0], [0], [1], [0, 0, 1, 1], [], []>} : vector<256x128xbf16>, vector<128x128xbf16>, vector<256x128xf32> -> vector<256x128xf32>
    %40 = arith.addf %35, %39 : vector<256x128xf32>
    %c2 = arith.constant 2 : index
    %c15_45 = arith.constant 15 : index
    %c0_46 = arith.constant 0 : index
    %41 = vector.load %arg7[%c2, %c15_45, %c0_46] : memref<18x48x128xbf16, #tpu.memory_space<vmem>>, vector<16x16x128xbf16>
    %42 = vector.shape_cast %41 : vector<16x16x128xbf16> to vector<256x128xbf16>
    %c768 = arith.constant 768 : index
    %c0_47 = arith.constant 0 : index
    %43 = vector.load %arg2[%c768, %c0_47] : memref<1152x128xbf16, #tpu.memory_space<vmem>>, vector<128x128xbf16>
    %cst_48 = arith.constant dense<0.000000e+00> : vector<256x128xf32>
    %44 = tpu.matmul %42, %43, %cst_48 {dimension_numbers = #tpu.dot_dimension_numbers<[1], [0], [0], [1], [0, 0, 1, 1], [], []>} : vector<256x128xbf16>, vector<128x128xbf16>, vector<256x128xf32> -> vector<256x128xf32>
    %45 = arith.addf %40, %44 : vector<256x128xf32>
    %c2_49 = arith.constant 2 : index
    %c16_50 = arith.constant 16 : index
    %c0_51 = arith.constant 0 : index
    %46 = vector.load %arg7[%c2_49, %c16_50, %c0_51] : memref<18x48x128xbf16, #tpu.memory_space<vmem>>, vector<16x16x128xbf16>
    %47 = vector.shape_cast %46 : vector<16x16x128xbf16> to vector<256x128xbf16>
    %c896 = arith.constant 896 : index
    %c0_52 = arith.constant 0 : index
    %48 = vector.load %arg2[%c896, %c0_52] : memref<1152x128xbf16, #tpu.memory_space<vmem>>, vector<128x128xbf16>
    %cst_53 = arith.constant dense<0.000000e+00> : vector<256x128xf32>
    %49 = tpu.matmul %47, %48, %cst_53 {dimension_numbers = #tpu.dot_dimension_numbers<[1], [0], [0], [1], [0, 0, 1, 1], [], []>} : vector<256x128xbf16>, vector<128x128xbf16>, vector<256x128xf32> -> vector<256x128xf32>
    %50 = arith.addf %45, %49 : vector<256x128xf32>
    %c2_54 = arith.constant 2 : index
    %c17_55 = arith.constant 17 : index
    %c0_56 = arith.constant 0 : index
    %51 = vector.load %arg7[%c2_54, %c17_55, %c0_56] : memref<18x48x128xbf16, #tpu.memory_space<vmem>>, vector<16x16x128xbf16>
    %52 = vector.shape_cast %51 : vector<16x16x128xbf16> to vector<256x128xbf16>
    %c1024 = arith.constant 1024 : index
    %c0_57 = arith.constant 0 : index
    %53 = vector.load %arg2[%c1024, %c0_57] : memref<1152x128xbf16, #tpu.memory_space<vmem>>, vector<128x128xbf16>
    %cst_58 = arith.constant dense<0.000000e+00> : vector<256x128xf32>
    %54 = tpu.matmul %52, %53, %cst_58 {dimension_numbers = #tpu.dot_dimension_numbers<[1], [0], [0], [1], [0, 0, 1, 1], [], []>} : vector<256x128xbf16>, vector<128x128xbf16>, vector<256x128xf32> -> vector<256x128xf32>
    %55 = arith.addf %50, %54 : vector<256x128xf32>
    %c0_59 = arith.constant 0 : index
    %c0_60 = arith.constant 0 : index
    %56 = vector.load %arg3[%c0_59, %c0_60] : memref<1x128xf32, #tpu.memory_space<vmem>>, vector<1x128xf32>
    %57 = vector.shape_cast %56 : vector<1x128xf32> to vector<128xf32>
    %58 = vector.shape_cast %57 : vector<128xf32> to vector<1x128xf32>
    %59 = vector.broadcast %58 : vector<1x128xf32> to vector<256x128xf32>
    %60 = arith.addf %55, %59 : vector<256x128xf32>
    %cst_61 = arith.constant 0.000000e+00 : f32
    %61 = vector.broadcast %cst_61 : f32 to vector<256x128xf32>
    %62 = arith.maximumf %60, %61 : vector<256x128xf32>
    %63 = vector.shape_cast %62 : vector<256x128xf32> to vector<16x16x128xf32>
    %64 = arith.truncf %63 : vector<16x16x128xf32> to vector<16x16x128xbf16>
    %c1_62 = arith.constant 1 : index
    %c16_63 = arith.constant 16 : index
    %c0_64 = arith.constant 0 : index
    %65 = vector.load %arg7[%c1_62, %c16_63, %c0_64] : memref<18x48x128xbf16, #tpu.memory_space<vmem>>, vector<16x16x128xbf16>
    tpu.vector_store %arg7[%c1_62, %c16_63, %c0_64], %64 {strides = array<i32>} : memref<18x48x128xbf16, #tpu.memory_space<vmem>>, vector<16x16x128xbf16>,
    %cst_65 = arith.constant 0.000000e+00 : f32
    %66 = vector.broadcast %cst_65 : f32 to vector<256x128xf32>
    %c0_66 = arith.constant 0 : index
    %c15_67 = arith.constant 15 : index
    %c0_68 = arith.constant 0 : index
    %67 = vector.load %arg7[%c0_66, %c15_67, %c0_68] : memref<18x48x128xbf16, #tpu.memory_space<vmem>>, vector<16x16x128xbf16>
    %68 = vector.shape_cast %67 : vector<16x16x128xbf16> to vector<256x128xbf16>
    %c0_69 = arith.constant 0 : index
    %c0_70 = arith.constant 0 : index
    %69 = vector.load %arg4[%c0_69, %c0_70] : memref<1152x128xbf16, #tpu.memory_space<vmem>>, vector<128x128xbf16>
    %cst_71 = arith.constant dense<0.000000e+00> : vector<256x128xf32>
    %70 = tpu.matmul %68, %69, %cst_71 {dimension_numbers = #tpu.dot_dimension_numbers<[1], [0], [0], [1], [0, 0, 1, 1], [], []>} : vector<256x128xbf16>, vector<128x128xbf16>, vector<256x128xf32> -> vector<256x128xf32>
    %71 = arith.addf %66, %70 : vector<256x128xf32>
    %c0_72 = arith.constant 0 : index
    %c16_73 = arith.constant 16 : index
    %c0_74 = arith.constant 0 : index
    %72 = vector.load %arg7[%c0_72, %c16_73, %c0_74] : memref<18x48x128xbf16, #tpu.memory_space<vmem>>, vector<16x16x128xbf16>
    %73 = vector.shape_cast %72 : vector<16x16x128xbf16> to vector<256x128xbf16>
    %c128_75 = arith.constant 128 : index
    %c0_76 = arith.constant 0 : index
    %74 = vector.load %arg4[%c128_75, %c0_76] : memref<1152x128xbf16, #tpu.memory_space<vmem>>, vector<128x128xbf16>
    %cst_77 = arith.constant dense<0.000000e+00> : vector<256x128xf32>
    %75 = tpu.matmul %73, %74, %cst_77 {dimension_numbers = #tpu.dot_dimension_numbers<[1], [0], [0], [1], [0, 0, 1, 1], [], []>} : vector<256x128xbf16>, vector<128x128xbf16>, vector<256x128xf32> -> vector<256x128xf32>
    %76 = arith.addf %71, %75 : vector<256x128xf32>
    %c0_78 = arith.constant 0 : index
    %c17_79 = arith.constant 17 : index
    %c0_80 = arith.constant 0 : index
    %77 = vector.load %arg7[%c0_78, %c17_79, %c0_80] : memref<18x48x128xbf16, #tpu.memory_space<vmem>>, vector<16x16x128xbf16>
    %78 = vector.shape_cast %77 : vector<16x16x128xbf16> to vector<256x128xbf16>
    %c256_81 = arith.constant 256 : index
    %c0_82 = arith.constant 0 : index
    %79 = vector.load %arg4[%c256_81, %c0_82] : memref<1152x128xbf16, #tpu.memory_space<vmem>>, vector<128x128xbf16>
    %cst_83 = arith.constant dense<0.000000e+00> : vector<256x128xf32>
    %80 = tpu.matmul %78, %79, %cst_83 {dimension_numbers = #tpu.dot_dimension_numbers<[1], [0], [0], [1], [0, 0, 1, 1], [], []>} : vector<256x128xbf16>, vector<128x128xbf16>, vector<256x128xf32> -> vector<256x128xf32>
    %81 = arith.addf %76, %80 : vector<256x128xf32>
    %c1_84 = arith.constant 1 : index
    %c15_85 = arith.constant 15 : index
    %c0_86 = arith.constant 0 : index
    %82 = vector.load %arg7[%c1_84, %c15_85, %c0_86] : memref<18x48x128xbf16, #tpu.memory_space<vmem>>, vector<16x16x128xbf16>
    %83 = vector.shape_cast %82 : vector<16x16x128xbf16> to vector<256x128xbf16>
    %c384_87 = arith.constant 384 : index
    %c0_88 = arith.constant 0 : index
    %84 = vector.load %arg4[%c384_87, %c0_88] : memref<1152x128xbf16, #tpu.memory_space<vmem>>, vector<128x128xbf16>
    %cst_89 = arith.constant dense<0.000000e+00> : vector<256x128xf32>
    %85 = tpu.matmul %83, %84, %cst_89 {dimension_numbers = #tpu.dot_dimension_numbers<[1], [0], [0], [1], [0, 0, 1, 1], [], []>} : vector<256x128xbf16>, vector<128x128xbf16>, vector<256x128xf32> -> vector<256x128xf32>
    %86 = arith.addf %81, %85 : vector<256x128xf32>
    %c1_90 = arith.constant 1 : index
    %c16_91 = arith.constant 16 : index
    %c0_92 = arith.constant 0 : index
    %87 = vector.load %arg7[%c1_90, %c16_91, %c0_92] : memref<18x48x128xbf16, #tpu.memory_space<vmem>>, vector<16x16x128xbf16>
    %88 = vector.shape_cast %87 : vector<16x16x128xbf16> to vector<256x128xbf16>
    %c512_93 = arith.constant 512 : index
    %c0_94 = arith.constant 0 : index
    %89 = vector.load %arg4[%c512_93, %c0_94] : memref<1152x128xbf16, #tpu.memory_space<vmem>>, vector<128x128xbf16>
    %cst_95 = arith.constant dense<0.000000e+00> : vector<256x128xf32>
    %90 = tpu.matmul %88, %89, %cst_95 {dimension_numbers = #tpu.dot_dimension_numbers<[1], [0], [0], [1], [0, 0, 1, 1], [], []>} : vector<256x128xbf16>, vector<128x128xbf16>, vector<256x128xf32> -> vector<256x128xf32>
    %91 = arith.addf %86, %90 : vector<256x128xf32>
    %c1_96 = arith.constant 1 : index
    %c17_97 = arith.constant 17 : index
    %c0_98 = arith.constant 0 : index
    %92 = vector.load %arg7[%c1_96, %c17_97, %c0_98] : memref<18x48x128xbf16, #tpu.memory_space<vmem>>, vector<16x16x128xbf16>
    %93 = vector.shape_cast %92 : vector<16x16x128xbf16> to vector<256x128xbf16>
    %c640_99 = arith.constant 640 : index
    %c0_100 = arith.constant 0 : index
    %94 = vector.load %arg4[%c640_99, %c0_100] : memref<1152x128xbf16, #tpu.memory_space<vmem>>, vector<128x128xbf16>
    %cst_101 = arith.constant dense<0.000000e+00> : vector<256x128xf32>
    %95 = tpu.matmul %93, %94, %cst_101 {dimension_numbers = #tpu.dot_dimension_numbers<[1], [0], [0], [1], [0, 0, 1, 1], [], []>} : vector<256x128xbf16>, vector<128x128xbf16>, vector<256x128xf32> -> vector<256x128xf32>
    %96 = arith.addf %91, %95 : vector<256x128xf32>
    %c2_102 = arith.constant 2 : index
    %c15_103 = arith.constant 15 : index
    %c0_104 = arith.constant 0 : index
    %97 = vector.load %arg7[%c2_102, %c15_103, %c0_104] : memref<18x48x128xbf16, #tpu.memory_space<vmem>>, vector<16x16x128xbf16>
    %98 = vector.shape_cast %97 : vector<16x16x128xbf16> to vector<256x128xbf16>
    %c768_105 = arith.constant 768 : index
    %c0_106 = arith.constant 0 : index
    %99 = vector.load %arg4[%c768_105, %c0_106] : memref<1152x128xbf16, #tpu.memory_space<vmem>>, vector<128x128xbf16>
    %cst_107 = arith.constant dense<0.000000e+00> : vector<256x128xf32>
    %100 = tpu.matmul %98, %99, %cst_107 {dimension_numbers = #tpu.dot_dimension_numbers<[1], [0], [0], [1], [0, 0, 1, 1], [], []>} : vector<256x128xbf16>, vector<128x128xbf16>, vector<256x128xf32> -> vector<256x128xf32>
    %101 = arith.addf %96, %100 : vector<256x128xf32>
    %c2_108 = arith.constant 2 : index
    %c16_109 = arith.constant 16 : index
    %c0_110 = arith.constant 0 : index
    %102 = vector.load %arg7[%c2_108, %c16_109, %c0_110] : memref<18x48x128xbf16, #tpu.memory_space<vmem>>, vector<16x16x128xbf16>
    %103 = vector.shape_cast %102 : vector<16x16x128xbf16> to vector<256x128xbf16>
    %c896_111 = arith.constant 896 : index
    %c0_112 = arith.constant 0 : index
    %104 = vector.load %arg4[%c896_111, %c0_112] : memref<1152x128xbf16, #tpu.memory_space<vmem>>, vector<128x128xbf16>
    %cst_113 = arith.constant dense<0.000000e+00> : vector<256x128xf32>
    %105 = tpu.matmul %103, %104, %cst_113 {dimension_numbers = #tpu.dot_dimension_numbers<[1], [0], [0], [1], [0, 0, 1, 1], [], []>} : vector<256x128xbf16>, vector<128x128xbf16>, vector<256x128xf32> -> vector<256x128xf32>
    %106 = arith.addf %101, %105 : vector<256x128xf32>
    %c2_114 = arith.constant 2 : index
    %c17_115 = arith.constant 17 : index
    %c0_116 = arith.constant 0 : index
    %107 = vector.load %arg7[%c2_114, %c17_115, %c0_116] : memref<18x48x128xbf16, #tpu.memory_space<vmem>>, vector<16x16x128xbf16>
    %108 = vector.shape_cast %107 : vector<16x16x128xbf16> to vector<256x128xbf16>
    %c1024_117 = arith.constant 1024 : index
    %c0_118 = arith.constant 0 : index
    %109 = vector.load %arg4[%c1024_117, %c0_118] : memref<1152x128xbf16, #tpu.memory_space<vmem>>, vector<128x128xbf16>
    %cst_119 = arith.constant dense<0.000000e+00> : vector<256x128xf32>
    %110 = tpu.matmul %108, %109, %cst_119 {dimension_numbers = #tpu.dot_dimension_numbers<[1], [0], [0], [1], [0, 0, 1, 1], [], []>} : vector<256x128xbf16>, vector<128x128xbf16>, vector<256x128xf32> -> vector<256x128xf32>
    %111 = arith.addf %106, %110 : vector<256x128xf32>
    %c0_120 = arith.constant 0 : index
    %c0_121 = arith.constant 0 : index
    %112 = vector.load %arg5[%c0_120, %c0_121] : memref<1x128xf32, #tpu.memory_space<vmem>>, vector<1x128xf32>
    %113 = vector.shape_cast %112 : vector<1x128xf32> to vector<128xf32>
    %114 = vector.shape_cast %113 : vector<128xf32> to vector<1x128xf32>
    %115 = vector.broadcast %114 : vector<1x128xf32> to vector<256x128xf32>
    %116 = arith.addf %111, %115 : vector<256x128xf32>
    %117 = vector.shape_cast %116 : vector<256x128xf32> to vector<16x16x128xf32>
    %c0_122 = arith.constant 0 : index
    %c0_123 = arith.constant 0 : index
    %c0_124 = arith.constant 0 : index
    %c0_125 = arith.constant 0 : index
    %118 = vector.load %arg1[%c0_122, %c0_123, %c0_124, %c0_125] : memref<1x16x16x128xf32, #tpu.memory_space<vmem>>, vector<1x16x16x128xf32>
    %119 = vector.shape_cast %118 : vector<1x16x16x128xf32> to vector<16x16x128xf32>
    %120 = arith.addf %117, %119 : vector<16x16x128xf32>
    %cst_126 = arith.constant 0.000000e+00 : f32
    %121 = vector.broadcast %cst_126 : f32 to vector<16x16x128xf32>
    %122 = arith.maximumf %120, %121 : vector<16x16x128xf32>
    %123 = vector.shape_cast %122 : vector<16x16x128xf32> to vector<1x16x16x128xf32>
    %c0_127 = arith.constant 0 : index
    %c0_128 = arith.constant 0 : index
    %c0_129 = arith.constant 0 : index
    %c0_130 = arith.constant 0 : index
    %124 = vector.load %arg6[%c0_127, %c0_128, %c0_129, %c0_130] : memref<1x16x16x128xf32, #tpu.memory_space<vmem>>, vector<1x16x16x128xf32>
    tpu.vector_store %arg6[%c0_127, %c0_128, %c0_129, %c0_130], %123 {strides = array<i32>} : memref<1x16x16x128xf32, #tpu.memory_space<vmem>>, vector<1x16x16x128xf32>,
    return
  }
  func.func @transform_0(%arg0: i32) -> (i32, i32, i32, i32) {
    %c0_i32 = arith.constant 0 : i32
    %c0_i32_0 = arith.constant 0 : i32
    %c0_i32_1 = arith.constant 0 : i32
    %c0_i32_2 = arith.constant 0 : i32
    return %arg0, %c0_i32, %c0_i32_0, %c0_i32_1 : i32, i32, i32, i32
  }
  func.func @transform_1(%arg0: i32) -> (i32, i32) {
    %c0_i32 = arith.constant 0 : i32
    %c0_i32_0 = arith.constant 0 : i32
    %c0_i32_1 = arith.constant 0 : i32
    return %c0_i32, %c0_i32_0 : i32, i32
  }
  func.func @transform_2(%arg0: i32) -> (i32, i32) {
    %c0_i32 = arith.constant 0 : i32
    %c0_i32_0 = arith.constant 0 : i32
    %c0_i32_1 = arith.constant 0 : i32
    return %c0_i32, %c0_i32_0 : i32, i32
  }
  func.func @transform_3(%arg0: i32) -> (i32, i32) {
    %c0_i32 = arith.constant 0 : i32
    %c0_i32_0 = arith.constant 0 : i32
    %c0_i32_1 = arith.constant 0 : i32
    return %c0_i32, %c0_i32_0 : i32, i32
  }
  func.func @transform_4(%arg0: i32) -> (i32, i32) {
    %c0_i32 = arith.constant 0 : i32
    %c0_i32_0 = arith.constant 0 : i32
    %c0_i32_1 = arith.constant 0 : i32
    return %c0_i32, %c0_i32_0 : i32, i32
  }
  func.func @transform_5(%arg0: i32) -> (i32, i32, i32, i32) {
    %c0_i32 = arith.constant 0 : i32
    %c0_i32_0 = arith.constant 0 : i32
    %c0_i32_1 = arith.constant 0 : i32
    %c0_i32_2 = arith.constant 0 : i32
    return %arg0, %c0_i32, %c0_i32_0, %c0_i32_1 : i32, i32, i32, i32
  }
}

</mosaic_0001>

<llo_original>
// kernel: basic_block_forward.1
$region0: #{basic_block_forward.1}
  #allocation0 [shape = 'u32[]', space=smem, size = 0x4, offset = 0x4, fixed_abs, tag = 'smem constant byte address 0x4 - core index']
  #allocation1 [shape = 'u32[72,128]{1,0:T(1,128)}', space=vmem, size = 0x9000, scoped, tag = 'internal scratch']
  #allocation2 [shape = 'bf16[18,48,128]{2,1,0:T(8,128)(2,1)}', space=vmem, size = 0x36000, scoped, tag = 'scratch operand']
  %s0 = inlined_call_operand.vmem [shape: f32[2,16,16,128], index: 0, kind: input, shape index: {}]
  %s1 = inlined_call_operand.vmem [shape: bf16[1152,128], index: 1, kind: input, shape index: {}]
  %s2 = inlined_call_operand.vmem [shape: f32[1,128], index: 2, kind: input, shape index: {}]
  %s3 = inlined_call_operand.vmem [shape: bf16[1152,128], index: 3, kind: input, shape index: {}]
  %s4 = inlined_call_operand.vmem [shape: f32[1,128], index: 4, kind: input, shape index: {}]
  %s5 = inlined_call_operand.vmem [shape: f32[2,16,16,128], index: 5, kind: output, shape index: {}]
  %s6 = sld [smem:[#allocation0]]
  $region53: #{basic_block_forward.1} parent=0
    _
  %s8 = ssub.s32 1, %s6
  %s9 = scalar_select 0, %s8, %s6
  loop: start=0, step=1, limit=4
  $region2: #{basic_block_forward.1} parent=0 // loop_pre_header
    _
  $region3: #{basic_block_forward.1} parent=0 // loop_header
    %s11 = sphi 0, %s15
    %p12 = scmp.ge.s32.totalorder %s11, 4
    %s21 = sphi 0, %s23
    %s24 = sphi 0, %s21
    %s25 = sphi 0, %s24
    %s41 = sphi 0, %s25
    %s45 = sphi 0, %s45
    %s47 = sphi 0, %s45
    %s48 = sphi 0, %s47
    %s62 = sphi 0, %s48
    %s66 = sphi 0, %s66
    %s68 = sphi 0, %s66
    %s69 = sphi 0, %s68
    %s83 = sphi 0, %s69
    %s87 = sphi 0, %s87
    %s89 = sphi 0, %s87
    %s90 = sphi 0, %s89
    %s104 = sphi 0, %s90
    %s108 = sphi 0, %s108
    %s110 = sphi 0, %s108
    %s111 = sphi 0, %s110
    %s125 = sphi 0, %s111
    %s131 = sphi 0, %s133
    %s134 = sphi 0, %s131
    %s135 = sphi 0, %s134
    %s151 = sphi 0, %s135
  $region4: #{basic_block_forward.1} parent=0 // loop_header_branch
    %14 = sbr.rel (%p12) target = $region8
  $region5: #{basic_block_forward.1} parent=0 // loop_body
    %s16 = ssub.s32 %s11, 1
    %s17 = ssub.s32 %s11, 2
    %s18 = sadd.s32 %s11, 1
    %s19 = ssub.s32 %s11, %s18
    %p20 = scmp.eq.s32.totalorder %s19, 0
    %s22 = sadd.s32 %s21, 1
    %s23 = scalar_select %p20, %s21, %s22
    %p26 = pneg %p20
    %p27 = scmp.eq.s32.totalorder %s11, 1
    %p28 = por %p26, %p27
    %p29 = scmp.ne.s32.totalorder %s21, %s24
    %p30 = scmp.eq.s32.totalorder %s11, 0
    %p31 = por %p29, %p30
    %p32 = scmp.ne.s32.totalorder %s21, %s24
    %p33 = scmp.eq.s32.totalorder %s16, 1
    %p34 = por %p32, %p33
    %p35 = scmp.ne.s32.totalorder %s24, %s25
    %p36 = scmp.eq.s32.totalorder %s16, 0
    %p37 = por %p35, %p36
    %p38 = scmp.ne.s32.totalorder %s24, %s25
    %p39 = scmp.eq.s32.totalorder %s17, 1
    %p40 = por %p38, %p39
    %p42 = scmp.ne.s32.totalorder %s25, %s41
    %p43 = scmp.eq.s32.totalorder %s17, 0
    %p44 = por %p42, %p43
    %s46 = sadd.s32 %s45, 1
    %p49 = scmp.eq.s32.totalorder %s11, 1
    %p50 = scmp.ne.s32.totalorder %s45, %s47
    %p51 = scmp.eq.s32.totalorder %s11, 0
    %p52 = por %p50, %p51
    %p53 = scmp.ne.s32.totalorder %s45, %s47
    %p54 = scmp.eq.s32.totalorder %s16, 1
    %p55 = por %p53, %p54
    %p56 = scmp.ne.s32.totalorder %s47, %s48
    %p57 = scmp.eq.s32.totalorder %s16, 0
    %p58 = por %p56, %p57
    %p59 = scmp.ne.s32.totalorder %s47, %s48
    %p60 = scmp.eq.s32.totalorder %s17, 1
    %p61 = por %p59, %p60
    %p63 = scmp.ne.s32.totalorder %s48, %s62
    %p64 = scmp.eq.s32.totalorder %s17, 0
    %p65 = por %p63, %p64
    %s67 = sadd.s32 %s66, 1
    %p70 = scmp.eq.s32.totalorder %s11, 1
    %p71 = scmp.ne.s32.totalorder %s66, %s68
    %p72 = scmp.eq.s32.totalorder %s11, 0
    %p73 = por %p71, %p72
    %p74 = scmp.ne.s32.totalorder %s66, %s68
    %p75 = scmp.eq.s32.totalorder %s16, 1
    %p76 = por %p74, %p75
    %p77 = scmp.ne.s32.totalorder %s68, %s69
    %p78 = scmp.eq.s32.totalorder %s16, 0
    %p79 = por %p77, %p78
    %p80 = scmp.ne.s32.totalorder %s68, %s69
    %p81 = scmp.eq.s32.totalorder %s17, 1
    %p82 = por %p80, %p81
    %p84 = scmp.ne.s32.totalorder %s69, %s83
    %p85 = scmp.eq.s32.totalorder %s17, 0
    %p86 = por %p84, %p85
    %s88 = sadd.s32 %s87, 1
    %p91 = scmp.eq.s32.totalorder %s11, 1
    %p92 = scmp.ne.s32.totalorder %s87, %s89
    %p93 = scmp.eq.s32.totalorder %s11, 0
    %p94 = por %p92, %p93
    %p95 = scmp.ne.s32.totalorder %s87, %s89
    %p96 = scmp.eq.s32.totalorder %s16, 1
    %p97 = por %p95, %p96
    %p98 = scmp.ne.s32.totalorder %s89, %s90
    %p99 = scmp.eq.s32.totalorder %s16, 0
    %p100 = por %p98, %p99
    %p101 = scmp.ne.s32.totalorder %s89, %s90
    %p102 = scmp.eq.s32.totalorder %s17, 1
    %p103 = por %p101, %p102
    %p105 = scmp.ne.s32.totalorder %s90, %s104
    %p106 = scmp.eq.s32.totalorder %s17, 0
    %p107 = por %p105, %p106
    %s109 = sadd.s32 %s108, 1
    %p112 = scmp.eq.s32.totalorder %s11, 1
    %p113 = scmp.ne.s32.totalorder %s108, %s110
    %p114 = scmp.eq.s32.totalorder %s11, 0
    %p115 = por %p113, %p114
    %p116 = scmp.ne.s32.totalorder %s108, %s110
    %p117 = scmp.eq.s32.totalorder %s16, 1
    %p118 = por %p116, %p117
    %p119 = scmp.ne.s32.totalorder %s110, %s111
    %p120 = scmp.eq.s32.totalorder %s16, 0
    %p121 = por %p119, %p120
    %p122 = scmp.ne.s32.totalorder %s110, %s111
    %p123 = scmp.eq.s32.totalorder %s17, 1
    %p124 = por %p122, %p123
    %p126 = scmp.ne.s32.totalorder %s111, %s125
    %p127 = scmp.eq.s32.totalorder %s17, 0
    %p128 = por %p126, %p127
    %s129 = ssub.s32 %s11, %s18
    %p130 = scmp.eq.s32.totalorder %s129, 0
    %s132 = sadd.s32 %s131, 1
    %s133 = scalar_select %p130, %s131, %s132
    %p136 = pneg %p130
    %p137 = scmp.eq.s32.totalorder %s11, 1
    %p138 = por %p136, %p137
    %p139 = scmp.ne.s32.totalorder %s131, %s134
    %p140 = scmp.eq.s32.totalorder %s11, 0
    %p141 = por %p139, %p140
    %p142 = scmp.ne.s32.totalorder %s131, %s134
    %p143 = scmp.eq.s32.totalorder %s16, 1
    %p144 = por %p142, %p143
    %p145 = scmp.ne.s32.totalorder %s134, %s135
    %p146 = scmp.eq.s32.totalorder %s16, 0
    %p147 = por %p145, %p146
    %p148 = scmp.ne.s32.totalorder %s134, %s135
    %p149 = scmp.eq.s32.totalorder %s17, 1
    %p150 = por %p148, %p149
    %p152 = scmp.ne.s32.totalorder %s135, %s151
    %p153 = scmp.eq.s32.totalorder %s17, 0
    %p154 = por %p152, %p153
    %p155 = scmp.le.s32.totalorder 1, %s11
    %p156 = scmp.lt.s32.totalorder %s11, 3
    %p157 = pnand %p155, %p156
    %p158 = pneg %p157
    // Predicated region
    $region9: #{basic_block_forward.1} parent=5 // pred_check
      _
    $region10: #{basic_block_forward.1} parent=5 // pred_check_branch
      %160 = sbr.rel (%p157) target = $region12
    $region11: #{basic_block_forward.1} parent=5 // pred_region
      %s161 = ssub.s32 %s11, 1
      // Predicated region
      $region13: #{basic_block_forward.1} parent=11 // pred_check
        %p162 = pneg %p58
      $region14: #{basic_block_forward.1} parent=11 // pred_check_branch
        %164 = sbr.rel (%p162) target = $region16
      $region15: #{basic_block_forward.1} parent=11 // pred_region
        _
      $region16: #{basic_block_forward.1} parent=11 // pred_fallthru
        _
      // Predicated region
      $region17: #{basic_block_forward.1} parent=11 // pred_check
        %p165 = pneg %p79
      $region18: #{basic_block_forward.1} parent=11 // pred_check_branch
        %167 = sbr.rel (%p165) target = $region20
      $region19: #{basic_block_forward.1} parent=11 // pred_region
        _
      $region20: #{basic_block_forward.1} parent=11 // pred_fallthru
        _
      // Predicated region
      $region21: #{basic_block_forward.1} parent=11 // pred_check
        %p168 = pneg %p100
      $region22: #{basic_block_forward.1} parent=11 // pred_check_branch
        %170 = sbr.rel (%p168) target = $region24
      $region23: #{basic_block_forward.1} parent=11 // pred_region
        _
      $region24: #{basic_block_forward.1} parent=11 // pred_fallthru
        _
      // Predicated region
      $region25: #{basic_block_forward.1} parent=11 // pred_check
        %p171 = pneg %p121
      $region26: #{basic_block_forward.1} parent=11 // pred_check_branch
        %173 = sbr.rel (%p171) target = $region28
      $region27: #{basic_block_forward.1} parent=11 // pred_region
        _
      $region28: #{basic_block_forward.1} parent=11 // pred_fallthru
        _
    $region12: #{basic_block_forward.1} parent=5 // pred_fallthru
      _
    %p174 = scmp.lt.s32.totalorder %s11, 2
    // Predicated region
    $region29: #{basic_block_forward.1} parent=5 // pred_check
      %p175 = pneg %p174
    $region30: #{basic_block_forward.1} parent=5 // pred_check_branch
      %177 = sbr.rel (%p175) target = $region32
    $region31: #{basic_block_forward.1} parent=5 // pred_region
      // Predicated region
      $region33: #{basic_block_forward.1} parent=31 // pred_check
        %p178 = pneg %p31
      $region34: #{basic_block_forward.1} parent=31 // pred_check_branch
        %180 = sbr.rel (%p178) target = $region36
      $region35: #{basic_block_forward.1} parent=31 // pred_region
        %p181 = scmp.lt.s32.totalorder %s11, 1
        %s182 = scalar_select %p181, %s11, 1
        %s183 = smul.addr %s182, 32
        %s184 = smul.addr %s183, 8
        %s185 = scalar_lea.vmem %s0, %s184
      $region36: #{basic_block_forward.1} parent=31 // pred_fallthru
        _
    $region32: #{basic_block_forward.1} parent=5 // pred_fallthru
      _
    %p186 = scmp.le.s32.totalorder 1, %s11
    %p187 = scmp.lt.s32.totalorder %s11, 3
    %p188 = pnand %p186, %p187
    %p189 = pneg %p188
    // Predicated region
    $region37: #{basic_block_forward.1} parent=5 // pred_check
      _
    $region38: #{basic_block_forward.1} parent=5 // pred_check_branch
      %191 = sbr.rel (%p188) target = $region40
    $region39: #{basic_block_forward.1} parent=5 // pred_region
      %s192 = ssub.s32 %s11, 1
      %p193 = scmp.lt.s32.totalorder %s16, 1
      %s194 = scalar_select %p193, %s16, 1
      %s195 = smul.addr %s194, 32
      %s196 = smul.addr %s195, 8
      %s197 = scalar_lea.vmem %s0, %s196
      %p198 = pneg %p37
      %p199 = pneg %p34
      %p200 = pneg %p58
      %p201 = pneg %p55
      %p202 = pneg %p79
      %p203 = pneg %p76
      %p204 = pneg %p100
      %p205 = pneg %p97
      %p206 = pneg %p121
      %p207 = pneg %p118
      %p208 = pneg %p147
      %p209 = pneg %p144
      %p210 = scmp.lt.s32.totalorder %s16, 1
      %s211 = scalar_select %p210, %s16, 1
      %s212 = smul.addr %s211, 32
      %s213 = smul.addr %s212, 8
      %s214 = scalar_lea.vmem %s5, %s213
      %p215 = scmp.lt.s32.totalorder %s16, 1
      %s216 = scalar_select %p215, %s16, 1
      %s217 = smul.addr %s216, 32
      %s218 = smul.addr %s217, 8
      %s219 = scalar_lea.vmem %s0, %s218
      %p220 = scmp.lt.s32.totalorder %s16, 1
      %s221 = scalar_select %p220, %s16, 1
      %s222 = smul.addr %s221, 32
      %s223 = smul.addr %s222, 8
      %s224 = scalar_lea.vmem %s5, %s223
      %226 = vst [vmem:[#allocation2 + $0x4] sm:$0xf] 0
      %227 = vst [vmem:[#allocation2 + $0x1c] sm:$0xf] 0
      %228 = vst [vmem:[#allocation2 + $0x34] sm:$0xf] 0
      %229 = vst [vmem:[#allocation2 + $0x4c] sm:$0xf] 0
      %230 = vst [vmem:[#allocation2 + $0x64] sm:$0xf] 0
      %231 = vst [vmem:[#allocation2 + $0x7c] sm:$0xf] 0
      %232 = vst [vmem:[#allocation2 + $0x94] sm:$0xf] 0
      %233 = vst [vmem:[#allocation2 + $0xac] sm:$0xf] 0
      %234 = vst [vmem:[#allocation2 + $0xc4] sm:$0xf] 0
      %235 = vst [vmem:[#allocation2 + $0xdc] sm:$0xf] 0
      %236 = vst [vmem:[#allocation2 + $0xf4] sm:$0xf] 0
      %237 = vst [vmem:[#allocation2 + $0x10c] sm:$0xf] 0
      %238 = vst [vmem:[#allocation2 + $0x124] sm:$0xf] 0
      %239 = vst [vmem:[#allocation2 + $0x13c] sm:$0xf] 0
      %240 = vst [vmem:[#allocation2 + $0x154] sm:$0xf] 0
      %241 = vst [vmem:[#allocation2 + $0x16c] sm:$0xf] 0
      %242 = vst [vmem:[#allocation2 + $0x184] sm:$0xf] 0
      %243 = vst [vmem:[#allocation2 + $0x19c] sm:$0xf] 0
      %244 = vst [vmem:[#allocation2 + $0x10] sm:$0xf] 0
      %245 = vst [vmem:[#allocation2 + $0x28] sm:$0xf] 0
      %246 = vst [vmem:[#allocation2 + $0x40] sm:$0xf] 0
      %247 = vst [vmem:[#allocation2 + $0x58] sm:$0xf] 0
      %248 = vst [vmem:[#allocation2 + $0x70] sm:$0xf] 0
      %249 = vst [vmem:[#allocation2 + $0x88] sm:$0xf] 0
      %250 = vst [vmem:[#allocation2 + $0xa0] sm:$0xf] 0
      %251 = vst [vmem:[#allocation2 + $0xb8] sm:$0xf] 0
      %252 = vst [vmem:[#allocation2 + $0xd0] sm:$0xf] 0
      %253 = vst [vmem:[#allocation2 + $0xe8] sm:$0xf] 0
      %254 = vst [vmem:[#allocation2 + $0x100] sm:$0xf] 0
      %255 = vst [vmem:[#allocation2 + $0x118] sm:$0xf] 0
      %256 = vst [vmem:[#allocation2 + $0x130] sm:$0xf] 0
      %257 = vst [vmem:[#allocation2 + $0x148] sm:$0xf] 0
      %258 = vst [vmem:[#allocation2 + $0x160] sm:$0xf] 0
      %259 = vst [vmem:[#allocation2 + $0x178] sm:$0xf] 0
      %260 = vst [vmem:[#allocation2 + $0x190] sm:$0xf] 0
      %261 = vst [vmem:[#allocation2 + $0x1a8] sm:$0xf] 0
      %262 = vst [vmem:[#allocation2 + $0x8] sm:$0xf] 0
      %263 = vst [vmem:[#allocation2 + $0xc] sm:$0xf] 0
      %s264 = scalar_lea.vmem [#allocation2], 408
      %265 = vst [vmem:[%s264 + $0x8] sm:$0xf] 0
      %266 = vst [vmem:[%s264 + $0xc] sm:$0xf] 0
      %v267 = vld [vmem:[%s219] sm:$0xff]
      %v268 = vld [vmem:[%s219 + $0x8] sm:$0xff]
      %v269 = vld [vmem:[%s219 + $0x10] sm:$0xff]
      %v270 = vld [vmem:[%s219 + $0x18] sm:$0xff]
      %v271 = vld [vmem:[%s219 + $0x20] sm:$0xff]
      %v272 = vld [vmem:[%s219 + $0x28] sm:$0xff]
      %v273 = vld [vmem:[%s219 + $0x30] sm:$0xff]
      %v274 = vld [vmem:[%s219 + $0x38] sm:$0xff]
      %v275 = vld [vmem:[%s219 + $0x40] sm:$0xff]
      %v276 = vld [vmem:[%s219 + $0x48] sm:$0xff]
      %v277 = vld [vmem:[%s219 + $0x50] sm:$0xff]
      %v278 = vld [vmem:[%s219 + $0x58] sm:$0xff]
      %v279 = vld [vmem:[%s219 + $0x60] sm:$0xff]
      %v280 = vld [vmem:[%s219 + $0x68] sm:$0xff]
      %v281 = vld [vmem:[%s219 + $0x70] sm:$0xff]
      %v282 = vld [vmem:[%s219 + $0x78] sm:$0xff]
      %v283 = vld [vmem:[%s219 + $0x80] sm:$0xff]
      %v284 = vld [vmem:[%s219 + $0x88] sm:$0xff]
      %v285 = vld [vmem:[%s219 + $0x90] sm:$0xff]
      %v286 = vld [vmem:[%s219 + $0x98] sm:$0xff]
      %v287 = vld [vmem:[%s219 + $0xa0] sm:$0xff]
      %v288 = vld [vmem:[%s219 + $0xa8] sm:$0xff]
      %v289 = vld [vmem:[%s219 + $0xb0] sm:$0xff]
      %v290 = vld [vmem:[%s219 + $0xb8] sm:$0xff]
      %v291 = vld [vmem:[%s219 + $0xc0] sm:$0xff]
      %v292 = vld [vmem:[%s219 + $0xc8] sm:$0xff]
      %v293 = vld [vmem:[%s219 + $0xd0] sm:$0xff]
      %v294 = vld [vmem:[%s219 + $0xd8] sm:$0xff]
      %v295 = vld [vmem:[%s219 + $0xe0] sm:$0xff]
      %v296 = vld [vmem:[%s219 + $0xe8] sm:$0xff]
      %v297 = vld [vmem:[%s219 + $0xf0] sm:$0xff]
      %v298 = vld [vmem:[%s219 + $0xf8] sm:$0xff]
      %v299 = vpack.c.bf16 %v267, %v267
      %v300 = vpack.c.bf16 %v268, %v268
      %v301 = vpack.c.bf16 %v269, %v269
      %v302 = vpack.c.bf16 %v270, %v270
      %v303 = vpack.c.bf16 %v271, %v271
      %v304 = vpack.c.bf16 %v272, %v272
      %v305 = vpack.c.bf16 %v273, %v273
      %v306 = vpack.c.bf16 %v274, %v274
      %v307 = vpack.c.bf16 %v275, %v275
      %v308 = vpack.c.bf16 %v276, %v276
      %v309 = vpack.c.bf16 %v277, %v277
      %v310 = vpack.c.bf16 %v278, %v278
      %v311 = vpack.c.bf16 %v279, %v279
      %v312 = vpack.c.bf16 %v280, %v280
      %v313 = vpack.c.bf16 %v281, %v281
      %v314 = vpack.c.bf16 %v282, %v282
      %v315 = vpack.c.bf16 %v283, %v283
      %v316 = vpack.c.bf16 %v284, %v284
      %v317 = vpack.c.bf16 %v285, %v285
      %v318 = vpack.c.bf16 %v286, %v286
      %v319 = vpack.c.bf16 %v287, %v287
      %v320 = vpack.c.bf16 %v288, %v288
      %v321 = vpack.c.bf16 %v289, %v289
      %v322 = vpack.c.bf16 %v290, %v290
      %v323 = vpack.c.bf16 %v291, %v291
      %v324 = vpack.c.bf16 %v292, %v292
      %v325 = vpack.c.bf16 %v293, %v293
      %v326 = vpack.c.bf16 %v294, %v294
      %v327 = vpack.c.bf16 %v295, %v295
      %v328 = vpack.c.bf16 %v296, %v296
      %v329 = vpack.c.bf16 %v297, %v297
      %v330 = vpack.c.bf16 %v298, %v298
      %s331 = scalar_lea.vmem [#allocation2], 24
      %332 = vst [vmem:[%s331 + $0x8] sm:$0xf] %v299
      %333 = vst [vmem:[%s331 + $0xc] sm:$0xf] %v300
      %334 = vst [vmem:[%s331 + $0x20] sm:$0xf] %v301
      %335 = vst [vmem:[%s331 + $0x24] sm:$0xf] %v302
      %336 = vst [vmem:[%s331 + $0x38] sm:$0xf] %v303
      %337 = vst [vmem:[%s331 + $0x3c] sm:$0xf] %v304
      %338 = vst [vmem:[%s331 + $0x50] sm:$0xf] %v305
      %339 = vst [vmem:[%s331 + $0x54] sm:$0xf] %v306
      %340 = vst [vmem:[%s331 + $0x68] sm:$0xf] %v307
      %341 = vst [vmem:[%s331 + $0x6c] sm:$0xf] %v308
      %342 = vst [vmem:[%s331 + $0x80] sm:$0xf] %v309
      %343 = vst [vmem:[%s331 + $0x84] sm:$0xf] %v310
      %344 = vst [vmem:[%s331 + $0x98] sm:$0xf] %v311
      %345 = vst [vmem:[%s331 + $0x9c] sm:$0xf] %v312
      %346 = vst [vmem:[%s331 + $0xb0] sm:$0xf] %v313
      %347 = vst [vmem:[%s331 + $0xb4] sm:$0xf] %v314
      %348 = vst [vmem:[%s331 + $0xc8] sm:$0xf] %v315
      %349 = vst [vmem:[%s331 + $0xcc] sm:$0xf] %v316
      %350 = vst [vmem:[%s331 + $0xe0] sm:$0xf] %v317
      %351 = vst [vmem:[%s331 + $0xe4] sm:$0xf] %v318
      %352 = vst [vmem:[%s331 + $0xf8] sm:$0xf] %v319
      %353 = vst [vmem:[%s331 + $0xfc] sm:$0xf] %v320
      %354 = vst [vmem:[%s331 + $0x110] sm:$0xf] %v321
      %355 = vst [vmem:[%s331 + $0x114] sm:$0xf] %v322
      %356 = vst [vmem:[%s331 + $0x128] sm:$0xf] %v323
      %357 = vst [vmem:[%s331 + $0x12c] sm:$0xf] %v324
      %358 = vst [vmem:[%s331 + $0x140] sm:$0xf] %v325
      %359 = vst [vmem:[%s331 + $0x144] sm:$0xf] %v326
      %360 = vst [vmem:[%s331 + $0x158] sm:$0xf] %v327
      %361 = vst [vmem:[%s331 + $0x15c] sm:$0xf] %v328
      %362 = vst [vmem:[%s331 + $0x170] sm:$0xf] %v329
      %363 = vst [vmem:[%s331 + $0x174] sm:$0xf] %v330
      %v364 = vld [vmem:[#allocation2 + $0x4] sm:$0x8]
      %v365 = vld [vmem:[#allocation2 + $0x8] sm:$0xf]
      %v366 = vld [vmem:[#allocation2 + $0xc] sm:$0xf]
      %v367 = vld [vmem:[#allocation2 + $0x1c] sm:$0x8]
      %v368 = vld [vmem:[#allocation2 + $0x20] sm:$0xf]
      %v369 = vld [vmem:[#allocation2 + $0x24] sm:$0xf]
      %v370 = vld [vmem:[#allocation2 + $0x34] sm:$0x8]
      %v371 = vld [vmem:[#allocation2 + $0x38] sm:$0xf]
      %v372 = vld [vmem:[#allocation2 + $0x3c] sm:$0xf]
      %v373 = vld [vmem:[#allocation2 + $0x4c] sm:$0x8]
      %v374 = vld [vmem:[#allocation2 + $0x50] sm:$0xf]
      %v375 = vld [vmem:[#allocation2 + $0x54] sm:$0xf]
      %v376 = vld [vmem:[#allocation2 + $0x64] sm:$0x8]
      %v377 = vld [vmem:[#allocation2 + $0x68] sm:$0xf]
      %v378 = vld [vmem:[#allocation2 + $0x6c] sm:$0xf]
      %v379 = vld [vmem:[#allocation2 + $0x7c] sm:$0x8]
      %v380 = vld [vmem:[#allocation2 + $0x80] sm:$0xf]
      %v381 = vld [vmem:[#allocation2 + $0x84] sm:$0xf]
      %v382 = vld [vmem:[#allocation2 + $0x94] sm:$0x8]
      %v383 = vld [vmem:[#allocation2 + $0x98] sm:$0xf]
      %v384 = vld [vmem:[#allocation2 + $0x9c] sm:$0xf]
      %v385 = vld [vmem:[#allocation2 + $0xac] sm:$0x8]
      %v386 = vld [vmem:[#allocation2 + $0xb0] sm:$0xf]
      %v387 = vld [vmem:[#allocation2 + $0xb4] sm:$0xf]
      %v388 = vld [vmem:[#allocation2 + $0xc4] sm:$0x8]
      %v389 = vld [vmem:[#allocation2 + $0xc8] sm:$0xf]
      %v390 = vld [vmem:[#allocation2 + $0xcc] sm:$0xf]
      %v391 = vld [vmem:[#allocation2 + $0xdc] sm:$0x8]
      %v392 = vld [vmem:[#allocation2 + $0xe0] sm:$0xf]
      %v393 = vld [vmem:[#allocation2 + $0xe4] sm:$0xf]
      %v394 = vld [vmem:[#allocation2 + $0xf4] sm:$0x8]
      %v395 = vld [vmem:[#allocation2 + $0xf8] sm:$0xf]
      %v396 = vld [vmem:[#allocation2 + $0xfc] sm:$0xf]
      %v397 = vld [vmem:[#allocation2 + $0x10c] sm:$0x8]
      %v398 = vld [vmem:[#allocation2 + $0x110] sm:$0xf]
      %v399 = vld [vmem:[#allocation2 + $0x114] sm:$0xf]
      %v400 = vld [vmem:[#allocation2 + $0x124] sm:$0x8]
      %v401 = vld [vmem:[#allocation2 + $0x128] sm:$0xf]
      %v402 = vld [vmem:[#allocation2 + $0x12c] sm:$0xf]
      %v403 = vld [vmem:[#allocation2 + $0x13c] sm:$0x8]
      %v404 = vld [vmem:[#allocation2 + $0x140] sm:$0xf]
      %v405 = vld [vmem:[#allocation2 + $0x144] sm:$0xf]
      %v406 = vld [vmem:[#allocation2 + $0x154] sm:$0x8]
      %v407 = vld [vmem:[#allocation2 + $0x158] sm:$0xf]
      %v408 = vld [vmem:[#allocation2 + $0x15c] sm:$0xf]
      %v409 = vld [vmem:[#allocation2 + $0x16c] sm:$0x8]
      %v410 = vld [vmem:[#allocation2 + $0x170] sm:$0xf]
      %v411 = vld [vmem:[#allocation2 + $0x174] sm:$0xf]
      %vm412 = vsmask.f32 256
      %vm413 = vsmask.f32 4368
      %vm414 = vmor %vm412, %vm413
      %v416 = vshrl.u32 %v364, 16
      %v418 = vrot.slane %v416, 7
      %v419 = vrot.slane %v418, 4
      %v421 = vshrl.u32 %v365, 16
      %v423 = vrot.slane %v421, 7
      %v424 = vshll.u32 %v365, 16
      %v426 = vor.u32 %v423, %v424
      %v427 = vsel %vm414, %v419, %v426
      %v428 = vrot.slane %v423, 4
      %v430 = vshrl.u32 %v366, 16
      %v432 = vrot.slane %v430, 7
      %v433 = vshll.u32 %v366, 16
      %v435 = vor.u32 %v432, %v433
      %v436 = vsel %vm414, %v428, %v435
      %v438 = vshrl.u32 %v367, 16
      %v440 = vrot.slane %v438, 7
      %v441 = vrot.slane %v440, 4
      %v443 = vshrl.u32 %v368, 16
      %v445 = vrot.slane %v443, 7
      %v446 = vshll.u32 %v368, 16
      %v448 = vor.u32 %v445, %v446
      %v449 = vsel %vm414, %v441, %v448
      %v450 = vrot.slane %v445, 4
      %v452 = vshrl.u32 %v369, 16
      %v454 = vrot.slane %v452, 7
      %v455 = vshll.u32 %v369, 16
      %v457 = vor.u32 %v454, %v455
      %v458 = vsel %vm414, %v450, %v457
      %v460 = vshrl.u32 %v370, 16
      %v462 = vrot.slane %v460, 7
      %v463 = vrot.slane %v462, 4
      %v465 = vshrl.u32 %v371, 16
      %v467 = vrot.slane %v465, 7
      %v468 = vshll.u32 %v371, 16
      %v470 = vor.u32 %v467, %v468
      %v471 = vsel %vm414, %v463, %v470
      %v472 = vrot.slane %v467, 4
      %v474 = vshrl.u32 %v372, 16
      %v476 = vrot.slane %v474, 7
      %v477 = vshll.u32 %v372, 16
      %v479 = vor.u32 %v476, %v477
      %v480 = vsel %vm414, %v472, %v479
      %v482 = vshrl.u32 %v373, 16
      %v484 = vrot.slane %v482, 7
      %v485 = vrot.slane %v484, 4
      %v487 = vshrl.u32 %v374, 16
      %v489 = vrot.slane %v487, 7
      %v490 = vshll.u32 %v374, 16
      %v492 = vor.u32 %v489, %v490
      %v493 = vsel %vm414, %v485, %v492
      %v494 = vrot.slane %v489, 4
      %v496 = vshrl.u32 %v375, 16
      %v498 = vrot.slane %v496, 7
      %v499 = vshll.u32 %v375, 16
      %v501 = vor.u32 %v498, %v499
      %v502 = vsel %vm414, %v494, %v501
      %v504 = vshrl.u32 %v376, 16
      %v506 = vrot.slane %v504, 7
      %v507 = vrot.slane %v506, 4
      %v509 = vshrl.u32 %v377, 16
      %v511 = vrot.slane %v509, 7
      %v512 = vshll.u32 %v377, 16
      %v514 = vor.u32 %v511, %v512
      %v515 = vsel %vm414, %v507, %v514
      %v516 = vrot.slane %v511, 4
      %v518 = vshrl.u32 %v378, 16
      %v520 = vrot.slane %v518, 7
      %v521 = vshll.u32 %v378, 16
      %v523 = vor.u32 %v520, %v521
      %v524 = vsel %vm414, %v516, %v523
      %v526 = vshrl.u32 %v379, 16
      %v528 = vrot.slane %v526, 7
      %v529 = vrot.slane %v528, 4
      %v531 = vshrl.u32 %v380, 16
      %v533 = vrot.slane %v531, 7
      %v534 = vshll.u32 %v380, 16
      %v536 = vor.u32 %v533, %v534
      %v537 = vsel %vm414, %v529, %v536
      %v538 = vrot.slane %v533, 4
      %v540 = vshrl.u32 %v381, 16
      %v542 = vrot.slane %v540, 7
      %v543 = vshll.u32 %v381, 16
      %v545 = vor.u32 %v542, %v543
      %v546 = vsel %vm414, %v538, %v545
      %v548 = vshrl.u32 %v382, 16
      %v550 = vrot.slane %v548, 7
      %v551 = vrot.slane %v550, 4
      %v553 = vshrl.u32 %v383, 16
      %v555 = vrot.slane %v553, 7
      %v556 = vshll.u32 %v383, 16
      %v558 = vor.u32 %v555, %v556
      %v559 = vsel %vm414, %v551, %v558
      %v560 = vrot.slane %v555, 4
      %v562 = vshrl.u32 %v384, 16
      %v564 = vrot.slane %v562, 7
      %v565 = vshll.u32 %v384, 16
      %v567 = vor.u32 %v564, %v565
      %v568 = vsel %vm414, %v560, %v567
      %v570 = vshrl.u32 %v385, 16
      %v572 = vrot.slane %v570, 7
      %v573 = vrot.slane %v572, 4
      %v575 = vshrl.u32 %v386, 16
      %v577 = vrot.slane %v575, 7
      %v578 = vshll.u32 %v386, 16
      %v580 = vor.u32 %v577, %v578
      %v581 = vsel %vm414, %v573, %v580
      %v582 = vrot.slane %v577, 4
      %v584 = vshrl.u32 %v387, 16
      %v586 = vrot.slane %v584, 7
      %v587 = vshll.u32 %v387, 16
      %v589 = vor.u32 %v586, %v587
      %v590 = vsel %vm414, %v582, %v589
      %v592 = vshrl.u32 %v388, 16
      %v594 = vrot.slane %v592, 7
      %v595 = vrot.slane %v594, 4
      %v597 = vshrl.u32 %v389, 16
      %v599 = vrot.slane %v597, 7
      %v600 = vshll.u32 %v389, 16
      %v602 = vor.u32 %v599, %v600
      %v603 = vsel %vm414, %v595, %v602
      %v604 = vrot.slane %v599, 4
      %v606 = vshrl.u32 %v390, 16
      %v608 = vrot.slane %v606, 7
      %v609 = vshll.u32 %v390, 16
      %v611 = vor.u32 %v608, %v609
      %v612 = vsel %vm414, %v604, %v611
      %v614 = vshrl.u32 %v391, 16
      %v616 = vrot.slane %v614, 7
      %v617 = vrot.slane %v616, 4
      %v619 = vshrl.u32 %v392, 16
      %v621 = vrot.slane %v619, 7
      %v622 = vshll.u32 %v392, 16
      %v624 = vor.u32 %v621, %v622
      %v625 = vsel %vm414, %v617, %v624
      %v626 = vrot.slane %v621, 4
      %v628 = vshrl.u32 %v393, 16
      %v630 = vrot.slane %v628, 7
      %v631 = vshll.u32 %v393, 16
      %v633 = vor.u32 %v630, %v631
      %v634 = vsel %vm414, %v626, %v633
      %v636 = vshrl.u32 %v394, 16
      %v638 = vrot.slane %v636, 7
      %v639 = vrot.slane %v638, 4
      %v641 = vshrl.u32 %v395, 16
      %v643 = vrot.slane %v641, 7
      %v644 = vshll.u32 %v395, 16
      %v646 = vor.u32 %v643, %v644
      %v647 = vsel %vm414, %v639, %v646
      %v648 = vrot.slane %v643, 4
      %v650 = vshrl.u32 %v396, 16
      %v652 = vrot.slane %v650, 7
      %v653 = vshll.u32 %v396, 16
      %v655 = vor.u32 %v652, %v653
      %v656 = vsel %vm414, %v648, %v655
      %v658 = vshrl.u32 %v397, 16
      %v660 = vrot.slane %v658, 7
      %v661 = vrot.slane %v660, 4
      %v663 = vshrl.u32 %v398, 16
      %v665 = vrot.slane %v663, 7
      %v666 = vshll.u32 %v398, 16
      %v668 = vor.u32 %v665, %v666
      %v669 = vsel %vm414, %v661, %v668
      %v670 = vrot.slane %v665, 4
      %v672 = vshrl.u32 %v399, 16
      %v674 = vrot.slane %v672, 7
      %v675 = vshll.u32 %v399, 16
      %v677 = vor.u32 %v674, %v675
      %v678 = vsel %vm414, %v670, %v677
      %v680 = vshrl.u32 %v400, 16
      %v682 = vrot.slane %v680, 7
      %v683 = vrot.slane %v682, 4
      %v685 = vshrl.u32 %v401, 16
      %v687 = vrot.slane %v685, 7
      %v688 = vshll.u32 %v401, 16
      %v690 = vor.u32 %v687, %v688
      %v691 = vsel %vm414, %v683, %v690
      %v692 = vrot.slane %v687, 4
      %v694 = vshrl.u32 %v402, 16
      %v696 = vrot.slane %v694, 7
      %v697 = vshll.u32 %v402, 16
      %v699 = vor.u32 %v696, %v697
      %v700 = vsel %vm414, %v692, %v699
      %v702 = vshrl.u32 %v403, 16
      %v704 = vrot.slane %v702, 7
      %v705 = vrot.slane %v704, 4
      %v707 = vshrl.u32 %v404, 16
      %v709 = vrot.slane %v707, 7
      %v710 = vshll.u32 %v404, 16
      %v712 = vor.u32 %v709, %v710
      %v713 = vsel %vm414, %v705, %v712
      %v714 = vrot.slane %v709, 4
      %v716 = vshrl.u32 %v405, 16
      %v718 = vrot.slane %v716, 7
      %v719 = vshll.u32 %v405, 16
      %v721 = vor.u32 %v718, %v719
      %v722 = vsel %vm414, %v714, %v721
      %v724 = vshrl.u32 %v406, 16
      %v726 = vrot.slane %v724, 7
      %v727 = vrot.slane %v726, 4
      %v729 = vshrl.u32 %v407, 16
      %v731 = vrot.slane %v729, 7
      %v732 = vshll.u32 %v407, 16
      %v734 = vor.u32 %v731, %v732
      %v735 = vsel %vm414, %v727, %v734
      %v736 = vrot.slane %v731, 4
      %v738 = vshrl.u32 %v408, 16
      %v740 = vrot.slane %v738, 7
      %v741 = vshll.u32 %v408, 16
      %v743 = vor.u32 %v740, %v741
      %v744 = vsel %vm414, %v736, %v743
      %v746 = vshrl.u32 %v409, 16
      %v748 = vrot.slane %v746, 7
      %v749 = vrot.slane %v748, 4
      %v751 = vshrl.u32 %v410, 16
      %v753 = vrot.slane %v751, 7
      %v754 = vshll.u32 %v410, 16
      %v756 = vor.u32 %v753, %v754
      %v757 = vsel %vm414, %v749, %v756
      %v758 = vrot.slane %v753, 4
      %v760 = vshrl.u32 %v411, 16
      %v762 = vrot.slane %v760, 7
      %v763 = vshll.u32 %v411, 16
      %v765 = vor.u32 %v762, %v763
      %v766 = vsel %vm414, %v758, %v765
      %v767 = vld [vmem:[%s1] sm:$0xf]
      %v768 = vld [vmem:[%s1 + $0x4] sm:$0xf]
      %v769 = vld [vmem:[%s1 + $0x8] sm:$0xf]
      %v770 = vld [vmem:[%s1 + $0xc] sm:$0xf]
      %v771 = vld [vmem:[%s1 + $0x10] sm:$0xf]
      %v772 = vld [vmem:[%s1 + $0x14] sm:$0xf]
      %v773 = vld [vmem:[%s1 + $0x18] sm:$0xf]
      %v774 = vld [vmem:[%s1 + $0x1c] sm:$0xf]
      %v775 = vld [vmem:[%s1 + $0x20] sm:$0xf]
      %v776 = vld [vmem:[%s1 + $0x24] sm:$0xf]
      %v777 = vld [vmem:[%s1 + $0x28] sm:$0xf]
      %v778 = vld [vmem:[%s1 + $0x2c] sm:$0xf]
      %v779 = vld [vmem:[%s1 + $0x30] sm:$0xf]
      %v780 = vld [vmem:[%s1 + $0x34] sm:$0xf]
      %v781 = vld [vmem:[%s1 + $0x38] sm:$0xf]
      %v782 = vld [vmem:[%s1 + $0x3c] sm:$0xf]
      %v783 = vld [vmem:[%s1 + $0x40] sm:$0xf]
      %v784 = vld [vmem:[%s1 + $0x44] sm:$0xf]
      %v785 = vld [vmem:[%s1 + $0x48] sm:$0xf]
      %v786 = vld [vmem:[%s1 + $0x4c] sm:$0xf]
      %v787 = vld [vmem:[%s1 + $0x50] sm:$0xf]
      %v788 = vld [vmem:[%s1 + $0x54] sm:$0xf]
      %v789 = vld [vmem:[%s1 + $0x58] sm:$0xf]
      %v790 = vld [vmem:[%s1 + $0x5c] sm:$0xf]
      %v791 = vld [vmem:[%s1 + $0x60] sm:$0xf]
      %v792 = vld [vmem:[%s1 + $0x64] sm:$0xf]
      %v793 = vld [vmem:[%s1 + $0x68] sm:$0xf]
      %v794 = vld [vmem:[%s1 + $0x6c] sm:$0xf]
      %v795 = vld [vmem:[%s1 + $0x70] sm:$0xf]
      %v796 = vld [vmem:[%s1 + $0x74] sm:$0xf]
      %v797 = vld [vmem:[%s1 + $0x78] sm:$0xf]
      %v798 = vld [vmem:[%s1 + $0x7c] sm:$0xf]
      %v831 = vunpack.c.l.b16 %v365
      %v832 = vunpack.c.l.b16 %v366
      %v833 = vunpack.c.l.b16 %v368
      %v834 = vunpack.c.l.b16 %v369
      %v835 = vunpack.c.l.b16 %v371
      %v836 = vunpack.c.l.b16 %v372
      %v837 = vunpack.c.l.b16 %v374
      %v838 = vunpack.c.l.b16 %v375
      %v839 = vunpack.c.l.b16 %v377
      %v840 = vunpack.c.l.b16 %v378
      %v841 = vunpack.c.l.b16 %v380
      %v842 = vunpack.c.l.b16 %v381
      %v843 = vunpack.c.l.b16 %v383
      %v844 = vunpack.c.l.b16 %v384
      %v845 = vunpack.c.l.b16 %v386
      %v846 = vunpack.c.l.b16 %v387
      %v847 = vunpack.c.l.b16 %v389
      %v848 = vunpack.c.l.b16 %v390
      %v849 = vunpack.c.l.b16 %v392
      %v850 = vunpack.c.l.b16 %v393
      %v851 = vunpack.c.l.b16 %v395
      %v852 = vunpack.c.l.b16 %v396
      %v853 = vunpack.c.l.b16 %v398
      %v854 = vunpack.c.l.b16 %v399
      %v855 = vunpack.c.l.b16 %v401
      %v856 = vunpack.c.l.b16 %v402
      %v857 = vunpack.c.l.b16 %v404
      %v858 = vunpack.c.l.b16 %v405
      %v859 = vunpack.c.l.b16 %v407
      %v860 = vunpack.c.l.b16 %v408
      %v861 = vunpack.c.l.b16 %v410
      %v862 = vunpack.c.l.b16 %v411
      %v863 = vpack.c.b16 %v832, %v831
      %v864 = vpack.c.b16 %v834, %v833
      %v865 = vpack.c.b16 %v836, %v835
      %v866 = vpack.c.b16 %v838, %v837
      %v867 = vpack.c.b16 %v840, %v839
      %v868 = vpack.c.b16 %v842, %v841
      %v869 = vpack.c.b16 %v844, %v843
      %v870 = vpack.c.b16 %v846, %v845
      %v871 = vpack.c.b16 %v848, %v847
      %v872 = vpack.c.b16 %v850, %v849
      %v873 = vpack.c.b16 %v852, %v851
      %v874 = vpack.c.b16 %v854, %v853
      %v875 = vpack.c.b16 %v856, %v855
      %v876 = vpack.c.b16 %v858, %v857
      %v877 = vpack.c.b16 %v860, %v859
      %v878 = vpack.c.b16 %v862, %v861
      %v911 = vunpack.c.l.b16 %v783
      %v912 = vunpack.c.l.b16 %v784
      %v913 = vunpack.c.l.b16 %v785
      %v914 = vunpack.c.l.b16 %v786
      %v915 = vunpack.c.l.b16 %v787
      %v916 = vunpack.c.l.b16 %v788
      %v917 = vunpack.c.l.b16 %v789
      %v918 = vunpack.c.l.b16 %v790
      %v919 = vunpack.c.l.b16 %v791
      %v920 = vunpack.c.l.b16 %v792
      %v921 = vunpack.c.l.b16 %v793
      %v922 = vunpack.c.l.b16 %v794
      %v923 = vunpack.c.l.b16 %v795
      %v924 = vunpack.c.l.b16 %v796
      %v925 = vunpack.c.l.b16 %v797
      %v926 = vunpack.c.l.b16 %v798
      %v927 = vpack.c.b16 %v912, %v911
      %v928 = vpack.c.b16 %v914, %v913
      %v929 = vpack.c.b16 %v916, %v915
      %v930 = vpack.c.b16 %v918, %v917
      %v931 = vpack.c.b16 %v920, %v919
      %v932 = vpack.c.b16 %v922, %v921
      %v933 = vpack.c.b16 %v924, %v923
      %v934 = vpack.c.b16 %v926, %v925
      %943 = vmatpush.bf16.msra.mxu0 %v934
      %944 = vmatpush.bf16.msra.mxu0 %v933
      %945 = vmatpush.bf16.msra.mxu0 %v932
      %946 = vmatpush.bf16.msra.mxu0 %v931
      %947 = vmatpush.bf16.msra.mxu0 %v930
      %948 = vmatpush.bf16.msra.mxu0 %v929
      %949 = vmatpush.bf16.msra.mxu0 %v928
      %950 = vmatpush.bf16.msra.mxu0 %v927
      %951 = vmatmul.bf16.gmra.mxu0 %v863
      %v952 = vpop.f32.mrf.mxu0
      %v953 = vadd.f32 0.0, %v952
      %v954 = vpop.f32.mrf.mxu0
      %v955 = vadd.f32 0.0, %v954
      %956 = vmatmul.bf16.gmra.mxu0 %v864
      %v957 = vpop.f32.mrf.mxu0
      %v958 = vadd.f32 0.0, %v957
      %v959 = vpop.f32.mrf.mxu0
      %v960 = vadd.f32 0.0, %v959
      %961 = vmatmul.bf16.gmra.mxu0 %v865
      %v962 = vpop.f32.mrf.mxu0
      %v963 = vadd.f32 0.0, %v962
      %v964 = vpop.f32.mrf.mxu0
      %v965 = vadd.f32 0.0, %v964
      %966 = vmatmul.bf16.gmra.mxu0 %v866
      %v967 = vpop.f32.mrf.mxu0
      %v968 = vadd.f32 0.0, %v967
      %v969 = vpop.f32.mrf.mxu0
      %v970 = vadd.f32 0.0, %v969
      %971 = vmatmul.bf16.gmra.mxu0 %v867
      %v972 = vpop.f32.mrf.mxu0
      %v973 = vadd.f32 0.0, %v972
      %v974 = vpop.f32.mrf.mxu0
      %v975 = vadd.f32 0.0, %v974
      %976 = vmatmul.bf16.gmra.mxu0 %v868
      %v977 = vpop.f32.mrf.mxu0
      %v978 = vadd.f32 0.0, %v977
      %v979 = vpop.f32.mrf.mxu0
      %v980 = vadd.f32 0.0, %v979
      %981 = vmatmul.bf16.gmra.mxu0 %v869
      %v982 = vpop.f32.mrf.mxu0
      %v983 = vadd.f32 0.0, %v982
      %v984 = vpop.f32.mrf.mxu0
      %v985 = vadd.f32 0.0, %v984
      %986 = vmatmul.bf16.gmra.mxu0 %v870
      %v987 = vpop.f32.mrf.mxu0
      %v988 = vadd.f32 0.0, %v987
      %v989 = vpop.f32.mrf.mxu0
      %v990 = vadd.f32 0.0, %v989
      %991 = vmatmul.bf16.gmra.mxu0 %v871
      %v992 = vpop.f32.mrf.mxu0
      %v993 = vadd.f32 0.0, %v992
      %v994 = vpop.f32.mrf.mxu0
      %v995 = vadd.f32 0.0, %v994
      %996 = vmatmul.bf16.gmra.mxu0 %v872
      %v997 = vpop.f32.mrf.mxu0
      %v998 = vadd.f32 0.0, %v997
      %v999 = vpop.f32.mrf.mxu0
      %v1000 = vadd.f32 0.0, %v999
      %1001 = vmatmul.bf16.gmra.mxu0 %v873
      %v1002 = vpop.f32.mrf.mxu0
      %v1003 = vadd.f32 0.0, %v1002
      %v1004 = vpop.f32.mrf.mxu0
      %v1005 = vadd.f32 0.0, %v1004
      %1006 = vmatmul.bf16.gmra.mxu0 %v874
      %v1007 = vpop.f32.mrf.mxu0
      %v1008 = vadd.f32 0.0, %v1007
      %v1009 = vpop.f32.mrf.mxu0
      %v1010 = vadd.f32 0.0, %v1009
      %1011 = vmatmul.bf16.gmra.mxu0 %v875
      %v1012 = vpop.f32.mrf.mxu0
      %v1013 = vadd.f32 0.0, %v1012
      %v1014 = vpop.f32.mrf.mxu0
      %v1015 = vadd.f32 0.0, %v1014
      %1016 = vmatmul.bf16.gmra.mxu0 %v876
      %v1017 = vpop.f32.mrf.mxu0
      %v1018 = vadd.f32 0.0, %v1017
      %v1019 = vpop.f32.mrf.mxu0
      %v1020 = vadd.f32 0.0, %v1019
      %1021 = vmatmul.bf16.gmra.mxu0 %v877
      %v1022 = vpop.f32.mrf.mxu0
      %v1023 = vadd.f32 0.0, %v1022
      %v1024 = vpop.f32.mrf.mxu0
      %v1025 = vadd.f32 0.0, %v1024
      %1026 = vmatmul.bf16.gmra.mxu0 %v878
      %v1027 = vpop.f32.mrf.mxu0
      %v1028 = vadd.f32 0.0, %v1027
      %v1029 = vpop.f32.mrf.mxu0
      %v1030 = vadd.f32 0.0, %v1029
      %1031 = vdwg.mxu0
      %v1032 = vunpack.c.l.b16 %v427
      %v1033 = vunpack.c.l.b16 %v436
      %v1034 = vunpack.c.l.b16 %v449
      %v1035 = vunpack.c.l.b16 %v458
      %v1036 = vunpack.c.l.b16 %v471
      %v1037 = vunpack.c.l.b16 %v480
      %v1038 = vunpack.c.l.b16 %v493
      %v1039 = vunpack.c.l.b16 %v502
      %v1040 = vunpack.c.l.b16 %v515
      %v1041 = vunpack.c.l.b16 %v524
      %v1042 = vunpack.c.l.b16 %v537
      %v1043 = vunpack.c.l.b16 %v546
      %v1044 = vunpack.c.l.b16 %v559
      %v1045 = vunpack.c.l.b16 %v568
      %v1046 = vunpack.c.l.b16 %v581
      %v1047 = vunpack.c.l.b16 %v590
      %v1048 = vunpack.c.l.b16 %v603
      %v1049 = vunpack.c.l.b16 %v612
      %v1050 = vunpack.c.l.b16 %v625
      %v1051 = vunpack.c.l.b16 %v634
      %v1052 = vunpack.c.l.b16 %v647
      %v1053 = vunpack.c.l.b16 %v656
      %v1054 = vunpack.c.l.b16 %v669
      %v1055 = vunpack.c.l.b16 %v678
      %v1056 = vunpack.c.l.b16 %v691
      %v1057 = vunpack.c.l.b16 %v700
      %v1058 = vunpack.c.l.b16 %v713
      %v1059 = vunpack.c.l.b16 %v722
      %v1060 = vunpack.c.l.b16 %v735
      %v1061 = vunpack.c.l.b16 %v744
      %v1062 = vunpack.c.l.b16 %v757
      %v1063 = vunpack.c.l.b16 %v766
      %v1064 = vpack.c.b16 %v1033, %v1032
      %v1065 = vpack.c.b16 %v1035, %v1034
      %v1066 = vpack.c.b16 %v1037, %v1036
      %v1067 = vpack.c.b16 %v1039, %v1038
      %v1068 = vpack.c.b16 %v1041, %v1040
      %v1069 = vpack.c.b16 %v1043, %v1042
      %v1070 = vpack.c.b16 %v1045, %v1044
      %v1071 = vpack.c.b16 %v1047, %v1046
      %v1072 = vpack.c.b16 %v1049, %v1048
      %v1073 = vpack.c.b16 %v1051, %v1050
      %v1074 = vpack.c.b16 %v1053, %v1052
      %v1075 = vpack.c.b16 %v1055, %v1054
      %v1076 = vpack.c.b16 %v1057, %v1056
      %v1077 = vpack.c.b16 %v1059, %v1058
      %v1078 = vpack.c.b16 %v1061, %v1060
      %v1079 = vpack.c.b16 %v1063, %v1062
      %v1112 = vunpack.c.l.b16 %v767
      %v1113 = vunpack.c.l.b16 %v768
      %v1114 = vunpack.c.l.b16 %v769
      %v1115 = vunpack.c.l.b16 %v770
      %v1116 = vunpack.c.l.b16 %v771
      %v1117 = vunpack.c.l.b16 %v772
      %v1118 = vunpack.c.l.b16 %v773
      %v1119 = vunpack.c.l.b16 %v774
      %v1120 = vunpack.c.l.b16 %v775
      %v1121 = vunpack.c.l.b16 %v776
      %v1122 = vunpack.c.l.b16 %v777
      %v1123 = vunpack.c.l.b16 %v778
      %v1124 = vunpack.c.l.b16 %v779
      %v1125 = vunpack.c.l.b16 %v780
      %v1126 = vunpack.c.l.b16 %v781
      %v1127 = vunpack.c.l.b16 %v782
      %v1128 = vpack.c.b16 %v1113, %v1112
      %v1129 = vpack.c.b16 %v1115, %v1114
      %v1130 = vpack.c.b16 %v1117, %v1116
      %v1131 = vpack.c.b16 %v1119, %v1118
      %v1132 = vpack.c.b16 %v1121, %v1120
      %v1133 = vpack.c.b16 %v1123, %v1122
      %v1134 = vpack.c.b16 %v1125, %v1124
      %v1135 = vpack.c.b16 %v1127, %v1126
      %1144 = vmatpush.bf16.msra.mxu0 %v1135
      %1145 = vmatpush.bf16.msra.mxu0 %v1134
      %1146 = vmatpush.bf16.msra.mxu0 %v1133
      %1147 = vmatpush.bf16.msra.mxu0 %v1132
      %1148 = vmatpush.bf16.msra.mxu0 %v1131
      %1149 = vmatpush.bf16.msra.mxu0 %v1130
      %1150 = vmatpush.bf16.msra.mxu0 %v1129
      %1151 = vmatpush.bf16.msra.mxu0 %v1128
      %1152 = vmatmul.bf16.gmra.mxu0 %v1064
      %v1153 = vpop.f32.mrf.mxu0
      %v1154 = vadd.f32 %v953, %v1153
      %v1155 = vpop.f32.mrf.mxu0
      %v1156 = vadd.f32 %v955, %v1155
      %1157 = vmatmul.bf16.gmra.mxu0 %v1065
      %v1158 = vpop.f32.mrf.mxu0
      %v1159 = vadd.f32 %v958, %v1158
      %v1160 = vpop.f32.mrf.mxu0
      %v1161 = vadd.f32 %v960, %v1160
      %1162 = vmatmul.bf16.gmra.mxu0 %v1066
      %v1163 = vpop.f32.mrf.mxu0
      %v1164 = vadd.f32 %v963, %v1163
      %v1165 = vpop.f32.mrf.mxu0
      %v1166 = vadd.f32 %v965, %v1165
      %1167 = vmatmul.bf16.gmra.mxu0 %v1067
      %v1168 = vpop.f32.mrf.mxu0
      %v1169 = vadd.f32 %v968, %v1168
      %v1170 = vpop.f32.mrf.mxu0
      %v1171 = vadd.f32 %v970, %v1170
      %1172 = vmatmul.bf16.gmra.mxu0 %v1068
      %v1173 = vpop.f32.mrf.mxu0
      %v1174 = vadd.f32 %v973, %v1173
      %v1175 = vpop.f32.mrf.mxu0
      %v1176 = vadd.f32 %v975, %v1175
      %1177 = vmatmul.bf16.gmra.mxu0 %v1069
      %v1178 = vpop.f32.mrf.mxu0
      %v1179 = vadd.f32 %v978, %v1178
      %v1180 = vpop.f32.mrf.mxu0
      %v1181 = vadd.f32 %v980, %v1180
      %1182 = vmatmul.bf16.gmra.mxu0 %v1070
      %v1183 = vpop.f32.mrf.mxu0
      %v1184 = vadd.f32 %v983, %v1183
      %v1185 = vpop.f32.mrf.mxu0
      %v1186 = vadd.f32 %v985, %v1185
      %1187 = vmatmul.bf16.gmra.mxu0 %v1071
      %v1188 = vpop.f32.mrf.mxu0
      %v1189 = vadd.f32 %v988, %v1188
      %v1190 = vpop.f32.mrf.mxu0
      %v1191 = vadd.f32 %v990, %v1190
      %1192 = vmatmul.bf16.gmra.mxu0 %v1072
      %v1193 = vpop.f32.mrf.mxu0
      %v1194 = vadd.f32 %v993, %v1193
      %v1195 = vpop.f32.mrf.mxu0
      %v1196 = vadd.f32 %v995, %v1195
      %1197 = vmatmul.bf16.gmra.mxu0 %v1073
      %v1198 = vpop.f32.mrf.mxu0
      %v1199 = vadd.f32 %v998, %v1198
      %v1200 = vpop.f32.mrf.mxu0
      %v1201 = vadd.f32 %v1000, %v1200
      %1202 = vmatmul.bf16.gmra.mxu0 %v1074
      %v1203 = vpop.f32.mrf.mxu0
      %v1204 = vadd.f32 %v1003, %v1203
      %v1205 = vpop.f32.mrf.mxu0
      %v1206 = vadd.f32 %v1005, %v1205
      %1207 = vmatmul.bf16.gmra.mxu0 %v1075
      %v1208 = vpop.f32.mrf.mxu0
      %v1209 = vadd.f32 %v1008, %v1208
      %v1210 = vpop.f32.mrf.mxu0
      %v1211 = vadd.f32 %v1010, %v1210
      %1212 = vmatmul.bf16.gmra.mxu0 %v1076
      %v1213 = vpop.f32.mrf.mxu0
      %v1214 = vadd.f32 %v1013, %v1213
      %v1215 = vpop.f32.mrf.mxu0
      %v1216 = vadd.f32 %v1015, %v1215
      %1217 = vmatmul.bf16.gmra.mxu0 %v1077
      %v1218 = vpop.f32.mrf.mxu0
      %v1219 = vadd.f32 %v1018, %v1218
      %v1220 = vpop.f32.mrf.mxu0
      %v1221 = vadd.f32 %v1020, %v1220
      %1222 = vmatmul.bf16.gmra.mxu0 %v1078
      %v1223 = vpop.f32.mrf.mxu0
      %v1224 = vadd.f32 %v1023, %v1223
      %v1225 = vpop.f32.mrf.mxu0
      %v1226 = vadd.f32 %v1025, %v1225
      %1227 = vmatmul.bf16.gmra.mxu0 %v1079
      %v1228 = vpop.f32.mrf.mxu0
      %v1229 = vadd.f32 %v1028, %v1228
      %v1230 = vpop.f32.mrf.mxu0
      %v1231 = vadd.f32 %v1030, %v1230
      %1232 = vdwg.mxu0
      %v1233 = vld [vmem:[#allocation2 + $0x8] sm:$0xf]
      %v1234 = vld [vmem:[#allocation2 + $0xc] sm:$0xf]
      %v1235 = vld [vmem:[#allocation2 + $0x10] sm:$0x1]
      %v1236 = vld [vmem:[#allocation2 + $0x20] sm:$0xf]
      %v1237 = vld [vmem:[#allocation2 + $0x24] sm:$0xf]
      %v1238 = vld [vmem:[#allocation2 + $0x28] sm:$0x1]
      %v1239 = vld [vmem:[#allocation2 + $0x38] sm:$0xf]
      %v1240 = vld [vmem:[#allocation2 + $0x3c] sm:$0xf]
      %v1241 = vld [vmem:[#allocation2 + $0x40] sm:$0x1]
      %v1242 = vld [vmem:[#allocation2 + $0x50] sm:$0xf]
      %v1243 = vld [vmem:[#allocation2 + $0x54] sm:$0xf]
      %v1244 = vld [vmem:[#allocation2 + $0x58] sm:$0x1]
      %v1245 = vld [vmem:[#allocation2 + $0x68] sm:$0xf]
      %v1246 = vld [vmem:[#allocation2 + $0x6c] sm:$0xf]
      %v1247 = vld [vmem:[#allocation2 + $0x70] sm:$0x1]
      %v1248 = vld [vmem:[#allocation2 + $0x80] sm:$0xf]
      %v1249 = vld [vmem:[#allocation2 + $0x84] sm:$0xf]
      %v1250 = vld [vmem:[#allocation2 + $0x88] sm:$0x1]
      %v1251 = vld [vmem:[#allocation2 + $0x98] sm:$0xf]
      %v1252 = vld [vmem:[#allocation2 + $0x9c] sm:$0xf]
      %v1253 = vld [vmem:[#allocation2 + $0xa0] sm:$0x1]
      %v1254 = vld [vmem:[#allocation2 + $0xb0] sm:$0xf]
      %v1255 = vld [vmem:[#allocation2 + $0xb4] sm:$0xf]
      %v1256 = vld [vmem:[#allocation2 + $0xb8] sm:$0x1]
      %v1257 = vld [vmem:[#allocation2 + $0xc8] sm:$0xf]
      %v1258 = vld [vmem:[#allocation2 + $0xcc] sm:$0xf]
      %v1259 = vld [vmem:[#allocation2 + $0xd0] sm:$0x1]
      %v1260 = vld [vmem:[#allocation2 + $0xe0] sm:$0xf]
      %v1261 = vld [vmem:[#allocation2 + $0xe4] sm:$0xf]
      %v1262 = vld [vmem:[#allocation2 + $0xe8] sm:$0x1]
      %v1263 = vld [vmem:[#allocation2 + $0xf8] sm:$0xf]
      %v1264 = vld [vmem:[#allocation2 + $0xfc] sm:$0xf]
      %v1265 = vld [vmem:[#allocation2 + $0x100] sm:$0x1]
      %v1266 = vld [vmem:[#allocation2 + $0x110] sm:$0xf]
      %v1267 = vld [vmem:[#allocation2 + $0x114] sm:$0xf]
      %v1268 = vld [vmem:[#allocation2 + $0x118] sm:$0x1]
      %v1269 = vld [vmem:[#allocation2 + $0x128] sm:$0xf]
      %v1270 = vld [vmem:[#allocation2 + $0x12c] sm:$0xf]
      %v1271 = vld [vmem:[#allocation2 + $0x130] sm:$0x1]
      %v1272 = vld [vmem:[#allocation2 + $0x140] sm:$0xf]
      %v1273 = vld [vmem:[#allocation2 + $0x144] sm:$0xf]
      %v1274 = vld [vmem:[#allocation2 + $0x148] sm:$0x1]
      %v1275 = vld [vmem:[#allocation2 + $0x158] sm:$0xf]
      %v1276 = vld [vmem:[#allocation2 + $0x15c] sm:$0xf]
      %v1277 = vld [vmem:[#allocation2 + $0x160] sm:$0x1]
      %v1278 = vld [vmem:[#allocation2 + $0x170] sm:$0xf]
      %v1279 = vld [vmem:[#allocation2 + $0x174] sm:$0xf]
      %v1280 = vld [vmem:[#allocation2 + $0x178] sm:$0x1]
      %vm1281 = vsmask.f32 3328
      %vm1282 = vsmask.f32 7440
      %vm1283 = vmor %vm1281, %vm1282
      %v1285 = vshrl.u32 %v1233, 16
      %v1287 = vrot.slane %v1285, 4
      %v1288 = vshll.u32 %v1233, 16
      %v1290 = vrot.slane %v1288, 5
      %v1291 = vor.u32 %v1287, %v1290
      %v1292 = vrot.slane %v1291, 4
      %v1294 = vshll.u32 %v1234, 16
      %v1296 = vrot.slane %v1294, 5
      %v1297 = vsel %vm1283, %v1292, %v1296
      %v1298 = vshrl.u32 %v1234, 16
      %v1300 = vrot.slane %v1298, 4
      %v1301 = vor.u32 %v1300, %v1296
      %v1302 = vrot.slane %v1301, 4
      %v1304 = vshll.u32 %v1235, 16
      %v1306 = vrot.slane %v1304, 5
      %v1307 = vsel %vm1283, %v1302, %v1306
      %v1309 = vshrl.u32 %v1236, 16
      %v1311 = vrot.slane %v1309, 4
      %v1312 = vshll.u32 %v1236, 16
      %v1314 = vrot.slane %v1312, 5
      %v1315 = vor.u32 %v1311, %v1314
      %v1316 = vrot.slane %v1315, 4
      %v1318 = vshll.u32 %v1237, 16
      %v1320 = vrot.slane %v1318, 5
      %v1321 = vsel %vm1283, %v1316, %v1320
      %v1322 = vshrl.u32 %v1237, 16
      %v1324 = vrot.slane %v1322, 4
      %v1325 = vor.u32 %v1324, %v1320
      %v1326 = vrot.slane %v1325, 4
      %v1328 = vshll.u32 %v1238, 16
      %v1330 = vrot.slane %v1328, 5
      %v1331 = vsel %vm1283, %v1326, %v1330
      %v1333 = vshrl.u32 %v1239, 16
      %v1335 = vrot.slane %v1333, 4
      %v1336 = vshll.u32 %v1239, 16
      %v1338 = vrot.slane %v1336, 5
      %v1339 = vor.u32 %v1335, %v1338
      %v1340 = vrot.slane %v1339, 4
      %v1342 = vshll.u32 %v1240, 16
      %v1344 = vrot.slane %v1342, 5
      %v1345 = vsel %vm1283, %v1340, %v1344
      %v1346 = vshrl.u32 %v1240, 16
      %v1348 = vrot.slane %v1346, 4
      %v1349 = vor.u32 %v1348, %v1344
      %v1350 = vrot.slane %v1349, 4
      %v1352 = vshll.u32 %v1241, 16
      %v1354 = vrot.slane %v1352, 5
      %v1355 = vsel %vm1283, %v1350, %v1354
      %v1357 = vshrl.u32 %v1242, 16
      %v1359 = vrot.slane %v1357, 4
      %v1360 = vshll.u32 %v1242, 16
      %v1362 = vrot.slane %v1360, 5
      %v1363 = vor.u32 %v1359, %v1362
      %v1364 = vrot.slane %v1363, 4
      %v1366 = vshll.u32 %v1243, 16
      %v1368 = vrot.slane %v1366, 5
      %v1369 = vsel %vm1283, %v1364, %v1368
      %v1370 = vshrl.u32 %v1243, 16
      %v1372 = vrot.slane %v1370, 4
      %v1373 = vor.u32 %v1372, %v1368
      %v1374 = vrot.slane %v1373, 4
      %v1376 = vshll.u32 %v1244, 16
      %v1378 = vrot.slane %v1376, 5
      %v1379 = vsel %vm1283, %v1374, %v1378
      %v1381 = vshrl.u32 %v1245, 16
      %v1383 = vrot.slane %v1381, 4
      %v1384 = vshll.u32 %v1245, 16
      %v1386 = vrot.slane %v1384, 5
      %v1387 = vor.u32 %v1383, %v1386
      %v1388 = vrot.slane %v1387, 4
      %v1390 = vshll.u32 %v1246, 16
      %v1392 = vrot.slane %v1390, 5
      %v1393 = vsel %vm1283, %v1388, %v1392
      %v1394 = vshrl.u32 %v1246, 16
      %v1396 = vrot.slane %v1394, 4
      %v1397 = vor.u32 %v1396, %v1392
      %v1398 = vrot.slane %v1397, 4
      %v1400 = vshll.u32 %v1247, 16
      %v1402 = vrot.slane %v1400, 5
      %v1403 = vsel %vm1283, %v1398, %v1402
      %v1405 = vshrl.u32 %v1248, 16
      %v1407 = vrot.slane %v1405, 4
      %v1408 = vshll.u32 %v1248, 16
      %v1410 = vrot.slane %v1408, 5
      %v1411 = vor.u32 %v1407, %v1410
      %v1412 = vrot.slane %v1411, 4
      %v1414 = vshll.u32 %v1249, 16
      %v1416 = vrot.slane %v1414, 5
      %v1417 = vsel %vm1283, %v1412, %v1416
      %v1418 = vshrl.u32 %v1249, 16
      %v1420 = vrot.slane %v1418, 4
      %v1421 = vor.u32 %v1420, %v1416
      %v1422 = vrot.slane %v1421, 4
      %v1424 = vshll.u32 %v1250, 16
      %v1426 = vrot.slane %v1424, 5
      %v1427 = vsel %vm1283, %v1422, %v1426
      %v1429 = vshrl.u32 %v1251, 16
      %v1431 = vrot.slane %v1429, 4
      %v1432 = vshll.u32 %v1251, 16
      %v1434 = vrot.slane %v1432, 5
      %v1435 = vor.u32 %v1431, %v1434
      %v1436 = vrot.slane %v1435, 4
      %v1438 = vshll.u32 %v1252, 16
      %v1440 = vrot.slane %v1438, 5
      %v1441 = vsel %vm1283, %v1436, %v1440
      %v1442 = vshrl.u32 %v1252, 16
      %v1444 = vrot.slane %v1442, 4
      %v1445 = vor.u32 %v1444, %v1440
      %v1446 = vrot.slane %v1445, 4
      %v1448 = vshll.u32 %v1253, 16
      %v1450 = vrot.slane %v1448, 5
      %v1451 = vsel %vm1283, %v1446, %v1450
      %v1453 = vshrl.u32 %v1254, 16
      %v1455 = vrot.slane %v1453, 4
      %v1456 = vshll.u32 %v1254, 16
      %v1458 = vrot.slane %v1456, 5
      %v1459 = vor.u32 %v1455, %v1458
      %v1460 = vrot.slane %v1459, 4
      %v1462 = vshll.u32 %v1255, 16
      %v1464 = vrot.slane %v1462, 5
      %v1465 = vsel %vm1283, %v1460, %v1464
      %v1466 = vshrl.u32 %v1255, 16
      %v1468 = vrot.slane %v1466, 4
      %v1469 = vor.u32 %v1468, %v1464
      %v1470 = vrot.slane %v1469, 4
      %v1472 = vshll.u32 %v1256, 16
      %v1474 = vrot.slane %v1472, 5
      %v1475 = vsel %vm1283, %v1470, %v1474
      %v1477 = vshrl.u32 %v1257, 16
      %v1479 = vrot.slane %v1477, 4
      %v1480 = vshll.u32 %v1257, 16
      %v1482 = vrot.slane %v1480, 5
      %v1483 = vor.u32 %v1479, %v1482
      %v1484 = vrot.slane %v1483, 4
      %v1486 = vshll.u32 %v1258, 16
      %v1488 = vrot.slane %v1486, 5
      %v1489 = vsel %vm1283, %v1484, %v1488
      %v1490 = vshrl.u32 %v1258, 16
      %v1492 = vrot.slane %v1490, 4
      %v1493 = vor.u32 %v1492, %v1488
      %v1494 = vrot.slane %v1493, 4
      %v1496 = vshll.u32 %v1259, 16
      %v1498 = vrot.slane %v1496, 5
      %v1499 = vsel %vm1283, %v1494, %v1498
      %v1501 = vshrl.u32 %v1260, 16
      %v1503 = vrot.slane %v1501, 4
      %v1504 = vshll.u32 %v1260, 16
      %v1506 = vrot.slane %v1504, 5
      %v1507 = vor.u32 %v1503, %v1506
      %v1508 = vrot.slane %v1507, 4
      %v1510 = vshll.u32 %v1261, 16
      %v1512 = vrot.slane %v1510, 5
      %v1513 = vsel %vm1283, %v1508, %v1512
      %v1514 = vshrl.u32 %v1261, 16
      %v1516 = vrot.slane %v1514, 4
      %v1517 = vor.u32 %v1516, %v1512
      %v1518 = vrot.slane %v1517, 4
      %v1520 = vshll.u32 %v1262, 16
      %v1522 = vrot.slane %v1520, 5
      %v1523 = vsel %vm1283, %v1518, %v1522
      %v1525 = vshrl.u32 %v1263, 16
      %v1527 = vrot.slane %v1525, 4
      %v1528 = vshll.u32 %v1263, 16
      %v1530 = vrot.slane %v1528, 5
      %v1531 = vor.u32 %v1527, %v1530
      %v1532 = vrot.slane %v1531, 4
      %v1534 = vshll.u32 %v1264, 16
      %v1536 = vrot.slane %v1534, 5
      %v1537 = vsel %vm1283, %v1532, %v1536
      %v1538 = vshrl.u32 %v1264, 16
      %v1540 = vrot.slane %v1538, 4
      %v1541 = vor.u32 %v1540, %v1536
      %v1542 = vrot.slane %v1541, 4
      %v1544 = vshll.u32 %v1265, 16
      %v1546 = vrot.slane %v1544, 5
      %v1547 = vsel %vm1283, %v1542, %v1546
      %v1549 = vshrl.u32 %v1266, 16
      %v1551 = vrot.slane %v1549, 4
      %v1552 = vshll.u32 %v1266, 16
      %v1554 = vrot.slane %v1552, 5
      %v1555 = vor.u32 %v1551, %v1554
      %v1556 = vrot.slane %v1555, 4
      %v1558 = vshll.u32 %v1267, 16
      %v1560 = vrot.slane %v1558, 5
      %v1561 = vsel %vm1283, %v1556, %v1560
      %v1562 = vshrl.u32 %v1267, 16
      %v1564 = vrot.slane %v1562, 4
      %v1565 = vor.u32 %v1564, %v1560
      %v1566 = vrot.slane %v1565, 4
      %v1568 = vshll.u32 %v1268, 16
      %v1570 = vrot.slane %v1568, 5
      %v1571 = vsel %vm1283, %v1566, %v1570
      %v1573 = vshrl.u32 %v1269, 16
      %v1575 = vrot.slane %v1573, 4
      %v1576 = vshll.u32 %v1269, 16
      %v1578 = vrot.slane %v1576, 5
      %v1579 = vor.u32 %v1575, %v1578
      %v1580 = vrot.slane %v1579, 4
      %v1582 = vshll.u32 %v1270, 16
      %v1584 = vrot.slane %v1582, 5
      %v1585 = vsel %vm1283, %v1580, %v1584
      %v1586 = vshrl.u32 %v1270, 16
      %v1588 = vrot.slane %v1586, 4
      %v1589 = vor.u32 %v1588, %v1584
      %v1590 = vrot.slane %v1589, 4
      %v1592 = vshll.u32 %v1271, 16
      %v1594 = vrot.slane %v1592, 5
      %v1595 = vsel %vm1283, %v1590, %v1594
      %v1597 = vshrl.u32 %v1272, 16
      %v1599 = vrot.slane %v1597, 4
      %v1600 = vshll.u32 %v1272, 16
      %v1602 = vrot.slane %v1600, 5
      %v1603 = vor.u32 %v1599, %v1602
      %v1604 = vrot.slane %v1603, 4
      %v1606 = vshll.u32 %v1273, 16
      %v1608 = vrot.slane %v1606, 5
      %v1609 = vsel %vm1283, %v1604, %v1608
      %v1610 = vshrl.u32 %v1273, 16
      %v1612 = vrot.slane %v1610, 4
      %v1613 = vor.u32 %v1612, %v1608
      %v1614 = vrot.slane %v1613, 4
      %v1616 = vshll.u32 %v1274, 16
      %v1618 = vrot.slane %v1616, 5
      %v1619 = vsel %vm1283, %v1614, %v1618
      %v1621 = vshrl.u32 %v1275, 16
      %v1623 = vrot.slane %v1621, 4
      %v1624 = vshll.u32 %v1275, 16
      %v1626 = vrot.slane %v1624, 5
      %v1627 = vor.u32 %v1623, %v1626
      %v1628 = vrot.slane %v1627, 4
      %v1630 = vshll.u32 %v1276, 16
      %v1632 = vrot.slane %v1630, 5
      %v1633 = vsel %vm1283, %v1628, %v1632
      %v1634 = vshrl.u32 %v1276, 16
      %v1636 = vrot.slane %v1634, 4
      %v1637 = vor.u32 %v1636, %v1632
      %v1638 = vrot.slane %v1637, 4
      %v1640 = vshll.u32 %v1277, 16
      %v1642 = vrot.slane %v1640, 5
      %v1643 = vsel %vm1283, %v1638, %v1642
      %v1645 = vshrl.u32 %v1278, 16
      %v1647 = vrot.slane %v1645, 4
      %v1648 = vshll.u32 %v1278, 16
      %v1650 = vrot.slane %v1648, 5
      %v1651 = vor.u32 %v1647, %v1650
      %v1652 = vrot.slane %v1651, 4
      %v1654 = vshll.u32 %v1279, 16
      %v1656 = vrot.slane %v1654, 5
      %v1657 = vsel %vm1283, %v1652, %v1656
      %v1658 = vshrl.u32 %v1279, 16
      %v1660 = vrot.slane %v1658, 4
      %v1661 = vor.u32 %v1660, %v1656
      %v1662 = vrot.slane %v1661, 4
      %v1664 = vshll.u32 %v1280, 16
      %v1666 = vrot.slane %v1664, 5
      %v1667 = vsel %vm1283, %v1662, %v1666
      %v1668 = vld [vmem:[%s1 + $0x80] sm:$0xf]
      %v1669 = vld [vmem:[%s1 + $0x84] sm:$0xf]
      %v1670 = vld [vmem:[%s1 + $0x88] sm:$0xf]
      %v1671 = vld [vmem:[%s1 + $0x8c] sm:$0xf]
      %v1672 = vld [vmem:[%s1 + $0x90] sm:$0xf]
      %v1673 = vld [vmem:[%s1 + $0x94] sm:$0xf]
      %v1674 = vld [vmem:[%s1 + $0x98] sm:$0xf]
      %v1675 = vld [vmem:[%s1 + $0x9c] sm:$0xf]
      %v1676 = vld [vmem:[%s1 + $0xa0] sm:$0xf]
      %v1677 = vld [vmem:[%s1 + $0xa4] sm:$0xf]
      %v1678 = vld [vmem:[%s1 + $0xa8] sm:$0xf]
      %v1679 = vld [vmem:[%s1 + $0xac] sm:$0xf]
      %v1680 = vld [vmem:[%s1 + $0xb0] sm:$0xf]
      %v1681 = vld [vmem:[%s1 + $0xb4] sm:$0xf]
      %v1682 = vld [vmem:[%s1 + $0xb8] sm:$0xf]
      %v1683 = vld [vmem:[%s1 + $0xbc] sm:$0xf]
      %v1684 = vunpack.c.l.b16 %v1297
      %v1685 = vunpack.c.l.b16 %v1307
      %v1686 = vunpack.c.l.b16 %v1321
      %v1687 = vunpack.c.l.b16 %v1331
      %v1688 = vunpack.c.l.b16 %v1345
      %v1689 = vunpack.c.l.b16 %v1355
      %v1690 = vunpack.c.l.b16 %v1369
      %v1691 = vunpack.c.l.b16 %v1379
      %v1692 = vunpack.c.l.b16 %v1393
      %v1693 = vunpack.c.l.b16 %v1403
      %v1694 = vunpack.c.l.b16 %v1417
      %v1695 = vunpack.c.l.b16 %v1427
      %v1696 = vunpack.c.l.b16 %v1441
      %v1697 = vunpack.c.l.b16 %v1451
      %v1698 = vunpack.c.l.b16 %v1465
      %v1699 = vunpack.c.l.b16 %v1475
      %v1700 = vunpack.c.l.b16 %v1489
      %v1701 = vunpack.c.l.b16 %v1499
      %v1702 = vunpack.c.l.b16 %v1513
      %v1703 = vunpack.c.l.b16 %v1523
      %v1704 = vunpack.c.l.b16 %v1537
      %v1705 = vunpack.c.l.b16 %v1547
      %v1706 = vunpack.c.l.b16 %v1561
      %v1707 = vunpack.c.l.b16 %v1571
      %v1708 = vunpack.c.l.b16 %v1585
      %v1709 = vunpack.c.l.b16 %v1595
      %v1710 = vunpack.c.l.b16 %v1609
      %v1711 = vunpack.c.l.b16 %v1619
      %v1712 = vunpack.c.l.b16 %v1633
      %v1713 = vunpack.c.l.b16 %v1643
      %v1714 = vunpack.c.l.b16 %v1657
      %v1715 = vunpack.c.l.b16 %v1667
      %v1716 = vpack.c.b16 %v1685, %v1684
      %v1717 = vpack.c.b16 %v1687, %v1686
      %v1718 = vpack.c.b16 %v1689, %v1688
      %v1719 = vpack.c.b16 %v1691, %v1690
      %v1720 = vpack.c.b16 %v1693, %v1692
      %v1721 = vpack.c.b16 %v1695, %v1694
      %v1722 = vpack.c.b16 %v1697, %v1696
      %v1723 = vpack.c.b16 %v1699, %v1698
      %v1724 = vpack.c.b16 %v1701, %v1700
      %v1725 = vpack.c.b16 %v1703, %v1702
      %v1726 = vpack.c.b16 %v1705, %v1704
      %v1727 = vpack.c.b16 %v1707, %v1706
      %v1728 = vpack.c.b16 %v1709, %v1708
      %v1729 = vpack.c.b16 %v1711, %v1710
      %v1730 = vpack.c.b16 %v1713, %v1712
      %v1731 = vpack.c.b16 %v1715, %v1714
      %v1764 = vunpack.c.l.b16 %v1668
      %v1765 = vunpack.c.l.b16 %v1669
      %v1766 = vunpack.c.l.b16 %v1670
      %v1767 = vunpack.c.l.b16 %v1671
      %v1768 = vunpack.c.l.b16 %v1672
      %v1769 = vunpack.c.l.b16 %v1673
      %v1770 = vunpack.c.l.b16 %v1674
      %v1771 = vunpack.c.l.b16 %v1675
      %v1772 = vunpack.c.l.b16 %v1676
      %v1773 = vunpack.c.l.b16 %v1677
      %v1774 = vunpack.c.l.b16 %v1678
      %v1775 = vunpack.c.l.b16 %v1679
      %v1776 = vunpack.c.l.b16 %v1680
      %v1777 = vunpack.c.l.b16 %v1681
      %v1778 = vunpack.c.l.b16 %v1682
      %v1779 = vunpack.c.l.b16 %v1683
      %v1780 = vpack.c.b16 %v1765, %v1764
      %v1781 = vpack.c.b16 %v1767, %v1766
      %v1782 = vpack.c.b16 %v1769, %v1768
      %v1783 = vpack.c.b16 %v1771, %v1770
      %v1784 = vpack.c.b16 %v1773, %v1772
      %v1785 = vpack.c.b16 %v1775, %v1774
      %v1786 = vpack.c.b16 %v1777, %v1776
      %v1787 = vpack.c.b16 %v1779, %v1778
      %1796 = vmatpush.bf16.msra.mxu0 %v1787
      %1797 = vmatpush.bf16.msra.mxu0 %v1786
      %1798 = vmatpush.bf16.msra.mxu0 %v1785
      %1799 = vmatpush.bf16.msra.mxu0 %v1784
      %1800 = vmatpush.bf16.msra.mxu0 %v1783
      %1801 = vmatpush.bf16.msra.mxu0 %v1782
      %1802 = vmatpush.bf16.msra.mxu0 %v1781
      %1803 = vmatpush.bf16.msra.mxu0 %v1780
      %1804 = vmatmul.bf16.gmra.mxu0 %v1716
      %v1805 = vpop.f32.mrf.mxu0
      %v1806 = vadd.f32 0.0, %v1805
      %v1807 = vpop.f32.mrf.mxu0
      %v1808 = vadd.f32 0.0, %v1807
      %1809 = vmatmul.bf16.gmra.mxu0 %v1717
      %v1810 = vpop.f32.mrf.mxu0
      %v1811 = vadd.f32 0.0, %v1810
      %v1812 = vpop.f32.mrf.mxu0
      %v1813 = vadd.f32 0.0, %v1812
      %1814 = vmatmul.bf16.gmra.mxu0 %v1718
      %v1815 = vpop.f32.mrf.mxu0
      %v1816 = vadd.f32 0.0, %v1815
      %v1817 = vpop.f32.mrf.mxu0
      %v1818 = vadd.f32 0.0, %v1817
      %1819 = vmatmul.bf16.gmra.mxu0 %v1719
      %v1820 = vpop.f32.mrf.mxu0
      %v1821 = vadd.f32 0.0, %v1820
      %v1822 = vpop.f32.mrf.mxu0
      %v1823 = vadd.f32 0.0, %v1822
      %1824 = vmatmul.bf16.gmra.mxu0 %v1720
      %v1825 = vpop.f32.mrf.mxu0
      %v1826 = vadd.f32 0.0, %v1825
      %v1827 = vpop.f32.mrf.mxu0
      %v1828 = vadd.f32 0.0, %v1827
      %1829 = vmatmul.bf16.gmra.mxu0 %v1721
      %v1830 = vpop.f32.mrf.mxu0
      %v1831 = vadd.f32 0.0, %v1830
      %v1832 = vpop.f32.mrf.mxu0
      %v1833 = vadd.f32 0.0, %v1832
      %1834 = vmatmul.bf16.gmra.mxu0 %v1722
      %v1835 = vpop.f32.mrf.mxu0
      %v1836 = vadd.f32 0.0, %v1835
      %v1837 = vpop.f32.mrf.mxu0
      %v1838 = vadd.f32 0.0, %v1837
      %1839 = vmatmul.bf16.gmra.mxu0 %v1723
      %v1840 = vpop.f32.mrf.mxu0
      %v1841 = vadd.f32 0.0, %v1840
      %v1842 = vpop.f32.mrf.mxu0
      %v1843 = vadd.f32 0.0, %v1842
      %1844 = vmatmul.bf16.gmra.mxu0 %v1724
      %v1845 = vpop.f32.mrf.mxu0
      %v1846 = vadd.f32 0.0, %v1845
      %v1847 = vpop.f32.mrf.mxu0
      %v1848 = vadd.f32 0.0, %v1847
      %1849 = vmatmul.bf16.gmra.mxu0 %v1725
      %v1850 = vpop.f32.mrf.mxu0
      %v1851 = vadd.f32 0.0, %v1850
      %v1852 = vpop.f32.mrf.mxu0
      %v1853 = vadd.f32 0.0, %v1852
      %1854 = vmatmul.bf16.gmra.mxu0 %v1726
      %v1855 = vpop.f32.mrf.mxu0
      %v1856 = vadd.f32 0.0, %v1855
      %v1857 = vpop.f32.mrf.mxu0
      %v1858 = vadd.f32 0.0, %v1857
      %1859 = vmatmul.bf16.gmra.mxu0 %v1727
      %v1860 = vpop.f32.mrf.mxu0
      %v1861 = vadd.f32 0.0, %v1860
      %v1862 = vpop.f32.mrf.mxu0
      %v1863 = vadd.f32 0.0, %v1862
      %1864 = vmatmul.bf16.gmra.mxu0 %v1728
      %v1865 = vpop.f32.mrf.mxu0
      %v1866 = vadd.f32 0.0, %v1865
      %v1867 = vpop.f32.mrf.mxu0
      %v1868 = vadd.f32 0.0, %v1867
      %1869 = vmatmul.bf16.gmra.mxu0 %v1729
      %v1870 = vpop.f32.mrf.mxu0
      %v1871 = vadd.f32 0.0, %v1870
      %v1872 = vpop.f32.mrf.mxu0
      %v1873 = vadd.f32 0.0, %v1872
      %1874 = vmatmul.bf16.gmra.mxu0 %v1730
      %v1875 = vpop.f32.mrf.mxu0
      %v1876 = vadd.f32 0.0, %v1875
      %v1877 = vpop.f32.mrf.mxu0
      %v1878 = vadd.f32 0.0, %v1877
      %1879 = vmatmul.bf16.gmra.mxu0 %v1731
      %v1880 = vpop.f32.mrf.mxu0
      %v1881 = vadd.f32 0.0, %v1880
      %v1882 = vpop.f32.mrf.mxu0
      %v1883 = vadd.f32 0.0, %v1882
      %1884 = vdwg.mxu0
      %v1885 = vadd.f32 %v1154, %v1806
      %v1886 = vadd.f32 %v1156, %v1808
      %v1887 = vadd.f32 %v1159, %v1811
      %v1888 = vadd.f32 %v1161, %v1813
      %v1889 = vadd.f32 %v1164, %v1816
      %v1890 = vadd.f32 %v1166, %v1818
      %v1891 = vadd.f32 %v1169, %v1821
      %v1892 = vadd.f32 %v1171, %v1823
      %v1893 = vadd.f32 %v1174, %v1826
      %v1894 = vadd.f32 %v1176, %v1828
      %v1895 = vadd.f32 %v1179, %v1831
      %v1896 = vadd.f32 %v1181, %v1833
      %v1897 = vadd.f32 %v1184, %v1836
      %v1898 = vadd.f32 %v1186, %v1838
      %v1899 = vadd.f32 %v1189, %v1841
      %v1900 = vadd.f32 %v1191, %v1843
      %v1901 = vadd.f32 %v1194, %v1846
      %v1902 = vadd.f32 %v1196, %v1848
      %v1903 = vadd.f32 %v1199, %v1851
      %v1904 = vadd.f32 %v1201, %v1853
      %v1905 = vadd.f32 %v1204, %v1856
      %v1906 = vadd.f32 %v1206, %v1858
      %v1907 = vadd.f32 %v1209, %v1861
      %v1908 = vadd.f32 %v1211, %v1863
      %v1909 = vadd.f32 %v1214, %v1866
      %v1910 = vadd.f32 %v1216, %v1868
      %v1911 = vadd.f32 %v1219, %v1871
      %v1912 = vadd.f32 %v1221, %v1873
      %v1913 = vadd.f32 %v1224, %v1876
      %v1914 = vadd.f32 %v1226, %v1878
      %v1915 = vadd.f32 %v1229, %v1881
      %v1916 = vadd.f32 %v1231, %v1883
      %v1917 = vld [vmem:[%s331 + $0x4] sm:$0x8]
      %v1918 = vld [vmem:[%s331 + $0x8] sm:$0xf]
      %v1919 = vld [vmem:[%s331 + $0xc] sm:$0xf]
      %v1920 = vld [vmem:[%s331 + $0x1c] sm:$0x8]
      %v1921 = vld [vmem:[%s331 + $0x20] sm:$0xf]
      %v1922 = vld [vmem:[%s331 + $0x24] sm:$0xf]
      %v1923 = vld [vmem:[%s331 + $0x34] sm:$0x8]
      %v1924 = vld [vmem:[%s331 + $0x38] sm:$0xf]
      %v1925 = vld [vmem:[%s331 + $0x3c] sm:$0xf]
      %v1926 = vld [vmem:[%s331 + $0x4c] sm:$0x8]
      %v1927 = vld [vmem:[%s331 + $0x50] sm:$0xf]
      %v1928 = vld [vmem:[%s331 + $0x54] sm:$0xf]
      %v1929 = vld [vmem:[%s331 + $0x64] sm:$0x8]
      %v1930 = vld [vmem:[%s331 + $0x68] sm:$0xf]
      %v1931 = vld [vmem:[%s331 + $0x6c] sm:$0xf]
      %v1932 = vld [vmem:[%s331 + $0x7c] sm:$0x8]
      %v1933 = vld [vmem:[%s331 + $0x80] sm:$0xf]
      %v1934 = vld [vmem:[%s331 + $0x84] sm:$0xf]
      %v1935 = vld [vmem:[%s331 + $0x94] sm:$0x8]
      %v1936 = vld [vmem:[%s331 + $0x98] sm:$0xf]
      %v1937 = vld [vmem:[%s331 + $0x9c] sm:$0xf]
      %v1938 = vld [vmem:[%s331 + $0xac] sm:$0x8]
      %v1939 = vld [vmem:[%s331 + $0xb0] sm:$0xf]
      %v1940 = vld [vmem:[%s331 + $0xb4] sm:$0xf]
      %v1941 = vld [vmem:[%s331 + $0xc4] sm:$0x8]
      %v1942 = vld [vmem:[%s331 + $0xc8] sm:$0xf]
      %v1943 = vld [vmem:[%s331 + $0xcc] sm:$0xf]
      %v1944 = vld [vmem:[%s331 + $0xdc] sm:$0x8]
      %v1945 = vld [vmem:[%s331 + $0xe0] sm:$0xf]
      %v1946 = vld [vmem:[%s331 + $0xe4] sm:$0xf]
      %v1947 = vld [vmem:[%s331 + $0xf4] sm:$0x8]
      %v1948 = vld [vmem:[%s331 + $0xf8] sm:$0xf]
      %v1949 = vld [vmem:[%s331 + $0xfc] sm:$0xf]
      %v1950 = vld [vmem:[%s331 + $0x10c] sm:$0x8]
      %v1951 = vld [vmem:[%s331 + $0x110] sm:$0xf]
      %v1952 = vld [vmem:[%s331 + $0x114] sm:$0xf]
      %v1953 = vld [vmem:[%s331 + $0x124] sm:$0x8]
      %v1954 = vld [vmem:[%s331 + $0x128] sm:$0xf]
      %v1955 = vld [vmem:[%s331 + $0x12c] sm:$0xf]
      %v1956 = vld [vmem:[%s331 + $0x13c] sm:$0x8]
      %v1957 = vld [vmem:[%s331 + $0x140] sm:$0xf]
      %v1958 = vld [vmem:[%s331 + $0x144] sm:$0xf]
      %v1959 = vld [vmem:[%s331 + $0x154] sm:$0x8]
      %v1960 = vld [vmem:[%s331 + $0x158] sm:$0xf]
      %v1961 = vld [vmem:[%s331 + $0x15c] sm:$0xf]
      %v1962 = vld [vmem:[%s331 + $0x16c] sm:$0x8]
      %v1963 = vld [vmem:[%s331 + $0x170] sm:$0xf]
      %v1964 = vld [vmem:[%s331 + $0x174] sm:$0xf]
      %v1966 = vshrl.u32 %v1917, 16
      %v1968 = vrot.slane %v1966, 7
      %v1969 = vrot.slane %v1968, 4
      %v1971 = vshrl.u32 %v1918, 16
      %v1973 = vrot.slane %v1971, 7
      %v1974 = vshll.u32 %v1918, 16
      %v1976 = vor.u32 %v1973, %v1974
      %v1977 = vsel %vm414, %v1969, %v1976
      %v1978 = vrot.slane %v1973, 4
      %v1980 = vshrl.u32 %v1919, 16
      %v1982 = vrot.slane %v1980, 7
      %v1983 = vshll.u32 %v1919, 16
      %v1985 = vor.u32 %v1982, %v1983
      %v1986 = vsel %vm414, %v1978, %v1985
      %v1988 = vshrl.u32 %v1920, 16
      %v1990 = vrot.slane %v1988, 7
      %v1991 = vrot.slane %v1990, 4
      %v1993 = vshrl.u32 %v1921, 16
      %v1995 = vrot.slane %v1993, 7
      %v1996 = vshll.u32 %v1921, 16
      %v1998 = vor.u32 %v1995, %v1996
      %v1999 = vsel %vm414, %v1991, %v1998
      %v2000 = vrot.slane %v1995, 4
      %v2002 = vshrl.u32 %v1922, 16
      %v2004 = vrot.slane %v2002, 7
      %v2005 = vshll.u32 %v1922, 16
      %v2007 = vor.u32 %v2004, %v2005
      %v2008 = vsel %vm414, %v2000, %v2007
      %v2010 = vshrl.u32 %v1923, 16
      %v2012 = vrot.slane %v2010, 7
      %v2013 = vrot.slane %v2012, 4
      %v2015 = vshrl.u32 %v1924, 16
      %v2017 = vrot.slane %v2015, 7
      %v2018 = vshll.u32 %v1924, 16
      %v2020 = vor.u32 %v2017, %v2018
      %v2021 = vsel %vm414, %v2013, %v2020
      %v2022 = vrot.slane %v2017, 4
      %v2024 = vshrl.u32 %v1925, 16
      %v2026 = vrot.slane %v2024, 7
      %v2027 = vshll.u32 %v1925, 16
      %v2029 = vor.u32 %v2026, %v2027
      %v2030 = vsel %vm414, %v2022, %v2029
      %v2032 = vshrl.u32 %v1926, 16
      %v2034 = vrot.slane %v2032, 7
      %v2035 = vrot.slane %v2034, 4
      %v2037 = vshrl.u32 %v1927, 16
      %v2039 = vrot.slane %v2037, 7
      %v2040 = vshll.u32 %v1927, 16
      %v2042 = vor.u32 %v2039, %v2040
      %v2043 = vsel %vm414, %v2035, %v2042
      %v2044 = vrot.slane %v2039, 4
      %v2046 = vshrl.u32 %v1928, 16
      %v2048 = vrot.slane %v2046, 7
      %v2049 = vshll.u32 %v1928, 16
      %v2051 = vor.u32 %v2048, %v2049
      %v2052 = vsel %vm414, %v2044, %v2051
      %v2054 = vshrl.u32 %v1929, 16
      %v2056 = vrot.slane %v2054, 7
      %v2057 = vrot.slane %v2056, 4
      %v2059 = vshrl.u32 %v1930, 16
      %v2061 = vrot.slane %v2059, 7
      %v2062 = vshll.u32 %v1930, 16
      %v2064 = vor.u32 %v2061, %v2062
      %v2065 = vsel %vm414, %v2057, %v2064
      %v2066 = vrot.slane %v2061, 4
      %v2068 = vshrl.u32 %v1931, 16
      %v2070 = vrot.slane %v2068, 7
      %v2071 = vshll.u32 %v1931, 16
      %v2073 = vor.u32 %v2070, %v2071
      %v2074 = vsel %vm414, %v2066, %v2073
      %v2076 = vshrl.u32 %v1932, 16
      %v2078 = vrot.slane %v2076, 7
      %v2079 = vrot.slane %v2078, 4
      %v2081 = vshrl.u32 %v1933, 16
      %v2083 = vrot.slane %v2081, 7
      %v2084 = vshll.u32 %v1933, 16
      %v2086 = vor.u32 %v2083, %v2084
      %v2087 = vsel %vm414, %v2079, %v2086
      %v2088 = vrot.slane %v2083, 4
      %v2090 = vshrl.u32 %v1934, 16
      %v2092 = vrot.slane %v2090, 7
      %v2093 = vshll.u32 %v1934, 16
      %v2095 = vor.u32 %v2092, %v2093
      %v2096 = vsel %vm414, %v2088, %v2095
      %v2098 = vshrl.u32 %v1935, 16
      %v2100 = vrot.slane %v2098, 7
      %v2101 = vrot.slane %v2100, 4
      %v2103 = vshrl.u32 %v1936, 16
      %v2105 = vrot.slane %v2103, 7
      %v2106 = vshll.u32 %v1936, 16
      %v2108 = vor.u32 %v2105, %v2106
      %v2109 = vsel %vm414, %v2101, %v2108
      %v2110 = vrot.slane %v2105, 4
      %v2112 = vshrl.u32 %v1937, 16
      %v2114 = vrot.slane %v2112, 7
      %v2115 = vshll.u32 %v1937, 16
      %v2117 = vor.u32 %v2114, %v2115
      %v2118 = vsel %vm414, %v2110, %v2117
      %v2120 = vshrl.u32 %v1938, 16
      %v2122 = vrot.slane %v2120, 7
      %v2123 = vrot.slane %v2122, 4
      %v2125 = vshrl.u32 %v1939, 16
      %v2127 = vrot.slane %v2125, 7
      %v2128 = vshll.u32 %v1939, 16
      %v2130 = vor.u32 %v2127, %v2128
      %v2131 = vsel %vm414, %v2123, %v2130
      %v2132 = vrot.slane %v2127, 4
      %v2134 = vshrl.u32 %v1940, 16
      %v2136 = vrot.slane %v2134, 7
      %v2137 = vshll.u32 %v1940, 16
      %v2139 = vor.u32 %v2136, %v2137
      %v2140 = vsel %vm414, %v2132, %v2139
      %v2142 = vshrl.u32 %v1941, 16
      %v2144 = vrot.slane %v2142, 7
      %v2145 = vrot.slane %v2144, 4
      %v2147 = vshrl.u32 %v1942, 16
      %v2149 = vrot.slane %v2147, 7
      %v2150 = vshll.u32 %v1942, 16
      %v2152 = vor.u32 %v2149, %v2150
      %v2153 = vsel %vm414, %v2145, %v2152
      %v2154 = vrot.slane %v2149, 4
      %v2156 = vshrl.u32 %v1943, 16
      %v2158 = vrot.slane %v2156, 7
      %v2159 = vshll.u32 %v1943, 16
      %v2161 = vor.u32 %v2158, %v2159
      %v2162 = vsel %vm414, %v2154, %v2161
      %v2164 = vshrl.u32 %v1944, 16
      %v2166 = vrot.slane %v2164, 7
      %v2167 = vrot.slane %v2166, 4
      %v2169 = vshrl.u32 %v1945, 16
      %v2171 = vrot.slane %v2169, 7
      %v2172 = vshll.u32 %v1945, 16
      %v2174 = vor.u32 %v2171, %v2172
      %v2175 = vsel %vm414, %v2167, %v2174
      %v2176 = vrot.slane %v2171, 4
      %v2178 = vshrl.u32 %v1946, 16
      %v2180 = vrot.slane %v2178, 7
      %v2181 = vshll.u32 %v1946, 16
      %v2183 = vor.u32 %v2180, %v2181
      %v2184 = vsel %vm414, %v2176, %v2183
      %v2186 = vshrl.u32 %v1947, 16
      %v2188 = vrot.slane %v2186, 7
      %v2189 = vrot.slane %v2188, 4
      %v2191 = vshrl.u32 %v1948, 16
      %v2193 = vrot.slane %v2191, 7
      %v2194 = vshll.u32 %v1948, 16
      %v2196 = vor.u32 %v2193, %v2194
      %v2197 = vsel %vm414, %v2189, %v2196
      %v2198 = vrot.slane %v2193, 4
      %v2200 = vshrl.u32 %v1949, 16
      %v2202 = vrot.slane %v2200, 7
      %v2203 = vshll.u32 %v1949, 16
      %v2205 = vor.u32 %v2202, %v2203
      %v2206 = vsel %vm414, %v2198, %v2205
      %v2208 = vshrl.u32 %v1950, 16
      %v2210 = vrot.slane %v2208, 7
      %v2211 = vrot.slane %v2210, 4
      %v2213 = vshrl.u32 %v1951, 16
      %v2215 = vrot.slane %v2213, 7
      %v2216 = vshll.u32 %v1951, 16
      %v2218 = vor.u32 %v2215, %v2216
      %v2219 = vsel %vm414, %v2211, %v2218
      %v2220 = vrot.slane %v2215, 4
      %v2222 = vshrl.u32 %v1952, 16
      %v2224 = vrot.slane %v2222, 7
      %v2225 = vshll.u32 %v1952, 16
      %v2227 = vor.u32 %v2224, %v2225
      %v2228 = vsel %vm414, %v2220, %v2227
      %v2230 = vshrl.u32 %v1953, 16
      %v2232 = vrot.slane %v2230, 7
      %v2233 = vrot.slane %v2232, 4
      %v2235 = vshrl.u32 %v1954, 16
      %v2237 = vrot.slane %v2235, 7
      %v2238 = vshll.u32 %v1954, 16
      %v2240 = vor.u32 %v2237, %v2238
      %v2241 = vsel %vm414, %v2233, %v2240
      %v2242 = vrot.slane %v2237, 4
      %v2244 = vshrl.u32 %v1955, 16
      %v2246 = vrot.slane %v2244, 7
      %v2247 = vshll.u32 %v1955, 16
      %v2249 = vor.u32 %v2246, %v2247
      %v2250 = vsel %vm414, %v2242, %v2249
      %v2252 = vshrl.u32 %v1956, 16
      %v2254 = vrot.slane %v2252, 7
      %v2255 = vrot.slane %v2254, 4
      %v2257 = vshrl.u32 %v1957, 16
      %v2259 = vrot.slane %v2257, 7
      %v2260 = vshll.u32 %v1957, 16
      %v2262 = vor.u32 %v2259, %v2260
      %v2263 = vsel %vm414, %v2255, %v2262
      %v2264 = vrot.slane %v2259, 4
      %v2266 = vshrl.u32 %v1958, 16
      %v2268 = vrot.slane %v2266, 7
      %v2269 = vshll.u32 %v1958, 16
      %v2271 = vor.u32 %v2268, %v2269
      %v2272 = vsel %vm414, %v2264, %v2271
      %v2274 = vshrl.u32 %v1959, 16
      %v2276 = vrot.slane %v2274, 7
      %v2277 = vrot.slane %v2276, 4
      %v2279 = vshrl.u32 %v1960, 16
      %v2281 = vrot.slane %v2279, 7
      %v2282 = vshll.u32 %v1960, 16
      %v2284 = vor.u32 %v2281, %v2282
      %v2285 = vsel %vm414, %v2277, %v2284
      %v2286 = vrot.slane %v2281, 4
      %v2288 = vshrl.u32 %v1961, 16
      %v2290 = vrot.slane %v2288, 7
      %v2291 = vshll.u32 %v1961, 16
      %v2293 = vor.u32 %v2290, %v2291
      %v2294 = vsel %vm414, %v2286, %v2293
      %v2296 = vshrl.u32 %v1962, 16
      %v2298 = vrot.slane %v2296, 7
      %v2299 = vrot.slane %v2298, 4
      %v2301 = vshrl.u32 %v1963, 16
      %v2303 = vrot.slane %v2301, 7
      %v2304 = vshll.u32 %v1963, 16
      %v2306 = vor.u32 %v2303, %v2304
      %v2307 = vsel %vm414, %v2299, %v2306
      %v2308 = vrot.slane %v2303, 4
      %v2310 = vshrl.u32 %v1964, 16
      %v2312 = vrot.slane %v2310, 7
      %v2313 = vshll.u32 %v1964, 16
      %v2315 = vor.u32 %v2312, %v2313
      %v2316 = vsel %vm414, %v2308, %v2315
      %v2317 = vld [vmem:[%s1 + $0xc0] sm:$0xf]
      %v2318 = vld [vmem:[%s1 + $0xc4] sm:$0xf]
      %v2319 = vld [vmem:[%s1 + $0xc8] sm:$0xf]
      %v2320 = vld [vmem:[%s1 + $0xcc] sm:$0xf]
      %v2321 = vld [vmem:[%s1 + $0xd0] sm:$0xf]
      %v2322 = vld [vmem:[%s1 + $0xd4] sm:$0xf]
      %v2323 = vld [vmem:[%s1 + $0xd8] sm:$0xf]
      %v2324 = vld [vmem:[%s1 + $0xdc] sm:$0xf]
      %v2325 = vld [vmem:[%s1 + $0xe0] sm:$0xf]
      %v2326 = vld [vmem:[%s1 + $0xe4] sm:$0xf]
      %v2327 = vld [vmem:[%s1 + $0xe8] sm:$0xf]
      %v2328 = vld [vmem:[%s1 + $0xec] sm:$0xf]
      %v2329 = vld [vmem:[%s1 + $0xf0] sm:$0xf]
      %v2330 = vld [vmem:[%s1 + $0xf4] sm:$0xf]
      %v2331 = vld [vmem:[%s1 + $0xf8] sm:$0xf]
      %v2332 = vld [vmem:[%s1 + $0xfc] sm:$0xf]
      %v2333 = vunpack.c.l.b16 %v1977
      %v2334 = vunpack.c.l.b16 %v1986
      %v2335 = vunpack.c.l.b16 %v1999
      %v2336 = vunpack.c.l.b16 %v2008
      %v2337 = vunpack.c.l.b16 %v2021
      %v2338 = vunpack.c.l.b16 %v2030
      %v2339 = vunpack.c.l.b16 %v2043
      %v2340 = vunpack.c.l.b16 %v2052
      %v2341 = vunpack.c.l.b16 %v2065
      %v2342 = vunpack.c.l.b16 %v2074
      %v2343 = vunpack.c.l.b16 %v2087
      %v2344 = vunpack.c.l.b16 %v2096
      %v2345 = vunpack.c.l.b16 %v2109
      %v2346 = vunpack.c.l.b16 %v2118
      %v2347 = vunpack.c.l.b16 %v2131
      %v2348 = vunpack.c.l.b16 %v2140
      %v2349 = vunpack.c.l.b16 %v2153
      %v2350 = vunpack.c.l.b16 %v2162
      %v2351 = vunpack.c.l.b16 %v2175
      %v2352 = vunpack.c.l.b16 %v2184
      %v2353 = vunpack.c.l.b16 %v2197
      %v2354 = vunpack.c.l.b16 %v2206
      %v2355 = vunpack.c.l.b16 %v2219
      %v2356 = vunpack.c.l.b16 %v2228
      %v2357 = vunpack.c.l.b16 %v2241
      %v2358 = vunpack.c.l.b16 %v2250
      %v2359 = vunpack.c.l.b16 %v2263
      %v2360 = vunpack.c.l.b16 %v2272
      %v2361 = vunpack.c.l.b16 %v2285
      %v2362 = vunpack.c.l.b16 %v2294
      %v2363 = vunpack.c.l.b16 %v2307
      %v2364 = vunpack.c.l.b16 %v2316
      %v2365 = vpack.c.b16 %v2334, %v2333
      %v2366 = vpack.c.b16 %v2336, %v2335
      %v2367 = vpack.c.b16 %v2338, %v2337
      %v2368 = vpack.c.b16 %v2340, %v2339
      %v2369 = vpack.c.b16 %v2342, %v2341
      %v2370 = vpack.c.b16 %v2344, %v2343
      %v2371 = vpack.c.b16 %v2346, %v2345
      %v2372 = vpack.c.b16 %v2348, %v2347
      %v2373 = vpack.c.b16 %v2350, %v2349
      %v2374 = vpack.c.b16 %v2352, %v2351
      %v2375 = vpack.c.b16 %v2354, %v2353
      %v2376 = vpack.c.b16 %v2356, %v2355
      %v2377 = vpack.c.b16 %v2358, %v2357
      %v2378 = vpack.c.b16 %v2360, %v2359
      %v2379 = vpack.c.b16 %v2362, %v2361
      %v2380 = vpack.c.b16 %v2364, %v2363
      %v2413 = vunpack.c.l.b16 %v2317
      %v2414 = vunpack.c.l.b16 %v2318
      %v2415 = vunpack.c.l.b16 %v2319
      %v2416 = vunpack.c.l.b16 %v2320
      %v2417 = vunpack.c.l.b16 %v2321
      %v2418 = vunpack.c.l.b16 %v2322
      %v2419 = vunpack.c.l.b16 %v2323
      %v2420 = vunpack.c.l.b16 %v2324
      %v2421 = vunpack.c.l.b16 %v2325
      %v2422 = vunpack.c.l.b16 %v2326
      %v2423 = vunpack.c.l.b16 %v2327
      %v2424 = vunpack.c.l.b16 %v2328
      %v2425 = vunpack.c.l.b16 %v2329
      %v2426 = vunpack.c.l.b16 %v2330
      %v2427 = vunpack.c.l.b16 %v2331
      %v2428 = vunpack.c.l.b16 %v2332
      %v2429 = vpack.c.b16 %v2414, %v2413
      %v2430 = vpack.c.b16 %v2416, %v2415
      %v2431 = vpack.c.b16 %v2418, %v2417
      %v2432 = vpack.c.b16 %v2420, %v2419
      %v2433 = vpack.c.b16 %v2422, %v2421
      %v2434 = vpack.c.b16 %v2424, %v2423
      %v2435 = vpack.c.b16 %v2426, %v2425
      %v2436 = vpack.c.b16 %v2428, %v2427
      %2445 = vmatpush.bf16.msra.mxu0 %v2436
      %2446 = vmatpush.bf16.msra.mxu0 %v2435
      %2447 = vmatpush.bf16.msra.mxu0 %v2434
      %2448 = vmatpush.bf16.msra.mxu0 %v2433
      %2449 = vmatpush.bf16.msra.mxu0 %v2432
      %2450 = vmatpush.bf16.msra.mxu0 %v2431
      %2451 = vmatpush.bf16.msra.mxu0 %v2430
      %2452 = vmatpush.bf16.msra.mxu0 %v2429
      %2453 = vmatmul.bf16.gmra.mxu0 %v2365
      %v2454 = vpop.f32.mrf.mxu0
      %v2455 = vadd.f32 0.0, %v2454
      %v2456 = vpop.f32.mrf.mxu0
      %v2457 = vadd.f32 0.0, %v2456
      %2458 = vmatmul.bf16.gmra.mxu0 %v2366
      %v2459 = vpop.f32.mrf.mxu0
      %v2460 = vadd.f32 0.0, %v2459
      %v2461 = vpop.f32.mrf.mxu0
      %v2462 = vadd.f32 0.0, %v2461
      %2463 = vmatmul.bf16.gmra.mxu0 %v2367
      %v2464 = vpop.f32.mrf.mxu0
      %v2465 = vadd.f32 0.0, %v2464
      %v2466 = vpop.f32.mrf.mxu0
      %v2467 = vadd.f32 0.0, %v2466
      %2468 = vmatmul.bf16.gmra.mxu0 %v2368
      %v2469 = vpop.f32.mrf.mxu0
      %v2470 = vadd.f32 0.0, %v2469
      %v2471 = vpop.f32.mrf.mxu0
      %v2472 = vadd.f32 0.0, %v2471
      %2473 = vmatmul.bf16.gmra.mxu0 %v2369
      %v2474 = vpop.f32.mrf.mxu0
      %v2475 = vadd.f32 0.0, %v2474
      %v2476 = vpop.f32.mrf.mxu0
      %v2477 = vadd.f32 0.0, %v2476
      %2478 = vmatmul.bf16.gmra.mxu0 %v2370
      %v2479 = vpop.f32.mrf.mxu0
      %v2480 = vadd.f32 0.0, %v2479
      %v2481 = vpop.f32.mrf.mxu0
      %v2482 = vadd.f32 0.0, %v2481
      %2483 = vmatmul.bf16.gmra.mxu0 %v2371
      %v2484 = vpop.f32.mrf.mxu0
      %v2485 = vadd.f32 0.0, %v2484
      %v2486 = vpop.f32.mrf.mxu0
      %v2487 = vadd.f32 0.0, %v2486
      %2488 = vmatmul.bf16.gmra.mxu0 %v2372
      %v2489 = vpop.f32.mrf.mxu0
      %v2490 = vadd.f32 0.0, %v2489
      %v2491 = vpop.f32.mrf.mxu0
      %v2492 = vadd.f32 0.0, %v2491
      %2493 = vmatmul.bf16.gmra.mxu0 %v2373
      %v2494 = vpop.f32.mrf.mxu0
      %v2495 = vadd.f32 0.0, %v2494
      %v2496 = vpop.f32.mrf.mxu0
      %v2497 = vadd.f32 0.0, %v2496
      %2498 = vmatmul.bf16.gmra.mxu0 %v2374
      %v2499 = vpop.f32.mrf.mxu0
      %v2500 = vadd.f32 0.0, %v2499
      %v2501 = vpop.f32.mrf.mxu0
      %v2502 = vadd.f32 0.0, %v2501
      %2503 = vmatmul.bf16.gmra.mxu0 %v2375
      %v2504 = vpop.f32.mrf.mxu0
      %v2505 = vadd.f32 0.0, %v2504
      %v2506 = vpop.f32.mrf.mxu0
      %v2507 = vadd.f32 0.0, %v2506
      %2508 = vmatmul.bf16.gmra.mxu0 %v2376
      %v2509 = vpop.f32.mrf.mxu0
      %v2510 = vadd.f32 0.0, %v2509
      %v2511 = vpop.f32.mrf.mxu0
      %v2512 = vadd.f32 0.0, %v2511
      %2513 = vmatmul.bf16.gmra.mxu0 %v2377
      %v2514 = vpop.f32.mrf.mxu0
      %v2515 = vadd.f32 0.0, %v2514
      %v2516 = vpop.f32.mrf.mxu0
      %v2517 = vadd.f32 0.0, %v2516
      %2518 = vmatmul.bf16.gmra.mxu0 %v2378
      %v2519 = vpop.f32.mrf.mxu0
      %v2520 = vadd.f32 0.0, %v2519
      %v2521 = vpop.f32.mrf.mxu0
      %v2522 = vadd.f32 0.0, %v2521
      %2523 = vmatmul.bf16.gmra.mxu0 %v2379
      %v2524 = vpop.f32.mrf.mxu0
      %v2525 = vadd.f32 0.0, %v2524
      %v2526 = vpop.f32.mrf.mxu0
      %v2527 = vadd.f32 0.0, %v2526
      %2528 = vmatmul.bf16.gmra.mxu0 %v2380
      %v2529 = vpop.f32.mrf.mxu0
      %v2530 = vadd.f32 0.0, %v2529
      %v2531 = vpop.f32.mrf.mxu0
      %v2532 = vadd.f32 0.0, %v2531
      %2533 = vdwg.mxu0
      %v2534 = vadd.f32 %v1885, %v2455
      %v2535 = vadd.f32 %v1886, %v2457
      %v2536 = vadd.f32 %v1887, %v2460
      %v2537 = vadd.f32 %v1888, %v2462
      %v2538 = vadd.f32 %v1889, %v2465
      %v2539 = vadd.f32 %v1890, %v2467
      %v2540 = vadd.f32 %v1891, %v2470
      %v2541 = vadd.f32 %v1892, %v2472
      %v2542 = vadd.f32 %v1893, %v2475
      %v2543 = vadd.f32 %v1894, %v2477
      %v2544 = vadd.f32 %v1895, %v2480
      %v2545 = vadd.f32 %v1896, %v2482
      %v2546 = vadd.f32 %v1897, %v2485
      %v2547 = vadd.f32 %v1898, %v2487
      %v2548 = vadd.f32 %v1899, %v2490
      %v2549 = vadd.f32 %v1900, %v2492
      %v2550 = vadd.f32 %v1901, %v2495
      %v2551 = vadd.f32 %v1902, %v2497
      %v2552 = vadd.f32 %v1903, %v2500
      %v2553 = vadd.f32 %v1904, %v2502
      %v2554 = vadd.f32 %v1905, %v2505
      %v2555 = vadd.f32 %v1906, %v2507
      %v2556 = vadd.f32 %v1907, %v2510
      %v2557 = vadd.f32 %v1908, %v2512
      %v2558 = vadd.f32 %v1909, %v2515
      %v2559 = vadd.f32 %v1910, %v2517
      %v2560 = vadd.f32 %v1911, %v2520
      %v2561 = vadd.f32 %v1912, %v2522
      %v2562 = vadd.f32 %v1913, %v2525
      %v2563 = vadd.f32 %v1914, %v2527
      %v2564 = vadd.f32 %v1915, %v2530
      %v2565 = vadd.f32 %v1916, %v2532
      %v2566 = vld [vmem:[%s1 + $0x100] sm:$0xf]
      %v2567 = vld [vmem:[%s1 + $0x104] sm:$0xf]
      %v2568 = vld [vmem:[%s1 + $0x108] sm:$0xf]
      %v2569 = vld [vmem:[%s1 + $0x10c] sm:$0xf]
      %v2570 = vld [vmem:[%s1 + $0x110] sm:$0xf]
      %v2571 = vld [vmem:[%s1 + $0x114] sm:$0xf]
      %v2572 = vld [vmem:[%s1 + $0x118] sm:$0xf]
      %v2573 = vld [vmem:[%s1 + $0x11c] sm:$0xf]
      %v2574 = vld [vmem:[%s1 + $0x120] sm:$0xf]
      %v2575 = vld [vmem:[%s1 + $0x124] sm:$0xf]
      %v2576 = vld [vmem:[%s1 + $0x128] sm:$0xf]
      %v2577 = vld [vmem:[%s1 + $0x12c] sm:$0xf]
      %v2578 = vld [vmem:[%s1 + $0x130] sm:$0xf]
      %v2579 = vld [vmem:[%s1 + $0x134] sm:$0xf]
      %v2580 = vld [vmem:[%s1 + $0x138] sm:$0xf]
      %v2581 = vld [vmem:[%s1 + $0x13c] sm:$0xf]
      %v2614 = vunpack.c.l.b16 %v1918
      %v2615 = vunpack.c.l.b16 %v1919
      %v2616 = vunpack.c.l.b16 %v1921
      %v2617 = vunpack.c.l.b16 %v1922
      %v2618 = vunpack.c.l.b16 %v1924
      %v2619 = vunpack.c.l.b16 %v1925
      %v2620 = vunpack.c.l.b16 %v1927
      %v2621 = vunpack.c.l.b16 %v1928
      %v2622 = vunpack.c.l.b16 %v1930
      %v2623 = vunpack.c.l.b16 %v1931
      %v2624 = vunpack.c.l.b16 %v1933
      %v2625 = vunpack.c.l.b16 %v1934
      %v2626 = vunpack.c.l.b16 %v1936
      %v2627 = vunpack.c.l.b16 %v1937
      %v2628 = vunpack.c.l.b16 %v1939
      %v2629 = vunpack.c.l.b16 %v1940
      %v2630 = vunpack.c.l.b16 %v1942
      %v2631 = vunpack.c.l.b16 %v1943
      %v2632 = vunpack.c.l.b16 %v1945
      %v2633 = vunpack.c.l.b16 %v1946
      %v2634 = vunpack.c.l.b16 %v1948
      %v2635 = vunpack.c.l.b16 %v1949
      %v2636 = vunpack.c.l.b16 %v1951
      %v2637 = vunpack.c.l.b16 %v1952
      %v2638 = vunpack.c.l.b16 %v1954
      %v2639 = vunpack.c.l.b16 %v1955
      %v2640 = vunpack.c.l.b16 %v1957
      %v2641 = vunpack.c.l.b16 %v1958
      %v2642 = vunpack.c.l.b16 %v1960
      %v2643 = vunpack.c.l.b16 %v1961
      %v2644 = vunpack.c.l.b16 %v1963
      %v2645 = vunpack.c.l.b16 %v1964
      %v2646 = vpack.c.b16 %v2615, %v2614
      %v2647 = vpack.c.b16 %v2617, %v2616
      %v2648 = vpack.c.b16 %v2619, %v2618
      %v2649 = vpack.c.b16 %v2621, %v2620
      %v2650 = vpack.c.b16 %v2623, %v2622
      %v2651 = vpack.c.b16 %v2625, %v2624
      %v2652 = vpack.c.b16 %v2627, %v2626
      %v2653 = vpack.c.b16 %v2629, %v2628
      %v2654 = vpack.c.b16 %v2631, %v2630
      %v2655 = vpack.c.b16 %v2633, %v2632
      %v2656 = vpack.c.b16 %v2635, %v2634
      %v2657 = vpack.c.b16 %v2637, %v2636
      %v2658 = vpack.c.b16 %v2639, %v2638
      %v2659 = vpack.c.b16 %v2641, %v2640
      %v2660 = vpack.c.b16 %v2643, %v2642
      %v2661 = vpack.c.b16 %v2645, %v2644
      %v2694 = vunpack.c.l.b16 %v2566
      %v2695 = vunpack.c.l.b16 %v2567
      %v2696 = vunpack.c.l.b16 %v2568
      %v2697 = vunpack.c.l.b16 %v2569
      %v2698 = vunpack.c.l.b16 %v2570
      %v2699 = vunpack.c.l.b16 %v2571
      %v2700 = vunpack.c.l.b16 %v2572
      %v2701 = vunpack.c.l.b16 %v2573
      %v2702 = vunpack.c.l.b16 %v2574
      %v2703 = vunpack.c.l.b16 %v2575
      %v2704 = vunpack.c.l.b16 %v2576
      %v2705 = vunpack.c.l.b16 %v2577
      %v2706 = vunpack.c.l.b16 %v2578
      %v2707 = vunpack.c.l.b16 %v2579
      %v2708 = vunpack.c.l.b16 %v2580
      %v2709 = vunpack.c.l.b16 %v2581
      %v2710 = vpack.c.b16 %v2695, %v2694
      %v2711 = vpack.c.b16 %v2697, %v2696
      %v2712 = vpack.c.b16 %v2699, %v2698
      %v2713 = vpack.c.b16 %v2701, %v2700
      %v2714 = vpack.c.b16 %v2703, %v2702
      %v2715 = vpack.c.b16 %v2705, %v2704
      %v2716 = vpack.c.b16 %v2707, %v2706
      %v2717 = vpack.c.b16 %v2709, %v2708
      %2726 = vmatpush.bf16.msra.mxu0 %v2717
      %2727 = vmatpush.bf16.msra.mxu0 %v2716
      %2728 = vmatpush.bf16.msra.mxu0 %v2715
      %2729 = vmatpush.bf16.msra.mxu0 %v2714
      %2730 = vmatpush.bf16.msra.mxu0 %v2713
      %2731 = vmatpush.bf16.msra.mxu0 %v2712
      %2732 = vmatpush.bf16.msra.mxu0 %v2711
      %2733 = vmatpush.bf16.msra.mxu0 %v2710
      %2734 = vmatmul.bf16.gmra.mxu0 %v2646
      %v2735 = vpop.f32.mrf.mxu0
      %v2736 = vadd.f32 0.0, %v2735
      %v2737 = vpop.f32.mrf.mxu0
      %v2738 = vadd.f32 0.0, %v2737
      %2739 = vmatmul.bf16.gmra.mxu0 %v2647
      %v2740 = vpop.f32.mrf.mxu0
      %v2741 = vadd.f32 0.0, %v2740
      %v2742 = vpop.f32.mrf.mxu0
      %v2743 = vadd.f32 0.0, %v2742
      %2744 = vmatmul.bf16.gmra.mxu0 %v2648
      %v2745 = vpop.f32.mrf.mxu0
      %v2746 = vadd.f32 0.0, %v2745
      %v2747 = vpop.f32.mrf.mxu0
      %v2748 = vadd.f32 0.0, %v2747
      %2749 = vmatmul.bf16.gmra.mxu0 %v2649
      %v2750 = vpop.f32.mrf.mxu0
      %v2751 = vadd.f32 0.0, %v2750
      %v2752 = vpop.f32.mrf.mxu0
      %v2753 = vadd.f32 0.0, %v2752
      %2754 = vmatmul.bf16.gmra.mxu0 %v2650
      %v2755 = vpop.f32.mrf.mxu0
      %v2756 = vadd.f32 0.0, %v2755
      %v2757 = vpop.f32.mrf.mxu0
      %v2758 = vadd.f32 0.0, %v2757
      %2759 = vmatmul.bf16.gmra.mxu0 %v2651
      %v2760 = vpop.f32.mrf.mxu0
      %v2761 = vadd.f32 0.0, %v2760
      %v2762 = vpop.f32.mrf.mxu0
      %v2763 = vadd.f32 0.0, %v2762
      %2764 = vmatmul.bf16.gmra.mxu0 %v2652
      %v2765 = vpop.f32.mrf.mxu0
      %v2766 = vadd.f32 0.0, %v2765
      %v2767 = vpop.f32.mrf.mxu0
      %v2768 = vadd.f32 0.0, %v2767
      %2769 = vmatmul.bf16.gmra.mxu0 %v2653
      %v2770 = vpop.f32.mrf.mxu0
      %v2771 = vadd.f32 0.0, %v2770
      %v2772 = vpop.f32.mrf.mxu0
      %v2773 = vadd.f32 0.0, %v2772
      %2774 = vmatmul.bf16.gmra.mxu0 %v2654
      %v2775 = vpop.f32.mrf.mxu0
      %v2776 = vadd.f32 0.0, %v2775
      %v2777 = vpop.f32.mrf.mxu0
      %v2778 = vadd.f32 0.0, %v2777
      %2779 = vmatmul.bf16.gmra.mxu0 %v2655
      %v2780 = vpop.f32.mrf.mxu0
      %v2781 = vadd.f32 0.0, %v2780
      %v2782 = vpop.f32.mrf.mxu0
      %v2783 = vadd.f32 0.0, %v2782
      %2784 = vmatmul.bf16.gmra.mxu0 %v2656
      %v2785 = vpop.f32.mrf.mxu0
      %v2786 = vadd.f32 0.0, %v2785
      %v2787 = vpop.f32.mrf.mxu0
      %v2788 = vadd.f32 0.0, %v2787
      %2789 = vmatmul.bf16.gmra.mxu0 %v2657
      %v2790 = vpop.f32.mrf.mxu0
      %v2791 = vadd.f32 0.0, %v2790
      %v2792 = vpop.f32.mrf.mxu0
      %v2793 = vadd.f32 0.0, %v2792
      %2794 = vmatmul.bf16.gmra.mxu0 %v2658
      %v2795 = vpop.f32.mrf.mxu0
      %v2796 = vadd.f32 0.0, %v2795
      %v2797 = vpop.f32.mrf.mxu0
      %v2798 = vadd.f32 0.0, %v2797
      %2799 = vmatmul.bf16.gmra.mxu0 %v2659
      %v2800 = vpop.f32.mrf.mxu0
      %v2801 = vadd.f32 0.0, %v2800
      %v2802 = vpop.f32.mrf.mxu0
      %v2803 = vadd.f32 0.0, %v2802
      %2804 = vmatmul.bf16.gmra.mxu0 %v2660
      %v2805 = vpop.f32.mrf.mxu0
      %v2806 = vadd.f32 0.0, %v2805
      %v2807 = vpop.f32.mrf.mxu0
      %v2808 = vadd.f32 0.0, %v2807
      %2809 = vmatmul.bf16.gmra.mxu0 %v2661
      %v2810 = vpop.f32.mrf.mxu0
      %v2811 = vadd.f32 0.0, %v2810
      %v2812 = vpop.f32.mrf.mxu0
      %v2813 = vadd.f32 0.0, %v2812
      %2814 = vdwg.mxu0
      %v2815 = vadd.f32 %v2534, %v2736
      %v2816 = vadd.f32 %v2535, %v2738
      %v2817 = vadd.f32 %v2536, %v2741
      %v2818 = vadd.f32 %v2537, %v2743
      %v2819 = vadd.f32 %v2538, %v2746
      %v2820 = vadd.f32 %v2539, %v2748
      %v2821 = vadd.f32 %v2540, %v2751
      %v2822 = vadd.f32 %v2541, %v2753
      %v2823 = vadd.f32 %v2542, %v2756
      %v2824 = vadd.f32 %v2543, %v2758
      %v2825 = vadd.f32 %v2544, %v2761
      %v2826 = vadd.f32 %v2545, %v2763
      %v2827 = vadd.f32 %v2546, %v2766
      %v2828 = vadd.f32 %v2547, %v2768
      %v2829 = vadd.f32 %v2548, %v2771
      %v2830 = vadd.f32 %v2549, %v2773
      %v2831 = vadd.f32 %v2550, %v2776
      %v2832 = vadd.f32 %v2551, %v2778
      %v2833 = vadd.f32 %v2552, %v2781
      %v2834 = vadd.f32 %v2553, %v2783
      %v2835 = vadd.f32 %v2554, %v2786
      %v2836 = vadd.f32 %v2555, %v2788
      %v2837 = vadd.f32 %v2556, %v2791
      %v2838 = vadd.f32 %v2557, %v2793
      %v2839 = vadd.f32 %v2558, %v2796
      %v2840 = vadd.f32 %v2559, %v2798
      %v2841 = vadd.f32 %v2560, %v2801
      %v2842 = vadd.f32 %v2561, %v2803
      %v2843 = vadd.f32 %v2562, %v2806
      %v2844 = vadd.f32 %v2563, %v2808
      %v2845 = vadd.f32 %v2564, %v2811
      %v2846 = vadd.f32 %v2565, %v2813
      %v2847 = vld [vmem:[%s331 + $0x8] sm:$0xf]
      %v2848 = vld [vmem:[%s331 + $0xc] sm:$0xf]
      %v2849 = vld [vmem:[%s331 + $0x10] sm:$0x1]
      %v2850 = vld [vmem:[%s331 + $0x20] sm:$0xf]
      %v2851 = vld [vmem:[%s331 + $0x24] sm:$0xf]
      %v2852 = vld [vmem:[%s331 + $0x28] sm:$0x1]
      %v2853 = vld [vmem:[%s331 + $0x38] sm:$0xf]
      %v2854 = vld [vmem:[%s331 + $0x3c] sm:$0xf]
      %v2855 = vld [vmem:[%s331 + $0x40] sm:$0x1]
      %v2856 = vld [vmem:[%s331 + $0x50] sm:$0xf]
      %v2857 = vld [vmem:[%s331 + $0x54] sm:$0xf]
      %v2858 = vld [vmem:[%s331 + $0x58] sm:$0x1]
      %v2859 = vld [vmem:[%s331 + $0x68] sm:$0xf]
      %v2860 = vld [vmem:[%s331 + $0x6c] sm:$0xf]
      %v2861 = vld [vmem:[%s331 + $0x70] sm:$0x1]
      %v2862 = vld [vmem:[%s331 + $0x80] sm:$0xf]
      %v2863 = vld [vmem:[%s331 + $0x84] sm:$0xf]
      %v2864 = vld [vmem:[%s331 + $0x88] sm:$0x1]
      %v2865 = vld [vmem:[%s331 + $0x98] sm:$0xf]
      %v2866 = vld [vmem:[%s331 + $0x9c] sm:$0xf]
      %v2867 = vld [vmem:[%s331 + $0xa0] sm:$0x1]
      %v2868 = vld [vmem:[%s331 + $0xb0] sm:$0xf]
      %v2869 = vld [vmem:[%s331 + $0xb4] sm:$0xf]
      %v2870 = vld [vmem:[%s331 + $0xb8] sm:$0x1]
      %v2871 = vld [vmem:[%s331 + $0xc8] sm:$0xf]
      %v2872 = vld [vmem:[%s331 + $0xcc] sm:$0xf]
      %v2873 = vld [vmem:[%s331 + $0xd0] sm:$0x1]
      %v2874 = vld [vmem:[%s331 + $0xe0] sm:$0xf]
      %v2875 = vld [vmem:[%s331 + $0xe4] sm:$0xf]
      %v2876 = vld [vmem:[%s331 + $0xe8] sm:$0x1]
      %v2877 = vld [vmem:[%s331 + $0xf8] sm:$0xf]
      %v2878 = vld [vmem:[%s331 + $0xfc] sm:$0xf]
      %v2879 = vld [vmem:[%s331 + $0x100] sm:$0x1]
      %v2880 = vld [vmem:[%s331 + $0x110] sm:$0xf]
      %v2881 = vld [vmem:[%s331 + $0x114] sm:$0xf]
      %v2882 = vld [vmem:[%s331 + $0x118] sm:$0x1]
      %v2883 = vld [vmem:[%s331 + $0x128] sm:$0xf]
      %v2884 = vld [vmem:[%s331 + $0x12c] sm:$0xf]
      %v2885 = vld [vmem:[%s331 + $0x130] sm:$0x1]
      %v2886 = vld [vmem:[%s331 + $0x140] sm:$0xf]
      %v2887 = vld [vmem:[%s331 + $0x144] sm:$0xf]
      %v2888 = vld [vmem:[%s331 + $0x148] sm:$0x1]
      %v2889 = vld [vmem:[%s331 + $0x158] sm:$0xf]
      %v2890 = vld [vmem:[%s331 + $0x15c] sm:$0xf]
      %v2891 = vld [vmem:[%s331 + $0x160] sm:$0x1]
      %v2892 = vld [vmem:[%s331 + $0x170] sm:$0xf]
      %v2893 = vld [vmem:[%s331 + $0x174] sm:$0xf]
      %v2894 = vld [vmem:[%s331 + $0x178] sm:$0x1]
      %v2896 = vshrl.u32 %v2847, 16
      %v2898 = vrot.slane %v2896, 4
      %v2899 = vshll.u32 %v2847, 16
      %v2901 = vrot.slane %v2899, 5
      %v2902 = vor.u32 %v2898, %v2901
      %v2903 = vrot.slane %v2902, 4
      %v2905 = vshll.u32 %v2848, 16
      %v2907 = vrot.slane %v2905, 5
      %v2908 = vsel %vm1283, %v2903, %v2907
      %v2909 = vshrl.u32 %v2848, 16
      %v2911 = vrot.slane %v2909, 4
      %v2912 = vor.u32 %v2911, %v2907
      %v2913 = vrot.slane %v2912, 4
      %v2915 = vshll.u32 %v2849, 16
      %v2917 = vrot.slane %v2915, 5
      %v2918 = vsel %vm1283, %v2913, %v2917
      %v2920 = vshrl.u32 %v2850, 16
      %v2922 = vrot.slane %v2920, 4
      %v2923 = vshll.u32 %v2850, 16
      %v2925 = vrot.slane %v2923, 5
      %v2926 = vor.u32 %v2922, %v2925
      %v2927 = vrot.slane %v2926, 4
      %v2929 = vshll.u32 %v2851, 16
      %v2931 = vrot.slane %v2929, 5
      %v2932 = vsel %vm1283, %v2927, %v2931
      %v2933 = vshrl.u32 %v2851, 16
      %v2935 = vrot.slane %v2933, 4
      %v2936 = vor.u32 %v2935, %v2931
      %v2937 = vrot.slane %v2936, 4
      %v2939 = vshll.u32 %v2852, 16
      %v2941 = vrot.slane %v2939, 5
      %v2942 = vsel %vm1283, %v2937, %v2941
      %v2944 = vshrl.u32 %v2853, 16
      %v2946 = vrot.slane %v2944, 4
      %v2947 = vshll.u32 %v2853, 16
      %v2949 = vrot.slane %v2947, 5
      %v2950 = vor.u32 %v2946, %v2949
      %v2951 = vrot.slane %v2950, 4
      %v2953 = vshll.u32 %v2854, 16
      %v2955 = vrot.slane %v2953, 5
      %v2956 = vsel %vm1283, %v2951, %v2955
      %v2957 = vshrl.u32 %v2854, 16
      %v2959 = vrot.slane %v2957, 4
      %v2960 = vor.u32 %v2959, %v2955
      %v2961 = vrot.slane %v2960, 4
      %v2963 = vshll.u32 %v2855, 16
      %v2965 = vrot.slane %v2963, 5
      %v2966 = vsel %vm1283, %v2961, %v2965
      %v2968 = vshrl.u32 %v2856, 16
      %v2970 = vrot.slane %v2968, 4
      %v2971 = vshll.u32 %v2856, 16
      %v2973 = vrot.slane %v2971, 5
      %v2974 = vor.u32 %v2970, %v2973
      %v2975 = vrot.slane %v2974, 4
      %v2977 = vshll.u32 %v2857, 16
      %v2979 = vrot.slane %v2977, 5
      %v2980 = vsel %vm1283, %v2975, %v2979
      %v2981 = vshrl.u32 %v2857, 16
      %v2983 = vrot.slane %v2981, 4
      %v2984 = vor.u32 %v2983, %v2979
      %v2985 = vrot.slane %v2984, 4
      %v2987 = vshll.u32 %v2858, 16
      %v2989 = vrot.slane %v2987, 5
      %v2990 = vsel %vm1283, %v2985, %v2989
      %v2992 = vshrl.u32 %v2859, 16
      %v2994 = vrot.slane %v2992, 4
      %v2995 = vshll.u32 %v2859, 16
      %v2997 = vrot.slane %v2995, 5
      %v2998 = vor.u32 %v2994, %v2997
      %v2999 = vrot.slane %v2998, 4
      %v3001 = vshll.u32 %v2860, 16
      %v3003 = vrot.slane %v3001, 5
      %v3004 = vsel %vm1283, %v2999, %v3003
      %v3005 = vshrl.u32 %v2860, 16
      %v3007 = vrot.slane %v3005, 4
      %v3008 = vor.u32 %v3007, %v3003
      %v3009 = vrot.slane %v3008, 4
      %v3011 = vshll.u32 %v2861, 16
      %v3013 = vrot.slane %v3011, 5
      %v3014 = vsel %vm1283, %v3009, %v3013
      %v3016 = vshrl.u32 %v2862, 16
      %v3018 = vrot.slane %v3016, 4
      %v3019 = vshll.u32 %v2862, 16
      %v3021 = vrot.slane %v3019, 5
      %v3022 = vor.u32 %v3018, %v3021
      %v3023 = vrot.slane %v3022, 4
      %v3025 = vshll.u32 %v2863, 16
      %v3027 = vrot.slane %v3025, 5
      %v3028 = vsel %vm1283, %v3023, %v3027
      %v3029 = vshrl.u32 %v2863, 16
      %v3031 = vrot.slane %v3029, 4
      %v3032 = vor.u32 %v3031, %v3027
      %v3033 = vrot.slane %v3032, 4
      %v3035 = vshll.u32 %v2864, 16
      %v3037 = vrot.slane %v3035, 5
      %v3038 = vsel %vm1283, %v3033, %v3037
      %v3040 = vshrl.u32 %v2865, 16
      %v3042 = vrot.slane %v3040, 4
      %v3043 = vshll.u32 %v2865, 16
      %v3045 = vrot.slane %v3043, 5
      %v3046 = vor.u32 %v3042, %v3045
      %v3047 = vrot.slane %v3046, 4
      %v3049 = vshll.u32 %v2866, 16
      %v3051 = vrot.slane %v3049, 5
      %v3052 = vsel %vm1283, %v3047, %v3051
      %v3053 = vshrl.u32 %v2866, 16
      %v3055 = vrot.slane %v3053, 4
      %v3056 = vor.u32 %v3055, %v3051
      %v3057 = vrot.slane %v3056, 4
      %v3059 = vshll.u32 %v2867, 16
      %v3061 = vrot.slane %v3059, 5
      %v3062 = vsel %vm1283, %v3057, %v3061
      %v3064 = vshrl.u32 %v2868, 16
      %v3066 = vrot.slane %v3064, 4
      %v3067 = vshll.u32 %v2868, 16
      %v3069 = vrot.slane %v3067, 5
      %v3070 = vor.u32 %v3066, %v3069
      %v3071 = vrot.slane %v3070, 4
      %v3073 = vshll.u32 %v2869, 16
      %v3075 = vrot.slane %v3073, 5
      %v3076 = vsel %vm1283, %v3071, %v3075
      %v3077 = vshrl.u32 %v2869, 16
      %v3079 = vrot.slane %v3077, 4
      %v3080 = vor.u32 %v3079, %v3075
      %v3081 = vrot.slane %v3080, 4
      %v3083 = vshll.u32 %v2870, 16
      %v3085 = vrot.slane %v3083, 5
      %v3086 = vsel %vm1283, %v3081, %v3085
      %v3088 = vshrl.u32 %v2871, 16
      %v3090 = vrot.slane %v3088, 4
      %v3091 = vshll.u32 %v2871, 16
      %v3093 = vrot.slane %v3091, 5
      %v3094 = vor.u32 %v3090, %v3093
      %v3095 = vrot.slane %v3094, 4
      %v3097 = vshll.u32 %v2872, 16
      %v3099 = vrot.slane %v3097, 5
      %v3100 = vsel %vm1283, %v3095, %v3099
      %v3101 = vshrl.u32 %v2872, 16
      %v3103 = vrot.slane %v3101, 4
      %v3104 = vor.u32 %v3103, %v3099
      %v3105 = vrot.slane %v3104, 4
      %v3107 = vshll.u32 %v2873, 16
      %v3109 = vrot.slane %v3107, 5
      %v3110 = vsel %vm1283, %v3105, %v3109
      %v3112 = vshrl.u32 %v2874, 16
      %v3114 = vrot.slane %v3112, 4
      %v3115 = vshll.u32 %v2874, 16
      %v3117 = vrot.slane %v3115, 5
      %v3118 = vor.u32 %v3114, %v3117
      %v3119 = vrot.slane %v3118, 4
      %v3121 = vshll.u32 %v2875, 16
      %v3123 = vrot.slane %v3121, 5
      %v3124 = vsel %vm1283, %v3119, %v3123
      %v3125 = vshrl.u32 %v2875, 16
      %v3127 = vrot.slane %v3125, 4
      %v3128 = vor.u32 %v3127, %v3123
      %v3129 = vrot.slane %v3128, 4
      %v3131 = vshll.u32 %v2876, 16
      %v3133 = vrot.slane %v3131, 5
      %v3134 = vsel %vm1283, %v3129, %v3133
      %v3136 = vshrl.u32 %v2877, 16
      %v3138 = vrot.slane %v3136, 4
      %v3139 = vshll.u32 %v2877, 16
      %v3141 = vrot.slane %v3139, 5
      %v3142 = vor.u32 %v3138, %v3141
      %v3143 = vrot.slane %v3142, 4
      %v3145 = vshll.u32 %v2878, 16
      %v3147 = vrot.slane %v3145, 5
      %v3148 = vsel %vm1283, %v3143, %v3147
      %v3149 = vshrl.u32 %v2878, 16
      %v3151 = vrot.slane %v3149, 4
      %v3152 = vor.u32 %v3151, %v3147
      %v3153 = vrot.slane %v3152, 4
      %v3155 = vshll.u32 %v2879, 16
      %v3157 = vrot.slane %v3155, 5
      %v3158 = vsel %vm1283, %v3153, %v3157
      %v3160 = vshrl.u32 %v2880, 16
      %v3162 = vrot.slane %v3160, 4
      %v3163 = vshll.u32 %v2880, 16
      %v3165 = vrot.slane %v3163, 5
      %v3166 = vor.u32 %v3162, %v3165
      %v3167 = vrot.slane %v3166, 4
      %v3169 = vshll.u32 %v2881, 16
      %v3171 = vrot.slane %v3169, 5
      %v3172 = vsel %vm1283, %v3167, %v3171
      %v3173 = vshrl.u32 %v2881, 16
      %v3175 = vrot.slane %v3173, 4
      %v3176 = vor.u32 %v3175, %v3171
      %v3177 = vrot.slane %v3176, 4
      %v3179 = vshll.u32 %v2882, 16
      %v3181 = vrot.slane %v3179, 5
      %v3182 = vsel %vm1283, %v3177, %v3181
      %v3184 = vshrl.u32 %v2883, 16
      %v3186 = vrot.slane %v3184, 4
      %v3187 = vshll.u32 %v2883, 16
      %v3189 = vrot.slane %v3187, 5
      %v3190 = vor.u32 %v3186, %v3189
      %v3191 = vrot.slane %v3190, 4
      %v3193 = vshll.u32 %v2884, 16
      %v3195 = vrot.slane %v3193, 5
      %v3196 = vsel %vm1283, %v3191, %v3195
      %v3197 = vshrl.u32 %v2884, 16
      %v3199 = vrot.slane %v3197, 4
      %v3200 = vor.u32 %v3199, %v3195
      %v3201 = vrot.slane %v3200, 4
      %v3203 = vshll.u32 %v2885, 16
      %v3205 = vrot.slane %v3203, 5
      %v3206 = vsel %vm1283, %v3201, %v3205
      %v3208 = vshrl.u32 %v2886, 16
      %v3210 = vrot.slane %v3208, 4
      %v3211 = vshll.u32 %v2886, 16
      %v3213 = vrot.slane %v3211, 5
      %v3214 = vor.u32 %v3210, %v3213
      %v3215 = vrot.slane %v3214, 4
      %v3217 = vshll.u32 %v2887, 16
      %v3219 = vrot.slane %v3217, 5
      %v3220 = vsel %vm1283, %v3215, %v3219
      %v3221 = vshrl.u32 %v2887, 16
      %v3223 = vrot.slane %v3221, 4
      %v3224 = vor.u32 %v3223, %v3219
      %v3225 = vrot.slane %v3224, 4
      %v3227 = vshll.u32 %v2888, 16
      %v3229 = vrot.slane %v3227, 5
      %v3230 = vsel %vm1283, %v3225, %v3229
      %v3232 = vshrl.u32 %v2889, 16
      %v3234 = vrot.slane %v3232, 4
      %v3235 = vshll.u32 %v2889, 16
      %v3237 = vrot.slane %v3235, 5
      %v3238 = vor.u32 %v3234, %v3237
      %v3239 = vrot.slane %v3238, 4
      %v3241 = vshll.u32 %v2890, 16
      %v3243 = vrot.slane %v3241, 5
      %v3244 = vsel %vm1283, %v3239, %v3243
      %v3245 = vshrl.u32 %v2890, 16
      %v3247 = vrot.slane %v3245, 4
      %v3248 = vor.u32 %v3247, %v3243
      %v3249 = vrot.slane %v3248, 4
      %v3251 = vshll.u32 %v2891, 16
      %v3253 = vrot.slane %v3251, 5
      %v3254 = vsel %vm1283, %v3249, %v3253
      %v3256 = vshrl.u32 %v2892, 16
      %v3258 = vrot.slane %v3256, 4
      %v3259 = vshll.u32 %v2892, 16
      %v3261 = vrot.slane %v3259, 5
      %v3262 = vor.u32 %v3258, %v3261
      %v3263 = vrot.slane %v3262, 4
      %v3265 = vshll.u32 %v2893, 16
      %v3267 = vrot.slane %v3265, 5
      %v3268 = vsel %vm1283, %v3263, %v3267
      %v3269 = vshrl.u32 %v2893, 16
      %v3271 = vrot.slane %v3269, 4
      %v3272 = vor.u32 %v3271, %v3267
      %v3273 = vrot.slane %v3272, 4
      %v3275 = vshll.u32 %v2894, 16
      %v3277 = vrot.slane %v3275, 5
      %v3278 = vsel %vm1283, %v3273, %v3277
      %v3279 = vld [vmem:[%s1 + $0x140] sm:$0xf]
      %v3280 = vld [vmem:[%s1 + $0x144] sm:$0xf]
      %v3281 = vld [vmem:[%s1 + $0x148] sm:$0xf]
      %v3282 = vld [vmem:[%s1 + $0x14c] sm:$0xf]
      %v3283 = vld [vmem:[%s1 + $0x150] sm:$0xf]
      %v3284 = vld [vmem:[%s1 + $0x154] sm:$0xf]
      %v3285 = vld [vmem:[%s1 + $0x158] sm:$0xf]
      %v3286 = vld [vmem:[%s1 + $0x15c] sm:$0xf]
      %v3287 = vld [vmem:[%s1 + $0x160] sm:$0xf]
      %v3288 = vld [vmem:[%s1 + $0x164] sm:$0xf]
      %v3289 = vld [vmem:[%s1 + $0x168] sm:$0xf]
      %v3290 = vld [vmem:[%s1 + $0x16c] sm:$0xf]
      %v3291 = vld [vmem:[%s1 + $0x170] sm:$0xf]
      %v3292 = vld [vmem:[%s1 + $0x174] sm:$0xf]
      %v3293 = vld [vmem:[%s1 + $0x178] sm:$0xf]
      %v3294 = vld [vmem:[%s1 + $0x17c] sm:$0xf]
      %v3295 = vunpack.c.l.b16 %v2908
      %v3296 = vunpack.c.l.b16 %v2918
      %v3297 = vunpack.c.l.b16 %v2932
      %v3298 = vunpack.c.l.b16 %v2942
      %v3299 = vunpack.c.l.b16 %v2956
      %v3300 = vunpack.c.l.b16 %v2966
      %v3301 = vunpack.c.l.b16 %v2980
      %v3302 = vunpack.c.l.b16 %v2990
      %v3303 = vunpack.c.l.b16 %v3004
      %v3304 = vunpack.c.l.b16 %v3014
      %v3305 = vunpack.c.l.b16 %v3028
      %v3306 = vunpack.c.l.b16 %v3038
      %v3307 = vunpack.c.l.b16 %v3052
      %v3308 = vunpack.c.l.b16 %v3062
      %v3309 = vunpack.c.l.b16 %v3076
      %v3310 = vunpack.c.l.b16 %v3086
      %v3311 = vunpack.c.l.b16 %v3100
      %v3312 = vunpack.c.l.b16 %v3110
      %v3313 = vunpack.c.l.b16 %v3124
      %v3314 = vunpack.c.l.b16 %v3134
      %v3315 = vunpack.c.l.b16 %v3148
      %v3316 = vunpack.c.l.b16 %v3158
      %v3317 = vunpack.c.l.b16 %v3172
      %v3318 = vunpack.c.l.b16 %v3182
      %v3319 = vunpack.c.l.b16 %v3196
      %v3320 = vunpack.c.l.b16 %v3206
      %v3321 = vunpack.c.l.b16 %v3220
      %v3322 = vunpack.c.l.b16 %v3230
      %v3323 = vunpack.c.l.b16 %v3244
      %v3324 = vunpack.c.l.b16 %v3254
      %v3325 = vunpack.c.l.b16 %v3268
      %v3326 = vunpack.c.l.b16 %v3278
      %v3327 = vpack.c.b16 %v3296, %v3295
      %v3328 = vpack.c.b16 %v3298, %v3297
      %v3329 = vpack.c.b16 %v3300, %v3299
      %v3330 = vpack.c.b16 %v3302, %v3301
      %v3331 = vpack.c.b16 %v3304, %v3303
      %v3332 = vpack.c.b16 %v3306, %v3305
      %v3333 = vpack.c.b16 %v3308, %v3307
      %v3334 = vpack.c.b16 %v3310, %v3309
      %v3335 = vpack.c.b16 %v3312, %v3311
      %v3336 = vpack.c.b16 %v3314, %v3313
      %v3337 = vpack.c.b16 %v3316, %v3315
      %v3338 = vpack.c.b16 %v3318, %v3317
      %v3339 = vpack.c.b16 %v3320, %v3319
      %v3340 = vpack.c.b16 %v3322, %v3321
      %v3341 = vpack.c.b16 %v3324, %v3323
      %v3342 = vpack.c.b16 %v3326, %v3325
      %v3375 = vunpack.c.l.b16 %v3279
      %v3376 = vunpack.c.l.b16 %v3280
      %v3377 = vunpack.c.l.b16 %v3281
      %v3378 = vunpack.c.l.b16 %v3282
      %v3379 = vunpack.c.l.b16 %v3283
      %v3380 = vunpack.c.l.b16 %v3284
      %v3381 = vunpack.c.l.b16 %v3285
      %v3382 = vunpack.c.l.b16 %v3286
      %v3383 = vunpack.c.l.b16 %v3287
      %v3384 = vunpack.c.l.b16 %v3288
      %v3385 = vunpack.c.l.b16 %v3289
      %v3386 = vunpack.c.l.b16 %v3290
      %v3387 = vunpack.c.l.b16 %v3291
      %v3388 = vunpack.c.l.b16 %v3292
      %v3389 = vunpack.c.l.b16 %v3293
      %v3390 = vunpack.c.l.b16 %v3294
      %v3391 = vpack.c.b16 %v3376, %v3375
      %v3392 = vpack.c.b16 %v3378, %v3377
      %v3393 = vpack.c.b16 %v3380, %v3379
      %v3394 = vpack.c.b16 %v3382, %v3381
      %v3395 = vpack.c.b16 %v3384, %v3383
      %v3396 = vpack.c.b16 %v3386, %v3385
      %v3397 = vpack.c.b16 %v3388, %v3387
      %v3398 = vpack.c.b16 %v3390, %v3389
      %3407 = vmatpush.bf16.msra.mxu0 %v3398
      %3408 = vmatpush.bf16.msra.mxu0 %v3397
      %3409 = vmatpush.bf16.msra.mxu0 %v3396
      %3410 = vmatpush.bf16.msra.mxu0 %v3395
      %3411 = vmatpush.bf16.msra.mxu0 %v3394
      %3412 = vmatpush.bf16.msra.mxu0 %v3393
      %3413 = vmatpush.bf16.msra.mxu0 %v3392
      %3414 = vmatpush.bf16.msra.mxu0 %v3391
      %3415 = vmatmul.bf16.gmra.mxu0 %v3327
      %v3416 = vpop.f32.mrf.mxu0
      %v3417 = vadd.f32 0.0, %v3416
      %v3418 = vpop.f32.mrf.mxu0
      %v3419 = vadd.f32 0.0, %v3418
      %3420 = vmatmul.bf16.gmra.mxu0 %v3328
      %v3421 = vpop.f32.mrf.mxu0
      %v3422 = vadd.f32 0.0, %v3421
      %v3423 = vpop.f32.mrf.mxu0
      %v3424 = vadd.f32 0.0, %v3423
      %3425 = vmatmul.bf16.gmra.mxu0 %v3329
      %v3426 = vpop.f32.mrf.mxu0
      %v3427 = vadd.f32 0.0, %v3426
      %v3428 = vpop.f32.mrf.mxu0
      %v3429 = vadd.f32 0.0, %v3428
      %3430 = vmatmul.bf16.gmra.mxu0 %v3330
      %v3431 = vpop.f32.mrf.mxu0
      %v3432 = vadd.f32 0.0, %v3431
      %v3433 = vpop.f32.mrf.mxu0
      %v3434 = vadd.f32 0.0, %v3433
      %3435 = vmatmul.bf16.gmra.mxu0 %v3331
      %v3436 = vpop.f32.mrf.mxu0
      %v3437 = vadd.f32 0.0, %v3436
      %v3438 = vpop.f32.mrf.mxu0
      %v3439 = vadd.f32 0.0, %v3438
      %3440 = vmatmul.bf16.gmra.mxu0 %v3332
      %v3441 = vpop.f32.mrf.mxu0
      %v3442 = vadd.f32 0.0, %v3441
      %v3443 = vpop.f32.mrf.mxu0
      %v3444 = vadd.f32 0.0, %v3443
      %3445 = vmatmul.bf16.gmra.mxu0 %v3333
      %v3446 = vpop.f32.mrf.mxu0
      %v3447 = vadd.f32 0.0, %v3446
      %v3448 = vpop.f32.mrf.mxu0
      %v3449 = vadd.f32 0.0, %v3448
      %3450 = vmatmul.bf16.gmra.mxu0 %v3334
      %v3451 = vpop.f32.mrf.mxu0
      %v3452 = vadd.f32 0.0, %v3451
      %v3453 = vpop.f32.mrf.mxu0
      %v3454 = vadd.f32 0.0, %v3453
      %3455 = vmatmul.bf16.gmra.mxu0 %v3335
      %v3456 = vpop.f32.mrf.mxu0
      %v3457 = vadd.f32 0.0, %v3456
      %v3458 = vpop.f32.mrf.mxu0
      %v3459 = vadd.f32 0.0, %v3458
      %3460 = vmatmul.bf16.gmra.mxu0 %v3336
      %v3461 = vpop.f32.mrf.mxu0
      %v3462 = vadd.f32 0.0, %v3461
      %v3463 = vpop.f32.mrf.mxu0
      %v3464 = vadd.f32 0.0, %v3463
      %3465 = vmatmul.bf16.gmra.mxu0 %v3337
      %v3466 = vpop.f32.mrf.mxu0
      %v3467 = vadd.f32 0.0, %v3466
      %v3468 = vpop.f32.mrf.mxu0
      %v3469 = vadd.f32 0.0, %v3468
      %3470 = vmatmul.bf16.gmra.mxu0 %v3338
      %v3471 = vpop.f32.mrf.mxu0
      %v3472 = vadd.f32 0.0, %v3471
      %v3473 = vpop.f32.mrf.mxu0
      %v3474 = vadd.f32 0.0, %v3473
      %3475 = vmatmul.bf16.gmra.mxu0 %v3339
      %v3476 = vpop.f32.mrf.mxu0
      %v3477 = vadd.f32 0.0, %v3476
      %v3478 = vpop.f32.mrf.mxu0
      %v3479 = vadd.f32 0.0, %v3478
      %3480 = vmatmul.bf16.gmra.mxu0 %v3340
      %v3481 = vpop.f32.mrf.mxu0
      %v3482 = vadd.f32 0.0, %v3481
      %v3483 = vpop.f32.mrf.mxu0
      %v3484 = vadd.f32 0.0, %v3483
      %3485 = vmatmul.bf16.gmra.mxu0 %v3341
      %v3486 = vpop.f32.mrf.mxu0
      %v3487 = vadd.f32 0.0, %v3486
      %v3488 = vpop.f32.mrf.mxu0
      %v3489 = vadd.f32 0.0, %v3488
      %3490 = vmatmul.bf16.gmra.mxu0 %v3342
      %v3491 = vpop.f32.mrf.mxu0
      %v3492 = vadd.f32 0.0, %v3491
      %v3493 = vpop.f32.mrf.mxu0
      %v3494 = vadd.f32 0.0, %v3493
      %3495 = vdwg.mxu0
      %v3496 = vadd.f32 %v2815, %v3417
      %v3497 = vadd.f32 %v2816, %v3419
      %v3498 = vadd.f32 %v2817, %v3422
      %v3499 = vadd.f32 %v2818, %v3424
      %v3500 = vadd.f32 %v2819, %v3427
      %v3501 = vadd.f32 %v2820, %v3429
      %v3502 = vadd.f32 %v2821, %v3432
      %v3503 = vadd.f32 %v2822, %v3434
      %v3504 = vadd.f32 %v2823, %v3437
      %v3505 = vadd.f32 %v2824, %v3439
      %v3506 = vadd.f32 %v2825, %v3442
      %v3507 = vadd.f32 %v2826, %v3444
      %v3508 = vadd.f32 %v2827, %v3447
      %v3509 = vadd.f32 %v2828, %v3449
      %v3510 = vadd.f32 %v2829, %v3452
      %v3511 = vadd.f32 %v2830, %v3454
      %v3512 = vadd.f32 %v2831, %v3457
      %v3513 = vadd.f32 %v2832, %v3459
      %v3514 = vadd.f32 %v2833, %v3462
      %v3515 = vadd.f32 %v2834, %v3464
      %v3516 = vadd.f32 %v2835, %v3467
      %v3517 = vadd.f32 %v2836, %v3469
      %v3518 = vadd.f32 %v2837, %v3472
      %v3519 = vadd.f32 %v2838, %v3474
      %v3520 = vadd.f32 %v2839, %v3477
      %v3521 = vadd.f32 %v2840, %v3479
      %v3522 = vadd.f32 %v2841, %v3482
      %v3523 = vadd.f32 %v2842, %v3484
      %v3524 = vadd.f32 %v2843, %v3487
      %v3525 = vadd.f32 %v2844, %v3489
      %v3526 = vadd.f32 %v2845, %v3492
      %v3527 = vadd.f32 %v2846, %v3494
      %s3528 = scalar_lea.vmem [#allocation2], 48
      %v3529 = vld [vmem:[%s3528 + $0x4] sm:$0x8]
      %v3530 = vld [vmem:[%s3528 + $0x8] sm:$0xf]
      %v3531 = vld [vmem:[%s3528 + $0xc] sm:$0xf]
      %v3532 = vld [vmem:[%s3528 + $0x1c] sm:$0x8]
      %v3533 = vld [vmem:[%s3528 + $0x20] sm:$0xf]
      %v3534 = vld [vmem:[%s3528 + $0x24] sm:$0xf]
      %v3535 = vld [vmem:[%s3528 + $0x34] sm:$0x8]
      %v3536 = vld [vmem:[%s3528 + $0x38] sm:$0xf]
      %v3537 = vld [vmem:[%s3528 + $0x3c] sm:$0xf]
      %v3538 = vld [vmem:[%s3528 + $0x4c] sm:$0x8]
      %v3539 = vld [vmem:[%s3528 + $0x50] sm:$0xf]
      %v3540 = vld [vmem:[%s3528 + $0x54] sm:$0xf]
      %v3541 = vld [vmem:[%s3528 + $0x64] sm:$0x8]
      %v3542 = vld [vmem:[%s3528 + $0x68] sm:$0xf]
      %v3543 = vld [vmem:[%s3528 + $0x6c] sm:$0xf]
      %v3544 = vld [vmem:[%s3528 + $0x7c] sm:$0x8]
      %v3545 = vld [vmem:[%s3528 + $0x80] sm:$0xf]
      %v3546 = vld [vmem:[%s3528 + $0x84] sm:$0xf]
      %v3547 = vld [vmem:[%s3528 + $0x94] sm:$0x8]
      %v3548 = vld [vmem:[%s3528 + $0x98] sm:$0xf]
      %v3549 = vld [vmem:[%s3528 + $0x9c] sm:$0xf]
      %v3550 = vld [vmem:[%s3528 + $0xac] sm:$0x8]
      %v3551 = vld [vmem:[%s3528 + $0xb0] sm:$0xf]
      %v3552 = vld [vmem:[%s3528 + $0xb4] sm:$0xf]
      %v3553 = vld [vmem:[%s3528 + $0xc4] sm:$0x8]
      %v3554 = vld [vmem:[%s3528 + $0xc8] sm:$0xf]
      %v3555 = vld [vmem:[%s3528 + $0xcc] sm:$0xf]
      %v3556 = vld [vmem:[%s3528 + $0xdc] sm:$0x8]
      %v3557 = vld [vmem:[%s3528 + $0xe0] sm:$0xf]
      %v3558 = vld [vmem:[%s3528 + $0xe4] sm:$0xf]
      %v3559 = vld [vmem:[%s3528 + $0xf4] sm:$0x8]
      %v3560 = vld [vmem:[%s3528 + $0xf8] sm:$0xf]
      %v3561 = vld [vmem:[%s3528 + $0xfc] sm:$0xf]
      %v3562 = vld [vmem:[%s3528 + $0x10c] sm:$0x8]
      %v3563 = vld [vmem:[%s3528 + $0x110] sm:$0xf]
      %v3564 = vld [vmem:[%s3528 + $0x114] sm:$0xf]
      %v3565 = vld [vmem:[%s3528 + $0x124] sm:$0x8]
      %v3566 = vld [vmem:[%s3528 + $0x128] sm:$0xf]
      %v3567 = vld [vmem:[%s3528 + $0x12c] sm:$0xf]
      %v3568 = vld [vmem:[%s3528 + $0x13c] sm:$0x8]
      %v3569 = vld [vmem:[%s3528 + $0x140] sm:$0xf]
      %v3570 = vld [vmem:[%s3528 + $0x144] sm:$0xf]
      %v3571 = vld [vmem:[%s3528 + $0x154] sm:$0x8]
      %v3572 = vld [vmem:[%s3528 + $0x158] sm:$0xf]
      %v3573 = vld [vmem:[%s3528 + $0x15c] sm:$0xf]
      %v3574 = vld [vmem:[%s3528 + $0x16c] sm:$0x8]
      %v3575 = vld [vmem:[%s3528 + $0x170] sm:$0xf]
      %v3576 = vld [vmem:[%s3528 + $0x174] sm:$0xf]
      %v3578 = vshrl.u32 %v3529, 16
      %v3580 = vrot.slane %v3578, 7
      %v3581 = vrot.slane %v3580, 4
      %v3583 = vshrl.u32 %v3530, 16
      %v3585 = vrot.slane %v3583, 7
      %v3586 = vshll.u32 %v3530, 16
      %v3588 = vor.u32 %v3585, %v3586
      %v3589 = vsel %vm414, %v3581, %v3588
      %v3590 = vrot.slane %v3585, 4
      %v3592 = vshrl.u32 %v3531, 16
      %v3594 = vrot.slane %v3592, 7
      %v3595 = vshll.u32 %v3531, 16
      %v3597 = vor.u32 %v3594, %v3595
      %v3598 = vsel %vm414, %v3590, %v3597
      %v3600 = vshrl.u32 %v3532, 16
      %v3602 = vrot.slane %v3600, 7
      %v3603 = vrot.slane %v3602, 4
      %v3605 = vshrl.u32 %v3533, 16
      %v3607 = vrot.slane %v3605, 7
      %v3608 = vshll.u32 %v3533, 16
      %v3610 = vor.u32 %v3607, %v3608
      %v3611 = vsel %vm414, %v3603, %v3610
      %v3612 = vrot.slane %v3607, 4
      %v3614 = vshrl.u32 %v3534, 16
      %v3616 = vrot.slane %v3614, 7
      %v3617 = vshll.u32 %v3534, 16
      %v3619 = vor.u32 %v3616, %v3617
      %v3620 = vsel %vm414, %v3612, %v3619
      %v3622 = vshrl.u32 %v3535, 16
      %v3624 = vrot.slane %v3622, 7
      %v3625 = vrot.slane %v3624, 4
      %v3627 = vshrl.u32 %v3536, 16
      %v3629 = vrot.slane %v3627, 7
      %v3630 = vshll.u32 %v3536, 16
      %v3632 = vor.u32 %v3629, %v3630
      %v3633 = vsel %vm414, %v3625, %v3632
      %v3634 = vrot.slane %v3629, 4
      %v3636 = vshrl.u32 %v3537, 16
      %v3638 = vrot.slane %v3636, 7
      %v3639 = vshll.u32 %v3537, 16
      %v3641 = vor.u32 %v3638, %v3639
      %v3642 = vsel %vm414, %v3634, %v3641
      %v3644 = vshrl.u32 %v3538, 16
      %v3646 = vrot.slane %v3644, 7
      %v3647 = vrot.slane %v3646, 4
      %v3649 = vshrl.u32 %v3539, 16
      %v3651 = vrot.slane %v3649, 7
      %v3652 = vshll.u32 %v3539, 16
      %v3654 = vor.u32 %v3651, %v3652
      %v3655 = vsel %vm414, %v3647, %v3654
      %v3656 = vrot.slane %v3651, 4
      %v3658 = vshrl.u32 %v3540, 16
      %v3660 = vrot.slane %v3658, 7
      %v3661 = vshll.u32 %v3540, 16
      %v3663 = vor.u32 %v3660, %v3661
      %v3664 = vsel %vm414, %v3656, %v3663
      %v3666 = vshrl.u32 %v3541, 16
      %v3668 = vrot.slane %v3666, 7
      %v3669 = vrot.slane %v3668, 4
      %v3671 = vshrl.u32 %v3542, 16
      %v3673 = vrot.slane %v3671, 7
      %v3674 = vshll.u32 %v3542, 16
      %v3676 = vor.u32 %v3673, %v3674
      %v3677 = vsel %vm414, %v3669, %v3676
      %v3678 = vrot.slane %v3673, 4
      %v3680 = vshrl.u32 %v3543, 16
      %v3682 = vrot.slane %v3680, 7
      %v3683 = vshll.u32 %v3543, 16
      %v3685 = vor.u32 %v3682, %v3683
      %v3686 = vsel %vm414, %v3678, %v3685
      %v3688 = vshrl.u32 %v3544, 16
      %v3690 = vrot.slane %v3688, 7
      %v3691 = vrot.slane %v3690, 4
      %v3693 = vshrl.u32 %v3545, 16
      %v3695 = vrot.slane %v3693, 7
      %v3696 = vshll.u32 %v3545, 16
      %v3698 = vor.u32 %v3695, %v3696
      %v3699 = vsel %vm414, %v3691, %v3698
      %v3700 = vrot.slane %v3695, 4
      %v3702 = vshrl.u32 %v3546, 16
      %v3704 = vrot.slane %v3702, 7
      %v3705 = vshll.u32 %v3546, 16
      %v3707 = vor.u32 %v3704, %v3705
      %v3708 = vsel %vm414, %v3700, %v3707
      %v3710 = vshrl.u32 %v3547, 16
      %v3712 = vrot.slane %v3710, 7
      %v3713 = vrot.slane %v3712, 4
      %v3715 = vshrl.u32 %v3548, 16
      %v3717 = vrot.slane %v3715, 7
      %v3718 = vshll.u32 %v3548, 16
      %v3720 = vor.u32 %v3717, %v3718
      %v3721 = vsel %vm414, %v3713, %v3720
      %v3722 = vrot.slane %v3717, 4
      %v3724 = vshrl.u32 %v3549, 16
      %v3726 = vrot.slane %v3724, 7
      %v3727 = vshll.u32 %v3549, 16
      %v3729 = vor.u32 %v3726, %v3727
      %v3730 = vsel %vm414, %v3722, %v3729
      %v3732 = vshrl.u32 %v3550, 16
      %v3734 = vrot.slane %v3732, 7
      %v3735 = vrot.slane %v3734, 4
      %v3737 = vshrl.u32 %v3551, 16
      %v3739 = vrot.slane %v3737, 7
      %v3740 = vshll.u32 %v3551, 16
      %v3742 = vor.u32 %v3739, %v3740
      %v3743 = vsel %vm414, %v3735, %v3742
      %v3744 = vrot.slane %v3739, 4
      %v3746 = vshrl.u32 %v3552, 16
      %v3748 = vrot.slane %v3746, 7
      %v3749 = vshll.u32 %v3552, 16
      %v3751 = vor.u32 %v3748, %v3749
      %v3752 = vsel %vm414, %v3744, %v3751
      %v3754 = vshrl.u32 %v3553, 16
      %v3756 = vrot.slane %v3754, 7
      %v3757 = vrot.slane %v3756, 4
      %v3759 = vshrl.u32 %v3554, 16
      %v3761 = vrot.slane %v3759, 7
      %v3762 = vshll.u32 %v3554, 16
      %v3764 = vor.u32 %v3761, %v3762
      %v3765 = vsel %vm414, %v3757, %v3764
      %v3766 = vrot.slane %v3761, 4
      %v3768 = vshrl.u32 %v3555, 16
      %v3770 = vrot.slane %v3768, 7
      %v3771 = vshll.u32 %v3555, 16
      %v3773 = vor.u32 %v3770, %v3771
      %v3774 = vsel %vm414, %v3766, %v3773
      %v3776 = vshrl.u32 %v3556, 16
      %v3778 = vrot.slane %v3776, 7
      %v3779 = vrot.slane %v3778, 4
      %v3781 = vshrl.u32 %v3557, 16
      %v3783 = vrot.slane %v3781, 7
      %v3784 = vshll.u32 %v3557, 16
      %v3786 = vor.u32 %v3783, %v3784
      %v3787 = vsel %vm414, %v3779, %v3786
      %v3788 = vrot.slane %v3783, 4
      %v3790 = vshrl.u32 %v3558, 16
      %v3792 = vrot.slane %v3790, 7
      %v3793 = vshll.u32 %v3558, 16
      %v3795 = vor.u32 %v3792, %v3793
      %v3796 = vsel %vm414, %v3788, %v3795
      %v3798 = vshrl.u32 %v3559, 16
      %v3800 = vrot.slane %v3798, 7
      %v3801 = vrot.slane %v3800, 4
      %v3803 = vshrl.u32 %v3560, 16
      %v3805 = vrot.slane %v3803, 7
      %v3806 = vshll.u32 %v3560, 16
      %v3808 = vor.u32 %v3805, %v3806
      %v3809 = vsel %vm414, %v3801, %v3808
      %v3810 = vrot.slane %v3805, 4
      %v3812 = vshrl.u32 %v3561, 16
      %v3814 = vrot.slane %v3812, 7
      %v3815 = vshll.u32 %v3561, 16
      %v3817 = vor.u32 %v3814, %v3815
      %v3818 = vsel %vm414, %v3810, %v3817
      %v3820 = vshrl.u32 %v3562, 16
      %v3822 = vrot.slane %v3820, 7
      %v3823 = vrot.slane %v3822, 4
      %v3825 = vshrl.u32 %v3563, 16
      %v3827 = vrot.slane %v3825, 7
      %v3828 = vshll.u32 %v3563, 16
      %v3830 = vor.u32 %v3827, %v3828
      %v3831 = vsel %vm414, %v3823, %v3830
      %v3832 = vrot.slane %v3827, 4
      %v3834 = vshrl.u32 %v3564, 16
      %v3836 = vrot.slane %v3834, 7
      %v3837 = vshll.u32 %v3564, 16
      %v3839 = vor.u32 %v3836, %v3837
      %v3840 = vsel %vm414, %v3832, %v3839
      %v3842 = vshrl.u32 %v3565, 16
      %v3844 = vrot.slane %v3842, 7
      %v3845 = vrot.slane %v3844, 4
      %v3847 = vshrl.u32 %v3566, 16
      %v3849 = vrot.slane %v3847, 7
      %v3850 = vshll.u32 %v3566, 16
      %v3852 = vor.u32 %v3849, %v3850
      %v3853 = vsel %vm414, %v3845, %v3852
      %v3854 = vrot.slane %v3849, 4
      %v3856 = vshrl.u32 %v3567, 16
      %v3858 = vrot.slane %v3856, 7
      %v3859 = vshll.u32 %v3567, 16
      %v3861 = vor.u32 %v3858, %v3859
      %v3862 = vsel %vm414, %v3854, %v3861
      %v3864 = vshrl.u32 %v3568, 16
      %v3866 = vrot.slane %v3864, 7
      %v3867 = vrot.slane %v3866, 4
      %v3869 = vshrl.u32 %v3569, 16
      %v3871 = vrot.slane %v3869, 7
      %v3872 = vshll.u32 %v3569, 16
      %v3874 = vor.u32 %v3871, %v3872
      %v3875 = vsel %vm414, %v3867, %v3874
      %v3876 = vrot.slane %v3871, 4
      %v3878 = vshrl.u32 %v3570, 16
      %v3880 = vrot.slane %v3878, 7
      %v3881 = vshll.u32 %v3570, 16
      %v3883 = vor.u32 %v3880, %v3881
      %v3884 = vsel %vm414, %v3876, %v3883
      %v3886 = vshrl.u32 %v3571, 16
      %v3888 = vrot.slane %v3886, 7
      %v3889 = vrot.slane %v3888, 4
      %v3891 = vshrl.u32 %v3572, 16
      %v3893 = vrot.slane %v3891, 7
      %v3894 = vshll.u32 %v3572, 16
      %v3896 = vor.u32 %v3893, %v3894
      %v3897 = vsel %vm414, %v3889, %v3896
      %v3898 = vrot.slane %v3893, 4
      %v3900 = vshrl.u32 %v3573, 16
      %v3902 = vrot.slane %v3900, 7
      %v3903 = vshll.u32 %v3573, 16
      %v3905 = vor.u32 %v3902, %v3903
      %v3906 = vsel %vm414, %v3898, %v3905
      %v3908 = vshrl.u32 %v3574, 16
      %v3910 = vrot.slane %v3908, 7
      %v3911 = vrot.slane %v3910, 4
      %v3913 = vshrl.u32 %v3575, 16
      %v3915 = vrot.slane %v3913, 7
      %v3916 = vshll.u32 %v3575, 16
      %v3918 = vor.u32 %v3915, %v3916
      %v3919 = vsel %vm414, %v3911, %v3918
      %v3920 = vrot.slane %v3915, 4
      %v3922 = vshrl.u32 %v3576, 16
      %v3924 = vrot.slane %v3922, 7
      %v3925 = vshll.u32 %v3576, 16
      %v3927 = vor.u32 %v3924, %v3925
      %v3928 = vsel %vm414, %v3920, %v3927
      %v3929 = vld [vmem:[%s1 + $0x180] sm:$0xf]
      %v3930 = vld [vmem:[%s1 + $0x184] sm:$0xf]
      %v3931 = vld [vmem:[%s1 + $0x188] sm:$0xf]
      %v3932 = vld [vmem:[%s1 + $0x18c] sm:$0xf]
      %v3933 = vld [vmem:[%s1 + $0x190] sm:$0xf]
      %v3934 = vld [vmem:[%s1 + $0x194] sm:$0xf]
      %v3935 = vld [vmem:[%s1 + $0x198] sm:$0xf]
      %v3936 = vld [vmem:[%s1 + $0x19c] sm:$0xf]
      %v3937 = vld [vmem:[%s1 + $0x1a0] sm:$0xf]
      %v3938 = vld [vmem:[%s1 + $0x1a4] sm:$0xf]
      %v3939 = vld [vmem:[%s1 + $0x1a8] sm:$0xf]
      %v3940 = vld [vmem:[%s1 + $0x1ac] sm:$0xf]
      %v3941 = vld [vmem:[%s1 + $0x1b0] sm:$0xf]
      %v3942 = vld [vmem:[%s1 + $0x1b4] sm:$0xf]
      %v3943 = vld [vmem:[%s1 + $0x1b8] sm:$0xf]
      %v3944 = vld [vmem:[%s1 + $0x1bc] sm:$0xf]
      %v3945 = vunpack.c.l.b16 %v3589
      %v3946 = vunpack.c.l.b16 %v3598
      %v3947 = vunpack.c.l.b16 %v3611
      %v3948 = vunpack.c.l.b16 %v3620
      %v3949 = vunpack.c.l.b16 %v3633
      %v3950 = vunpack.c.l.b16 %v3642
      %v3951 = vunpack.c.l.b16 %v3655
      %v3952 = vunpack.c.l.b16 %v3664
      %v3953 = vunpack.c.l.b16 %v3677
      %v3954 = vunpack.c.l.b16 %v3686
      %v3955 = vunpack.c.l.b16 %v3699
      %v3956 = vunpack.c.l.b16 %v3708
      %v3957 = vunpack.c.l.b16 %v3721
      %v3958 = vunpack.c.l.b16 %v3730
      %v3959 = vunpack.c.l.b16 %v3743
      %v3960 = vunpack.c.l.b16 %v3752
      %v3961 = vunpack.c.l.b16 %v3765
      %v3962 = vunpack.c.l.b16 %v3774
      %v3963 = vunpack.c.l.b16 %v3787
      %v3964 = vunpack.c.l.b16 %v3796
      %v3965 = vunpack.c.l.b16 %v3809
      %v3966 = vunpack.c.l.b16 %v3818
      %v3967 = vunpack.c.l.b16 %v3831
      %v3968 = vunpack.c.l.b16 %v3840
      %v3969 = vunpack.c.l.b16 %v3853
      %v3970 = vunpack.c.l.b16 %v3862
      %v3971 = vunpack.c.l.b16 %v3875
      %v3972 = vunpack.c.l.b16 %v3884
      %v3973 = vunpack.c.l.b16 %v3897
      %v3974 = vunpack.c.l.b16 %v3906
      %v3975 = vunpack.c.l.b16 %v3919
      %v3976 = vunpack.c.l.b16 %v3928
      %v3977 = vpack.c.b16 %v3946, %v3945
      %v3978 = vpack.c.b16 %v3948, %v3947
      %v3979 = vpack.c.b16 %v3950, %v3949
      %v3980 = vpack.c.b16 %v3952, %v3951
      %v3981 = vpack.c.b16 %v3954, %v3953
      %v3982 = vpack.c.b16 %v3956, %v3955
      %v3983 = vpack.c.b16 %v3958, %v3957
      %v3984 = vpack.c.b16 %v3960, %v3959
      %v3985 = vpack.c.b16 %v3962, %v3961
      %v3986 = vpack.c.b16 %v3964, %v3963
      %v3987 = vpack.c.b16 %v3966, %v3965
      %v3988 = vpack.c.b16 %v3968, %v3967
      %v3989 = vpack.c.b16 %v3970, %v3969
      %v3990 = vpack.c.b16 %v3972, %v3971
      %v3991 = vpack.c.b16 %v3974, %v3973
      %v3992 = vpack.c.b16 %v3976, %v3975
      %v4025 = vunpack.c.l.b16 %v3929
      %v4026 = vunpack.c.l.b16 %v3930
      %v4027 = vunpack.c.l.b16 %v3931
      %v4028 = vunpack.c.l.b16 %v3932
      %v4029 = vunpack.c.l.b16 %v3933
      %v4030 = vunpack.c.l.b16 %v3934
      %v4031 = vunpack.c.l.b16 %v3935
      %v4032 = vunpack.c.l.b16 %v3936
      %v4033 = vunpack.c.l.b16 %v3937
      %v4034 = vunpack.c.l.b16 %v3938
      %v4035 = vunpack.c.l.b16 %v3939
      %v4036 = vunpack.c.l.b16 %v3940
      %v4037 = vunpack.c.l.b16 %v3941
      %v4038 = vunpack.c.l.b16 %v3942
      %v4039 = vunpack.c.l.b16 %v3943
      %v4040 = vunpack.c.l.b16 %v3944
      %v4041 = vpack.c.b16 %v4026, %v4025
      %v4042 = vpack.c.b16 %v4028, %v4027
      %v4043 = vpack.c.b16 %v4030, %v4029
      %v4044 = vpack.c.b16 %v4032, %v4031
      %v4045 = vpack.c.b16 %v4034, %v4033
      %v4046 = vpack.c.b16 %v4036, %v4035
      %v4047 = vpack.c.b16 %v4038, %v4037
      %v4048 = vpack.c.b16 %v4040, %v4039
      %4057 = vmatpush.bf16.msra.mxu0 %v4048
      %4058 = vmatpush.bf16.msra.mxu0 %v4047
      %4059 = vmatpush.bf16.msra.mxu0 %v4046
      %4060 = vmatpush.bf16.msra.mxu0 %v4045
      %4061 = vmatpush.bf16.msra.mxu0 %v4044
      %4062 = vmatpush.bf16.msra.mxu0 %v4043
      %4063 = vmatpush.bf16.msra.mxu0 %v4042
      %4064 = vmatpush.bf16.msra.mxu0 %v4041
      %4065 = vmatmul.bf16.gmra.mxu0 %v3977
      %v4066 = vpop.f32.mrf.mxu0
      %v4067 = vadd.f32 0.0, %v4066
      %v4068 = vpop.f32.mrf.mxu0
      %v4069 = vadd.f32 0.0, %v4068
      %4070 = vmatmul.bf16.gmra.mxu0 %v3978
      %v4071 = vpop.f32.mrf.mxu0
      %v4072 = vadd.f32 0.0, %v4071
      %v4073 = vpop.f32.mrf.mxu0
      %v4074 = vadd.f32 0.0, %v4073
      %4075 = vmatmul.bf16.gmra.mxu0 %v3979
      %v4076 = vpop.f32.mrf.mxu0
      %v4077 = vadd.f32 0.0, %v4076
      %v4078 = vpop.f32.mrf.mxu0
      %v4079 = vadd.f32 0.0, %v4078
      %4080 = vmatmul.bf16.gmra.mxu0 %v3980
      %v4081 = vpop.f32.mrf.mxu0
      %v4082 = vadd.f32 0.0, %v4081
      %v4083 = vpop.f32.mrf.mxu0
      %v4084 = vadd.f32 0.0, %v4083
      %4085 = vmatmul.bf16.gmra.mxu0 %v3981
      %v4086 = vpop.f32.mrf.mxu0
      %v4087 = vadd.f32 0.0, %v4086
      %v4088 = vpop.f32.mrf.mxu0
      %v4089 = vadd.f32 0.0, %v4088
      %4090 = vmatmul.bf16.gmra.mxu0 %v3982
      %v4091 = vpop.f32.mrf.mxu0
      %v4092 = vadd.f32 0.0, %v4091
      %v4093 = vpop.f32.mrf.mxu0
      %v4094 = vadd.f32 0.0, %v4093
      %4095 = vmatmul.bf16.gmra.mxu0 %v3983
      %v4096 = vpop.f32.mrf.mxu0
      %v4097 = vadd.f32 0.0, %v4096
      %v4098 = vpop.f32.mrf.mxu0
      %v4099 = vadd.f32 0.0, %v4098
      %4100 = vmatmul.bf16.gmra.mxu0 %v3984
      %v4101 = vpop.f32.mrf.mxu0
      %v4102 = vadd.f32 0.0, %v4101
      %v4103 = vpop.f32.mrf.mxu0
      %v4104 = vadd.f32 0.0, %v4103
      %4105 = vmatmul.bf16.gmra.mxu0 %v3985
      %v4106 = vpop.f32.mrf.mxu0
      %v4107 = vadd.f32 0.0, %v4106
      %v4108 = vpop.f32.mrf.mxu0
      %v4109 = vadd.f32 0.0, %v4108
      %4110 = vmatmul.bf16.gmra.mxu0 %v3986
      %v4111 = vpop.f32.mrf.mxu0
      %v4112 = vadd.f32 0.0, %v4111
      %v4113 = vpop.f32.mrf.mxu0
      %v4114 = vadd.f32 0.0, %v4113
      %4115 = vmatmul.bf16.gmra.mxu0 %v3987
      %v4116 = vpop.f32.mrf.mxu0
      %v4117 = vadd.f32 0.0, %v4116
      %v4118 = vpop.f32.mrf.mxu0
      %v4119 = vadd.f32 0.0, %v4118
      %4120 = vmatmul.bf16.gmra.mxu0 %v3988
      %v4121 = vpop.f32.mrf.mxu0
      %v4122 = vadd.f32 0.0, %v4121
      %v4123 = vpop.f32.mrf.mxu0
      %v4124 = vadd.f32 0.0, %v4123
      %4125 = vmatmul.bf16.gmra.mxu0 %v3989
      %v4126 = vpop.f32.mrf.mxu0
      %v4127 = vadd.f32 0.0, %v4126
      %v4128 = vpop.f32.mrf.mxu0
      %v4129 = vadd.f32 0.0, %v4128
      %4130 = vmatmul.bf16.gmra.mxu0 %v3990
      %v4131 = vpop.f32.mrf.mxu0
      %v4132 = vadd.f32 0.0, %v4131
      %v4133 = vpop.f32.mrf.mxu0
      %v4134 = vadd.f32 0.0, %v4133
      %4135 = vmatmul.bf16.gmra.mxu0 %v3991
      %v4136 = vpop.f32.mrf.mxu0
      %v4137 = vadd.f32 0.0, %v4136
      %v4138 = vpop.f32.mrf.mxu0
      %v4139 = vadd.f32 0.0, %v4138
      %4140 = vmatmul.bf16.gmra.mxu0 %v3992
      %v4141 = vpop.f32.mrf.mxu0
      %v4142 = vadd.f32 0.0, %v4141
      %v4143 = vpop.f32.mrf.mxu0
      %v4144 = vadd.f32 0.0, %v4143
      %4145 = vdwg.mxu0
      %v4146 = vadd.f32 %v3496, %v4067
      %v4147 = vadd.f32 %v3497, %v4069
      %v4148 = vadd.f32 %v3498, %v4072
      %v4149 = vadd.f32 %v3499, %v4074
      %v4150 = vadd.f32 %v3500, %v4077
      %v4151 = vadd.f32 %v3501, %v4079
      %v4152 = vadd.f32 %v3502, %v4082
      %v4153 = vadd.f32 %v3503, %v4084
      %v4154 = vadd.f32 %v3504, %v4087
      %v4155 = vadd.f32 %v3505, %v4089
      %v4156 = vadd.f32 %v3506, %v4092
      %v4157 = vadd.f32 %v3507, %v4094
      %v4158 = vadd.f32 %v3508, %v4097
      %v4159 = vadd.f32 %v3509, %v4099
      %v4160 = vadd.f32 %v3510, %v4102
      %v4161 = vadd.f32 %v3511, %v4104
      %v4162 = vadd.f32 %v3512, %v4107
      %v4163 = vadd.f32 %v3513, %v4109
      %v4164 = vadd.f32 %v3514, %v4112
      %v4165 = vadd.f32 %v3515, %v4114
      %v4166 = vadd.f32 %v3516, %v4117
      %v4167 = vadd.f32 %v3517, %v4119
      %v4168 = vadd.f32 %v3518, %v4122
      %v4169 = vadd.f32 %v3519, %v4124
      %v4170 = vadd.f32 %v3520, %v4127
      %v4171 = vadd.f32 %v3521, %v4129
      %v4172 = vadd.f32 %v3522, %v4132
      %v4173 = vadd.f32 %v3523, %v4134
      %v4174 = vadd.f32 %v3524, %v4137
      %v4175 = vadd.f32 %v3525, %v4139
      %v4176 = vadd.f32 %v3526, %v4142
      %v4177 = vadd.f32 %v3527, %v4144
      %v4178 = vld [vmem:[%s1 + $0x1c0] sm:$0xf]
      %v4179 = vld [vmem:[%s1 + $0x1c4] sm:$0xf]
      %v4180 = vld [vmem:[%s1 + $0x1c8] sm:$0xf]
      %v4181 = vld [vmem:[%s1 + $0x1cc] sm:$0xf]
      %v4182 = vld [vmem:[%s1 + $0x1d0] sm:$0xf]
      %v4183 = vld [vmem:[%s1 + $0x1d4] sm:$0xf]
      %v4184 = vld [vmem:[%s1 + $0x1d8] sm:$0xf]
      %v4185 = vld [vmem:[%s1 + $0x1dc] sm:$0xf]
      %v4186 = vld [vmem:[%s1 + $0x1e0] sm:$0xf]
      %v4187 = vld [vmem:[%s1 + $0x1e4] sm:$0xf]
      %v4188 = vld [vmem:[%s1 + $0x1e8] sm:$0xf]
      %v4189 = vld [vmem:[%s1 + $0x1ec] sm:$0xf]
      %v4190 = vld [vmem:[%s1 + $0x1f0] sm:$0xf]
      %v4191 = vld [vmem:[%s1 + $0x1f4] sm:$0xf]
      %v4192 = vld [vmem:[%s1 + $0x1f8] sm:$0xf]
      %v4193 = vld [vmem:[%s1 + $0x1fc] sm:$0xf]
      %v4226 = vunpack.c.l.b16 %v3530
      %v4227 = vunpack.c.l.b16 %v3531
      %v4228 = vunpack.c.l.b16 %v3533
      %v4229 = vunpack.c.l.b16 %v3534
      %v4230 = vunpack.c.l.b16 %v3536
      %v4231 = vunpack.c.l.b16 %v3537
      %v4232 = vunpack.c.l.b16 %v3539
      %v4233 = vunpack.c.l.b16 %v3540
      %v4234 = vunpack.c.l.b16 %v3542
      %v4235 = vunpack.c.l.b16 %v3543
      %v4236 = vunpack.c.l.b16 %v3545
      %v4237 = vunpack.c.l.b16 %v3546
      %v4238 = vunpack.c.l.b16 %v3548
      %v4239 = vunpack.c.l.b16 %v3549
      %v4240 = vunpack.c.l.b16 %v3551
      %v4241 = vunpack.c.l.b16 %v3552
      %v4242 = vunpack.c.l.b16 %v3554
      %v4243 = vunpack.c.l.b16 %v3555
      %v4244 = vunpack.c.l.b16 %v3557
      %v4245 = vunpack.c.l.b16 %v3558
      %v4246 = vunpack.c.l.b16 %v3560
      %v4247 = vunpack.c.l.b16 %v3561
      %v4248 = vunpack.c.l.b16 %v3563
      %v4249 = vunpack.c.l.b16 %v3564
      %v4250 = vunpack.c.l.b16 %v3566
      %v4251 = vunpack.c.l.b16 %v3567
      %v4252 = vunpack.c.l.b16 %v3569
      %v4253 = vunpack.c.l.b16 %v3570
      %v4254 = vunpack.c.l.b16 %v3572
      %v4255 = vunpack.c.l.b16 %v3573
      %v4256 = vunpack.c.l.b16 %v3575
      %v4257 = vunpack.c.l.b16 %v3576
      %v4258 = vpack.c.b16 %v4227, %v4226
      %v4259 = vpack.c.b16 %v4229, %v4228
      %v4260 = vpack.c.b16 %v4231, %v4230
      %v4261 = vpack.c.b16 %v4233, %v4232
      %v4262 = vpack.c.b16 %v4235, %v4234
      %v4263 = vpack.c.b16 %v4237, %v4236
      %v4264 = vpack.c.b16 %v4239, %v4238
      %v4265 = vpack.c.b16 %v4241, %v4240
      %v4266 = vpack.c.b16 %v4243, %v4242
      %v4267 = vpack.c.b16 %v4245, %v4244
      %v4268 = vpack.c.b16 %v4247, %v4246
      %v4269 = vpack.c.b16 %v4249, %v4248
      %v4270 = vpack.c.b16 %v4251, %v4250
      %v4271 = vpack.c.b16 %v4253, %v4252
      %v4272 = vpack.c.b16 %v4255, %v4254
      %v4273 = vpack.c.b16 %v4257, %v4256
      %v4306 = vunpack.c.l.b16 %v4178
      %v4307 = vunpack.c.l.b16 %v4179
      %v4308 = vunpack.c.l.b16 %v4180
      %v4309 = vunpack.c.l.b16 %v4181
      %v4310 = vunpack.c.l.b16 %v4182
      %v4311 = vunpack.c.l.b16 %v4183
      %v4312 = vunpack.c.l.b16 %v4184
      %v4313 = vunpack.c.l.b16 %v4185
      %v4314 = vunpack.c.l.b16 %v4186
      %v4315 = vunpack.c.l.b16 %v4187
      %v4316 = vunpack.c.l.b16 %v4188
      %v4317 = vunpack.c.l.b16 %v4189
      %v4318 = vunpack.c.l.b16 %v4190
      %v4319 = vunpack.c.l.b16 %v4191
      %v4320 = vunpack.c.l.b16 %v4192
      %v4321 = vunpack.c.l.b16 %v4193
      %v4322 = vpack.c.b16 %v4307, %v4306
      %v4323 = vpack.c.b16 %v4309, %v4308
      %v4324 = vpack.c.b16 %v4311, %v4310
      %v4325 = vpack.c.b16 %v4313, %v4312
      %v4326 = vpack.c.b16 %v4315, %v4314
      %v4327 = vpack.c.b16 %v4317, %v4316
      %v4328 = vpack.c.b16 %v4319, %v4318
      %v4329 = vpack.c.b16 %v4321, %v4320
      %4338 = vmatpush.bf16.msra.mxu0 %v4329
      %4339 = vmatpush.bf16.msra.mxu0 %v4328
      %4340 = vmatpush.bf16.msra.mxu0 %v4327
      %4341 = vmatpush.bf16.msra.mxu0 %v4326
      %4342 = vmatpush.bf16.msra.mxu0 %v4325
      %4343 = vmatpush.bf16.msra.mxu0 %v4324
      %4344 = vmatpush.bf16.msra.mxu0 %v4323
      %4345 = vmatpush.bf16.msra.mxu0 %v4322
      %4346 = vmatmul.bf16.gmra.mxu0 %v4258
      %v4347 = vpop.f32.mrf.mxu0
      %v4348 = vadd.f32 0.0, %v4347
      %v4349 = vpop.f32.mrf.mxu0
      %v4350 = vadd.f32 0.0, %v4349
      %4351 = vmatmul.bf16.gmra.mxu0 %v4259
      %v4352 = vpop.f32.mrf.mxu0
      %v4353 = vadd.f32 0.0, %v4352
      %v4354 = vpop.f32.mrf.mxu0
      %v4355 = vadd.f32 0.0, %v4354
      %4356 = vmatmul.bf16.gmra.mxu0 %v4260
      %v4357 = vpop.f32.mrf.mxu0
      %v4358 = vadd.f32 0.0, %v4357
      %v4359 = vpop.f32.mrf.mxu0
      %v4360 = vadd.f32 0.0, %v4359
      %4361 = vmatmul.bf16.gmra.mxu0 %v4261
      %v4362 = vpop.f32.mrf.mxu0
      %v4363 = vadd.f32 0.0, %v4362
      %v4364 = vpop.f32.mrf.mxu0
      %v4365 = vadd.f32 0.0, %v4364
      %4366 = vmatmul.bf16.gmra.mxu0 %v4262
      %v4367 = vpop.f32.mrf.mxu0
      %v4368 = vadd.f32 0.0, %v4367
      %v4369 = vpop.f32.mrf.mxu0
      %v4370 = vadd.f32 0.0, %v4369
      %4371 = vmatmul.bf16.gmra.mxu0 %v4263
      %v4372 = vpop.f32.mrf.mxu0
      %v4373 = vadd.f32 0.0, %v4372
      %v4374 = vpop.f32.mrf.mxu0
      %v4375 = vadd.f32 0.0, %v4374
      %4376 = vmatmul.bf16.gmra.mxu0 %v4264
      %v4377 = vpop.f32.mrf.mxu0
      %v4378 = vadd.f32 0.0, %v4377
      %v4379 = vpop.f32.mrf.mxu0
      %v4380 = vadd.f32 0.0, %v4379
      %4381 = vmatmul.bf16.gmra.mxu0 %v4265
      %v4382 = vpop.f32.mrf.mxu0
      %v4383 = vadd.f32 0.0, %v4382
      %v4384 = vpop.f32.mrf.mxu0
      %v4385 = vadd.f32 0.0, %v4384
      %4386 = vmatmul.bf16.gmra.mxu0 %v4266
      %v4387 = vpop.f32.mrf.mxu0
      %v4388 = vadd.f32 0.0, %v4387
      %v4389 = vpop.f32.mrf.mxu0
      %v4390 = vadd.f32 0.0, %v4389
      %4391 = vmatmul.bf16.gmra.mxu0 %v4267
      %v4392 = vpop.f32.mrf.mxu0
      %v4393 = vadd.f32 0.0, %v4392
      %v4394 = vpop.f32.mrf.mxu0
      %v4395 = vadd.f32 0.0, %v4394
      %4396 = vmatmul.bf16.gmra.mxu0 %v4268
      %v4397 = vpop.f32.mrf.mxu0
      %v4398 = vadd.f32 0.0, %v4397
      %v4399 = vpop.f32.mrf.mxu0
      %v4400 = vadd.f32 0.0, %v4399
      %4401 = vmatmul.bf16.gmra.mxu0 %v4269
      %v4402 = vpop.f32.mrf.mxu0
      %v4403 = vadd.f32 0.0, %v4402
      %v4404 = vpop.f32.mrf.mxu0
      %v4405 = vadd.f32 0.0, %v4404
      %4406 = vmatmul.bf16.gmra.mxu0 %v4270
      %v4407 = vpop.f32.mrf.mxu0
      %v4408 = vadd.f32 0.0, %v4407
      %v4409 = vpop.f32.mrf.mxu0
      %v4410 = vadd.f32 0.0, %v4409
      %4411 = vmatmul.bf16.gmra.mxu0 %v4271
      %v4412 = vpop.f32.mrf.mxu0
      %v4413 = vadd.f32 0.0, %v4412
      %v4414 = vpop.f32.mrf.mxu0
      %v4415 = vadd.f32 0.0, %v4414
      %4416 = vmatmul.bf16.gmra.mxu0 %v4272
      %v4417 = vpop.f32.mrf.mxu0
      %v4418 = vadd.f32 0.0, %v4417
      %v4419 = vpop.f32.mrf.mxu0
      %v4420 = vadd.f32 0.0, %v4419
      %4421 = vmatmul.bf16.gmra.mxu0 %v4273
      %v4422 = vpop.f32.mrf.mxu0
      %v4423 = vadd.f32 0.0, %v4422
      %v4424 = vpop.f32.mrf.mxu0
      %v4425 = vadd.f32 0.0, %v4424
      %4426 = vdwg.mxu0
      %v4427 = vadd.f32 %v4146, %v4348
      %v4428 = vadd.f32 %v4147, %v4350
      %v4429 = vadd.f32 %v4148, %v4353
      %v4430 = vadd.f32 %v4149, %v4355
      %v4431 = vadd.f32 %v4150, %v4358
      %v4432 = vadd.f32 %v4151, %v4360
      %v4433 = vadd.f32 %v4152, %v4363
      %v4434 = vadd.f32 %v4153, %v4365
      %v4435 = vadd.f32 %v4154, %v4368
      %v4436 = vadd.f32 %v4155, %v4370
      %v4437 = vadd.f32 %v4156, %v4373
      %v4438 = vadd.f32 %v4157, %v4375
      %v4439 = vadd.f32 %v4158, %v4378
      %v4440 = vadd.f32 %v4159, %v4380
      %v4441 = vadd.f32 %v4160, %v4383
      %v4442 = vadd.f32 %v4161, %v4385
      %v4443 = vadd.f32 %v4162, %v4388
      %v4444 = vadd.f32 %v4163, %v4390
      %v4445 = vadd.f32 %v4164, %v4393
      %v4446 = vadd.f32 %v4165, %v4395
      %v4447 = vadd.f32 %v4166, %v4398
      %v4448 = vadd.f32 %v4167, %v4400
      %v4449 = vadd.f32 %v4168, %v4403
      %v4450 = vadd.f32 %v4169, %v4405
      %v4451 = vadd.f32 %v4170, %v4408
      %v4452 = vadd.f32 %v4171, %v4410
      %v4453 = vadd.f32 %v4172, %v4413
      %v4454 = vadd.f32 %v4173, %v4415
      %v4455 = vadd.f32 %v4174, %v4418
      %v4456 = vadd.f32 %v4175, %v4420
      %v4457 = vadd.f32 %v4176, %v4423
      %v4458 = vadd.f32 %v4177, %v4425
      %v4459 = vld [vmem:[%s3528 + $0x8] sm:$0xf]
      %v4460 = vld [vmem:[%s3528 + $0xc] sm:$0xf]
      %v4461 = vld [vmem:[%s3528 + $0x10] sm:$0x1]
      %v4462 = vld [vmem:[%s3528 + $0x20] sm:$0xf]
      %v4463 = vld [vmem:[%s3528 + $0x24] sm:$0xf]
      %v4464 = vld [vmem:[%s3528 + $0x28] sm:$0x1]
      %v4465 = vld [vmem:[%s3528 + $0x38] sm:$0xf]
      %v4466 = vld [vmem:[%s3528 + $0x3c] sm:$0xf]
      %v4467 = vld [vmem:[%s3528 + $0x40] sm:$0x1]
      %v4468 = vld [vmem:[%s3528 + $0x50] sm:$0xf]
      %v4469 = vld [vmem:[%s3528 + $0x54] sm:$0xf]
      %v4470 = vld [vmem:[%s3528 + $0x58] sm:$0x1]
      %v4471 = vld [vmem:[%s3528 + $0x68] sm:$0xf]
      %v4472 = vld [vmem:[%s3528 + $0x6c] sm:$0xf]
      %v4473 = vld [vmem:[%s3528 + $0x70] sm:$0x1]
      %v4474 = vld [vmem:[%s3528 + $0x80] sm:$0xf]
      %v4475 = vld [vmem:[%s3528 + $0x84] sm:$0xf]
      %v4476 = vld [vmem:[%s3528 + $0x88] sm:$0x1]
      %v4477 = vld [vmem:[%s3528 + $0x98] sm:$0xf]
      %v4478 = vld [vmem:[%s3528 + $0x9c] sm:$0xf]
      %v4479 = vld [vmem:[%s3528 + $0xa0] sm:$0x1]
      %v4480 = vld [vmem:[%s3528 + $0xb0] sm:$0xf]
      %v4481 = vld [vmem:[%s3528 + $0xb4] sm:$0xf]
      %v4482 = vld [vmem:[%s3528 + $0xb8] sm:$0x1]
      %v4483 = vld [vmem:[%s3528 + $0xc8] sm:$0xf]
      %v4484 = vld [vmem:[%s3528 + $0xcc] sm:$0xf]
      %v4485 = vld [vmem:[%s3528 + $0xd0] sm:$0x1]
      %v4486 = vld [vmem:[%s3528 + $0xe0] sm:$0xf]
      %v4487 = vld [vmem:[%s3528 + $0xe4] sm:$0xf]
      %v4488 = vld [vmem:[%s3528 + $0xe8] sm:$0x1]
      %v4489 = vld [vmem:[%s3528 + $0xf8] sm:$0xf]
      %v4490 = vld [vmem:[%s3528 + $0xfc] sm:$0xf]
      %v4491 = vld [vmem:[%s3528 + $0x100] sm:$0x1]
      %v4492 = vld [vmem:[%s3528 + $0x110] sm:$0xf]
      %v4493 = vld [vmem:[%s3528 + $0x114] sm:$0xf]
      %v4494 = vld [vmem:[%s3528 + $0x118] sm:$0x1]
      %v4495 = vld [vmem:[%s3528 + $0x128] sm:$0xf]
      %v4496 = vld [vmem:[%s3528 + $0x12c] sm:$0xf]
      %v4497 = vld [vmem:[%s3528 + $0x130] sm:$0x1]
      %v4498 = vld [vmem:[%s3528 + $0x140] sm:$0xf]
      %v4499 = vld [vmem:[%s3528 + $0x144] sm:$0xf]
      %v4500 = vld [vmem:[%s3528 + $0x148] sm:$0x1]
      %v4501 = vld [vmem:[%s3528 + $0x158] sm:$0xf]
      %v4502 = vld [vmem:[%s3528 + $0x15c] sm:$0xf]
      %v4503 = vld [vmem:[%s3528 + $0x160] sm:$0x1]
      %v4504 = vld [vmem:[%s3528 + $0x170] sm:$0xf]
      %v4505 = vld [vmem:[%s3528 + $0x174] sm:$0xf]
      %v4506 = vld [vmem:[%s3528 + $0x178] sm:$0x1]
      %v4508 = vshrl.u32 %v4459, 16
      %v4510 = vrot.slane %v4508, 4
      %v4511 = vshll.u32 %v4459, 16
      %v4513 = vrot.slane %v4511, 5
      %v4514 = vor.u32 %v4510, %v4513
      %v4515 = vrot.slane %v4514, 4
      %v4517 = vshll.u32 %v4460, 16
      %v4519 = vrot.slane %v4517, 5
      %v4520 = vsel %vm1283, %v4515, %v4519
      %v4521 = vshrl.u32 %v4460, 16
      %v4523 = vrot.slane %v4521, 4
      %v4524 = vor.u32 %v4523, %v4519
      %v4525 = vrot.slane %v4524, 4
      %v4527 = vshll.u32 %v4461, 16
      %v4529 = vrot.slane %v4527, 5
      %v4530 = vsel %vm1283, %v4525, %v4529
      %v4532 = vshrl.u32 %v4462, 16
      %v4534 = vrot.slane %v4532, 4
      %v4535 = vshll.u32 %v4462, 16
      %v4537 = vrot.slane %v4535, 5
      %v4538 = vor.u32 %v4534, %v4537
      %v4539 = vrot.slane %v4538, 4
      %v4541 = vshll.u32 %v4463, 16
      %v4543 = vrot.slane %v4541, 5
      %v4544 = vsel %vm1283, %v4539, %v4543
      %v4545 = vshrl.u32 %v4463, 16
      %v4547 = vrot.slane %v4545, 4
      %v4548 = vor.u32 %v4547, %v4543
      %v4549 = vrot.slane %v4548, 4
      %v4551 = vshll.u32 %v4464, 16
      %v4553 = vrot.slane %v4551, 5
      %v4554 = vsel %vm1283, %v4549, %v4553
      %v4556 = vshrl.u32 %v4465, 16
      %v4558 = vrot.slane %v4556, 4
      %v4559 = vshll.u32 %v4465, 16
      %v4561 = vrot.slane %v4559, 5
      %v4562 = vor.u32 %v4558, %v4561
      %v4563 = vrot.slane %v4562, 4
      %v4565 = vshll.u32 %v4466, 16
      %v4567 = vrot.slane %v4565, 5
      %v4568 = vsel %vm1283, %v4563, %v4567
      %v4569 = vshrl.u32 %v4466, 16
      %v4571 = vrot.slane %v4569, 4
      %v4572 = vor.u32 %v4571, %v4567
      %v4573 = vrot.slane %v4572, 4
      %v4575 = vshll.u32 %v4467, 16
      %v4577 = vrot.slane %v4575, 5
      %v4578 = vsel %vm1283, %v4573, %v4577
      %v4580 = vshrl.u32 %v4468, 16
      %v4582 = vrot.slane %v4580, 4
      %v4583 = vshll.u32 %v4468, 16
      %v4585 = vrot.slane %v4583, 5
      %v4586 = vor.u32 %v4582, %v4585
      %v4587 = vrot.slane %v4586, 4
      %v4589 = vshll.u32 %v4469, 16
      %v4591 = vrot.slane %v4589, 5
      %v4592 = vsel %vm1283, %v4587, %v4591
      %v4593 = vshrl.u32 %v4469, 16
      %v4595 = vrot.slane %v4593, 4
      %v4596 = vor.u32 %v4595, %v4591
      %v4597 = vrot.slane %v4596, 4
      %v4599 = vshll.u32 %v4470, 16
      %v4601 = vrot.slane %v4599, 5
      %v4602 = vsel %vm1283, %v4597, %v4601
      %v4604 = vshrl.u32 %v4471, 16
      %v4606 = vrot.slane %v4604, 4
      %v4607 = vshll.u32 %v4471, 16
      %v4609 = vrot.slane %v4607, 5
      %v4610 = vor.u32 %v4606, %v4609
      %v4611 = vrot.slane %v4610, 4
      %v4613 = vshll.u32 %v4472, 16
      %v4615 = vrot.slane %v4613, 5
      %v4616 = vsel %vm1283, %v4611, %v4615
      %v4617 = vshrl.u32 %v4472, 16
      %v4619 = vrot.slane %v4617, 4
      %v4620 = vor.u32 %v4619, %v4615
      %v4621 = vrot.slane %v4620, 4
      %v4623 = vshll.u32 %v4473, 16
      %v4625 = vrot.slane %v4623, 5
      %v4626 = vsel %vm1283, %v4621, %v4625
      %v4628 = vshrl.u32 %v4474, 16
      %v4630 = vrot.slane %v4628, 4
      %v4631 = vshll.u32 %v4474, 16
      %v4633 = vrot.slane %v4631, 5
      %v4634 = vor.u32 %v4630, %v4633
      %v4635 = vrot.slane %v4634, 4
      %v4637 = vshll.u32 %v4475, 16
      %v4639 = vrot.slane %v4637, 5
      %v4640 = vsel %vm1283, %v4635, %v4639
      %v4641 = vshrl.u32 %v4475, 16
      %v4643 = vrot.slane %v4641, 4
      %v4644 = vor.u32 %v4643, %v4639
      %v4645 = vrot.slane %v4644, 4
      %v4647 = vshll.u32 %v4476, 16
      %v4649 = vrot.slane %v4647, 5
      %v4650 = vsel %vm1283, %v4645, %v4649
      %v4652 = vshrl.u32 %v4477, 16
      %v4654 = vrot.slane %v4652, 4
      %v4655 = vshll.u32 %v4477, 16
      %v4657 = vrot.slane %v4655, 5
      %v4658 = vor.u32 %v4654, %v4657
      %v4659 = vrot.slane %v4658, 4
      %v4661 = vshll.u32 %v4478, 16
      %v4663 = vrot.slane %v4661, 5
      %v4664 = vsel %vm1283, %v4659, %v4663
      %v4665 = vshrl.u32 %v4478, 16
      %v4667 = vrot.slane %v4665, 4
      %v4668 = vor.u32 %v4667, %v4663
      %v4669 = vrot.slane %v4668, 4
      %v4671 = vshll.u32 %v4479, 16
      %v4673 = vrot.slane %v4671, 5
      %v4674 = vsel %vm1283, %v4669, %v4673
      %v4676 = vshrl.u32 %v4480, 16
      %v4678 = vrot.slane %v4676, 4
      %v4679 = vshll.u32 %v4480, 16
      %v4681 = vrot.slane %v4679, 5
      %v4682 = vor.u32 %v4678, %v4681
      %v4683 = vrot.slane %v4682, 4
      %v4685 = vshll.u32 %v4481, 16
      %v4687 = vrot.slane %v4685, 5
      %v4688 = vsel %vm1283, %v4683, %v4687
      %v4689 = vshrl.u32 %v4481, 16
      %v4691 = vrot.slane %v4689, 4
      %v4692 = vor.u32 %v4691, %v4687
      %v4693 = vrot.slane %v4692, 4
      %v4695 = vshll.u32 %v4482, 16
      %v4697 = vrot.slane %v4695, 5
      %v4698 = vsel %vm1283, %v4693, %v4697
      %v4700 = vshrl.u32 %v4483, 16
      %v4702 = vrot.slane %v4700, 4
      %v4703 = vshll.u32 %v4483, 16
      %v4705 = vrot.slane %v4703, 5
      %v4706 = vor.u32 %v4702, %v4705
      %v4707 = vrot.slane %v4706, 4
      %v4709 = vshll.u32 %v4484, 16
      %v4711 = vrot.slane %v4709, 5
      %v4712 = vsel %vm1283, %v4707, %v4711
      %v4713 = vshrl.u32 %v4484, 16
      %v4715 = vrot.slane %v4713, 4
      %v4716 = vor.u32 %v4715, %v4711
      %v4717 = vrot.slane %v4716, 4
      %v4719 = vshll.u32 %v4485, 16
      %v4721 = vrot.slane %v4719, 5
      %v4722 = vsel %vm1283, %v4717, %v4721
      %v4724 = vshrl.u32 %v4486, 16
      %v4726 = vrot.slane %v4724, 4
      %v4727 = vshll.u32 %v4486, 16
      %v4729 = vrot.slane %v4727, 5
      %v4730 = vor.u32 %v4726, %v4729
      %v4731 = vrot.slane %v4730, 4
      %v4733 = vshll.u32 %v4487, 16
      %v4735 = vrot.slane %v4733, 5
      %v4736 = vsel %vm1283, %v4731, %v4735
      %v4737 = vshrl.u32 %v4487, 16
      %v4739 = vrot.slane %v4737, 4
      %v4740 = vor.u32 %v4739, %v4735
      %v4741 = vrot.slane %v4740, 4
      %v4743 = vshll.u32 %v4488, 16
      %v4745 = vrot.slane %v4743, 5
      %v4746 = vsel %vm1283, %v4741, %v4745
      %v4748 = vshrl.u32 %v4489, 16
      %v4750 = vrot.slane %v4748, 4
      %v4751 = vshll.u32 %v4489, 16
      %v4753 = vrot.slane %v4751, 5
      %v4754 = vor.u32 %v4750, %v4753
      %v4755 = vrot.slane %v4754, 4
      %v4757 = vshll.u32 %v4490, 16
      %v4759 = vrot.slane %v4757, 5
      %v4760 = vsel %vm1283, %v4755, %v4759
      %v4761 = vshrl.u32 %v4490, 16
      %v4763 = vrot.slane %v4761, 4
      %v4764 = vor.u32 %v4763, %v4759
      %v4765 = vrot.slane %v4764, 4
      %v4767 = vshll.u32 %v4491, 16
      %v4769 = vrot.slane %v4767, 5
      %v4770 = vsel %vm1283, %v4765, %v4769
      %v4772 = vshrl.u32 %v4492, 16
      %v4774 = vrot.slane %v4772, 4
      %v4775 = vshll.u32 %v4492, 16
      %v4777 = vrot.slane %v4775, 5
      %v4778 = vor.u32 %v4774, %v4777
      %v4779 = vrot.slane %v4778, 4
      %v4781 = vshll.u32 %v4493, 16
      %v4783 = vrot.slane %v4781, 5
      %v4784 = vsel %vm1283, %v4779, %v4783
      %v4785 = vshrl.u32 %v4493, 16
      %v4787 = vrot.slane %v4785, 4
      %v4788 = vor.u32 %v4787, %v4783
      %v4789 = vrot.slane %v4788, 4
      %v4791 = vshll.u32 %v4494, 16
      %v4793 = vrot.slane %v4791, 5
      %v4794 = vsel %vm1283, %v4789, %v4793
      %v4796 = vshrl.u32 %v4495, 16
      %v4798 = vrot.slane %v4796, 4
      %v4799 = vshll.u32 %v4495, 16
      %v4801 = vrot.slane %v4799, 5
      %v4802 = vor.u32 %v4798, %v4801
      %v4803 = vrot.slane %v4802, 4
      %v4805 = vshll.u32 %v4496, 16
      %v4807 = vrot.slane %v4805, 5
      %v4808 = vsel %vm1283, %v4803, %v4807
      %v4809 = vshrl.u32 %v4496, 16
      %v4811 = vrot.slane %v4809, 4
      %v4812 = vor.u32 %v4811, %v4807
      %v4813 = vrot.slane %v4812, 4
      %v4815 = vshll.u32 %v4497, 16
      %v4817 = vrot.slane %v4815, 5
      %v4818 = vsel %vm1283, %v4813, %v4817
      %v4820 = vshrl.u32 %v4498, 16
      %v4822 = vrot.slane %v4820, 4
      %v4823 = vshll.u32 %v4498, 16
      %v4825 = vrot.slane %v4823, 5
      %v4826 = vor.u32 %v4822, %v4825
      %v4827 = vrot.slane %v4826, 4
      %v4829 = vshll.u32 %v4499, 16
      %v4831 = vrot.slane %v4829, 5
      %v4832 = vsel %vm1283, %v4827, %v4831
      %v4833 = vshrl.u32 %v4499, 16
      %v4835 = vrot.slane %v4833, 4
      %v4836 = vor.u32 %v4835, %v4831
      %v4837 = vrot.slane %v4836, 4
      %v4839 = vshll.u32 %v4500, 16
      %v4841 = vrot.slane %v4839, 5
      %v4842 = vsel %vm1283, %v4837, %v4841
      %v4844 = vshrl.u32 %v4501, 16
      %v4846 = vrot.slane %v4844, 4
      %v4847 = vshll.u32 %v4501, 16
      %v4849 = vrot.slane %v4847, 5
      %v4850 = vor.u32 %v4846, %v4849
      %v4851 = vrot.slane %v4850, 4
      %v4853 = vshll.u32 %v4502, 16
      %v4855 = vrot.slane %v4853, 5
      %v4856 = vsel %vm1283, %v4851, %v4855
      %v4857 = vshrl.u32 %v4502, 16
      %v4859 = vrot.slane %v4857, 4
      %v4860 = vor.u32 %v4859, %v4855
      %v4861 = vrot.slane %v4860, 4
      %v4863 = vshll.u32 %v4503, 16
      %v4865 = vrot.slane %v4863, 5
      %v4866 = vsel %vm1283, %v4861, %v4865
      %v4868 = vshrl.u32 %v4504, 16
      %v4870 = vrot.slane %v4868, 4
      %v4871 = vshll.u32 %v4504, 16
      %v4873 = vrot.slane %v4871, 5
      %v4874 = vor.u32 %v4870, %v4873
      %v4875 = vrot.slane %v4874, 4
      %v4877 = vshll.u32 %v4505, 16
      %v4879 = vrot.slane %v4877, 5
      %v4880 = vsel %vm1283, %v4875, %v4879
      %v4881 = vshrl.u32 %v4505, 16
      %v4883 = vrot.slane %v4881, 4
      %v4884 = vor.u32 %v4883, %v4879
      %v4885 = vrot.slane %v4884, 4
      %v4887 = vshll.u32 %v4506, 16
      %v4889 = vrot.slane %v4887, 5
      %v4890 = vsel %vm1283, %v4885, %v4889
      %v4891 = vld [vmem:[%s1 + $0x200] sm:$0xf]
      %v4892 = vld [vmem:[%s1 + $0x204] sm:$0xf]
      %v4893 = vld [vmem:[%s1 + $0x208] sm:$0xf]
      %v4894 = vld [vmem:[%s1 + $0x20c] sm:$0xf]
      %v4895 = vld [vmem:[%s1 + $0x210] sm:$0xf]
      %v4896 = vld [vmem:[%s1 + $0x214] sm:$0xf]
      %v4897 = vld [vmem:[%s1 + $0x218] sm:$0xf]
      %v4898 = vld [vmem:[%s1 + $0x21c] sm:$0xf]
      %v4899 = vld [vmem:[%s1 + $0x220] sm:$0xf]
      %v4900 = vld [vmem:[%s1 + $0x224] sm:$0xf]
      %v4901 = vld [vmem:[%s1 + $0x228] sm:$0xf]
      %v4902 = vld [vmem:[%s1 + $0x22c] sm:$0xf]
      %v4903 = vld [vmem:[%s1 + $0x230] sm:$0xf]
      %v4904 = vld [vmem:[%s1 + $0x234] sm:$0xf]
      %v4905 = vld [vmem:[%s1 + $0x238] sm:$0xf]
      %v4906 = vld [vmem:[%s1 + $0x23c] sm:$0xf]
      %v4907 = vunpack.c.l.b16 %v4520
      %v4908 = vunpack.c.l.b16 %v4530
      %v4909 = vunpack.c.l.b16 %v4544
      %v4910 = vunpack.c.l.b16 %v4554
      %v4911 = vunpack.c.l.b16 %v4568
      %v4912 = vunpack.c.l.b16 %v4578
      %v4913 = vunpack.c.l.b16 %v4592
      %v4914 = vunpack.c.l.b16 %v4602
      %v4915 = vunpack.c.l.b16 %v4616
      %v4916 = vunpack.c.l.b16 %v4626
      %v4917 = vunpack.c.l.b16 %v4640
      %v4918 = vunpack.c.l.b16 %v4650
      %v4919 = vunpack.c.l.b16 %v4664
      %v4920 = vunpack.c.l.b16 %v4674
      %v4921 = vunpack.c.l.b16 %v4688
      %v4922 = vunpack.c.l.b16 %v4698
      %v4923 = vunpack.c.l.b16 %v4712
      %v4924 = vunpack.c.l.b16 %v4722
      %v4925 = vunpack.c.l.b16 %v4736
      %v4926 = vunpack.c.l.b16 %v4746
      %v4927 = vunpack.c.l.b16 %v4760
      %v4928 = vunpack.c.l.b16 %v4770
      %v4929 = vunpack.c.l.b16 %v4784
      %v4930 = vunpack.c.l.b16 %v4794
      %v4931 = vunpack.c.l.b16 %v4808
      %v4932 = vunpack.c.l.b16 %v4818
      %v4933 = vunpack.c.l.b16 %v4832
      %v4934 = vunpack.c.l.b16 %v4842
      %v4935 = vunpack.c.l.b16 %v4856
      %v4936 = vunpack.c.l.b16 %v4866
      %v4937 = vunpack.c.l.b16 %v4880
      %v4938 = vunpack.c.l.b16 %v4890
      %v4939 = vpack.c.b16 %v4908, %v4907
      %v4940 = vpack.c.b16 %v4910, %v4909
      %v4941 = vpack.c.b16 %v4912, %v4911
      %v4942 = vpack.c.b16 %v4914, %v4913
      %v4943 = vpack.c.b16 %v4916, %v4915
      %v4944 = vpack.c.b16 %v4918, %v4917
      %v4945 = vpack.c.b16 %v4920, %v4919
      %v4946 = vpack.c.b16 %v4922, %v4921
      %v4947 = vpack.c.b16 %v4924, %v4923
      %v4948 = vpack.c.b16 %v4926, %v4925
      %v4949 = vpack.c.b16 %v4928, %v4927
      %v4950 = vpack.c.b16 %v4930, %v4929
      %v4951 = vpack.c.b16 %v4932, %v4931
      %v4952 = vpack.c.b16 %v4934, %v4933
      %v4953 = vpack.c.b16 %v4936, %v4935
      %v4954 = vpack.c.b16 %v4938, %v4937
      %v4987 = vunpack.c.l.b16 %v4891
      %v4988 = vunpack.c.l.b16 %v4892
      %v4989 = vunpack.c.l.b16 %v4893
      %v4990 = vunpack.c.l.b16 %v4894
      %v4991 = vunpack.c.l.b16 %v4895
      %v4992 = vunpack.c.l.b16 %v4896
      %v4993 = vunpack.c.l.b16 %v4897
      %v4994 = vunpack.c.l.b16 %v4898
      %v4995 = vunpack.c.l.b16 %v4899
      %v4996 = vunpack.c.l.b16 %v4900
      %v4997 = vunpack.c.l.b16 %v4901
      %v4998 = vunpack.c.l.b16 %v4902
      %v4999 = vunpack.c.l.b16 %v4903
      %v5000 = vunpack.c.l.b16 %v4904
      %v5001 = vunpack.c.l.b16 %v4905
      %v5002 = vunpack.c.l.b16 %v4906
      %v5003 = vpack.c.b16 %v4988, %v4987
      %v5004 = vpack.c.b16 %v4990, %v4989
      %v5005 = vpack.c.b16 %v4992, %v4991
      %v5006 = vpack.c.b16 %v4994, %v4993
      %v5007 = vpack.c.b16 %v4996, %v4995
      %v5008 = vpack.c.b16 %v4998, %v4997
      %v5009 = vpack.c.b16 %v5000, %v4999
      %v5010 = vpack.c.b16 %v5002, %v5001
      %5019 = vmatpush.bf16.msra.mxu0 %v5010
      %5020 = vmatpush.bf16.msra.mxu0 %v5009
      %5021 = vmatpush.bf16.msra.mxu0 %v5008
      %5022 = vmatpush.bf16.msra.mxu0 %v5007
      %5023 = vmatpush.bf16.msra.mxu0 %v5006
      %5024 = vmatpush.bf16.msra.mxu0 %v5005
      %5025 = vmatpush.bf16.msra.mxu0 %v5004
      %5026 = vmatpush.bf16.msra.mxu0 %v5003
      %5027 = vmatmul.bf16.gmra.mxu0 %v4939
      %v5028 = vpop.f32.mrf.mxu0
      %v5029 = vadd.f32 0.0, %v5028
      %v5030 = vpop.f32.mrf.mxu0
      %v5031 = vadd.f32 0.0, %v5030
      %5032 = vmatmul.bf16.gmra.mxu0 %v4940
      %v5033 = vpop.f32.mrf.mxu0
      %v5034 = vadd.f32 0.0, %v5033
      %v5035 = vpop.f32.mrf.mxu0
      %v5036 = vadd.f32 0.0, %v5035
      %5037 = vmatmul.bf16.gmra.mxu0 %v4941
      %v5038 = vpop.f32.mrf.mxu0
      %v5039 = vadd.f32 0.0, %v5038
      %v5040 = vpop.f32.mrf.mxu0
      %v5041 = vadd.f32 0.0, %v5040
      %5042 = vmatmul.bf16.gmra.mxu0 %v4942
      %v5043 = vpop.f32.mrf.mxu0
      %v5044 = vadd.f32 0.0, %v5043
      %v5045 = vpop.f32.mrf.mxu0
      %v5046 = vadd.f32 0.0, %v5045
      %5047 = vmatmul.bf16.gmra.mxu0 %v4943
      %v5048 = vpop.f32.mrf.mxu0
      %v5049 = vadd.f32 0.0, %v5048
      %v5050 = vpop.f32.mrf.mxu0
      %v5051 = vadd.f32 0.0, %v5050
      %5052 = vmatmul.bf16.gmra.mxu0 %v4944
      %v5053 = vpop.f32.mrf.mxu0
      %v5054 = vadd.f32 0.0, %v5053
      %v5055 = vpop.f32.mrf.mxu0
      %v5056 = vadd.f32 0.0, %v5055
      %5057 = vmatmul.bf16.gmra.mxu0 %v4945
      %v5058 = vpop.f32.mrf.mxu0
      %v5059 = vadd.f32 0.0, %v5058
      %v5060 = vpop.f32.mrf.mxu0
      %v5061 = vadd.f32 0.0, %v5060
      %5062 = vmatmul.bf16.gmra.mxu0 %v4946
      %v5063 = vpop.f32.mrf.mxu0
      %v5064 = vadd.f32 0.0, %v5063
      %v5065 = vpop.f32.mrf.mxu0
      %v5066 = vadd.f32 0.0, %v5065
      %5067 = vmatmul.bf16.gmra.mxu0 %v4947
      %v5068 = vpop.f32.mrf.mxu0
      %v5069 = vadd.f32 0.0, %v5068
      %v5070 = vpop.f32.mrf.mxu0
      %v5071 = vadd.f32 0.0, %v5070
      %5072 = vmatmul.bf16.gmra.mxu0 %v4948
      %v5073 = vpop.f32.mrf.mxu0
      %v5074 = vadd.f32 0.0, %v5073
      %v5075 = vpop.f32.mrf.mxu0
      %v5076 = vadd.f32 0.0, %v5075
      %5077 = vmatmul.bf16.gmra.mxu0 %v4949
      %v5078 = vpop.f32.mrf.mxu0
      %v5079 = vadd.f32 0.0, %v5078
      %v5080 = vpop.f32.mrf.mxu0
      %v5081 = vadd.f32 0.0, %v5080
      %5082 = vmatmul.bf16.gmra.mxu0 %v4950
      %v5083 = vpop.f32.mrf.mxu0
      %v5084 = vadd.f32 0.0, %v5083
      %v5085 = vpop.f32.mrf.mxu0
      %v5086 = vadd.f32 0.0, %v5085
      %5087 = vmatmul.bf16.gmra.mxu0 %v4951
      %v5088 = vpop.f32.mrf.mxu0
      %v5089 = vadd.f32 0.0, %v5088
      %v5090 = vpop.f32.mrf.mxu0
      %v5091 = vadd.f32 0.0, %v5090
      %5092 = vmatmul.bf16.gmra.mxu0 %v4952
      %v5093 = vpop.f32.mrf.mxu0
      %v5094 = vadd.f32 0.0, %v5093
      %v5095 = vpop.f32.mrf.mxu0
      %v5096 = vadd.f32 0.0, %v5095
      %5097 = vmatmul.bf16.gmra.mxu0 %v4953
      %v5098 = vpop.f32.mrf.mxu0
      %v5099 = vadd.f32 0.0, %v5098
      %v5100 = vpop.f32.mrf.mxu0
      %v5101 = vadd.f32 0.0, %v5100
      %5102 = vmatmul.bf16.gmra.mxu0 %v4954
      %v5103 = vpop.f32.mrf.mxu0
      %v5104 = vadd.f32 0.0, %v5103
      %v5105 = vpop.f32.mrf.mxu0
      %v5106 = vadd.f32 0.0, %v5105
      %5107 = vdwg.mxu0
      %v5108 = vadd.f32 %v4427, %v5029
      %v5109 = vadd.f32 %v4428, %v5031
      %v5110 = vadd.f32 %v4429, %v5034
      %v5111 = vadd.f32 %v4430, %v5036
      %v5112 = vadd.f32 %v4431, %v5039
      %v5113 = vadd.f32 %v4432, %v5041
      %v5114 = vadd.f32 %v4433, %v5044
      %v5115 = vadd.f32 %v4434, %v5046
      %v5116 = vadd.f32 %v4435, %v5049
      %v5117 = vadd.f32 %v4436, %v5051
      %v5118 = vadd.f32 %v4437, %v5054
      %v5119 = vadd.f32 %v4438, %v5056
      %v5120 = vadd.f32 %v4439, %v5059
      %v5121 = vadd.f32 %v4440, %v5061
      %v5122 = vadd.f32 %v4441, %v5064
      %v5123 = vadd.f32 %v4442, %v5066
      %v5124 = vadd.f32 %v4443, %v5069
      %v5125 = vadd.f32 %v4444, %v5071
      %v5126 = vadd.f32 %v4445, %v5074
      %v5127 = vadd.f32 %v4446, %v5076
      %v5128 = vadd.f32 %v4447, %v5079
      %v5129 = vadd.f32 %v4448, %v5081
      %v5130 = vadd.f32 %v4449, %v5084
      %v5131 = vadd.f32 %v4450, %v5086
      %v5132 = vadd.f32 %v4451, %v5089
      %v5133 = vadd.f32 %v4452, %v5091
      %v5134 = vadd.f32 %v4453, %v5094
      %v5135 = vadd.f32 %v4454, %v5096
      %v5136 = vadd.f32 %v4455, %v5099
      %v5137 = vadd.f32 %v4456, %v5101
      %v5138 = vadd.f32 %v4457, %v5104
      %v5139 = vadd.f32 %v4458, %v5106
      %v5140 = vld [vmem:[%s2] sm:$0x1]
      %v5142 = vperm.slane %v5140, 0
      %v5144 = vadd.f32 %v5108, %v5142
      %v5145 = vadd.f32 %v5109, %v5142
      %v5146 = vadd.f32 %v5110, %v5142
      %v5147 = vadd.f32 %v5111, %v5142
      %v5148 = vadd.f32 %v5112, %v5142
      %v5149 = vadd.f32 %v5113, %v5142
      %v5150 = vadd.f32 %v5114, %v5142
      %v5151 = vadd.f32 %v5115, %v5142
      %v5152 = vadd.f32 %v5116, %v5142
      %v5153 = vadd.f32 %v5117, %v5142
      %v5154 = vadd.f32 %v5118, %v5142
      %v5155 = vadd.f32 %v5119, %v5142
      %v5156 = vadd.f32 %v5120, %v5142
      %v5157 = vadd.f32 %v5121, %v5142
      %v5158 = vadd.f32 %v5122, %v5142
      %v5159 = vadd.f32 %v5123, %v5142
      %v5160 = vadd.f32 %v5124, %v5142
      %v5161 = vadd.f32 %v5125, %v5142
      %v5162 = vadd.f32 %v5126, %v5142
      %v5163 = vadd.f32 %v5127, %v5142
      %v5164 = vadd.f32 %v5128, %v5142
      %v5165 = vadd.f32 %v5129, %v5142
      %v5166 = vadd.f32 %v5130, %v5142
      %v5167 = vadd.f32 %v5131, %v5142
      %v5168 = vadd.f32 %v5132, %v5142
      %v5169 = vadd.f32 %v5133, %v5142
      %v5170 = vadd.f32 %v5134, %v5142
      %v5171 = vadd.f32 %v5135, %v5142
      %v5172 = vadd.f32 %v5136, %v5142
      %v5173 = vadd.f32 %v5137, %v5142
      %v5174 = vadd.f32 %v5138, %v5142
      %v5175 = vadd.f32 %v5139, %v5142
      %v5176 = vmax.f32 %v5144, 0.0
      %v5177 = vmax.f32 %v5145, 0.0
      %v5178 = vmax.f32 %v5146, 0.0
      %v5179 = vmax.f32 %v5147, 0.0
      %v5180 = vmax.f32 %v5148, 0.0
      %v5181 = vmax.f32 %v5149, 0.0
      %v5182 = vmax.f32 %v5150, 0.0
      %v5183 = vmax.f32 %v5151, 0.0
      %v5184 = vmax.f32 %v5152, 0.0
      %v5185 = vmax.f32 %v5153, 0.0
      %v5186 = vmax.f32 %v5154, 0.0
      %v5187 = vmax.f32 %v5155, 0.0
      %v5188 = vmax.f32 %v5156, 0.0
      %v5189 = vmax.f32 %v5157, 0.0
      %v5190 = vmax.f32 %v5158, 0.0
      %v5191 = vmax.f32 %v5159, 0.0
      %v5192 = vmax.f32 %v5160, 0.0
      %v5193 = vmax.f32 %v5161, 0.0
      %v5194 = vmax.f32 %v5162, 0.0
      %v5195 = vmax.f32 %v5163, 0.0
      %v5196 = vmax.f32 %v5164, 0.0
      %v5197 = vmax.f32 %v5165, 0.0
      %v5198 = vmax.f32 %v5166, 0.0
      %v5199 = vmax.f32 %v5167, 0.0
      %v5200 = vmax.f32 %v5168, 0.0
      %v5201 = vmax.f32 %v5169, 0.0
      %v5202 = vmax.f32 %v5170, 0.0
      %v5203 = vmax.f32 %v5171, 0.0
      %v5204 = vmax.f32 %v5172, 0.0
      %v5205 = vmax.f32 %v5173, 0.0
      %v5206 = vmax.f32 %v5174, 0.0
      %v5207 = vmax.f32 %v5175, 0.0
      %v5208 = vpack.c.bf16 %v5176, %v5176
      %v5209 = vpack.c.bf16 %v5177, %v5177
      %v5210 = vpack.c.bf16 %v5178, %v5178
      %v5211 = vpack.c.bf16 %v5179, %v5179
      %v5212 = vpack.c.bf16 %v5180, %v5180
      %v5213 = vpack.c.bf16 %v5181, %v5181
      %v5214 = vpack.c.bf16 %v5182, %v5182
      %v5215 = vpack.c.bf16 %v5183, %v5183
      %v5216 = vpack.c.bf16 %v5184, %v5184
      %v5217 = vpack.c.bf16 %v5185, %v5185
      %v5218 = vpack.c.bf16 %v5186, %v5186
      %v5219 = vpack.c.bf16 %v5187, %v5187
      %v5220 = vpack.c.bf16 %v5188, %v5188
      %v5221 = vpack.c.bf16 %v5189, %v5189
      %v5222 = vpack.c.bf16 %v5190, %v5190
      %v5223 = vpack.c.bf16 %v5191, %v5191
      %v5224 = vpack.c.bf16 %v5192, %v5192
      %v5225 = vpack.c.bf16 %v5193, %v5193
      %v5226 = vpack.c.bf16 %v5194, %v5194
      %v5227 = vpack.c.bf16 %v5195, %v5195
      %v5228 = vpack.c.bf16 %v5196, %v5196
      %v5229 = vpack.c.bf16 %v5197, %v5197
      %v5230 = vpack.c.bf16 %v5198, %v5198
      %v5231 = vpack.c.bf16 %v5199, %v5199
      %v5232 = vpack.c.bf16 %v5200, %v5200
      %v5233 = vpack.c.bf16 %v5201, %v5201
      %v5234 = vpack.c.bf16 %v5202, %v5202
      %v5235 = vpack.c.bf16 %v5203, %v5203
      %v5236 = vpack.c.bf16 %v5204, %v5204
      %v5237 = vpack.c.bf16 %v5205, %v5205
      %v5238 = vpack.c.bf16 %v5206, %v5206
      %v5239 = vpack.c.bf16 %v5207, %v5207
      %5240 = vst [vmem:[%s331 + $0x8] sm:$0xf] %v5208
      %5241 = vst [vmem:[%s331 + $0xc] sm:$0xf] %v5209
      %5242 = vst [vmem:[%s331 + $0x20] sm:$0xf] %v5210
      %5243 = vst [vmem:[%s331 + $0x24] sm:$0xf] %v5211
      %5244 = vst [vmem:[%s331 + $0x38] sm:$0xf] %v5212
      %5245 = vst [vmem:[%s331 + $0x3c] sm:$0xf] %v5213
      %5246 = vst [vmem:[%s331 + $0x50] sm:$0xf] %v5214
      %5247 = vst [vmem:[%s331 + $0x54] sm:$0xf] %v5215
      %5248 = vst [vmem:[%s331 + $0x68] sm:$0xf] %v5216
      %5249 = vst [vmem:[%s331 + $0x6c] sm:$0xf] %v5217
      %5250 = vst [vmem:[%s331 + $0x80] sm:$0xf] %v5218
      %5251 = vst [vmem:[%s331 + $0x84] sm:$0xf] %v5219
      %5252 = vst [vmem:[%s331 + $0x98] sm:$0xf] %v5220
      %5253 = vst [vmem:[%s331 + $0x9c] sm:$0xf] %v5221
      %5254 = vst [vmem:[%s331 + $0xb0] sm:$0xf] %v5222
      %5255 = vst [vmem:[%s331 + $0xb4] sm:$0xf] %v5223
      %5256 = vst [vmem:[%s331 + $0xc8] sm:$0xf] %v5224
      %5257 = vst [vmem:[%s331 + $0xcc] sm:$0xf] %v5225
      %5258 = vst [vmem:[%s331 + $0xe0] sm:$0xf] %v5226
      %5259 = vst [vmem:[%s331 + $0xe4] sm:$0xf] %v5227
      %5260 = vst [vmem:[%s331 + $0xf8] sm:$0xf] %v5228
      %5261 = vst [vmem:[%s331 + $0xfc] sm:$0xf] %v5229
      %5262 = vst [vmem:[%s331 + $0x110] sm:$0xf] %v5230
      %5263 = vst [vmem:[%s331 + $0x114] sm:$0xf] %v5231
      %5264 = vst [vmem:[%s331 + $0x128] sm:$0xf] %v5232
      %5265 = vst [vmem:[%s331 + $0x12c] sm:$0xf] %v5233
      %5266 = vst [vmem:[%s331 + $0x140] sm:$0xf] %v5234
      %5267 = vst [vmem:[%s331 + $0x144] sm:$0xf] %v5235
      %5268 = vst [vmem:[%s331 + $0x158] sm:$0xf] %v5236
      %5269 = vst [vmem:[%s331 + $0x15c] sm:$0xf] %v5237
      %5270 = vst [vmem:[%s331 + $0x170] sm:$0xf] %v5238
      %5271 = vst [vmem:[%s331 + $0x174] sm:$0xf] %v5239
      %v5272 = vld [vmem:[#allocation2 + $0x4] sm:$0x8]
      %v5273 = vld [vmem:[#allocation2 + $0x8] sm:$0xf]
      %v5274 = vld [vmem:[#allocation2 + $0xc] sm:$0xf]
      %v5275 = vld [vmem:[#allocation2 + $0x1c] sm:$0x8]
      %v5276 = vld [vmem:[#allocation2 + $0x20] sm:$0xf]
      %v5277 = vld [vmem:[#allocation2 + $0x24] sm:$0xf]
      %v5278 = vld [vmem:[#allocation2 + $0x34] sm:$0x8]
      %v5279 = vld [vmem:[#allocation2 + $0x38] sm:$0xf]
      %v5280 = vld [vmem:[#allocation2 + $0x3c] sm:$0xf]
      %v5281 = vld [vmem:[#allocation2 + $0x4c] sm:$0x8]
      %v5282 = vld [vmem:[#allocation2 + $0x50] sm:$0xf]
      %v5283 = vld [vmem:[#allocation2 + $0x54] sm:$0xf]
      %v5284 = vld [vmem:[#allocation2 + $0x64] sm:$0x8]
      %v5285 = vld [vmem:[#allocation2 + $0x68] sm:$0xf]
      %v5286 = vld [vmem:[#allocation2 + $0x6c] sm:$0xf]
      %v5287 = vld [vmem:[#allocation2 + $0x7c] sm:$0x8]
      %v5288 = vld [vmem:[#allocation2 + $0x80] sm:$0xf]
      %v5289 = vld [vmem:[#allocation2 + $0x84] sm:$0xf]
      %v5290 = vld [vmem:[#allocation2 + $0x94] sm:$0x8]
      %v5291 = vld [vmem:[#allocation2 + $0x98] sm:$0xf]
      %v5292 = vld [vmem:[#allocation2 + $0x9c] sm:$0xf]
      %v5293 = vld [vmem:[#allocation2 + $0xac] sm:$0x8]
      %v5294 = vld [vmem:[#allocation2 + $0xb0] sm:$0xf]
      %v5295 = vld [vmem:[#allocation2 + $0xb4] sm:$0xf]
      %v5296 = vld [vmem:[#allocation2 + $0xc4] sm:$0x8]
      %v5297 = vld [vmem:[#allocation2 + $0xc8] sm:$0xf]
      %v5298 = vld [vmem:[#allocation2 + $0xcc] sm:$0xf]
      %v5299 = vld [vmem:[#allocation2 + $0xdc] sm:$0x8]
      %v5300 = vld [vmem:[#allocation2 + $0xe0] sm:$0xf]
      %v5301 = vld [vmem:[#allocation2 + $0xe4] sm:$0xf]
      %v5302 = vld [vmem:[#allocation2 + $0xf4] sm:$0x8]
      %v5303 = vld [vmem:[#allocation2 + $0xf8] sm:$0xf]
      %v5304 = vld [vmem:[#allocation2 + $0xfc] sm:$0xf]
      %v5305 = vld [vmem:[#allocation2 + $0x10c] sm:$0x8]
      %v5306 = vld [vmem:[#allocation2 + $0x110] sm:$0xf]
      %v5307 = vld [vmem:[#allocation2 + $0x114] sm:$0xf]
      %v5308 = vld [vmem:[#allocation2 + $0x124] sm:$0x8]
      %v5309 = vld [vmem:[#allocation2 + $0x128] sm:$0xf]
      %v5310 = vld [vmem:[#allocation2 + $0x12c] sm:$0xf]
      %v5311 = vld [vmem:[#allocation2 + $0x13c] sm:$0x8]
      %v5312 = vld [vmem:[#allocation2 + $0x140] sm:$0xf]
      %v5313 = vld [vmem:[#allocation2 + $0x144] sm:$0xf]
      %v5314 = vld [vmem:[#allocation2 + $0x154] sm:$0x8]
      %v5315 = vld [vmem:[#allocation2 + $0x158] sm:$0xf]
      %v5316 = vld [vmem:[#allocation2 + $0x15c] sm:$0xf]
      %v5317 = vld [vmem:[#allocation2 + $0x16c] sm:$0x8]
      %v5318 = vld [vmem:[#allocation2 + $0x170] sm:$0xf]
      %v5319 = vld [vmem:[#allocation2 + $0x174] sm:$0xf]
      %v5321 = vshrl.u32 %v5272, 16
      %v5323 = vrot.slane %v5321, 7
      %v5324 = vrot.slane %v5323, 4
      %v5326 = vshrl.u32 %v5273, 16
      %v5328 = vrot.slane %v5326, 7
      %v5329 = vshll.u32 %v5273, 16
      %v5331 = vor.u32 %v5328, %v5329
      %v5332 = vsel %vm414, %v5324, %v5331
      %v5333 = vrot.slane %v5328, 4
      %v5335 = vshrl.u32 %v5274, 16
      %v5337 = vrot.slane %v5335, 7
      %v5338 = vshll.u32 %v5274, 16
      %v5340 = vor.u32 %v5337, %v5338
      %v5341 = vsel %vm414, %v5333, %v5340
      %v5343 = vshrl.u32 %v5275, 16
      %v5345 = vrot.slane %v5343, 7
      %v5346 = vrot.slane %v5345, 4
      %v5348 = vshrl.u32 %v5276, 16
      %v5350 = vrot.slane %v5348, 7
      %v5351 = vshll.u32 %v5276, 16
      %v5353 = vor.u32 %v5350, %v5351
      %v5354 = vsel %vm414, %v5346, %v5353
      %v5355 = vrot.slane %v5350, 4
      %v5357 = vshrl.u32 %v5277, 16
      %v5359 = vrot.slane %v5357, 7
      %v5360 = vshll.u32 %v5277, 16
      %v5362 = vor.u32 %v5359, %v5360
      %v5363 = vsel %vm414, %v5355, %v5362
      %v5365 = vshrl.u32 %v5278, 16
      %v5367 = vrot.slane %v5365, 7
      %v5368 = vrot.slane %v5367, 4
      %v5370 = vshrl.u32 %v5279, 16
      %v5372 = vrot.slane %v5370, 7
      %v5373 = vshll.u32 %v5279, 16
      %v5375 = vor.u32 %v5372, %v5373
      %v5376 = vsel %vm414, %v5368, %v5375
      %v5377 = vrot.slane %v5372, 4
      %v5379 = vshrl.u32 %v5280, 16
      %v5381 = vrot.slane %v5379, 7
      %v5382 = vshll.u32 %v5280, 16
      %v5384 = vor.u32 %v5381, %v5382
      %v5385 = vsel %vm414, %v5377, %v5384
      %v5387 = vshrl.u32 %v5281, 16
      %v5389 = vrot.slane %v5387, 7
      %v5390 = vrot.slane %v5389, 4
      %v5392 = vshrl.u32 %v5282, 16
      %v5394 = vrot.slane %v5392, 7
      %v5395 = vshll.u32 %v5282, 16
      %v5397 = vor.u32 %v5394, %v5395
      %v5398 = vsel %vm414, %v5390, %v5397
      %v5399 = vrot.slane %v5394, 4
      %v5401 = vshrl.u32 %v5283, 16
      %v5403 = vrot.slane %v5401, 7
      %v5404 = vshll.u32 %v5283, 16
      %v5406 = vor.u32 %v5403, %v5404
      %v5407 = vsel %vm414, %v5399, %v5406
      %v5409 = vshrl.u32 %v5284, 16
      %v5411 = vrot.slane %v5409, 7
      %v5412 = vrot.slane %v5411, 4
      %v5414 = vshrl.u32 %v5285, 16
      %v5416 = vrot.slane %v5414, 7
      %v5417 = vshll.u32 %v5285, 16
      %v5419 = vor.u32 %v5416, %v5417
      %v5420 = vsel %vm414, %v5412, %v5419
      %v5421 = vrot.slane %v5416, 4
      %v5423 = vshrl.u32 %v5286, 16
      %v5425 = vrot.slane %v5423, 7
      %v5426 = vshll.u32 %v5286, 16
      %v5428 = vor.u32 %v5425, %v5426
      %v5429 = vsel %vm414, %v5421, %v5428
      %v5431 = vshrl.u32 %v5287, 16
      %v5433 = vrot.slane %v5431, 7
      %v5434 = vrot.slane %v5433, 4
      %v5436 = vshrl.u32 %v5288, 16
      %v5438 = vrot.slane %v5436, 7
      %v5439 = vshll.u32 %v5288, 16
      %v5441 = vor.u32 %v5438, %v5439
      %v5442 = vsel %vm414, %v5434, %v5441
      %v5443 = vrot.slane %v5438, 4
      %v5445 = vshrl.u32 %v5289, 16
      %v5447 = vrot.slane %v5445, 7
      %v5448 = vshll.u32 %v5289, 16
      %v5450 = vor.u32 %v5447, %v5448
      %v5451 = vsel %vm414, %v5443, %v5450
      %v5453 = vshrl.u32 %v5290, 16
      %v5455 = vrot.slane %v5453, 7
      %v5456 = vrot.slane %v5455, 4
      %v5458 = vshrl.u32 %v5291, 16
      %v5460 = vrot.slane %v5458, 7
      %v5461 = vshll.u32 %v5291, 16
      %v5463 = vor.u32 %v5460, %v5461
      %v5464 = vsel %vm414, %v5456, %v5463
      %v5465 = vrot.slane %v5460, 4
      %v5467 = vshrl.u32 %v5292, 16
      %v5469 = vrot.slane %v5467, 7
      %v5470 = vshll.u32 %v5292, 16
      %v5472 = vor.u32 %v5469, %v5470
      %v5473 = vsel %vm414, %v5465, %v5472
      %v5475 = vshrl.u32 %v5293, 16
      %v5477 = vrot.slane %v5475, 7
      %v5478 = vrot.slane %v5477, 4
      %v5480 = vshrl.u32 %v5294, 16
      %v5482 = vrot.slane %v5480, 7
      %v5483 = vshll.u32 %v5294, 16
      %v5485 = vor.u32 %v5482, %v5483
      %v5486 = vsel %vm414, %v5478, %v5485
      %v5487 = vrot.slane %v5482, 4
      %v5489 = vshrl.u32 %v5295, 16
      %v5491 = vrot.slane %v5489, 7
      %v5492 = vshll.u32 %v5295, 16
      %v5494 = vor.u32 %v5491, %v5492
      %v5495 = vsel %vm414, %v5487, %v5494
      %v5497 = vshrl.u32 %v5296, 16
      %v5499 = vrot.slane %v5497, 7
      %v5500 = vrot.slane %v5499, 4
      %v5502 = vshrl.u32 %v5297, 16
      %v5504 = vrot.slane %v5502, 7
      %v5505 = vshll.u32 %v5297, 16
      %v5507 = vor.u32 %v5504, %v5505
      %v5508 = vsel %vm414, %v5500, %v5507
      %v5509 = vrot.slane %v5504, 4
      %v5511 = vshrl.u32 %v5298, 16
      %v5513 = vrot.slane %v5511, 7
      %v5514 = vshll.u32 %v5298, 16
      %v5516 = vor.u32 %v5513, %v5514
      %v5517 = vsel %vm414, %v5509, %v5516
      %v5519 = vshrl.u32 %v5299, 16
      %v5521 = vrot.slane %v5519, 7
      %v5522 = vrot.slane %v5521, 4
      %v5524 = vshrl.u32 %v5300, 16
      %v5526 = vrot.slane %v5524, 7
      %v5527 = vshll.u32 %v5300, 16
      %v5529 = vor.u32 %v5526, %v5527
      %v5530 = vsel %vm414, %v5522, %v5529
      %v5531 = vrot.slane %v5526, 4
      %v5533 = vshrl.u32 %v5301, 16
      %v5535 = vrot.slane %v5533, 7
      %v5536 = vshll.u32 %v5301, 16
      %v5538 = vor.u32 %v5535, %v5536
      %v5539 = vsel %vm414, %v5531, %v5538
      %v5541 = vshrl.u32 %v5302, 16
      %v5543 = vrot.slane %v5541, 7
      %v5544 = vrot.slane %v5543, 4
      %v5546 = vshrl.u32 %v5303, 16
      %v5548 = vrot.slane %v5546, 7
      %v5549 = vshll.u32 %v5303, 16
      %v5551 = vor.u32 %v5548, %v5549
      %v5552 = vsel %vm414, %v5544, %v5551
      %v5553 = vrot.slane %v5548, 4
      %v5555 = vshrl.u32 %v5304, 16
      %v5557 = vrot.slane %v5555, 7
      %v5558 = vshll.u32 %v5304, 16
      %v5560 = vor.u32 %v5557, %v5558
      %v5561 = vsel %vm414, %v5553, %v5560
      %v5563 = vshrl.u32 %v5305, 16
      %v5565 = vrot.slane %v5563, 7
      %v5566 = vrot.slane %v5565, 4
      %v5568 = vshrl.u32 %v5306, 16
      %v5570 = vrot.slane %v5568, 7
      %v5571 = vshll.u32 %v5306, 16
      %v5573 = vor.u32 %v5570, %v5571
      %v5574 = vsel %vm414, %v5566, %v5573
      %v5575 = vrot.slane %v5570, 4
      %v5577 = vshrl.u32 %v5307, 16
      %v5579 = vrot.slane %v5577, 7
      %v5580 = vshll.u32 %v5307, 16
      %v5582 = vor.u32 %v5579, %v5580
      %v5583 = vsel %vm414, %v5575, %v5582
      %v5585 = vshrl.u32 %v5308, 16
      %v5587 = vrot.slane %v5585, 7
      %v5588 = vrot.slane %v5587, 4
      %v5590 = vshrl.u32 %v5309, 16
      %v5592 = vrot.slane %v5590, 7
      %v5593 = vshll.u32 %v5309, 16
      %v5595 = vor.u32 %v5592, %v5593
      %v5596 = vsel %vm414, %v5588, %v5595
      %v5597 = vrot.slane %v5592, 4
      %v5599 = vshrl.u32 %v5310, 16
      %v5601 = vrot.slane %v5599, 7
      %v5602 = vshll.u32 %v5310, 16
      %v5604 = vor.u32 %v5601, %v5602
      %v5605 = vsel %vm414, %v5597, %v5604
      %v5607 = vshrl.u32 %v5311, 16
      %v5609 = vrot.slane %v5607, 7
      %v5610 = vrot.slane %v5609, 4
      %v5612 = vshrl.u32 %v5312, 16
      %v5614 = vrot.slane %v5612, 7
      %v5615 = vshll.u32 %v5312, 16
      %v5617 = vor.u32 %v5614, %v5615
      %v5618 = vsel %vm414, %v5610, %v5617
      %v5619 = vrot.slane %v5614, 4
      %v5621 = vshrl.u32 %v5313, 16
      %v5623 = vrot.slane %v5621, 7
      %v5624 = vshll.u32 %v5313, 16
      %v5626 = vor.u32 %v5623, %v5624
      %v5627 = vsel %vm414, %v5619, %v5626
      %v5629 = vshrl.u32 %v5314, 16
      %v5631 = vrot.slane %v5629, 7
      %v5632 = vrot.slane %v5631, 4
      %v5634 = vshrl.u32 %v5315, 16
      %v5636 = vrot.slane %v5634, 7
      %v5637 = vshll.u32 %v5315, 16
      %v5639 = vor.u32 %v5636, %v5637
      %v5640 = vsel %vm414, %v5632, %v5639
      %v5641 = vrot.slane %v5636, 4
      %v5643 = vshrl.u32 %v5316, 16
      %v5645 = vrot.slane %v5643, 7
      %v5646 = vshll.u32 %v5316, 16
      %v5648 = vor.u32 %v5645, %v5646
      %v5649 = vsel %vm414, %v5641, %v5648
      %v5651 = vshrl.u32 %v5317, 16
      %v5653 = vrot.slane %v5651, 7
      %v5654 = vrot.slane %v5653, 4
      %v5656 = vshrl.u32 %v5318, 16
      %v5658 = vrot.slane %v5656, 7
      %v5659 = vshll.u32 %v5318, 16
      %v5661 = vor.u32 %v5658, %v5659
      %v5662 = vsel %vm414, %v5654, %v5661
      %v5663 = vrot.slane %v5658, 4
      %v5665 = vshrl.u32 %v5319, 16
      %v5667 = vrot.slane %v5665, 7
      %v5668 = vshll.u32 %v5319, 16
      %v5670 = vor.u32 %v5667, %v5668
      %v5671 = vsel %vm414, %v5663, %v5670
      %v5672 = vld [vmem:[%s3] sm:$0xf]
      %v5673 = vld [vmem:[%s3 + $0x4] sm:$0xf]
      %v5674 = vld [vmem:[%s3 + $0x8] sm:$0xf]
      %v5675 = vld [vmem:[%s3 + $0xc] sm:$0xf]
      %v5676 = vld [vmem:[%s3 + $0x10] sm:$0xf]
      %v5677 = vld [vmem:[%s3 + $0x14] sm:$0xf]
      %v5678 = vld [vmem:[%s3 + $0x18] sm:$0xf]
      %v5679 = vld [vmem:[%s3 + $0x1c] sm:$0xf]
      %v5680 = vld [vmem:[%s3 + $0x20] sm:$0xf]
      %v5681 = vld [vmem:[%s3 + $0x24] sm:$0xf]
      %v5682 = vld [vmem:[%s3 + $0x28] sm:$0xf]
      %v5683 = vld [vmem:[%s3 + $0x2c] sm:$0xf]
      %v5684 = vld [vmem:[%s3 + $0x30] sm:$0xf]
      %v5685 = vld [vmem:[%s3 + $0x34] sm:$0xf]
      %v5686 = vld [vmem:[%s3 + $0x38] sm:$0xf]
      %v5687 = vld [vmem:[%s3 + $0x3c] sm:$0xf]
      %v5688 = vld [vmem:[%s3 + $0x40] sm:$0xf]
      %v5689 = vld [vmem:[%s3 + $0x44] sm:$0xf]
      %v5690 = vld [vmem:[%s3 + $0x48] sm:$0xf]
      %v5691 = vld [vmem:[%s3 + $0x4c] sm:$0xf]
      %v5692 = vld [vmem:[%s3 + $0x50] sm:$0xf]
      %v5693 = vld [vmem:[%s3 + $0x54] sm:$0xf]
      %v5694 = vld [vmem:[%s3 + $0x58] sm:$0xf]
      %v5695 = vld [vmem:[%s3 + $0x5c] sm:$0xf]
      %v5696 = vld [vmem:[%s3 + $0x60] sm:$0xf]
      %v5697 = vld [vmem:[%s3 + $0x64] sm:$0xf]
      %v5698 = vld [vmem:[%s3 + $0x68] sm:$0xf]
      %v5699 = vld [vmem:[%s3 + $0x6c] sm:$0xf]
      %v5700 = vld [vmem:[%s3 + $0x70] sm:$0xf]
      %v5701 = vld [vmem:[%s3 + $0x74] sm:$0xf]
      %v5702 = vld [vmem:[%s3 + $0x78] sm:$0xf]
      %v5703 = vld [vmem:[%s3 + $0x7c] sm:$0xf]
      %v5736 = vunpack.c.l.b16 %v5273
      %v5737 = vunpack.c.l.b16 %v5274
      %v5738 = vunpack.c.l.b16 %v5276
      %v5739 = vunpack.c.l.b16 %v5277
      %v5740 = vunpack.c.l.b16 %v5279
      %v5741 = vunpack.c.l.b16 %v5280
      %v5742 = vunpack.c.l.b16 %v5282
      %v5743 = vunpack.c.l.b16 %v5283
      %v5744 = vunpack.c.l.b16 %v5285
      %v5745 = vunpack.c.l.b16 %v5286
      %v5746 = vunpack.c.l.b16 %v5288
      %v5747 = vunpack.c.l.b16 %v5289
      %v5748 = vunpack.c.l.b16 %v5291
      %v5749 = vunpack.c.l.b16 %v5292
      %v5750 = vunpack.c.l.b16 %v5294
      %v5751 = vunpack.c.l.b16 %v5295
      %v5752 = vunpack.c.l.b16 %v5297
      %v5753 = vunpack.c.l.b16 %v5298
      %v5754 = vunpack.c.l.b16 %v5300
      %v5755 = vunpack.c.l.b16 %v5301
      %v5756 = vunpack.c.l.b16 %v5303
      %v5757 = vunpack.c.l.b16 %v5304
      %v5758 = vunpack.c.l.b16 %v5306
      %v5759 = vunpack.c.l.b16 %v5307
      %v5760 = vunpack.c.l.b16 %v5309
      %v5761 = vunpack.c.l.b16 %v5310
      %v5762 = vunpack.c.l.b16 %v5312
      %v5763 = vunpack.c.l.b16 %v5313
      %v5764 = vunpack.c.l.b16 %v5315
      %v5765 = vunpack.c.l.b16 %v5316
      %v5766 = vunpack.c.l.b16 %v5318
      %v5767 = vunpack.c.l.b16 %v5319
      %v5768 = vpack.c.b16 %v5737, %v5736
      %v5769 = vpack.c.b16 %v5739, %v5738
      %v5770 = vpack.c.b16 %v5741, %v5740
      %v5771 = vpack.c.b16 %v5743, %v5742
      %v5772 = vpack.c.b16 %v5745, %v5744
      %v5773 = vpack.c.b16 %v5747, %v5746
      %v5774 = vpack.c.b16 %v5749, %v5748
      %v5775 = vpack.c.b16 %v5751, %v5750
      %v5776 = vpack.c.b16 %v5753, %v5752
      %v5777 = vpack.c.b16 %v5755, %v5754
      %v5778 = vpack.c.b16 %v5757, %v5756
      %v5779 = vpack.c.b16 %v5759, %v5758
      %v5780 = vpack.c.b16 %v5761, %v5760
      %v5781 = vpack.c.b16 %v5763, %v5762
      %v5782 = vpack.c.b16 %v5765, %v5764
      %v5783 = vpack.c.b16 %v5767, %v5766
      %v5816 = vunpack.c.l.b16 %v5688
      %v5817 = vunpack.c.l.b16 %v5689
      %v5818 = vunpack.c.l.b16 %v5690
      %v5819 = vunpack.c.l.b16 %v5691
      %v5820 = vunpack.c.l.b16 %v5692
      %v5821 = vunpack.c.l.b16 %v5693
      %v5822 = vunpack.c.l.b16 %v5694
      %v5823 = vunpack.c.l.b16 %v5695
      %v5824 = vunpack.c.l.b16 %v5696
      %v5825 = vunpack.c.l.b16 %v5697
      %v5826 = vunpack.c.l.b16 %v5698
      %v5827 = vunpack.c.l.b16 %v5699
      %v5828 = vunpack.c.l.b16 %v5700
      %v5829 = vunpack.c.l.b16 %v5701
      %v5830 = vunpack.c.l.b16 %v5702
      %v5831 = vunpack.c.l.b16 %v5703
      %v5832 = vpack.c.b16 %v5817, %v5816
      %v5833 = vpack.c.b16 %v5819, %v5818
      %v5834 = vpack.c.b16 %v5821, %v5820
      %v5835 = vpack.c.b16 %v5823, %v5822
      %v5836 = vpack.c.b16 %v5825, %v5824
      %v5837 = vpack.c.b16 %v5827, %v5826
      %v5838 = vpack.c.b16 %v5829, %v5828
      %v5839 = vpack.c.b16 %v5831, %v5830
      %5848 = vmatpush.bf16.msra.mxu0 %v5839
      %5849 = vmatpush.bf16.msra.mxu0 %v5838
      %5850 = vmatpush.bf16.msra.mxu0 %v5837
      %5851 = vmatpush.bf16.msra.mxu0 %v5836
      %5852 = vmatpush.bf16.msra.mxu0 %v5835
      %5853 = vmatpush.bf16.msra.mxu0 %v5834
      %5854 = vmatpush.bf16.msra.mxu0 %v5833
      %5855 = vmatpush.bf16.msra.mxu0 %v5832
      %5856 = vmatmul.bf16.gmra.mxu0 %v5768
      %v5857 = vpop.f32.mrf.mxu0
      %v5858 = vadd.f32 0.0, %v5857
      %v5859 = vpop.f32.mrf.mxu0
      %v5860 = vadd.f32 0.0, %v5859
      %5861 = vmatmul.bf16.gmra.mxu0 %v5769
      %v5862 = vpop.f32.mrf.mxu0
      %v5863 = vadd.f32 0.0, %v5862
      %v5864 = vpop.f32.mrf.mxu0
      %v5865 = vadd.f32 0.0, %v5864
      %5866 = vmatmul.bf16.gmra.mxu0 %v5770
      %v5867 = vpop.f32.mrf.mxu0
      %v5868 = vadd.f32 0.0, %v5867
      %v5869 = vpop.f32.mrf.mxu0
      %v5870 = vadd.f32 0.0, %v5869
      %5871 = vmatmul.bf16.gmra.mxu0 %v5771
      %v5872 = vpop.f32.mrf.mxu0
      %v5873 = vadd.f32 0.0, %v5872
      %v5874 = vpop.f32.mrf.mxu0
      %v5875 = vadd.f32 0.0, %v5874
      %5876 = vmatmul.bf16.gmra.mxu0 %v5772
      %v5877 = vpop.f32.mrf.mxu0
      %v5878 = vadd.f32 0.0, %v5877
      %v5879 = vpop.f32.mrf.mxu0
      %v5880 = vadd.f32 0.0, %v5879
      %5881 = vmatmul.bf16.gmra.mxu0 %v5773
      %v5882 = vpop.f32.mrf.mxu0
      %v5883 = vadd.f32 0.0, %v5882
      %v5884 = vpop.f32.mrf.mxu0
      %v5885 = vadd.f32 0.0, %v5884
      %5886 = vmatmul.bf16.gmra.mxu0 %v5774
      %v5887 = vpop.f32.mrf.mxu0
      %v5888 = vadd.f32 0.0, %v5887
      %v5889 = vpop.f32.mrf.mxu0
      %v5890 = vadd.f32 0.0, %v5889
      %5891 = vmatmul.bf16.gmra.mxu0 %v5775
      %v5892 = vpop.f32.mrf.mxu0
      %v5893 = vadd.f32 0.0, %v5892
      %v5894 = vpop.f32.mrf.mxu0
      %v5895 = vadd.f32 0.0, %v5894
      %5896 = vmatmul.bf16.gmra.mxu0 %v5776
      %v5897 = vpop.f32.mrf.mxu0
      %v5898 = vadd.f32 0.0, %v5897
      %v5899 = vpop.f32.mrf.mxu0
      %v5900 = vadd.f32 0.0, %v5899
      %5901 = vmatmul.bf16.gmra.mxu0 %v5777
      %v5902 = vpop.f32.mrf.mxu0
      %v5903 = vadd.f32 0.0, %v5902
      %v5904 = vpop.f32.mrf.mxu0
      %v5905 = vadd.f32 0.0, %v5904
      %5906 = vmatmul.bf16.gmra.mxu0 %v5778
      %v5907 = vpop.f32.mrf.mxu0
      %v5908 = vadd.f32 0.0, %v5907
      %v5909 = vpop.f32.mrf.mxu0
      %v5910 = vadd.f32 0.0, %v5909
      %5911 = vmatmul.bf16.gmra.mxu0 %v5779
      %v5912 = vpop.f32.mrf.mxu0
      %v5913 = vadd.f32 0.0, %v5912
      %v5914 = vpop.f32.mrf.mxu0
      %v5915 = vadd.f32 0.0, %v5914
      %5916 = vmatmul.bf16.gmra.mxu0 %v5780
      %v5917 = vpop.f32.mrf.mxu0
      %v5918 = vadd.f32 0.0, %v5917
      %v5919 = vpop.f32.mrf.mxu0
      %v5920 = vadd.f32 0.0, %v5919
      %5921 = vmatmul.bf16.gmra.mxu0 %v5781
      %v5922 = vpop.f32.mrf.mxu0
      %v5923 = vadd.f32 0.0, %v5922
      %v5924 = vpop.f32.mrf.mxu0
      %v5925 = vadd.f32 0.0, %v5924
      %5926 = vmatmul.bf16.gmra.mxu0 %v5782
      %v5927 = vpop.f32.mrf.mxu0
      %v5928 = vadd.f32 0.0, %v5927
      %v5929 = vpop.f32.mrf.mxu0
      %v5930 = vadd.f32 0.0, %v5929
      %5931 = vmatmul.bf16.gmra.mxu0 %v5783
      %v5932 = vpop.f32.mrf.mxu0
      %v5933 = vadd.f32 0.0, %v5932
      %v5934 = vpop.f32.mrf.mxu0
      %v5935 = vadd.f32 0.0, %v5934
      %5936 = vdwg.mxu0
      %v5937 = vunpack.c.l.b16 %v5332
      %v5938 = vunpack.c.l.b16 %v5341
      %v5939 = vunpack.c.l.b16 %v5354
      %v5940 = vunpack.c.l.b16 %v5363
      %v5941 = vunpack.c.l.b16 %v5376
      %v5942 = vunpack.c.l.b16 %v5385
      %v5943 = vunpack.c.l.b16 %v5398
      %v5944 = vunpack.c.l.b16 %v5407
      %v5945 = vunpack.c.l.b16 %v5420
      %v5946 = vunpack.c.l.b16 %v5429
      %v5947 = vunpack.c.l.b16 %v5442
      %v5948 = vunpack.c.l.b16 %v5451
      %v5949 = vunpack.c.l.b16 %v5464
      %v5950 = vunpack.c.l.b16 %v5473
      %v5951 = vunpack.c.l.b16 %v5486
      %v5952 = vunpack.c.l.b16 %v5495
      %v5953 = vunpack.c.l.b16 %v5508
      %v5954 = vunpack.c.l.b16 %v5517
      %v5955 = vunpack.c.l.b16 %v5530
      %v5956 = vunpack.c.l.b16 %v5539
      %v5957 = vunpack.c.l.b16 %v5552
      %v5958 = vunpack.c.l.b16 %v5561
      %v5959 = vunpack.c.l.b16 %v5574
      %v5960 = vunpack.c.l.b16 %v5583
      %v5961 = vunpack.c.l.b16 %v5596
      %v5962 = vunpack.c.l.b16 %v5605
      %v5963 = vunpack.c.l.b16 %v5618
      %v5964 = vunpack.c.l.b16 %v5627
      %v5965 = vunpack.c.l.b16 %v5640
      %v5966 = vunpack.c.l.b16 %v5649
      %v5967 = vunpack.c.l.b16 %v5662
      %v5968 = vunpack.c.l.b16 %v5671
      %v5969 = vpack.c.b16 %v5938, %v5937
      %v5970 = vpack.c.b16 %v5940, %v5939
      %v5971 = vpack.c.b16 %v5942, %v5941
      %v5972 = vpack.c.b16 %v5944, %v5943
      %v5973 = vpack.c.b16 %v5946, %v5945
      %v5974 = vpack.c.b16 %v5948, %v5947
      %v5975 = vpack.c.b16 %v5950, %v5949
      %v5976 = vpack.c.b16 %v5952, %v5951
      %v5977 = vpack.c.b16 %v5954, %v5953
      %v5978 = vpack.c.b16 %v5956, %v5955
      %v5979 = vpack.c.b16 %v5958, %v5957
      %v5980 = vpack.c.b16 %v5960, %v5959
      %v5981 = vpack.c.b16 %v5962, %v5961
      %v5982 = vpack.c.b16 %v5964, %v5963
      %v5983 = vpack.c.b16 %v5966, %v5965
      %v5984 = vpack.c.b16 %v5968, %v5967
      %v6017 = vunpack.c.l.b16 %v5672
      %v6018 = vunpack.c.l.b16 %v5673
      %v6019 = vunpack.c.l.b16 %v5674
      %v6020 = vunpack.c.l.b16 %v5675
      %v6021 = vunpack.c.l.b16 %v5676
      %v6022 = vunpack.c.l.b16 %v5677
      %v6023 = vunpack.c.l.b16 %v5678
      %v6024 = vunpack.c.l.b16 %v5679
      %v6025 = vunpack.c.l.b16 %v5680
      %v6026 = vunpack.c.l.b16 %v5681
      %v6027 = vunpack.c.l.b16 %v5682
      %v6028 = vunpack.c.l.b16 %v5683
      %v6029 = vunpack.c.l.b16 %v5684
      %v6030 = vunpack.c.l.b16 %v5685
      %v6031 = vunpack.c.l.b16 %v5686
      %v6032 = vunpack.c.l.b16 %v5687
      %v6033 = vpack.c.b16 %v6018, %v6017
      %v6034 = vpack.c.b16 %v6020, %v6019
      %v6035 = vpack.c.b16 %v6022, %v6021
      %v6036 = vpack.c.b16 %v6024, %v6023
      %v6037 = vpack.c.b16 %v6026, %v6025
      %v6038 = vpack.c.b16 %v6028, %v6027
      %v6039 = vpack.c.b16 %v6030, %v6029
      %v6040 = vpack.c.b16 %v6032, %v6031
      %6049 = vmatpush.bf16.msra.mxu0 %v6040
      %6050 = vmatpush.bf16.msra.mxu0 %v6039
      %6051 = vmatpush.bf16.msra.mxu0 %v6038
      %6052 = vmatpush.bf16.msra.mxu0 %v6037
      %6053 = vmatpush.bf16.msra.mxu0 %v6036
      %6054 = vmatpush.bf16.msra.mxu0 %v6035
      %6055 = vmatpush.bf16.msra.mxu0 %v6034
      %6056 = vmatpush.bf16.msra.mxu0 %v6033
      %6057 = vmatmul.bf16.gmra.mxu0 %v5969
      %v6058 = vpop.f32.mrf.mxu0
      %v6059 = vadd.f32 %v5858, %v6058
      %v6060 = vpop.f32.mrf.mxu0
      %v6061 = vadd.f32 %v5860, %v6060
      %6062 = vmatmul.bf16.gmra.mxu0 %v5970
      %v6063 = vpop.f32.mrf.mxu0
      %v6064 = vadd.f32 %v5863, %v6063
      %v6065 = vpop.f32.mrf.mxu0
      %v6066 = vadd.f32 %v5865, %v6065
      %6067 = vmatmul.bf16.gmra.mxu0 %v5971
      %v6068 = vpop.f32.mrf.mxu0
      %v6069 = vadd.f32 %v5868, %v6068
      %v6070 = vpop.f32.mrf.mxu0
      %v6071 = vadd.f32 %v5870, %v6070
      %6072 = vmatmul.bf16.gmra.mxu0 %v5972
      %v6073 = vpop.f32.mrf.mxu0
      %v6074 = vadd.f32 %v5873, %v6073
      %v6075 = vpop.f32.mrf.mxu0
      %v6076 = vadd.f32 %v5875, %v6075
      %6077 = vmatmul.bf16.gmra.mxu0 %v5973
      %v6078 = vpop.f32.mrf.mxu0
      %v6079 = vadd.f32 %v5878, %v6078
      %v6080 = vpop.f32.mrf.mxu0
      %v6081 = vadd.f32 %v5880, %v6080
      %6082 = vmatmul.bf16.gmra.mxu0 %v5974
      %v6083 = vpop.f32.mrf.mxu0
      %v6084 = vadd.f32 %v5883, %v6083
      %v6085 = vpop.f32.mrf.mxu0
      %v6086 = vadd.f32 %v5885, %v6085
      %6087 = vmatmul.bf16.gmra.mxu0 %v5975
      %v6088 = vpop.f32.mrf.mxu0
      %v6089 = vadd.f32 %v5888, %v6088
      %v6090 = vpop.f32.mrf.mxu0
      %v6091 = vadd.f32 %v5890, %v6090
      %6092 = vmatmul.bf16.gmra.mxu0 %v5976
      %v6093 = vpop.f32.mrf.mxu0
      %v6094 = vadd.f32 %v5893, %v6093
      %v6095 = vpop.f32.mrf.mxu0
      %v6096 = vadd.f32 %v5895, %v6095
      %6097 = vmatmul.bf16.gmra.mxu0 %v5977
      %v6098 = vpop.f32.mrf.mxu0
      %v6099 = vadd.f32 %v5898, %v6098
      %v6100 = vpop.f32.mrf.mxu0
      %v6101 = vadd.f32 %v5900, %v6100
      %6102 = vmatmul.bf16.gmra.mxu0 %v5978
      %v6103 = vpop.f32.mrf.mxu0
      %v6104 = vadd.f32 %v5903, %v6103
      %v6105 = vpop.f32.mrf.mxu0
      %v6106 = vadd.f32 %v5905, %v6105
      %6107 = vmatmul.bf16.gmra.mxu0 %v5979
      %v6108 = vpop.f32.mrf.mxu0
      %v6109 = vadd.f32 %v5908, %v6108
      %v6110 = vpop.f32.mrf.mxu0
      %v6111 = vadd.f32 %v5910, %v6110
      %6112 = vmatmul.bf16.gmra.mxu0 %v5980
      %v6113 = vpop.f32.mrf.mxu0
      %v6114 = vadd.f32 %v5913, %v6113
      %v6115 = vpop.f32.mrf.mxu0
      %v6116 = vadd.f32 %v5915, %v6115
      %6117 = vmatmul.bf16.gmra.mxu0 %v5981
      %v6118 = vpop.f32.mrf.mxu0
      %v6119 = vadd.f32 %v5918, %v6118
      %v6120 = vpop.f32.mrf.mxu0
      %v6121 = vadd.f32 %v5920, %v6120
      %6122 = vmatmul.bf16.gmra.mxu0 %v5982
      %v6123 = vpop.f32.mrf.mxu0
      %v6124 = vadd.f32 %v5923, %v6123
      %v6125 = vpop.f32.mrf.mxu0
      %v6126 = vadd.f32 %v5925, %v6125
      %6127 = vmatmul.bf16.gmra.mxu0 %v5983
      %v6128 = vpop.f32.mrf.mxu0
      %v6129 = vadd.f32 %v5928, %v6128
      %v6130 = vpop.f32.mrf.mxu0
      %v6131 = vadd.f32 %v5930, %v6130
      %6132 = vmatmul.bf16.gmra.mxu0 %v5984
      %v6133 = vpop.f32.mrf.mxu0
      %v6134 = vadd.f32 %v5933, %v6133
      %v6135 = vpop.f32.mrf.mxu0
      %v6136 = vadd.f32 %v5935, %v6135
      %6137 = vdwg.mxu0
      %v6138 = vld [vmem:[#allocation2 + $0x8] sm:$0xf]
      %v6139 = vld [vmem:[#allocation2 + $0xc] sm:$0xf]
      %v6140 = vld [vmem:[#allocation2 + $0x10] sm:$0x1]
      %v6141 = vld [vmem:[#allocation2 + $0x20] sm:$0xf]
      %v6142 = vld [vmem:[#allocation2 + $0x24] sm:$0xf]
      %v6143 = vld [vmem:[#allocation2 + $0x28] sm:$0x1]
      %v6144 = vld [vmem:[#allocation2 + $0x38] sm:$0xf]
      %v6145 = vld [vmem:[#allocation2 + $0x3c] sm:$0xf]
      %v6146 = vld [vmem:[#allocation2 + $0x40] sm:$0x1]
      %v6147 = vld [vmem:[#allocation2 + $0x50] sm:$0xf]
      %v6148 = vld [vmem:[#allocation2 + $0x54] sm:$0xf]
      %v6149 = vld [vmem:[#allocation2 + $0x58] sm:$0x1]
      %v6150 = vld [vmem:[#allocation2 + $0x68] sm:$0xf]
      %v6151 = vld [vmem:[#allocation2 + $0x6c] sm:$0xf]
      %v6152 = vld [vmem:[#allocation2 + $0x70] sm:$0x1]
      %v6153 = vld [vmem:[#allocation2 + $0x80] sm:$0xf]
      %v6154 = vld [vmem:[#allocation2 + $0x84] sm:$0xf]
      %v6155 = vld [vmem:[#allocation2 + $0x88] sm:$0x1]
      %v6156 = vld [vmem:[#allocation2 + $0x98] sm:$0xf]
      %v6157 = vld [vmem:[#allocation2 + $0x9c] sm:$0xf]
      %v6158 = vld [vmem:[#allocation2 + $0xa0] sm:$0x1]
      %v6159 = vld [vmem:[#allocation2 + $0xb0] sm:$0xf]
      %v6160 = vld [vmem:[#allocation2 + $0xb4] sm:$0xf]
      %v6161 = vld [vmem:[#allocation2 + $0xb8] sm:$0x1]
      %v6162 = vld [vmem:[#allocation2 + $0xc8] sm:$0xf]
      %v6163 = vld [vmem:[#allocation2 + $0xcc] sm:$0xf]
      %v6164 = vld [vmem:[#allocation2 + $0xd0] sm:$0x1]
      %v6165 = vld [vmem:[#allocation2 + $0xe0] sm:$0xf]
      %v6166 = vld [vmem:[#allocation2 + $0xe4] sm:$0xf]
      %v6167 = vld [vmem:[#allocation2 + $0xe8] sm:$0x1]
      %v6168 = vld [vmem:[#allocation2 + $0xf8] sm:$0xf]
      %v6169 = vld [vmem:[#allocation2 + $0xfc] sm:$0xf]
      %v6170 = vld [vmem:[#allocation2 + $0x100] sm:$0x1]
      %v6171 = vld [vmem:[#allocation2 + $0x110] sm:$0xf]
      %v6172 = vld [vmem:[#allocation2 + $0x114] sm:$0xf]
      %v6173 = vld [vmem:[#allocation2 + $0x118] sm:$0x1]
      %v6174 = vld [vmem:[#allocation2 + $0x128] sm:$0xf]
      %v6175 = vld [vmem:[#allocation2 + $0x12c] sm:$0xf]
      %v6176 = vld [vmem:[#allocation2 + $0x130] sm:$0x1]
      %v6177 = vld [vmem:[#allocation2 + $0x140] sm:$0xf]
      %v6178 = vld [vmem:[#allocation2 + $0x144] sm:$0xf]
      %v6179 = vld [vmem:[#allocation2 + $0x148] sm:$0x1]
      %v6180 = vld [vmem:[#allocation2 + $0x158] sm:$0xf]
      %v6181 = vld [vmem:[#allocation2 + $0x15c] sm:$0xf]
      %v6182 = vld [vmem:[#allocation2 + $0x160] sm:$0x1]
      %v6183 = vld [vmem:[#allocation2 + $0x170] sm:$0xf]
      %v6184 = vld [vmem:[#allocation2 + $0x174] sm:$0xf]
      %v6185 = vld [vmem:[#allocation2 + $0x178] sm:$0x1]
      %v6187 = vshrl.u32 %v6138, 16
      %v6189 = vrot.slane %v6187, 4
      %v6190 = vshll.u32 %v6138, 16
      %v6192 = vrot.slane %v6190, 5
      %v6193 = vor.u32 %v6189, %v6192
      %v6194 = vrot.slane %v6193, 4
      %v6196 = vshll.u32 %v6139, 16
      %v6198 = vrot.slane %v6196, 5
      %v6199 = vsel %vm1283, %v6194, %v6198
      %v6200 = vshrl.u32 %v6139, 16
      %v6202 = vrot.slane %v6200, 4
      %v6203 = vor.u32 %v6202, %v6198
      %v6204 = vrot.slane %v6203, 4
      %v6206 = vshll.u32 %v6140, 16
      %v6208 = vrot.slane %v6206, 5
      %v6209 = vsel %vm1283, %v6204, %v6208
      %v6211 = vshrl.u32 %v6141, 16
      %v6213 = vrot.slane %v6211, 4
      %v6214 = vshll.u32 %v6141, 16
      %v6216 = vrot.slane %v6214, 5
      %v6217 = vor.u32 %v6213, %v6216
      %v6218 = vrot.slane %v6217, 4
      %v6220 = vshll.u32 %v6142, 16
      %v6222 = vrot.slane %v6220, 5
      %v6223 = vsel %vm1283, %v6218, %v6222
      %v6224 = vshrl.u32 %v6142, 16
      %v6226 = vrot.slane %v6224, 4
      %v6227 = vor.u32 %v6226, %v6222
      %v6228 = vrot.slane %v6227, 4
      %v6230 = vshll.u32 %v6143, 16
      %v6232 = vrot.slane %v6230, 5
      %v6233 = vsel %vm1283, %v6228, %v6232
      %v6235 = vshrl.u32 %v6144, 16
      %v6237 = vrot.slane %v6235, 4
      %v6238 = vshll.u32 %v6144, 16
      %v6240 = vrot.slane %v6238, 5
      %v6241 = vor.u32 %v6237, %v6240
      %v6242 = vrot.slane %v6241, 4
      %v6244 = vshll.u32 %v6145, 16
      %v6246 = vrot.slane %v6244, 5
      %v6247 = vsel %vm1283, %v6242, %v6246
      %v6248 = vshrl.u32 %v6145, 16
      %v6250 = vrot.slane %v6248, 4
      %v6251 = vor.u32 %v6250, %v6246
      %v6252 = vrot.slane %v6251, 4
      %v6254 = vshll.u32 %v6146, 16
      %v6256 = vrot.slane %v6254, 5
      %v6257 = vsel %vm1283, %v6252, %v6256
      %v6259 = vshrl.u32 %v6147, 16
      %v6261 = vrot.slane %v6259, 4
      %v6262 = vshll.u32 %v6147, 16
      %v6264 = vrot.slane %v6262, 5
      %v6265 = vor.u32 %v6261, %v6264
      %v6266 = vrot.slane %v6265, 4
      %v6268 = vshll.u32 %v6148, 16
      %v6270 = vrot.slane %v6268, 5
      %v6271 = vsel %vm1283, %v6266, %v6270
      %v6272 = vshrl.u32 %v6148, 16
      %v6274 = vrot.slane %v6272, 4
      %v6275 = vor.u32 %v6274, %v6270
      %v6276 = vrot.slane %v6275, 4
      %v6278 = vshll.u32 %v6149, 16
      %v6280 = vrot.slane %v6278, 5
      %v6281 = vsel %vm1283, %v6276, %v6280
      %v6283 = vshrl.u32 %v6150, 16
      %v6285 = vrot.slane %v6283, 4
      %v6286 = vshll.u32 %v6150, 16
      %v6288 = vrot.slane %v6286, 5
      %v6289 = vor.u32 %v6285, %v6288
      %v6290 = vrot.slane %v6289, 4
      %v6292 = vshll.u32 %v6151, 16
      %v6294 = vrot.slane %v6292, 5
      %v6295 = vsel %vm1283, %v6290, %v6294
      %v6296 = vshrl.u32 %v6151, 16
      %v6298 = vrot.slane %v6296, 4
      %v6299 = vor.u32 %v6298, %v6294
      %v6300 = vrot.slane %v6299, 4
      %v6302 = vshll.u32 %v6152, 16
      %v6304 = vrot.slane %v6302, 5
      %v6305 = vsel %vm1283, %v6300, %v6304
      %v6307 = vshrl.u32 %v6153, 16
      %v6309 = vrot.slane %v6307, 4
      %v6310 = vshll.u32 %v6153, 16
      %v6312 = vrot.slane %v6310, 5
      %v6313 = vor.u32 %v6309, %v6312
      %v6314 = vrot.slane %v6313, 4
      %v6316 = vshll.u32 %v6154, 16
      %v6318 = vrot.slane %v6316, 5
      %v6319 = vsel %vm1283, %v6314, %v6318
      %v6320 = vshrl.u32 %v6154, 16
      %v6322 = vrot.slane %v6320, 4
      %v6323 = vor.u32 %v6322, %v6318
      %v6324 = vrot.slane %v6323, 4
      %v6326 = vshll.u32 %v6155, 16
      %v6328 = vrot.slane %v6326, 5
      %v6329 = vsel %vm1283, %v6324, %v6328
      %v6331 = vshrl.u32 %v6156, 16
      %v6333 = vrot.slane %v6331, 4
      %v6334 = vshll.u32 %v6156, 16
      %v6336 = vrot.slane %v6334, 5
      %v6337 = vor.u32 %v6333, %v6336
      %v6338 = vrot.slane %v6337, 4
      %v6340 = vshll.u32 %v6157, 16
      %v6342 = vrot.slane %v6340, 5
      %v6343 = vsel %vm1283, %v6338, %v6342
      %v6344 = vshrl.u32 %v6157, 16
      %v6346 = vrot.slane %v6344, 4
      %v6347 = vor.u32 %v6346, %v6342
      %v6348 = vrot.slane %v6347, 4
      %v6350 = vshll.u32 %v6158, 16
      %v6352 = vrot.slane %v6350, 5
      %v6353 = vsel %vm1283, %v6348, %v6352
      %v6355 = vshrl.u32 %v6159, 16
      %v6357 = vrot.slane %v6355, 4
      %v6358 = vshll.u32 %v6159, 16
      %v6360 = vrot.slane %v6358, 5
      %v6361 = vor.u32 %v6357, %v6360
      %v6362 = vrot.slane %v6361, 4
      %v6364 = vshll.u32 %v6160, 16
      %v6366 = vrot.slane %v6364, 5
      %v6367 = vsel %vm1283, %v6362, %v6366
      %v6368 = vshrl.u32 %v6160, 16
      %v6370 = vrot.slane %v6368, 4
      %v6371 = vor.u32 %v6370, %v6366
      %v6372 = vrot.slane %v6371, 4
      %v6374 = vshll.u32 %v6161, 16
      %v6376 = vrot.slane %v6374, 5
      %v6377 = vsel %vm1283, %v6372, %v6376
      %v6379 = vshrl.u32 %v6162, 16
      %v6381 = vrot.slane %v6379, 4
      %v6382 = vshll.u32 %v6162, 16
      %v6384 = vrot.slane %v6382, 5
      %v6385 = vor.u32 %v6381, %v6384
      %v6386 = vrot.slane %v6385, 4
      %v6388 = vshll.u32 %v6163, 16
      %v6390 = vrot.slane %v6388, 5
      %v6391 = vsel %vm1283, %v6386, %v6390
      %v6392 = vshrl.u32 %v6163, 16
      %v6394 = vrot.slane %v6392, 4
      %v6395 = vor.u32 %v6394, %v6390
      %v6396 = vrot.slane %v6395, 4
      %v6398 = vshll.u32 %v6164, 16
      %v6400 = vrot.slane %v6398, 5
      %v6401 = vsel %vm1283, %v6396, %v6400
      %v6403 = vshrl.u32 %v6165, 16
      %v6405 = vrot.slane %v6403, 4
      %v6406 = vshll.u32 %v6165, 16
      %v6408 = vrot.slane %v6406, 5
      %v6409 = vor.u32 %v6405, %v6408
      %v6410 = vrot.slane %v6409, 4
      %v6412 = vshll.u32 %v6166, 16
      %v6414 = vrot.slane %v6412, 5
      %v6415 = vsel %vm1283, %v6410, %v6414
      %v6416 = vshrl.u32 %v6166, 16
      %v6418 = vrot.slane %v6416, 4
      %v6419 = vor.u32 %v6418, %v6414
      %v6420 = vrot.slane %v6419, 4
      %v6422 = vshll.u32 %v6167, 16
      %v6424 = vrot.slane %v6422, 5
      %v6425 = vsel %vm1283, %v6420, %v6424
      %v6427 = vshrl.u32 %v6168, 16
      %v6429 = vrot.slane %v6427, 4
      %v6430 = vshll.u32 %v6168, 16
      %v6432 = vrot.slane %v6430, 5
      %v6433 = vor.u32 %v6429, %v6432
      %v6434 = vrot.slane %v6433, 4
      %v6436 = vshll.u32 %v6169, 16
      %v6438 = vrot.slane %v6436, 5
      %v6439 = vsel %vm1283, %v6434, %v6438
      %v6440 = vshrl.u32 %v6169, 16
      %v6442 = vrot.slane %v6440, 4
      %v6443 = vor.u32 %v6442, %v6438
      %v6444 = vrot.slane %v6443, 4
      %v6446 = vshll.u32 %v6170, 16
      %v6448 = vrot.slane %v6446, 5
      %v6449 = vsel %vm1283, %v6444, %v6448
      %v6451 = vshrl.u32 %v6171, 16
      %v6453 = vrot.slane %v6451, 4
      %v6454 = vshll.u32 %v6171, 16
      %v6456 = vrot.slane %v6454, 5
      %v6457 = vor.u32 %v6453, %v6456
      %v6458 = vrot.slane %v6457, 4
      %v6460 = vshll.u32 %v6172, 16
      %v6462 = vrot.slane %v6460, 5
      %v6463 = vsel %vm1283, %v6458, %v6462
      %v6464 = vshrl.u32 %v6172, 16
      %v6466 = vrot.slane %v6464, 4
      %v6467 = vor.u32 %v6466, %v6462
      %v6468 = vrot.slane %v6467, 4
      %v6470 = vshll.u32 %v6173, 16
      %v6472 = vrot.slane %v6470, 5
      %v6473 = vsel %vm1283, %v6468, %v6472
      %v6475 = vshrl.u32 %v6174, 16
      %v6477 = vrot.slane %v6475, 4
      %v6478 = vshll.u32 %v6174, 16
      %v6480 = vrot.slane %v6478, 5
      %v6481 = vor.u32 %v6477, %v6480
      %v6482 = vrot.slane %v6481, 4
      %v6484 = vshll.u32 %v6175, 16
      %v6486 = vrot.slane %v6484, 5
      %v6487 = vsel %vm1283, %v6482, %v6486
      %v6488 = vshrl.u32 %v6175, 16
      %v6490 = vrot.slane %v6488, 4
      %v6491 = vor.u32 %v6490, %v6486
      %v6492 = vrot.slane %v6491, 4
      %v6494 = vshll.u32 %v6176, 16
      %v6496 = vrot.slane %v6494, 5
      %v6497 = vsel %vm1283, %v6492, %v6496
      %v6499 = vshrl.u32 %v6177, 16
      %v6501 = vrot.slane %v6499, 4
      %v6502 = vshll.u32 %v6177, 16
      %v6504 = vrot.slane %v6502, 5
      %v6505 = vor.u32 %v6501, %v6504
      %v6506 = vrot.slane %v6505, 4
      %v6508 = vshll.u32 %v6178, 16
      %v6510 = vrot.slane %v6508, 5
      %v6511 = vsel %vm1283, %v6506, %v6510
      %v6512 = vshrl.u32 %v6178, 16
      %v6514 = vrot.slane %v6512, 4
      %v6515 = vor.u32 %v6514, %v6510
      %v6516 = vrot.slane %v6515, 4
      %v6518 = vshll.u32 %v6179, 16
      %v6520 = vrot.slane %v6518, 5
      %v6521 = vsel %vm1283, %v6516, %v6520
      %v6523 = vshrl.u32 %v6180, 16
      %v6525 = vrot.slane %v6523, 4
      %v6526 = vshll.u32 %v6180, 16
      %v6528 = vrot.slane %v6526, 5
      %v6529 = vor.u32 %v6525, %v6528
      %v6530 = vrot.slane %v6529, 4
      %v6532 = vshll.u32 %v6181, 16
      %v6534 = vrot.slane %v6532, 5
      %v6535 = vsel %vm1283, %v6530, %v6534
      %v6536 = vshrl.u32 %v6181, 16
      %v6538 = vrot.slane %v6536, 4
      %v6539 = vor.u32 %v6538, %v6534
      %v6540 = vrot.slane %v6539, 4
      %v6542 = vshll.u32 %v6182, 16
      %v6544 = vrot.slane %v6542, 5
      %v6545 = vsel %vm1283, %v6540, %v6544
      %v6547 = vshrl.u32 %v6183, 16
      %v6549 = vrot.slane %v6547, 4
      %v6550 = vshll.u32 %v6183, 16
      %v6552 = vrot.slane %v6550, 5
      %v6553 = vor.u32 %v6549, %v6552
      %v6554 = vrot.slane %v6553, 4
      %v6556 = vshll.u32 %v6184, 16
      %v6558 = vrot.slane %v6556, 5
      %v6559 = vsel %vm1283, %v6554, %v6558
      %v6560 = vshrl.u32 %v6184, 16
      %v6562 = vrot.slane %v6560, 4
      %v6563 = vor.u32 %v6562, %v6558
      %v6564 = vrot.slane %v6563, 4
      %v6566 = vshll.u32 %v6185, 16
      %v6568 = vrot.slane %v6566, 5
      %v6569 = vsel %vm1283, %v6564, %v6568
      %v6570 = vld [vmem:[%s3 + $0x80] sm:$0xf]
      %v6571 = vld [vmem:[%s3 + $0x84] sm:$0xf]
      %v6572 = vld [vmem:[%s3 + $0x88] sm:$0xf]
      %v6573 = vld [vmem:[%s3 + $0x8c] sm:$0xf]
      %v6574 = vld [vmem:[%s3 + $0x90] sm:$0xf]
      %v6575 = vld [vmem:[%s3 + $0x94] sm:$0xf]
      %v6576 = vld [vmem:[%s3 + $0x98] sm:$0xf]
      %v6577 = vld [vmem:[%s3 + $0x9c] sm:$0xf]
      %v6578 = vld [vmem:[%s3 + $0xa0] sm:$0xf]
      %v6579 = vld [vmem:[%s3 + $0xa4] sm:$0xf]
      %v6580 = vld [vmem:[%s3 + $0xa8] sm:$0xf]
      %v6581 = vld [vmem:[%s3 + $0xac] sm:$0xf]
      %v6582 = vld [vmem:[%s3 + $0xb0] sm:$0xf]
      %v6583 = vld [vmem:[%s3 + $0xb4] sm:$0xf]
      %v6584 = vld [vmem:[%s3 + $0xb8] sm:$0xf]
      %v6585 = vld [vmem:[%s3 + $0xbc] sm:$0xf]
      %v6586 = vunpack.c.l.b16 %v6199
      %v6587 = vunpack.c.l.b16 %v6209
      %v6588 = vunpack.c.l.b16 %v6223
      %v6589 = vunpack.c.l.b16 %v6233
      %v6590 = vunpack.c.l.b16 %v6247
      %v6591 = vunpack.c.l.b16 %v6257
      %v6592 = vunpack.c.l.b16 %v6271
      %v6593 = vunpack.c.l.b16 %v6281
      %v6594 = vunpack.c.l.b16 %v6295
      %v6595 = vunpack.c.l.b16 %v6305
      %v6596 = vunpack.c.l.b16 %v6319
      %v6597 = vunpack.c.l.b16 %v6329
      %v6598 = vunpack.c.l.b16 %v6343
      %v6599 = vunpack.c.l.b16 %v6353
      %v6600 = vunpack.c.l.b16 %v6367
      %v6601 = vunpack.c.l.b16 %v6377
      %v6602 = vunpack.c.l.b16 %v6391
      %v6603 = vunpack.c.l.b16 %v6401
      %v6604 = vunpack.c.l.b16 %v6415
      %v6605 = vunpack.c.l.b16 %v6425
      %v6606 = vunpack.c.l.b16 %v6439
      %v6607 = vunpack.c.l.b16 %v6449
      %v6608 = vunpack.c.l.b16 %v6463
      %v6609 = vunpack.c.l.b16 %v6473
      %v6610 = vunpack.c.l.b16 %v6487
      %v6611 = vunpack.c.l.b16 %v6497
      %v6612 = vunpack.c.l.b16 %v6511
      %v6613 = vunpack.c.l.b16 %v6521
      %v6614 = vunpack.c.l.b16 %v6535
      %v6615 = vunpack.c.l.b16 %v6545
      %v6616 = vunpack.c.l.b16 %v6559
      %v6617 = vunpack.c.l.b16 %v6569
      %v6618 = vpack.c.b16 %v6587, %v6586
      %v6619 = vpack.c.b16 %v6589, %v6588
      %v6620 = vpack.c.b16 %v6591, %v6590
      %v6621 = vpack.c.b16 %v6593, %v6592
      %v6622 = vpack.c.b16 %v6595, %v6594
      %v6623 = vpack.c.b16 %v6597, %v6596
      %v6624 = vpack.c.b16 %v6599, %v6598
      %v6625 = vpack.c.b16 %v6601, %v6600
      %v6626 = vpack.c.b16 %v6603, %v6602
      %v6627 = vpack.c.b16 %v6605, %v6604
      %v6628 = vpack.c.b16 %v6607, %v6606
      %v6629 = vpack.c.b16 %v6609, %v6608
      %v6630 = vpack.c.b16 %v6611, %v6610
      %v6631 = vpack.c.b16 %v6613, %v6612
      %v6632 = vpack.c.b16 %v6615, %v6614
      %v6633 = vpack.c.b16 %v6617, %v6616
      %v6666 = vunpack.c.l.b16 %v6570
      %v6667 = vunpack.c.l.b16 %v6571
      %v6668 = vunpack.c.l.b16 %v6572
      %v6669 = vunpack.c.l.b16 %v6573
      %v6670 = vunpack.c.l.b16 %v6574
      %v6671 = vunpack.c.l.b16 %v6575
      %v6672 = vunpack.c.l.b16 %v6576
      %v6673 = vunpack.c.l.b16 %v6577
      %v6674 = vunpack.c.l.b16 %v6578
      %v6675 = vunpack.c.l.b16 %v6579
      %v6676 = vunpack.c.l.b16 %v6580
      %v6677 = vunpack.c.l.b16 %v6581
      %v6678 = vunpack.c.l.b16 %v6582
      %v6679 = vunpack.c.l.b16 %v6583
      %v6680 = vunpack.c.l.b16 %v6584
      %v6681 = vunpack.c.l.b16 %v6585
      %v6682 = vpack.c.b16 %v6667, %v6666
      %v6683 = vpack.c.b16 %v6669, %v6668
      %v6684 = vpack.c.b16 %v6671, %v6670
      %v6685 = vpack.c.b16 %v6673, %v6672
      %v6686 = vpack.c.b16 %v6675, %v6674
      %v6687 = vpack.c.b16 %v6677, %v6676
      %v6688 = vpack.c.b16 %v6679, %v6678
      %v6689 = vpack.c.b16 %v6681, %v6680
      %6698 = vmatpush.bf16.msra.mxu0 %v6689
      %6699 = vmatpush.bf16.msra.mxu0 %v6688
      %6700 = vmatpush.bf16.msra.mxu0 %v6687
      %6701 = vmatpush.bf16.msra.mxu0 %v6686
      %6702 = vmatpush.bf16.msra.mxu0 %v6685
      %6703 = vmatpush.bf16.msra.mxu0 %v6684
      %6704 = vmatpush.bf16.msra.mxu0 %v6683
      %6705 = vmatpush.bf16.msra.mxu0 %v6682
      %6706 = vmatmul.bf16.gmra.mxu0 %v6618
      %v6707 = vpop.f32.mrf.mxu0
      %v6708 = vadd.f32 0.0, %v6707
      %v6709 = vpop.f32.mrf.mxu0
      %v6710 = vadd.f32 0.0, %v6709
      %6711 = vmatmul.bf16.gmra.mxu0 %v6619
      %v6712 = vpop.f32.mrf.mxu0
      %v6713 = vadd.f32 0.0, %v6712
      %v6714 = vpop.f32.mrf.mxu0
      %v6715 = vadd.f32 0.0, %v6714
      %6716 = vmatmul.bf16.gmra.mxu0 %v6620
      %v6717 = vpop.f32.mrf.mxu0
      %v6718 = vadd.f32 0.0, %v6717
      %v6719 = vpop.f32.mrf.mxu0
      %v6720 = vadd.f32 0.0, %v6719
      %6721 = vmatmul.bf16.gmra.mxu0 %v6621
      %v6722 = vpop.f32.mrf.mxu0
      %v6723 = vadd.f32 0.0, %v6722
      %v6724 = vpop.f32.mrf.mxu0
      %v6725 = vadd.f32 0.0, %v6724
      %6726 = vmatmul.bf16.gmra.mxu0 %v6622
      %v6727 = vpop.f32.mrf.mxu0
      %v6728 = vadd.f32 0.0, %v6727
      %v6729 = vpop.f32.mrf.mxu0
      %v6730 = vadd.f32 0.0, %v6729
      %6731 = vmatmul.bf16.gmra.mxu0 %v6623
      %v6732 = vpop.f32.mrf.mxu0
      %v6733 = vadd.f32 0.0, %v6732
      %v6734 = vpop.f32.mrf.mxu0
      %v6735 = vadd.f32 0.0, %v6734
      %6736 = vmatmul.bf16.gmra.mxu0 %v6624
      %v6737 = vpop.f32.mrf.mxu0
      %v6738 = vadd.f32 0.0, %v6737
      %v6739 = vpop.f32.mrf.mxu0
      %v6740 = vadd.f32 0.0, %v6739
      %6741 = vmatmul.bf16.gmra.mxu0 %v6625
      %v6742 = vpop.f32.mrf.mxu0
      %v6743 = vadd.f32 0.0, %v6742
      %v6744 = vpop.f32.mrf.mxu0
      %v6745 = vadd.f32 0.0, %v6744
      %6746 = vmatmul.bf16.gmra.mxu0 %v6626
      %v6747 = vpop.f32.mrf.mxu0
      %v6748 = vadd.f32 0.0, %v6747
      %v6749 = vpop.f32.mrf.mxu0
      %v6750 = vadd.f32 0.0, %v6749
      %6751 = vmatmul.bf16.gmra.mxu0 %v6627
      %v6752 = vpop.f32.mrf.mxu0
      %v6753 = vadd.f32 0.0, %v6752
      %v6754 = vpop.f32.mrf.mxu0
      %v6755 = vadd.f32 0.0, %v6754
      %6756 = vmatmul.bf16.gmra.mxu0 %v6628
      %v6757 = vpop.f32.mrf.mxu0
      %v6758 = vadd.f32 0.0, %v6757
      %v6759 = vpop.f32.mrf.mxu0
      %v6760 = vadd.f32 0.0, %v6759
      %6761 = vmatmul.bf16.gmra.mxu0 %v6629
      %v6762 = vpop.f32.mrf.mxu0
      %v6763 = vadd.f32 0.0, %v6762
      %v6764 = vpop.f32.mrf.mxu0
      %v6765 = vadd.f32 0.0, %v6764
      %6766 = vmatmul.bf16.gmra.mxu0 %v6630
      %v6767 = vpop.f32.mrf.mxu0
      %v6768 = vadd.f32 0.0, %v6767
      %v6769 = vpop.f32.mrf.mxu0
      %v6770 = vadd.f32 0.0, %v6769
      %6771 = vmatmul.bf16.gmra.mxu0 %v6631
      %v6772 = vpop.f32.mrf.mxu0
      %v6773 = vadd.f32 0.0, %v6772
      %v6774 = vpop.f32.mrf.mxu0
      %v6775 = vadd.f32 0.0, %v6774
      %6776 = vmatmul.bf16.gmra.mxu0 %v6632
      %v6777 = vpop.f32.mrf.mxu0
      %v6778 = vadd.f32 0.0, %v6777
      %v6779 = vpop.f32.mrf.mxu0
      %v6780 = vadd.f32 0.0, %v6779
      %6781 = vmatmul.bf16.gmra.mxu0 %v6633
      %v6782 = vpop.f32.mrf.mxu0
      %v6783 = vadd.f32 0.0, %v6782
      %v6784 = vpop.f32.mrf.mxu0
      %v6785 = vadd.f32 0.0, %v6784
      %6786 = vdwg.mxu0
      %v6787 = vadd.f32 %v6059, %v6708
      %v6788 = vadd.f32 %v6061, %v6710
      %v6789 = vadd.f32 %v6064, %v6713
      %v6790 = vadd.f32 %v6066, %v6715
      %v6791 = vadd.f32 %v6069, %v6718
      %v6792 = vadd.f32 %v6071, %v6720
      %v6793 = vadd.f32 %v6074, %v6723
      %v6794 = vadd.f32 %v6076, %v6725
      %v6795 = vadd.f32 %v6079, %v6728
      %v6796 = vadd.f32 %v6081, %v6730
      %v6797 = vadd.f32 %v6084, %v6733
      %v6798 = vadd.f32 %v6086, %v6735
      %v6799 = vadd.f32 %v6089, %v6738
      %v6800 = vadd.f32 %v6091, %v6740
      %v6801 = vadd.f32 %v6094, %v6743
      %v6802 = vadd.f32 %v6096, %v6745
      %v6803 = vadd.f32 %v6099, %v6748
      %v6804 = vadd.f32 %v6101, %v6750
      %v6805 = vadd.f32 %v6104, %v6753
      %v6806 = vadd.f32 %v6106, %v6755
      %v6807 = vadd.f32 %v6109, %v6758
      %v6808 = vadd.f32 %v6111, %v6760
      %v6809 = vadd.f32 %v6114, %v6763
      %v6810 = vadd.f32 %v6116, %v6765
      %v6811 = vadd.f32 %v6119, %v6768
      %v6812 = vadd.f32 %v6121, %v6770
      %v6813 = vadd.f32 %v6124, %v6773
      %v6814 = vadd.f32 %v6126, %v6775
      %v6815 = vadd.f32 %v6129, %v6778
      %v6816 = vadd.f32 %v6131, %v6780
      %v6817 = vadd.f32 %v6134, %v6783
      %v6818 = vadd.f32 %v6136, %v6785
      %v6819 = vld [vmem:[%s331 + $0x4] sm:$0x8]
      %v6820 = vld [vmem:[%s331 + $0x8] sm:$0xf]
      %v6821 = vld [vmem:[%s331 + $0xc] sm:$0xf]
      %v6822 = vld [vmem:[%s331 + $0x1c] sm:$0x8]
      %v6823 = vld [vmem:[%s331 + $0x20] sm:$0xf]
      %v6824 = vld [vmem:[%s331 + $0x24] sm:$0xf]
      %v6825 = vld [vmem:[%s331 + $0x34] sm:$0x8]
      %v6826 = vld [vmem:[%s331 + $0x38] sm:$0xf]
      %v6827 = vld [vmem:[%s331 + $0x3c] sm:$0xf]
      %v6828 = vld [vmem:[%s331 + $0x4c] sm:$0x8]
      %v6829 = vld [vmem:[%s331 + $0x50] sm:$0xf]
      %v6830 = vld [vmem:[%s331 + $0x54] sm:$0xf]
      %v6831 = vld [vmem:[%s331 + $0x64] sm:$0x8]
      %v6832 = vld [vmem:[%s331 + $0x68] sm:$0xf]
      %v6833 = vld [vmem:[%s331 + $0x6c] sm:$0xf]
      %v6834 = vld [vmem:[%s331 + $0x7c] sm:$0x8]
      %v6835 = vld [vmem:[%s331 + $0x80] sm:$0xf]
      %v6836 = vld [vmem:[%s331 + $0x84] sm:$0xf]
      %v6837 = vld [vmem:[%s331 + $0x94] sm:$0x8]
      %v6838 = vld [vmem:[%s331 + $0x98] sm:$0xf]
      %v6839 = vld [vmem:[%s331 + $0x9c] sm:$0xf]
      %v6840 = vld [vmem:[%s331 + $0xac] sm:$0x8]
      %v6841 = vld [vmem:[%s331 + $0xb0] sm:$0xf]
      %v6842 = vld [vmem:[%s331 + $0xb4] sm:$0xf]
      %v6843 = vld [vmem:[%s331 + $0xc4] sm:$0x8]
      %v6844 = vld [vmem:[%s331 + $0xc8] sm:$0xf]
      %v6845 = vld [vmem:[%s331 + $0xcc] sm:$0xf]
      %v6846 = vld [vmem:[%s331 + $0xdc] sm:$0x8]
      %v6847 = vld [vmem:[%s331 + $0xe0] sm:$0xf]
      %v6848 = vld [vmem:[%s331 + $0xe4] sm:$0xf]
      %v6849 = vld [vmem:[%s331 + $0xf4] sm:$0x8]
      %v6850 = vld [vmem:[%s331 + $0xf8] sm:$0xf]
      %v6851 = vld [vmem:[%s331 + $0xfc] sm:$0xf]
      %v6852 = vld [vmem:[%s331 + $0x10c] sm:$0x8]
      %v6853 = vld [vmem:[%s331 + $0x110] sm:$0xf]
      %v6854 = vld [vmem:[%s331 + $0x114] sm:$0xf]
      %v6855 = vld [vmem:[%s331 + $0x124] sm:$0x8]
      %v6856 = vld [vmem:[%s331 + $0x128] sm:$0xf]
      %v6857 = vld [vmem:[%s331 + $0x12c] sm:$0xf]
      %v6858 = vld [vmem:[%s331 + $0x13c] sm:$0x8]
      %v6859 = vld [vmem:[%s331 + $0x140] sm:$0xf]
      %v6860 = vld [vmem:[%s331 + $0x144] sm:$0xf]
      %v6861 = vld [vmem:[%s331 + $0x154] sm:$0x8]
      %v6862 = vld [vmem:[%s331 + $0x158] sm:$0xf]
      %v6863 = vld [vmem:[%s331 + $0x15c] sm:$0xf]
      %v6864 = vld [vmem:[%s331 + $0x16c] sm:$0x8]
      %v6865 = vld [vmem:[%s331 + $0x170] sm:$0xf]
      %v6866 = vld [vmem:[%s331 + $0x174] sm:$0xf]
      %v6868 = vshrl.u32 %v6819, 16
      %v6870 = vrot.slane %v6868, 7
      %v6871 = vrot.slane %v6870, 4
      %v6873 = vshrl.u32 %v6820, 16
      %v6875 = vrot.slane %v6873, 7
      %v6876 = vshll.u32 %v6820, 16
      %v6878 = vor.u32 %v6875, %v6876
      %v6879 = vsel %vm414, %v6871, %v6878
      %v6880 = vrot.slane %v6875, 4
      %v6882 = vshrl.u32 %v6821, 16
      %v6884 = vrot.slane %v6882, 7
      %v6885 = vshll.u32 %v6821, 16
      %v6887 = vor.u32 %v6884, %v6885
      %v6888 = vsel %vm414, %v6880, %v6887
      %v6890 = vshrl.u32 %v6822, 16
      %v6892 = vrot.slane %v6890, 7
      %v6893 = vrot.slane %v6892, 4
      %v6895 = vshrl.u32 %v6823, 16
      %v6897 = vrot.slane %v6895, 7
      %v6898 = vshll.u32 %v6823, 16
      %v6900 = vor.u32 %v6897, %v6898
      %v6901 = vsel %vm414, %v6893, %v6900
      %v6902 = vrot.slane %v6897, 4
      %v6904 = vshrl.u32 %v6824, 16
      %v6906 = vrot.slane %v6904, 7
      %v6907 = vshll.u32 %v6824, 16
      %v6909 = vor.u32 %v6906, %v6907
      %v6910 = vsel %vm414, %v6902, %v6909
      %v6912 = vshrl.u32 %v6825, 16
      %v6914 = vrot.slane %v6912, 7
      %v6915 = vrot.slane %v6914, 4
      %v6917 = vshrl.u32 %v6826, 16
      %v6919 = vrot.slane %v6917, 7
      %v6920 = vshll.u32 %v6826, 16
      %v6922 = vor.u32 %v6919, %v6920
      %v6923 = vsel %vm414, %v6915, %v6922
      %v6924 = vrot.slane %v6919, 4
      %v6926 = vshrl.u32 %v6827, 16
      %v6928 = vrot.slane %v6926, 7
      %v6929 = vshll.u32 %v6827, 16
      %v6931 = vor.u32 %v6928, %v6929
      %v6932 = vsel %vm414, %v6924, %v6931
      %v6934 = vshrl.u32 %v6828, 16
      %v6936 = vrot.slane %v6934, 7
      %v6937 = vrot.slane %v6936, 4
      %v6939 = vshrl.u32 %v6829, 16
      %v6941 = vrot.slane %v6939, 7
      %v6942 = vshll.u32 %v6829, 16
      %v6944 = vor.u32 %v6941, %v6942
      %v6945 = vsel %vm414, %v6937, %v6944
      %v6946 = vrot.slane %v6941, 4
      %v6948 = vshrl.u32 %v6830, 16
      %v6950 = vrot.slane %v6948, 7
      %v6951 = vshll.u32 %v6830, 16
      %v6953 = vor.u32 %v6950, %v6951
      %v6954 = vsel %vm414, %v6946, %v6953
      %v6956 = vshrl.u32 %v6831, 16
      %v6958 = vrot.slane %v6956, 7
      %v6959 = vrot.slane %v6958, 4
      %v6961 = vshrl.u32 %v6832, 16
      %v6963 = vrot.slane %v6961, 7
      %v6964 = vshll.u32 %v6832, 16
      %v6966 = vor.u32 %v6963, %v6964
      %v6967 = vsel %vm414, %v6959, %v6966
      %v6968 = vrot.slane %v6963, 4
      %v6970 = vshrl.u32 %v6833, 16
      %v6972 = vrot.slane %v6970, 7
      %v6973 = vshll.u32 %v6833, 16
      %v6975 = vor.u32 %v6972, %v6973
      %v6976 = vsel %vm414, %v6968, %v6975
      %v6978 = vshrl.u32 %v6834, 16
      %v6980 = vrot.slane %v6978, 7
      %v6981 = vrot.slane %v6980, 4
      %v6983 = vshrl.u32 %v6835, 16
      %v6985 = vrot.slane %v6983, 7
      %v6986 = vshll.u32 %v6835, 16
      %v6988 = vor.u32 %v6985, %v6986
      %v6989 = vsel %vm414, %v6981, %v6988
      %v6990 = vrot.slane %v6985, 4
      %v6992 = vshrl.u32 %v6836, 16
      %v6994 = vrot.slane %v6992, 7
      %v6995 = vshll.u32 %v6836, 16
      %v6997 = vor.u32 %v6994, %v6995
      %v6998 = vsel %vm414, %v6990, %v6997
      %v7000 = vshrl.u32 %v6837, 16
      %v7002 = vrot.slane %v7000, 7
      %v7003 = vrot.slane %v7002, 4
      %v7005 = vshrl.u32 %v6838, 16
      %v7007 = vrot.slane %v7005, 7
      %v7008 = vshll.u32 %v6838, 16
      %v7010 = vor.u32 %v7007, %v7008
      %v7011 = vsel %vm414, %v7003, %v7010
      %v7012 = vrot.slane %v7007, 4
      %v7014 = vshrl.u32 %v6839, 16
      %v7016 = vrot.slane %v7014, 7
      %v7017 = vshll.u32 %v6839, 16
      %v7019 = vor.u32 %v7016, %v7017
      %v7020 = vsel %vm414, %v7012, %v7019
      %v7022 = vshrl.u32 %v6840, 16
      %v7024 = vrot.slane %v7022, 7
      %v7025 = vrot.slane %v7024, 4
      %v7027 = vshrl.u32 %v6841, 16
      %v7029 = vrot.slane %v7027, 7
      %v7030 = vshll.u32 %v6841, 16
      %v7032 = vor.u32 %v7029, %v7030
      %v7033 = vsel %vm414, %v7025, %v7032
      %v7034 = vrot.slane %v7029, 4
      %v7036 = vshrl.u32 %v6842, 16
      %v7038 = vrot.slane %v7036, 7
      %v7039 = vshll.u32 %v6842, 16
      %v7041 = vor.u32 %v7038, %v7039
      %v7042 = vsel %vm414, %v7034, %v7041
      %v7044 = vshrl.u32 %v6843, 16
      %v7046 = vrot.slane %v7044, 7
      %v7047 = vrot.slane %v7046, 4
      %v7049 = vshrl.u32 %v6844, 16
      %v7051 = vrot.slane %v7049, 7
      %v7052 = vshll.u32 %v6844, 16
      %v7054 = vor.u32 %v7051, %v7052
      %v7055 = vsel %vm414, %v7047, %v7054
      %v7056 = vrot.slane %v7051, 4
      %v7058 = vshrl.u32 %v6845, 16
      %v7060 = vrot.slane %v7058, 7
      %v7061 = vshll.u32 %v6845, 16
      %v7063 = vor.u32 %v7060, %v7061
      %v7064 = vsel %vm414, %v7056, %v7063
      %v7066 = vshrl.u32 %v6846, 16
      %v7068 = vrot.slane %v7066, 7
      %v7069 = vrot.slane %v7068, 4
      %v7071 = vshrl.u32 %v6847, 16
      %v7073 = vrot.slane %v7071, 7
      %v7074 = vshll.u32 %v6847, 16
      %v7076 = vor.u32 %v7073, %v7074
      %v7077 = vsel %vm414, %v7069, %v7076
      %v7078 = vrot.slane %v7073, 4
      %v7080 = vshrl.u32 %v6848, 16
      %v7082 = vrot.slane %v7080, 7
      %v7083 = vshll.u32 %v6848, 16
      %v7085 = vor.u32 %v7082, %v7083
      %v7086 = vsel %vm414, %v7078, %v7085
      %v7088 = vshrl.u32 %v6849, 16
      %v7090 = vrot.slane %v7088, 7
      %v7091 = vrot.slane %v7090, 4
      %v7093 = vshrl.u32 %v6850, 16
      %v7095 = vrot.slane %v7093, 7
      %v7096 = vshll.u32 %v6850, 16
      %v7098 = vor.u32 %v7095, %v7096
      %v7099 = vsel %vm414, %v7091, %v7098
      %v7100 = vrot.slane %v7095, 4
      %v7102 = vshrl.u32 %v6851, 16
      %v7104 = vrot.slane %v7102, 7
      %v7105 = vshll.u32 %v6851, 16
      %v7107 = vor.u32 %v7104, %v7105
      %v7108 = vsel %vm414, %v7100, %v7107
      %v7110 = vshrl.u32 %v6852, 16
      %v7112 = vrot.slane %v7110, 7
      %v7113 = vrot.slane %v7112, 4
      %v7115 = vshrl.u32 %v6853, 16
      %v7117 = vrot.slane %v7115, 7
      %v7118 = vshll.u32 %v6853, 16
      %v7120 = vor.u32 %v7117, %v7118
      %v7121 = vsel %vm414, %v7113, %v7120
      %v7122 = vrot.slane %v7117, 4
      %v7124 = vshrl.u32 %v6854, 16
      %v7126 = vrot.slane %v7124, 7
      %v7127 = vshll.u32 %v6854, 16
      %v7129 = vor.u32 %v7126, %v7127
      %v7130 = vsel %vm414, %v7122, %v7129
      %v7132 = vshrl.u32 %v6855, 16
      %v7134 = vrot.slane %v7132, 7
      %v7135 = vrot.slane %v7134, 4
      %v7137 = vshrl.u32 %v6856, 16
      %v7139 = vrot.slane %v7137, 7
      %v7140 = vshll.u32 %v6856, 16
      %v7142 = vor.u32 %v7139, %v7140
      %v7143 = vsel %vm414, %v7135, %v7142
      %v7144 = vrot.slane %v7139, 4
      %v7146 = vshrl.u32 %v6857, 16
      %v7148 = vrot.slane %v7146, 7
      %v7149 = vshll.u32 %v6857, 16
      %v7151 = vor.u32 %v7148, %v7149
      %v7152 = vsel %vm414, %v7144, %v7151
      %v7154 = vshrl.u32 %v6858, 16
      %v7156 = vrot.slane %v7154, 7
      %v7157 = vrot.slane %v7156, 4
      %v7159 = vshrl.u32 %v6859, 16
      %v7161 = vrot.slane %v7159, 7
      %v7162 = vshll.u32 %v6859, 16
      %v7164 = vor.u32 %v7161, %v7162
      %v7165 = vsel %vm414, %v7157, %v7164
      %v7166 = vrot.slane %v7161, 4
      %v7168 = vshrl.u32 %v6860, 16
      %v7170 = vrot.slane %v7168, 7
      %v7171 = vshll.u32 %v6860, 16
      %v7173 = vor.u32 %v7170, %v7171
      %v7174 = vsel %vm414, %v7166, %v7173
      %v7176 = vshrl.u32 %v6861, 16
      %v7178 = vrot.slane %v7176, 7
      %v7179 = vrot.slane %v7178, 4
      %v7181 = vshrl.u32 %v6862, 16
      %v7183 = vrot.slane %v7181, 7
      %v7184 = vshll.u32 %v6862, 16
      %v7186 = vor.u32 %v7183, %v7184
      %v7187 = vsel %vm414, %v7179, %v7186
      %v7188 = vrot.slane %v7183, 4
      %v7190 = vshrl.u32 %v6863, 16
      %v7192 = vrot.slane %v7190, 7
      %v7193 = vshll.u32 %v6863, 16
      %v7195 = vor.u32 %v7192, %v7193
      %v7196 = vsel %vm414, %v7188, %v7195
      %v7198 = vshrl.u32 %v6864, 16
      %v7200 = vrot.slane %v7198, 7
      %v7201 = vrot.slane %v7200, 4
      %v7203 = vshrl.u32 %v6865, 16
      %v7205 = vrot.slane %v7203, 7
      %v7206 = vshll.u32 %v6865, 16
      %v7208 = vor.u32 %v7205, %v7206
      %v7209 = vsel %vm414, %v7201, %v7208
      %v7210 = vrot.slane %v7205, 4
      %v7212 = vshrl.u32 %v6866, 16
      %v7214 = vrot.slane %v7212, 7
      %v7215 = vshll.u32 %v6866, 16
      %v7217 = vor.u32 %v7214, %v7215
      %v7218 = vsel %vm414, %v7210, %v7217
      %v7219 = vld [vmem:[%s3 + $0xc0] sm:$0xf]
      %v7220 = vld [vmem:[%s3 + $0xc4] sm:$0xf]
      %v7221 = vld [vmem:[%s3 + $0xc8] sm:$0xf]
      %v7222 = vld [vmem:[%s3 + $0xcc] sm:$0xf]
      %v7223 = vld [vmem:[%s3 + $0xd0] sm:$0xf]
      %v7224 = vld [vmem:[%s3 + $0xd4] sm:$0xf]
      %v7225 = vld [vmem:[%s3 + $0xd8] sm:$0xf]
      %v7226 = vld [vmem:[%s3 + $0xdc] sm:$0xf]
      %v7227 = vld [vmem:[%s3 + $0xe0] sm:$0xf]
      %v7228 = vld [vmem:[%s3 + $0xe4] sm:$0xf]
      %v7229 = vld [vmem:[%s3 + $0xe8] sm:$0xf]
      %v7230 = vld [vmem:[%s3 + $0xec] sm:$0xf]
      %v7231 = vld [vmem:[%s3 + $0xf0] sm:$0xf]
      %v7232 = vld [vmem:[%s3 + $0xf4] sm:$0xf]
      %v7233 = vld [vmem:[%s3 + $0xf8] sm:$0xf]
      %v7234 = vld [vmem:[%s3 + $0xfc] sm:$0xf]
      %v7235 = vunpack.c.l.b16 %v6879
      %v7236 = vunpack.c.l.b16 %v6888
      %v7237 = vunpack.c.l.b16 %v6901
      %v7238 = vunpack.c.l.b16 %v6910
      %v7239 = vunpack.c.l.b16 %v6923
      %v7240 = vunpack.c.l.b16 %v6932
      %v7241 = vunpack.c.l.b16 %v6945
      %v7242 = vunpack.c.l.b16 %v6954
      %v7243 = vunpack.c.l.b16 %v6967
      %v7244 = vunpack.c.l.b16 %v6976
      %v7245 = vunpack.c.l.b16 %v6989
      %v7246 = vunpack.c.l.b16 %v6998
      %v7247 = vunpack.c.l.b16 %v7011
      %v7248 = vunpack.c.l.b16 %v7020
      %v7249 = vunpack.c.l.b16 %v7033
      %v7250 = vunpack.c.l.b16 %v7042
      %v7251 = vunpack.c.l.b16 %v7055
      %v7252 = vunpack.c.l.b16 %v7064
      %v7253 = vunpack.c.l.b16 %v7077
      %v7254 = vunpack.c.l.b16 %v7086
      %v7255 = vunpack.c.l.b16 %v7099
      %v7256 = vunpack.c.l.b16 %v7108
      %v7257 = vunpack.c.l.b16 %v7121
      %v7258 = vunpack.c.l.b16 %v7130
      %v7259 = vunpack.c.l.b16 %v7143
      %v7260 = vunpack.c.l.b16 %v7152
      %v7261 = vunpack.c.l.b16 %v7165
      %v7262 = vunpack.c.l.b16 %v7174
      %v7263 = vunpack.c.l.b16 %v7187
      %v7264 = vunpack.c.l.b16 %v7196
      %v7265 = vunpack.c.l.b16 %v7209
      %v7266 = vunpack.c.l.b16 %v7218
      %v7267 = vpack.c.b16 %v7236, %v7235
      %v7268 = vpack.c.b16 %v7238, %v7237
      %v7269 = vpack.c.b16 %v7240, %v7239
      %v7270 = vpack.c.b16 %v7242, %v7241
      %v7271 = vpack.c.b16 %v7244, %v7243
      %v7272 = vpack.c.b16 %v7246, %v7245
      %v7273 = vpack.c.b16 %v7248, %v7247
      %v7274 = vpack.c.b16 %v7250, %v7249
      %v7275 = vpack.c.b16 %v7252, %v7251
      %v7276 = vpack.c.b16 %v7254, %v7253
      %v7277 = vpack.c.b16 %v7256, %v7255
      %v7278 = vpack.c.b16 %v7258, %v7257
      %v7279 = vpack.c.b16 %v7260, %v7259
      %v7280 = vpack.c.b16 %v7262, %v7261
      %v7281 = vpack.c.b16 %v7264, %v7263
      %v7282 = vpack.c.b16 %v7266, %v7265
      %v7315 = vunpack.c.l.b16 %v7219
      %v7316 = vunpack.c.l.b16 %v7220
      %v7317 = vunpack.c.l.b16 %v7221
      %v7318 = vunpack.c.l.b16 %v7222
      %v7319 = vunpack.c.l.b16 %v7223
      %v7320 = vunpack.c.l.b16 %v7224
      %v7321 = vunpack.c.l.b16 %v7225
      %v7322 = vunpack.c.l.b16 %v7226
      %v7323 = vunpack.c.l.b16 %v7227
      %v7324 = vunpack.c.l.b16 %v7228
      %v7325 = vunpack.c.l.b16 %v7229
      %v7326 = vunpack.c.l.b16 %v7230
      %v7327 = vunpack.c.l.b16 %v7231
      %v7328 = vunpack.c.l.b16 %v7232
      %v7329 = vunpack.c.l.b16 %v7233
      %v7330 = vunpack.c.l.b16 %v7234
      %v7331 = vpack.c.b16 %v7316, %v7315
      %v7332 = vpack.c.b16 %v7318, %v7317
      %v7333 = vpack.c.b16 %v7320, %v7319
      %v7334 = vpack.c.b16 %v7322, %v7321
      %v7335 = vpack.c.b16 %v7324, %v7323
      %v7336 = vpack.c.b16 %v7326, %v7325
      %v7337 = vpack.c.b16 %v7328, %v7327
      %v7338 = vpack.c.b16 %v7330, %v7329
      %7347 = vmatpush.bf16.msra.mxu0 %v7338
      %7348 = vmatpush.bf16.msra.mxu0 %v7337
      %7349 = vmatpush.bf16.msra.mxu0 %v7336
      %7350 = vmatpush.bf16.msra.mxu0 %v7335
      %7351 = vmatpush.bf16.msra.mxu0 %v7334
      %7352 = vmatpush.bf16.msra.mxu0 %v7333
      %7353 = vmatpush.bf16.msra.mxu0 %v7332
      %7354 = vmatpush.bf16.msra.mxu0 %v7331
      %7355 = vmatmul.bf16.gmra.mxu0 %v7267
      %v7356 = vpop.f32.mrf.mxu0
      %v7357 = vadd.f32 0.0, %v7356
      %v7358 = vpop.f32.mrf.mxu0
      %v7359 = vadd.f32 0.0, %v7358
      %7360 = vmatmul.bf16.gmra.mxu0 %v7268
      %v7361 = vpop.f32.mrf.mxu0
      %v7362 = vadd.f32 0.0, %v7361
      %v7363 = vpop.f32.mrf.mxu0
      %v7364 = vadd.f32 0.0, %v7363
      %7365 = vmatmul.bf16.gmra.mxu0 %v7269
      %v7366 = vpop.f32.mrf.mxu0
      %v7367 = vadd.f32 0.0, %v7366
      %v7368 = vpop.f32.mrf.mxu0
      %v7369 = vadd.f32 0.0, %v7368
      %7370 = vmatmul.bf16.gmra.mxu0 %v7270
      %v7371 = vpop.f32.mrf.mxu0
      %v7372 = vadd.f32 0.0, %v7371
      %v7373 = vpop.f32.mrf.mxu0
      %v7374 = vadd.f32 0.0, %v7373
      %7375 = vmatmul.bf16.gmra.mxu0 %v7271
      %v7376 = vpop.f32.mrf.mxu0
      %v7377 = vadd.f32 0.0, %v7376
      %v7378 = vpop.f32.mrf.mxu0
      %v7379 = vadd.f32 0.0, %v7378
      %7380 = vmatmul.bf16.gmra.mxu0 %v7272
      %v7381 = vpop.f32.mrf.mxu0
      %v7382 = vadd.f32 0.0, %v7381
      %v7383 = vpop.f32.mrf.mxu0
      %v7384 = vadd.f32 0.0, %v7383
      %7385 = vmatmul.bf16.gmra.mxu0 %v7273
      %v7386 = vpop.f32.mrf.mxu0
      %v7387 = vadd.f32 0.0, %v7386
      %v7388 = vpop.f32.mrf.mxu0
      %v7389 = vadd.f32 0.0, %v7388
      %7390 = vmatmul.bf16.gmra.mxu0 %v7274
      %v7391 = vpop.f32.mrf.mxu0
      %v7392 = vadd.f32 0.0, %v7391
      %v7393 = vpop.f32.mrf.mxu0
      %v7394 = vadd.f32 0.0, %v7393
      %7395 = vmatmul.bf16.gmra.mxu0 %v7275
      %v7396 = vpop.f32.mrf.mxu0
      %v7397 = vadd.f32 0.0, %v7396
      %v7398 = vpop.f32.mrf.mxu0
      %v7399 = vadd.f32 0.0, %v7398
      %7400 = vmatmul.bf16.gmra.mxu0 %v7276
      %v7401 = vpop.f32.mrf.mxu0
      %v7402 = vadd.f32 0.0, %v7401
      %v7403 = vpop.f32.mrf.mxu0
      %v7404 = vadd.f32 0.0, %v7403
      %7405 = vmatmul.bf16.gmra.mxu0 %v7277
      %v7406 = vpop.f32.mrf.mxu0
      %v7407 = vadd.f32 0.0, %v7406
      %v7408 = vpop.f32.mrf.mxu0
      %v7409 = vadd.f32 0.0, %v7408
      %7410 = vmatmul.bf16.gmra.mxu0 %v7278
      %v7411 = vpop.f32.mrf.mxu0
      %v7412 = vadd.f32 0.0, %v7411
      %v7413 = vpop.f32.mrf.mxu0
      %v7414 = vadd.f32 0.0, %v7413
      %7415 = vmatmul.bf16.gmra.mxu0 %v7279
      %v7416 = vpop.f32.mrf.mxu0
      %v7417 = vadd.f32 0.0, %v7416
      %v7418 = vpop.f32.mrf.mxu0
      %v7419 = vadd.f32 0.0, %v7418
      %7420 = vmatmul.bf16.gmra.mxu0 %v7280
      %v7421 = vpop.f32.mrf.mxu0
      %v7422 = vadd.f32 0.0, %v7421
      %v7423 = vpop.f32.mrf.mxu0
      %v7424 = vadd.f32 0.0, %v7423
      %7425 = vmatmul.bf16.gmra.mxu0 %v7281
      %v7426 = vpop.f32.mrf.mxu0
      %v7427 = vadd.f32 0.0, %v7426
      %v7428 = vpop.f32.mrf.mxu0
      %v7429 = vadd.f32 0.0, %v7428
      %7430 = vmatmul.bf16.gmra.mxu0 %v7282
      %v7431 = vpop.f32.mrf.mxu0
      %v7432 = vadd.f32 0.0, %v7431
      %v7433 = vpop.f32.mrf.mxu0
      %v7434 = vadd.f32 0.0, %v7433
      %7435 = vdwg.mxu0
      %v7436 = vadd.f32 %v6787, %v7357
      %v7437 = vadd.f32 %v6788, %v7359
      %v7438 = vadd.f32 %v6789, %v7362
      %v7439 = vadd.f32 %v6790, %v7364
      %v7440 = vadd.f32 %v6791, %v7367
      %v7441 = vadd.f32 %v6792, %v7369
      %v7442 = vadd.f32 %v6793, %v7372
      %v7443 = vadd.f32 %v6794, %v7374
      %v7444 = vadd.f32 %v6795, %v7377
      %v7445 = vadd.f32 %v6796, %v7379
      %v7446 = vadd.f32 %v6797, %v7382
      %v7447 = vadd.f32 %v6798, %v7384
      %v7448 = vadd.f32 %v6799, %v7387
      %v7449 = vadd.f32 %v6800, %v7389
      %v7450 = vadd.f32 %v6801, %v7392
      %v7451 = vadd.f32 %v6802, %v7394
      %v7452 = vadd.f32 %v6803, %v7397
      %v7453 = vadd.f32 %v6804, %v7399
      %v7454 = vadd.f32 %v6805, %v7402
      %v7455 = vadd.f32 %v6806, %v7404
      %v7456 = vadd.f32 %v6807, %v7407
      %v7457 = vadd.f32 %v6808, %v7409
      %v7458 = vadd.f32 %v6809, %v7412
      %v7459 = vadd.f32 %v6810, %v7414
      %v7460 = vadd.f32 %v6811, %v7417
      %v7461 = vadd.f32 %v6812, %v7419
      %v7462 = vadd.f32 %v6813, %v7422
      %v7463 = vadd.f32 %v6814, %v7424
      %v7464 = vadd.f32 %v6815, %v7427
      %v7465 = vadd.f32 %v6816, %v7429
      %v7466 = vadd.f32 %v6817, %v7432
      %v7467 = vadd.f32 %v6818, %v7434
      %v7468 = vld [vmem:[%s3 + $0x100] sm:$0xf]
      %v7469 = vld [vmem:[%s3 + $0x104] sm:$0xf]
      %v7470 = vld [vmem:[%s3 + $0x108] sm:$0xf]
      %v7471 = vld [vmem:[%s3 + $0x10c] sm:$0xf]
      %v7472 = vld [vmem:[%s3 + $0x110] sm:$0xf]
      %v7473 = vld [vmem:[%s3 + $0x114] sm:$0xf]
      %v7474 = vld [vmem:[%s3 + $0x118] sm:$0xf]
      %v7475 = vld [vmem:[%s3 + $0x11c] sm:$0xf]
      %v7476 = vld [vmem:[%s3 + $0x120] sm:$0xf]
      %v7477 = vld [vmem:[%s3 + $0x124] sm:$0xf]
      %v7478 = vld [vmem:[%s3 + $0x128] sm:$0xf]
      %v7479 = vld [vmem:[%s3 + $0x12c] sm:$0xf]
      %v7480 = vld [vmem:[%s3 + $0x130] sm:$0xf]
      %v7481 = vld [vmem:[%s3 + $0x134] sm:$0xf]
      %v7482 = vld [vmem:[%s3 + $0x138] sm:$0xf]
      %v7483 = vld [vmem:[%s3 + $0x13c] sm:$0xf]
      %v7516 = vunpack.c.l.b16 %v6820
      %v7517 = vunpack.c.l.b16 %v6821
      %v7518 = vunpack.c.l.b16 %v6823
      %v7519 = vunpack.c.l.b16 %v6824
      %v7520 = vunpack.c.l.b16 %v6826
      %v7521 = vunpack.c.l.b16 %v6827
      %v7522 = vunpack.c.l.b16 %v6829
      %v7523 = vunpack.c.l.b16 %v6830
      %v7524 = vunpack.c.l.b16 %v6832
      %v7525 = vunpack.c.l.b16 %v6833
      %v7526 = vunpack.c.l.b16 %v6835
      %v7527 = vunpack.c.l.b16 %v6836
      %v7528 = vunpack.c.l.b16 %v6838
      %v7529 = vunpack.c.l.b16 %v6839
      %v7530 = vunpack.c.l.b16 %v6841
      %v7531 = vunpack.c.l.b16 %v6842
      %v7532 = vunpack.c.l.b16 %v6844
      %v7533 = vunpack.c.l.b16 %v6845
      %v7534 = vunpack.c.l.b16 %v6847
      %v7535 = vunpack.c.l.b16 %v6848
      %v7536 = vunpack.c.l.b16 %v6850
      %v7537 = vunpack.c.l.b16 %v6851
      %v7538 = vunpack.c.l.b16 %v6853
      %v7539 = vunpack.c.l.b16 %v6854
      %v7540 = vunpack.c.l.b16 %v6856
      %v7541 = vunpack.c.l.b16 %v6857
      %v7542 = vunpack.c.l.b16 %v6859
      %v7543 = vunpack.c.l.b16 %v6860
      %v7544 = vunpack.c.l.b16 %v6862
      %v7545 = vunpack.c.l.b16 %v6863
      %v7546 = vunpack.c.l.b16 %v6865
      %v7547 = vunpack.c.l.b16 %v6866
      %v7548 = vpack.c.b16 %v7517, %v7516
      %v7549 = vpack.c.b16 %v7519, %v7518
      %v7550 = vpack.c.b16 %v7521, %v7520
      %v7551 = vpack.c.b16 %v7523, %v7522
      %v7552 = vpack.c.b16 %v7525, %v7524
      %v7553 = vpack.c.b16 %v7527, %v7526
      %v7554 = vpack.c.b16 %v7529, %v7528
      %v7555 = vpack.c.b16 %v7531, %v7530
      %v7556 = vpack.c.b16 %v7533, %v7532
      %v7557 = vpack.c.b16 %v7535, %v7534
      %v7558 = vpack.c.b16 %v7537, %v7536
      %v7559 = vpack.c.b16 %v7539, %v7538
      %v7560 = vpack.c.b16 %v7541, %v7540
      %v7561 = vpack.c.b16 %v7543, %v7542
      %v7562 = vpack.c.b16 %v7545, %v7544
      %v7563 = vpack.c.b16 %v7547, %v7546
      %v7596 = vunpack.c.l.b16 %v7468
      %v7597 = vunpack.c.l.b16 %v7469
      %v7598 = vunpack.c.l.b16 %v7470
      %v7599 = vunpack.c.l.b16 %v7471
      %v7600 = vunpack.c.l.b16 %v7472
      %v7601 = vunpack.c.l.b16 %v7473
      %v7602 = vunpack.c.l.b16 %v7474
      %v7603 = vunpack.c.l.b16 %v7475
      %v7604 = vunpack.c.l.b16 %v7476
      %v7605 = vunpack.c.l.b16 %v7477
      %v7606 = vunpack.c.l.b16 %v7478
      %v7607 = vunpack.c.l.b16 %v7479
      %v7608 = vunpack.c.l.b16 %v7480
      %v7609 = vunpack.c.l.b16 %v7481
      %v7610 = vunpack.c.l.b16 %v7482
      %v7611 = vunpack.c.l.b16 %v7483
      %v7612 = vpack.c.b16 %v7597, %v7596
      %v7613 = vpack.c.b16 %v7599, %v7598
      %v7614 = vpack.c.b16 %v7601, %v7600
      %v7615 = vpack.c.b16 %v7603, %v7602
      %v7616 = vpack.c.b16 %v7605, %v7604
      %v7617 = vpack.c.b16 %v7607, %v7606
      %v7618 = vpack.c.b16 %v7609, %v7608
      %v7619 = vpack.c.b16 %v7611, %v7610
      %7628 = vmatpush.bf16.msra.mxu0 %v7619
      %7629 = vmatpush.bf16.msra.mxu0 %v7618
      %7630 = vmatpush.bf16.msra.mxu0 %v7617
      %7631 = vmatpush.bf16.msra.mxu0 %v7616
      %7632 = vmatpush.bf16.msra.mxu0 %v7615
      %7633 = vmatpush.bf16.msra.mxu0 %v7614
      %7634 = vmatpush.bf16.msra.mxu0 %v7613
      %7635 = vmatpush.bf16.msra.mxu0 %v7612
      %7636 = vmatmul.bf16.gmra.mxu0 %v7548
      %v7637 = vpop.f32.mrf.mxu0
      %v7638 = vadd.f32 0.0, %v7637
      %v7639 = vpop.f32.mrf.mxu0
      %v7640 = vadd.f32 0.0, %v7639
      %7641 = vmatmul.bf16.gmra.mxu0 %v7549
      %v7642 = vpop.f32.mrf.mxu0
      %v7643 = vadd.f32 0.0, %v7642
      %v7644 = vpop.f32.mrf.mxu0
      %v7645 = vadd.f32 0.0, %v7644
      %7646 = vmatmul.bf16.gmra.mxu0 %v7550
      %v7647 = vpop.f32.mrf.mxu0
      %v7648 = vadd.f32 0.0, %v7647
      %v7649 = vpop.f32.mrf.mxu0
      %v7650 = vadd.f32 0.0, %v7649
      %7651 = vmatmul.bf16.gmra.mxu0 %v7551
      %v7652 = vpop.f32.mrf.mxu0
      %v7653 = vadd.f32 0.0, %v7652
      %v7654 = vpop.f32.mrf.mxu0
      %v7655 = vadd.f32 0.0, %v7654
      %7656 = vmatmul.bf16.gmra.mxu0 %v7552
      %v7657 = vpop.f32.mrf.mxu0
      %v7658 = vadd.f32 0.0, %v7657
      %v7659 = vpop.f32.mrf.mxu0
      %v7660 = vadd.f32 0.0, %v7659
      %7661 = vmatmul.bf16.gmra.mxu0 %v7553
      %v7662 = vpop.f32.mrf.mxu0
      %v7663 = vadd.f32 0.0, %v7662
      %v7664 = vpop.f32.mrf.mxu0
      %v7665 = vadd.f32 0.0, %v7664
      %7666 = vmatmul.bf16.gmra.mxu0 %v7554
      %v7667 = vpop.f32.mrf.mxu0
      %v7668 = vadd.f32 0.0, %v7667
      %v7669 = vpop.f32.mrf.mxu0
      %v7670 = vadd.f32 0.0, %v7669
      %7671 = vmatmul.bf16.gmra.mxu0 %v7555
      %v7672 = vpop.f32.mrf.mxu0
      %v7673 = vadd.f32 0.0, %v7672
      %v7674 = vpop.f32.mrf.mxu0
      %v7675 = vadd.f32 0.0, %v7674
      %7676 = vmatmul.bf16.gmra.mxu0 %v7556
      %v7677 = vpop.f32.mrf.mxu0
      %v7678 = vadd.f32 0.0, %v7677
      %v7679 = vpop.f32.mrf.mxu0
      %v7680 = vadd.f32 0.0, %v7679
      %7681 = vmatmul.bf16.gmra.mxu0 %v7557
      %v7682 = vpop.f32.mrf.mxu0
      %v7683 = vadd.f32 0.0, %v7682
      %v7684 = vpop.f32.mrf.mxu0
      %v7685 = vadd.f32 0.0, %v7684
      %7686 = vmatmul.bf16.gmra.mxu0 %v7558
      %v7687 = vpop.f32.mrf.mxu0
      %v7688 = vadd.f32 0.0, %v7687
      %v7689 = vpop.f32.mrf.mxu0
      %v7690 = vadd.f32 0.0, %v7689
      %7691 = vmatmul.bf16.gmra.mxu0 %v7559
      %v7692 = vpop.f32.mrf.mxu0
      %v7693 = vadd.f32 0.0, %v7692
      %v7694 = vpop.f32.mrf.mxu0
      %v7695 = vadd.f32 0.0, %v7694
      %7696 = vmatmul.bf16.gmra.mxu0 %v7560
      %v7697 = vpop.f32.mrf.mxu0
      %v7698 = vadd.f32 0.0, %v7697
      %v7699 = vpop.f32.mrf.mxu0
      %v7700 = vadd.f32 0.0, %v7699
      %7701 = vmatmul.bf16.gmra.mxu0 %v7561
      %v7702 = vpop.f32.mrf.mxu0
      %v7703 = vadd.f32 0.0, %v7702
      %v7704 = vpop.f32.mrf.mxu0
      %v7705 = vadd.f32 0.0, %v7704
      %7706 = vmatmul.bf16.gmra.mxu0 %v7562
      %v7707 = vpop.f32.mrf.mxu0
      %v7708 = vadd.f32 0.0, %v7707
      %v7709 = vpop.f32.mrf.mxu0
      %v7710 = vadd.f32 0.0, %v7709
      %7711 = vmatmul.bf16.gmra.mxu0 %v7563
      %v7712 = vpop.f32.mrf.mxu0
      %v7713 = vadd.f32 0.0, %v7712
      %v7714 = vpop.f32.mrf.mxu0
      %v7715 = vadd.f32 0.0, %v7714
      %7716 = vdwg.mxu0
      %v7717 = vadd.f32 %v7436, %v7638
      %v7718 = vadd.f32 %v7437, %v7640
      %v7719 = vadd.f32 %v7438, %v7643
      %v7720 = vadd.f32 %v7439, %v7645
      %v7721 = vadd.f32 %v7440, %v7648
      %v7722 = vadd.f32 %v7441, %v7650
      %v7723 = vadd.f32 %v7442, %v7653
      %v7724 = vadd.f32 %v7443, %v7655
      %v7725 = vadd.f32 %v7444, %v7658
      %v7726 = vadd.f32 %v7445, %v7660
      %v7727 = vadd.f32 %v7446, %v7663
      %v7728 = vadd.f32 %v7447, %v7665
      %v7729 = vadd.f32 %v7448, %v7668
      %v7730 = vadd.f32 %v7449, %v7670
      %v7731 = vadd.f32 %v7450, %v7673
      %v7732 = vadd.f32 %v7451, %v7675
      %v7733 = vadd.f32 %v7452, %v7678
      %v7734 = vadd.f32 %v7453, %v7680
      %v7735 = vadd.f32 %v7454, %v7683
      %v7736 = vadd.f32 %v7455, %v7685
      %v7737 = vadd.f32 %v7456, %v7688
      %v7738 = vadd.f32 %v7457, %v7690
      %v7739 = vadd.f32 %v7458, %v7693
      %v7740 = vadd.f32 %v7459, %v7695
      %v7741 = vadd.f32 %v7460, %v7698
      %v7742 = vadd.f32 %v7461, %v7700
      %v7743 = vadd.f32 %v7462, %v7703
      %v7744 = vadd.f32 %v7463, %v7705
      %v7745 = vadd.f32 %v7464, %v7708
      %v7746 = vadd.f32 %v7465, %v7710
      %v7747 = vadd.f32 %v7466, %v7713
      %v7748 = vadd.f32 %v7467, %v7715
      %v7749 = vld [vmem:[%s331 + $0x8] sm:$0xf]
      %v7750 = vld [vmem:[%s331 + $0xc] sm:$0xf]
      %v7751 = vld [vmem:[%s331 + $0x10] sm:$0x1]
      %v7752 = vld [vmem:[%s331 + $0x20] sm:$0xf]
      %v7753 = vld [vmem:[%s331 + $0x24] sm:$0xf]
      %v7754 = vld [vmem:[%s331 + $0x28] sm:$0x1]
      %v7755 = vld [vmem:[%s331 + $0x38] sm:$0xf]
      %v7756 = vld [vmem:[%s331 + $0x3c] sm:$0xf]
      %v7757 = vld [vmem:[%s331 + $0x40] sm:$0x1]
      %v7758 = vld [vmem:[%s331 + $0x50] sm:$0xf]
      %v7759 = vld [vmem:[%s331 + $0x54] sm:$0xf]
      %v7760 = vld [vmem:[%s331 + $0x58] sm:$0x1]
      %v7761 = vld [vmem:[%s331 + $0x68] sm:$0xf]
      %v7762 = vld [vmem:[%s331 + $0x6c] sm:$0xf]
      %v7763 = vld [vmem:[%s331 + $0x70] sm:$0x1]
      %v7764 = vld [vmem:[%s331 + $0x80] sm:$0xf]
      %v7765 = vld [vmem:[%s331 + $0x84] sm:$0xf]
      %v7766 = vld [vmem:[%s331 + $0x88] sm:$0x1]
      %v7767 = vld [vmem:[%s331 + $0x98] sm:$0xf]
      %v7768 = vld [vmem:[%s331 + $0x9c] sm:$0xf]
      %v7769 = vld [vmem:[%s331 + $0xa0] sm:$0x1]
      %v7770 = vld [vmem:[%s331 + $0xb0] sm:$0xf]
      %v7771 = vld [vmem:[%s331 + $0xb4] sm:$0xf]
      %v7772 = vld [vmem:[%s331 + $0xb8] sm:$0x1]
      %v7773 = vld [vmem:[%s331 + $0xc8] sm:$0xf]
      %v7774 = vld [vmem:[%s331 + $0xcc] sm:$0xf]
      %v7775 = vld [vmem:[%s331 + $0xd0] sm:$0x1]
      %v7776 = vld [vmem:[%s331 + $0xe0] sm:$0xf]
      %v7777 = vld [vmem:[%s331 + $0xe4] sm:$0xf]
      %v7778 = vld [vmem:[%s331 + $0xe8] sm:$0x1]
      %v7779 = vld [vmem:[%s331 + $0xf8] sm:$0xf]
      %v7780 = vld [vmem:[%s331 + $0xfc] sm:$0xf]
      %v7781 = vld [vmem:[%s331 + $0x100] sm:$0x1]
      %v7782 = vld [vmem:[%s331 + $0x110] sm:$0xf]
      %v7783 = vld [vmem:[%s331 + $0x114] sm:$0xf]
      %v7784 = vld [vmem:[%s331 + $0x118] sm:$0x1]
      %v7785 = vld [vmem:[%s331 + $0x128] sm:$0xf]
      %v7786 = vld [vmem:[%s331 + $0x12c] sm:$0xf]
      %v7787 = vld [vmem:[%s331 + $0x130] sm:$0x1]
      %v7788 = vld [vmem:[%s331 + $0x140] sm:$0xf]
      %v7789 = vld [vmem:[%s331 + $0x144] sm:$0xf]
      %v7790 = vld [vmem:[%s331 + $0x148] sm:$0x1]
      %v7791 = vld [vmem:[%s331 + $0x158] sm:$0xf]
      %v7792 = vld [vmem:[%s331 + $0x15c] sm:$0xf]
      %v7793 = vld [vmem:[%s331 + $0x160] sm:$0x1]
      %v7794 = vld [vmem:[%s331 + $0x170] sm:$0xf]
      %v7795 = vld [vmem:[%s331 + $0x174] sm:$0xf]
      %v7796 = vld [vmem:[%s331 + $0x178] sm:$0x1]
      %v7798 = vshrl.u32 %v7749, 16
      %v7800 = vrot.slane %v7798, 4
      %v7801 = vshll.u32 %v7749, 16
      %v7803 = vrot.slane %v7801, 5
      %v7804 = vor.u32 %v7800, %v7803
      %v7805 = vrot.slane %v7804, 4
      %v7807 = vshll.u32 %v7750, 16
      %v7809 = vrot.slane %v7807, 5
      %v7810 = vsel %vm1283, %v7805, %v7809
      %v7811 = vshrl.u32 %v7750, 16
      %v7813 = vrot.slane %v7811, 4
      %v7814 = vor.u32 %v7813, %v7809
      %v7815 = vrot.slane %v7814, 4
      %v7817 = vshll.u32 %v7751, 16
      %v7819 = vrot.slane %v7817, 5
      %v7820 = vsel %vm1283, %v7815, %v7819
      %v7822 = vshrl.u32 %v7752, 16
      %v7824 = vrot.slane %v7822, 4
      %v7825 = vshll.u32 %v7752, 16
      %v7827 = vrot.slane %v7825, 5
      %v7828 = vor.u32 %v7824, %v7827
      %v7829 = vrot.slane %v7828, 4
      %v7831 = vshll.u32 %v7753, 16
      %v7833 = vrot.slane %v7831, 5
      %v7834 = vsel %vm1283, %v7829, %v7833
      %v7835 = vshrl.u32 %v7753, 16
      %v7837 = vrot.slane %v7835, 4
      %v7838 = vor.u32 %v7837, %v7833
      %v7839 = vrot.slane %v7838, 4
      %v7841 = vshll.u32 %v7754, 16
      %v7843 = vrot.slane %v7841, 5
      %v7844 = vsel %vm1283, %v7839, %v7843
      %v7846 = vshrl.u32 %v7755, 16
      %v7848 = vrot.slane %v7846, 4
      %v7849 = vshll.u32 %v7755, 16
      %v7851 = vrot.slane %v7849, 5
      %v7852 = vor.u32 %v7848, %v7851
      %v7853 = vrot.slane %v7852, 4
      %v7855 = vshll.u32 %v7756, 16
      %v7857 = vrot.slane %v7855, 5
      %v7858 = vsel %vm1283, %v7853, %v7857
      %v7859 = vshrl.u32 %v7756, 16
      %v7861 = vrot.slane %v7859, 4
      %v7862 = vor.u32 %v7861, %v7857
      %v7863 = vrot.slane %v7862, 4
      %v7865 = vshll.u32 %v7757, 16
      %v7867 = vrot.slane %v7865, 5
      %v7868 = vsel %vm1283, %v7863, %v7867
      %v7870 = vshrl.u32 %v7758, 16
      %v7872 = vrot.slane %v7870, 4
      %v7873 = vshll.u32 %v7758, 16
      %v7875 = vrot.slane %v7873, 5
      %v7876 = vor.u32 %v7872, %v7875
      %v7877 = vrot.slane %v7876, 4
      %v7879 = vshll.u32 %v7759, 16
      %v7881 = vrot.slane %v7879, 5
      %v7882 = vsel %vm1283, %v7877, %v7881
      %v7883 = vshrl.u32 %v7759, 16
      %v7885 = vrot.slane %v7883, 4
      %v7886 = vor.u32 %v7885, %v7881
      %v7887 = vrot.slane %v7886, 4
      %v7889 = vshll.u32 %v7760, 16
      %v7891 = vrot.slane %v7889, 5
      %v7892 = vsel %vm1283, %v7887, %v7891
      %v7894 = vshrl.u32 %v7761, 16
      %v7896 = vrot.slane %v7894, 4
      %v7897 = vshll.u32 %v7761, 16
      %v7899 = vrot.slane %v7897, 5
      %v7900 = vor.u32 %v7896, %v7899
      %v7901 = vrot.slane %v7900, 4
      %v7903 = vshll.u32 %v7762, 16
      %v7905 = vrot.slane %v7903, 5
      %v7906 = vsel %vm1283, %v7901, %v7905
      %v7907 = vshrl.u32 %v7762, 16
      %v7909 = vrot.slane %v7907, 4
      %v7910 = vor.u32 %v7909, %v7905
      %v7911 = vrot.slane %v7910, 4
      %v7913 = vshll.u32 %v7763, 16
      %v7915 = vrot.slane %v7913, 5
      %v7916 = vsel %vm1283, %v7911, %v7915
      %v7918 = vshrl.u32 %v7764, 16
      %v7920 = vrot.slane %v7918, 4
      %v7921 = vshll.u32 %v7764, 16
      %v7923 = vrot.slane %v7921, 5
      %v7924 = vor.u32 %v7920, %v7923
      %v7925 = vrot.slane %v7924, 4
      %v7927 = vshll.u32 %v7765, 16
      %v7929 = vrot.slane %v7927, 5
      %v7930 = vsel %vm1283, %v7925, %v7929
      %v7931 = vshrl.u32 %v7765, 16
      %v7933 = vrot.slane %v7931, 4
      %v7934 = vor.u32 %v7933, %v7929
      %v7935 = vrot.slane %v7934, 4
      %v7937 = vshll.u32 %v7766, 16
      %v7939 = vrot.slane %v7937, 5
      %v7940 = vsel %vm1283, %v7935, %v7939
      %v7942 = vshrl.u32 %v7767, 16
      %v7944 = vrot.slane %v7942, 4
      %v7945 = vshll.u32 %v7767, 16
      %v7947 = vrot.slane %v7945, 5
      %v7948 = vor.u32 %v7944, %v7947
      %v7949 = vrot.slane %v7948, 4
      %v7951 = vshll.u32 %v7768, 16
      %v7953 = vrot.slane %v7951, 5
      %v7954 = vsel %vm1283, %v7949, %v7953
      %v7955 = vshrl.u32 %v7768, 16
      %v7957 = vrot.slane %v7955, 4
      %v7958 = vor.u32 %v7957, %v7953
      %v7959 = vrot.slane %v7958, 4
      %v7961 = vshll.u32 %v7769, 16
      %v7963 = vrot.slane %v7961, 5
      %v7964 = vsel %vm1283, %v7959, %v7963
      %v7966 = vshrl.u32 %v7770, 16
      %v7968 = vrot.slane %v7966, 4
      %v7969 = vshll.u32 %v7770, 16
      %v7971 = vrot.slane %v7969, 5
      %v7972 = vor.u32 %v7968, %v7971
      %v7973 = vrot.slane %v7972, 4
      %v7975 = vshll.u32 %v7771, 16
      %v7977 = vrot.slane %v7975, 5
      %v7978 = vsel %vm1283, %v7973, %v7977
      %v7979 = vshrl.u32 %v7771, 16
      %v7981 = vrot.slane %v7979, 4
      %v7982 = vor.u32 %v7981, %v7977
      %v7983 = vrot.slane %v7982, 4
      %v7985 = vshll.u32 %v7772, 16
      %v7987 = vrot.slane %v7985, 5
      %v7988 = vsel %vm1283, %v7983, %v7987
      %v7990 = vshrl.u32 %v7773, 16
      %v7992 = vrot.slane %v7990, 4
      %v7993 = vshll.u32 %v7773, 16
      %v7995 = vrot.slane %v7993, 5
      %v7996 = vor.u32 %v7992, %v7995
      %v7997 = vrot.slane %v7996, 4
      %v7999 = vshll.u32 %v7774, 16
      %v8001 = vrot.slane %v7999, 5
      %v8002 = vsel %vm1283, %v7997, %v8001
      %v8003 = vshrl.u32 %v7774, 16
      %v8005 = vrot.slane %v8003, 4
      %v8006 = vor.u32 %v8005, %v8001
      %v8007 = vrot.slane %v8006, 4
      %v8009 = vshll.u32 %v7775, 16
      %v8011 = vrot.slane %v8009, 5
      %v8012 = vsel %vm1283, %v8007, %v8011
      %v8014 = vshrl.u32 %v7776, 16
      %v8016 = vrot.slane %v8014, 4
      %v8017 = vshll.u32 %v7776, 16
      %v8019 = vrot.slane %v8017, 5
      %v8020 = vor.u32 %v8016, %v8019
      %v8021 = vrot.slane %v8020, 4
      %v8023 = vshll.u32 %v7777, 16
      %v8025 = vrot.slane %v8023, 5
      %v8026 = vsel %vm1283, %v8021, %v8025
      %v8027 = vshrl.u32 %v7777, 16
      %v8029 = vrot.slane %v8027, 4
      %v8030 = vor.u32 %v8029, %v8025
      %v8031 = vrot.slane %v8030, 4
      %v8033 = vshll.u32 %v7778, 16
      %v8035 = vrot.slane %v8033, 5
      %v8036 = vsel %vm1283, %v8031, %v8035
      %v8038 = vshrl.u32 %v7779, 16
      %v8040 = vrot.slane %v8038, 4
      %v8041 = vshll.u32 %v7779, 16
      %v8043 = vrot.slane %v8041, 5
      %v8044 = vor.u32 %v8040, %v8043
      %v8045 = vrot.slane %v8044, 4
      %v8047 = vshll.u32 %v7780, 16
      %v8049 = vrot.slane %v8047, 5
      %v8050 = vsel %vm1283, %v8045, %v8049
      %v8051 = vshrl.u32 %v7780, 16
      %v8053 = vrot.slane %v8051, 4
      %v8054 = vor.u32 %v8053, %v8049
      %v8055 = vrot.slane %v8054, 4
      %v8057 = vshll.u32 %v7781, 16
      %v8059 = vrot.slane %v8057, 5
      %v8060 = vsel %vm1283, %v8055, %v8059
      %v8062 = vshrl.u32 %v7782, 16
      %v8064 = vrot.slane %v8062, 4
      %v8065 = vshll.u32 %v7782, 16
      %v8067 = vrot.slane %v8065, 5
      %v8068 = vor.u32 %v8064, %v8067
      %v8069 = vrot.slane %v8068, 4
      %v8071 = vshll.u32 %v7783, 16
      %v8073 = vrot.slane %v8071, 5
      %v8074 = vsel %vm1283, %v8069, %v8073
      %v8075 = vshrl.u32 %v7783, 16
      %v8077 = vrot.slane %v8075, 4
      %v8078 = vor.u32 %v8077, %v8073
      %v8079 = vrot.slane %v8078, 4
      %v8081 = vshll.u32 %v7784, 16
      %v8083 = vrot.slane %v8081, 5
      %v8084 = vsel %vm1283, %v8079, %v8083
      %v8086 = vshrl.u32 %v7785, 16
      %v8088 = vrot.slane %v8086, 4
      %v8089 = vshll.u32 %v7785, 16
      %v8091 = vrot.slane %v8089, 5
      %v8092 = vor.u32 %v8088, %v8091
      %v8093 = vrot.slane %v8092, 4
      %v8095 = vshll.u32 %v7786, 16
      %v8097 = vrot.slane %v8095, 5
      %v8098 = vsel %vm1283, %v8093, %v8097
      %v8099 = vshrl.u32 %v7786, 16
      %v8101 = vrot.slane %v8099, 4
      %v8102 = vor.u32 %v8101, %v8097
      %v8103 = vrot.slane %v8102, 4
      %v8105 = vshll.u32 %v7787, 16
      %v8107 = vrot.slane %v8105, 5
      %v8108 = vsel %vm1283, %v8103, %v8107
      %v8110 = vshrl.u32 %v7788, 16
      %v8112 = vrot.slane %v8110, 4
      %v8113 = vshll.u32 %v7788, 16
      %v8115 = vrot.slane %v8113, 5
      %v8116 = vor.u32 %v8112, %v8115
      %v8117 = vrot.slane %v8116, 4
      %v8119 = vshll.u32 %v7789, 16
      %v8121 = vrot.slane %v8119, 5
      %v8122 = vsel %vm1283, %v8117, %v8121
      %v8123 = vshrl.u32 %v7789, 16
      %v8125 = vrot.slane %v8123, 4
      %v8126 = vor.u32 %v8125, %v8121
      %v8127 = vrot.slane %v8126, 4
      %v8129 = vshll.u32 %v7790, 16
      %v8131 = vrot.slane %v8129, 5
      %v8132 = vsel %vm1283, %v8127, %v8131
      %v8134 = vshrl.u32 %v7791, 16
      %v8136 = vrot.slane %v8134, 4
      %v8137 = vshll.u32 %v7791, 16
      %v8139 = vrot.slane %v8137, 5
      %v8140 = vor.u32 %v8136, %v8139
      %v8141 = vrot.slane %v8140, 4
      %v8143 = vshll.u32 %v7792, 16
      %v8145 = vrot.slane %v8143, 5
      %v8146 = vsel %vm1283, %v8141, %v8145
      %v8147 = vshrl.u32 %v7792, 16
      %v8149 = vrot.slane %v8147, 4
      %v8150 = vor.u32 %v8149, %v8145
      %v8151 = vrot.slane %v8150, 4
      %v8153 = vshll.u32 %v7793, 16
      %v8155 = vrot.slane %v8153, 5
      %v8156 = vsel %vm1283, %v8151, %v8155
      %v8158 = vshrl.u32 %v7794, 16
      %v8160 = vrot.slane %v8158, 4
      %v8161 = vshll.u32 %v7794, 16
      %v8163 = vrot.slane %v8161, 5
      %v8164 = vor.u32 %v8160, %v8163
      %v8165 = vrot.slane %v8164, 4
      %v8167 = vshll.u32 %v7795, 16
      %v8169 = vrot.slane %v8167, 5
      %v8170 = vsel %vm1283, %v8165, %v8169
      %v8171 = vshrl.u32 %v7795, 16
      %v8173 = vrot.slane %v8171, 4
      %v8174 = vor.u32 %v8173, %v8169
      %v8175 = vrot.slane %v8174, 4
      %v8177 = vshll.u32 %v7796, 16
      %v8179 = vrot.slane %v8177, 5
      %v8180 = vsel %vm1283, %v8175, %v8179
      %v8181 = vld [vmem:[%s3 + $0x140] sm:$0xf]
      %v8182 = vld [vmem:[%s3 + $0x144] sm:$0xf]
      %v8183 = vld [vmem:[%s3 + $0x148] sm:$0xf]
      %v8184 = vld [vmem:[%s3 + $0x14c] sm:$0xf]
      %v8185 = vld [vmem:[%s3 + $0x150] sm:$0xf]
      %v8186 = vld [vmem:[%s3 + $0x154] sm:$0xf]
      %v8187 = vld [vmem:[%s3 + $0x158] sm:$0xf]
      %v8188 = vld [vmem:[%s3 + $0x15c] sm:$0xf]
      %v8189 = vld [vmem:[%s3 + $0x160] sm:$0xf]
      %v8190 = vld [vmem:[%s3 + $0x164] sm:$0xf]
      %v8191 = vld [vmem:[%s3 + $0x168] sm:$0xf]
      %v8192 = vld [vmem:[%s3 + $0x16c] sm:$0xf]
      %v8193 = vld [vmem:[%s3 + $0x170] sm:$0xf]
      %v8194 = vld [vmem:[%s3 + $0x174] sm:$0xf]
      %v8195 = vld [vmem:[%s3 + $0x178] sm:$0xf]
      %v8196 = vld [vmem:[%s3 + $0x17c] sm:$0xf]
      %v8197 = vunpack.c.l.b16 %v7810
      %v8198 = vunpack.c.l.b16 %v7820
      %v8199 = vunpack.c.l.b16 %v7834
      %v8200 = vunpack.c.l.b16 %v7844
      %v8201 = vunpack.c.l.b16 %v7858
      %v8202 = vunpack.c.l.b16 %v7868
      %v8203 = vunpack.c.l.b16 %v7882
      %v8204 = vunpack.c.l.b16 %v7892
      %v8205 = vunpack.c.l.b16 %v7906
      %v8206 = vunpack.c.l.b16 %v7916
      %v8207 = vunpack.c.l.b16 %v7930
      %v8208 = vunpack.c.l.b16 %v7940
      %v8209 = vunpack.c.l.b16 %v7954
      %v8210 = vunpack.c.l.b16 %v7964
      %v8211 = vunpack.c.l.b16 %v7978
      %v8212 = vunpack.c.l.b16 %v7988
      %v8213 = vunpack.c.l.b16 %v8002
      %v8214 = vunpack.c.l.b16 %v8012
      %v8215 = vunpack.c.l.b16 %v8026
      %v8216 = vunpack.c.l.b16 %v8036
      %v8217 = vunpack.c.l.b16 %v8050
      %v8218 = vunpack.c.l.b16 %v8060
      %v8219 = vunpack.c.l.b16 %v8074
      %v8220 = vunpack.c.l.b16 %v8084
      %v8221 = vunpack.c.l.b16 %v8098
      %v8222 = vunpack.c.l.b16 %v8108
      %v8223 = vunpack.c.l.b16 %v8122
      %v8224 = vunpack.c.l.b16 %v8132
      %v8225 = vunpack.c.l.b16 %v8146
      %v8226 = vunpack.c.l.b16 %v8156
      %v8227 = vunpack.c.l.b16 %v8170
      %v8228 = vunpack.c.l.b16 %v8180
      %v8229 = vpack.c.b16 %v8198, %v8197
      %v8230 = vpack.c.b16 %v8200, %v8199
      %v8231 = vpack.c.b16 %v8202, %v8201
      %v8232 = vpack.c.b16 %v8204, %v8203
      %v8233 = vpack.c.b16 %v8206, %v8205
      %v8234 = vpack.c.b16 %v8208, %v8207
      %v8235 = vpack.c.b16 %v8210, %v8209
      %v8236 = vpack.c.b16 %v8212, %v8211
      %v8237 = vpack.c.b16 %v8214, %v8213
      %v8238 = vpack.c.b16 %v8216, %v8215
      %v8239 = vpack.c.b16 %v8218, %v8217
      %v8240 = vpack.c.b16 %v8220, %v8219
      %v8241 = vpack.c.b16 %v8222, %v8221
      %v8242 = vpack.c.b16 %v8224, %v8223
      %v8243 = vpack.c.b16 %v8226, %v8225
      %v8244 = vpack.c.b16 %v8228, %v8227
      %v8277 = vunpack.c.l.b16 %v8181
      %v8278 = vunpack.c.l.b16 %v8182
      %v8279 = vunpack.c.l.b16 %v8183
      %v8280 = vunpack.c.l.b16 %v8184
      %v8281 = vunpack.c.l.b16 %v8185
      %v8282 = vunpack.c.l.b16 %v8186
      %v8283 = vunpack.c.l.b16 %v8187
      %v8284 = vunpack.c.l.b16 %v8188
      %v8285 = vunpack.c.l.b16 %v8189
      %v8286 = vunpack.c.l.b16 %v8190
      %v8287 = vunpack.c.l.b16 %v8191
      %v8288 = vunpack.c.l.b16 %v8192
      %v8289 = vunpack.c.l.b16 %v8193
      %v8290 = vunpack.c.l.b16 %v8194
      %v8291 = vunpack.c.l.b16 %v8195
      %v8292 = vunpack.c.l.b16 %v8196
      %v8293 = vpack.c.b16 %v8278, %v8277
      %v8294 = vpack.c.b16 %v8280, %v8279
      %v8295 = vpack.c.b16 %v8282, %v8281
      %v8296 = vpack.c.b16 %v8284, %v8283
      %v8297 = vpack.c.b16 %v8286, %v8285
      %v8298 = vpack.c.b16 %v8288, %v8287
      %v8299 = vpack.c.b16 %v8290, %v8289
      %v8300 = vpack.c.b16 %v8292, %v8291
      %8309 = vmatpush.bf16.msra.mxu0 %v8300
      %8310 = vmatpush.bf16.msra.mxu0 %v8299
      %8311 = vmatpush.bf16.msra.mxu0 %v8298
      %8312 = vmatpush.bf16.msra.mxu0 %v8297
      %8313 = vmatpush.bf16.msra.mxu0 %v8296
      %8314 = vmatpush.bf16.msra.mxu0 %v8295
      %8315 = vmatpush.bf16.msra.mxu0 %v8294
      %8316 = vmatpush.bf16.msra.mxu0 %v8293
      %8317 = vmatmul.bf16.gmra.mxu0 %v8229
      %v8318 = vpop.f32.mrf.mxu0
      %v8319 = vadd.f32 0.0, %v8318
      %v8320 = vpop.f32.mrf.mxu0
      %v8321 = vadd.f32 0.0, %v8320
      %8322 = vmatmul.bf16.gmra.mxu0 %v8230
      %v8323 = vpop.f32.mrf.mxu0
      %v8324 = vadd.f32 0.0, %v8323
      %v8325 = vpop.f32.mrf.mxu0
      %v8326 = vadd.f32 0.0, %v8325
      %8327 = vmatmul.bf16.gmra.mxu0 %v8231
      %v8328 = vpop.f32.mrf.mxu0
      %v8329 = vadd.f32 0.0, %v8328
      %v8330 = vpop.f32.mrf.mxu0
      %v8331 = vadd.f32 0.0, %v8330
      %8332 = vmatmul.bf16.gmra.mxu0 %v8232
      %v8333 = vpop.f32.mrf.mxu0
      %v8334 = vadd.f32 0.0, %v8333
      %v8335 = vpop.f32.mrf.mxu0
      %v8336 = vadd.f32 0.0, %v8335
      %8337 = vmatmul.bf16.gmra.mxu0 %v8233
      %v8338 = vpop.f32.mrf.mxu0
      %v8339 = vadd.f32 0.0, %v8338
      %v8340 = vpop.f32.mrf.mxu0
      %v8341 = vadd.f32 0.0, %v8340
      %8342 = vmatmul.bf16.gmra.mxu0 %v8234
      %v8343 = vpop.f32.mrf.mxu0
      %v8344 = vadd.f32 0.0, %v8343
      %v8345 = vpop.f32.mrf.mxu0
      %v8346 = vadd.f32 0.0, %v8345
      %8347 = vmatmul.bf16.gmra.mxu0 %v8235
      %v8348 = vpop.f32.mrf.mxu0
      %v8349 = vadd.f32 0.0, %v8348
      %v8350 = vpop.f32.mrf.mxu0
      %v8351 = vadd.f32 0.0, %v8350
      %8352 = vmatmul.bf16.gmra.mxu0 %v8236
      %v8353 = vpop.f32.mrf.mxu0
      %v8354 = vadd.f32 0.0, %v8353
      %v8355 = vpop.f32.mrf.mxu0
      %v8356 = vadd.f32 0.0, %v8355
      %8357 = vmatmul.bf16.gmra.mxu0 %v8237
      %v8358 = vpop.f32.mrf.mxu0
      %v8359 = vadd.f32 0.0, %v8358
      %v8360 = vpop.f32.mrf.mxu0
      %v8361 = vadd.f32 0.0, %v8360
      %8362 = vmatmul.bf16.gmra.mxu0 %v8238
      %v8363 = vpop.f32.mrf.mxu0
      %v8364 = vadd.f32 0.0, %v8363
      %v8365 = vpop.f32.mrf.mxu0
      %v8366 = vadd.f32 0.0, %v8365
      %8367 = vmatmul.bf16.gmra.mxu0 %v8239
      %v8368 = vpop.f32.mrf.mxu0
      %v8369 = vadd.f32 0.0, %v8368
      %v8370 = vpop.f32.mrf.mxu0
      %v8371 = vadd.f32 0.0, %v8370
      %8372 = vmatmul.bf16.gmra.mxu0 %v8240
      %v8373 = vpop.f32.mrf.mxu0
      %v8374 = vadd.f32 0.0, %v8373
      %v8375 = vpop.f32.mrf.mxu0
      %v8376 = vadd.f32 0.0, %v8375
      %8377 = vmatmul.bf16.gmra.mxu0 %v8241
      %v8378 = vpop.f32.mrf.mxu0
      %v8379 = vadd.f32 0.0, %v8378
      %v8380 = vpop.f32.mrf.mxu0
      %v8381 = vadd.f32 0.0, %v8380
      %8382 = vmatmul.bf16.gmra.mxu0 %v8242
      %v8383 = vpop.f32.mrf.mxu0
      %v8384 = vadd.f32 0.0, %v8383
      %v8385 = vpop.f32.mrf.mxu0
      %v8386 = vadd.f32 0.0, %v8385
      %8387 = vmatmul.bf16.gmra.mxu0 %v8243
      %v8388 = vpop.f32.mrf.mxu0
      %v8389 = vadd.f32 0.0, %v8388
      %v8390 = vpop.f32.mrf.mxu0
      %v8391 = vadd.f32 0.0, %v8390
      %8392 = vmatmul.bf16.gmra.mxu0 %v8244
      %v8393 = vpop.f32.mrf.mxu0
      %v8394 = vadd.f32 0.0, %v8393
      %v8395 = vpop.f32.mrf.mxu0
      %v8396 = vadd.f32 0.0, %v8395
      %8397 = vdwg.mxu0
      %v8398 = vadd.f32 %v7717, %v8319
      %v8399 = vadd.f32 %v7718, %v8321
      %v8400 = vadd.f32 %v7719, %v8324
      %v8401 = vadd.f32 %v7720, %v8326
      %v8402 = vadd.f32 %v7721, %v8329
      %v8403 = vadd.f32 %v7722, %v8331
      %v8404 = vadd.f32 %v7723, %v8334
      %v8405 = vadd.f32 %v7724, %v8336
      %v8406 = vadd.f32 %v7725, %v8339
      %v8407 = vadd.f32 %v7726, %v8341
      %v8408 = vadd.f32 %v7727, %v8344
      %v8409 = vadd.f32 %v7728, %v8346
      %v8410 = vadd.f32 %v7729, %v8349
      %v8411 = vadd.f32 %v7730, %v8351
      %v8412 = vadd.f32 %v7731, %v8354
      %v8413 = vadd.f32 %v7732, %v8356
      %v8414 = vadd.f32 %v7733, %v8359
      %v8415 = vadd.f32 %v7734, %v8361
      %v8416 = vadd.f32 %v7735, %v8364
      %v8417 = vadd.f32 %v7736, %v8366
      %v8418 = vadd.f32 %v7737, %v8369
      %v8419 = vadd.f32 %v7738, %v8371
      %v8420 = vadd.f32 %v7739, %v8374
      %v8421 = vadd.f32 %v7740, %v8376
      %v8422 = vadd.f32 %v7741, %v8379
      %v8423 = vadd.f32 %v7742, %v8381
      %v8424 = vadd.f32 %v7743, %v8384
      %v8425 = vadd.f32 %v7744, %v8386
      %v8426 = vadd.f32 %v7745, %v8389
      %v8427 = vadd.f32 %v7746, %v8391
      %v8428 = vadd.f32 %v7747, %v8394
      %v8429 = vadd.f32 %v7748, %v8396
      %v8430 = vld [vmem:[%s3528 + $0x4] sm:$0x8]
      %v8431 = vld [vmem:[%s3528 + $0x8] sm:$0xf]
      %v8432 = vld [vmem:[%s3528 + $0xc] sm:$0xf]
      %v8433 = vld [vmem:[%s3528 + $0x1c] sm:$0x8]
      %v8434 = vld [vmem:[%s3528 + $0x20] sm:$0xf]
      %v8435 = vld [vmem:[%s3528 + $0x24] sm:$0xf]
      %v8436 = vld [vmem:[%s3528 + $0x34] sm:$0x8]
      %v8437 = vld [vmem:[%s3528 + $0x38] sm:$0xf]
      %v8438 = vld [vmem:[%s3528 + $0x3c] sm:$0xf]
      %v8439 = vld [vmem:[%s3528 + $0x4c] sm:$0x8]
      %v8440 = vld [vmem:[%s3528 + $0x50] sm:$0xf]
      %v8441 = vld [vmem:[%s3528 + $0x54] sm:$0xf]
      %v8442 = vld [vmem:[%s3528 + $0x64] sm:$0x8]
      %v8443 = vld [vmem:[%s3528 + $0x68] sm:$0xf]
      %v8444 = vld [vmem:[%s3528 + $0x6c] sm:$0xf]
      %v8445 = vld [vmem:[%s3528 + $0x7c] sm:$0x8]
      %v8446 = vld [vmem:[%s3528 + $0x80] sm:$0xf]
      %v8447 = vld [vmem:[%s3528 + $0x84] sm:$0xf]
      %v8448 = vld [vmem:[%s3528 + $0x94] sm:$0x8]
      %v8449 = vld [vmem:[%s3528 + $0x98] sm:$0xf]
      %v8450 = vld [vmem:[%s3528 + $0x9c] sm:$0xf]
      %v8451 = vld [vmem:[%s3528 + $0xac] sm:$0x8]
      %v8452 = vld [vmem:[%s3528 + $0xb0] sm:$0xf]
      %v8453 = vld [vmem:[%s3528 + $0xb4] sm:$0xf]
      %v8454 = vld [vmem:[%s3528 + $0xc4] sm:$0x8]
      %v8455 = vld [vmem:[%s3528 + $0xc8] sm:$0xf]
      %v8456 = vld [vmem:[%s3528 + $0xcc] sm:$0xf]
      %v8457 = vld [vmem:[%s3528 + $0xdc] sm:$0x8]
      %v8458 = vld [vmem:[%s3528 + $0xe0] sm:$0xf]
      %v8459 = vld [vmem:[%s3528 + $0xe4] sm:$0xf]
      %v8460 = vld [vmem:[%s3528 + $0xf4] sm:$0x8]
      %v8461 = vld [vmem:[%s3528 + $0xf8] sm:$0xf]
      %v8462 = vld [vmem:[%s3528 + $0xfc] sm:$0xf]
      %v8463 = vld [vmem:[%s3528 + $0x10c] sm:$0x8]
      %v8464 = vld [vmem:[%s3528 + $0x110] sm:$0xf]
      %v8465 = vld [vmem:[%s3528 + $0x114] sm:$0xf]
      %v8466 = vld [vmem:[%s3528 + $0x124] sm:$0x8]
      %v8467 = vld [vmem:[%s3528 + $0x128] sm:$0xf]
      %v8468 = vld [vmem:[%s3528 + $0x12c] sm:$0xf]
      %v8469 = vld [vmem:[%s3528 + $0x13c] sm:$0x8]
      %v8470 = vld [vmem:[%s3528 + $0x140] sm:$0xf]
      %v8471 = vld [vmem:[%s3528 + $0x144] sm:$0xf]
      %v8472 = vld [vmem:[%s3528 + $0x154] sm:$0x8]
      %v8473 = vld [vmem:[%s3528 + $0x158] sm:$0xf]
      %v8474 = vld [vmem:[%s3528 + $0x15c] sm:$0xf]
      %v8475 = vld [vmem:[%s3528 + $0x16c] sm:$0x8]
      %v8476 = vld [vmem:[%s3528 + $0x170] sm:$0xf]
      %v8477 = vld [vmem:[%s3528 + $0x174] sm:$0xf]
      %v8479 = vshrl.u32 %v8430, 16
      %v8481 = vrot.slane %v8479, 7
      %v8482 = vrot.slane %v8481, 4
      %v8484 = vshrl.u32 %v8431, 16
      %v8486 = vrot.slane %v8484, 7
      %v8487 = vshll.u32 %v8431, 16
      %v8489 = vor.u32 %v8486, %v8487
      %v8490 = vsel %vm414, %v8482, %v8489
      %v8491 = vrot.slane %v8486, 4
      %v8493 = vshrl.u32 %v8432, 16
      %v8495 = vrot.slane %v8493, 7
      %v8496 = vshll.u32 %v8432, 16
      %v8498 = vor.u32 %v8495, %v8496
      %v8499 = vsel %vm414, %v8491, %v8498
      %v8501 = vshrl.u32 %v8433, 16
      %v8503 = vrot.slane %v8501, 7
      %v8504 = vrot.slane %v8503, 4
      %v8506 = vshrl.u32 %v8434, 16
      %v8508 = vrot.slane %v8506, 7
      %v8509 = vshll.u32 %v8434, 16
      %v8511 = vor.u32 %v8508, %v8509
      %v8512 = vsel %vm414, %v8504, %v8511
      %v8513 = vrot.slane %v8508, 4
      %v8515 = vshrl.u32 %v8435, 16
      %v8517 = vrot.slane %v8515, 7
      %v8518 = vshll.u32 %v8435, 16
      %v8520 = vor.u32 %v8517, %v8518
      %v8521 = vsel %vm414, %v8513, %v8520
      %v8523 = vshrl.u32 %v8436, 16
      %v8525 = vrot.slane %v8523, 7
      %v8526 = vrot.slane %v8525, 4
      %v8528 = vshrl.u32 %v8437, 16
      %v8530 = vrot.slane %v8528, 7
      %v8531 = vshll.u32 %v8437, 16
      %v8533 = vor.u32 %v8530, %v8531
      %v8534 = vsel %vm414, %v8526, %v8533
      %v8535 = vrot.slane %v8530, 4
      %v8537 = vshrl.u32 %v8438, 16
      %v8539 = vrot.slane %v8537, 7
      %v8540 = vshll.u32 %v8438, 16
      %v8542 = vor.u32 %v8539, %v8540
      %v8543 = vsel %vm414, %v8535, %v8542
      %v8545 = vshrl.u32 %v8439, 16
      %v8547 = vrot.slane %v8545, 7
      %v8548 = vrot.slane %v8547, 4
      %v8550 = vshrl.u32 %v8440, 16
      %v8552 = vrot.slane %v8550, 7
      %v8553 = vshll.u32 %v8440, 16
      %v8555 = vor.u32 %v8552, %v8553
      %v8556 = vsel %vm414, %v8548, %v8555
      %v8557 = vrot.slane %v8552, 4
      %v8559 = vshrl.u32 %v8441, 16
      %v8561 = vrot.slane %v8559, 7
      %v8562 = vshll.u32 %v8441, 16
      %v8564 = vor.u32 %v8561, %v8562
      %v8565 = vsel %vm414, %v8557, %v8564
      %v8567 = vshrl.u32 %v8442, 16
      %v8569 = vrot.slane %v8567, 7
      %v8570 = vrot.slane %v8569, 4
      %v8572 = vshrl.u32 %v8443, 16
      %v8574 = vrot.slane %v8572, 7
      %v8575 = vshll.u32 %v8443, 16
      %v8577 = vor.u32 %v8574, %v8575
      %v8578 = vsel %vm414, %v8570, %v8577
      %v8579 = vrot.slane %v8574, 4
      %v8581 = vshrl.u32 %v8444, 16
      %v8583 = vrot.slane %v8581, 7
      %v8584 = vshll.u32 %v8444, 16
      %v8586 = vor.u32 %v8583, %v8584
      %v8587 = vsel %vm414, %v8579, %v8586
      %v8589 = vshrl.u32 %v8445, 16
      %v8591 = vrot.slane %v8589, 7
      %v8592 = vrot.slane %v8591, 4
      %v8594 = vshrl.u32 %v8446, 16
      %v8596 = vrot.slane %v8594, 7
      %v8597 = vshll.u32 %v8446, 16
      %v8599 = vor.u32 %v8596, %v8597
      %v8600 = vsel %vm414, %v8592, %v8599
      %v8601 = vrot.slane %v8596, 4
      %v8603 = vshrl.u32 %v8447, 16
      %v8605 = vrot.slane %v8603, 7
      %v8606 = vshll.u32 %v8447, 16
      %v8608 = vor.u32 %v8605, %v8606
      %v8609 = vsel %vm414, %v8601, %v8608
      %v8611 = vshrl.u32 %v8448, 16
      %v8613 = vrot.slane %v8611, 7
      %v8614 = vrot.slane %v8613, 4
      %v8616 = vshrl.u32 %v8449, 16
      %v8618 = vrot.slane %v8616, 7
      %v8619 = vshll.u32 %v8449, 16
      %v8621 = vor.u32 %v8618, %v8619
      %v8622 = vsel %vm414, %v8614, %v8621
      %v8623 = vrot.slane %v8618, 4
      %v8625 = vshrl.u32 %v8450, 16
      %v8627 = vrot.slane %v8625, 7
      %v8628 = vshll.u32 %v8450, 16
      %v8630 = vor.u32 %v8627, %v8628
      %v8631 = vsel %vm414, %v8623, %v8630
      %v8633 = vshrl.u32 %v8451, 16
      %v8635 = vrot.slane %v8633, 7
      %v8636 = vrot.slane %v8635, 4
      %v8638 = vshrl.u32 %v8452, 16
      %v8640 = vrot.slane %v8638, 7
      %v8641 = vshll.u32 %v8452, 16
      %v8643 = vor.u32 %v8640, %v8641
      %v8644 = vsel %vm414, %v8636, %v8643
      %v8645 = vrot.slane %v8640, 4
      %v8647 = vshrl.u32 %v8453, 16
      %v8649 = vrot.slane %v8647, 7
      %v8650 = vshll.u32 %v8453, 16
      %v8652 = vor.u32 %v8649, %v8650
      %v8653 = vsel %vm414, %v8645, %v8652
      %v8655 = vshrl.u32 %v8454, 16
      %v8657 = vrot.slane %v8655, 7
      %v8658 = vrot.slane %v8657, 4
      %v8660 = vshrl.u32 %v8455, 16
      %v8662 = vrot.slane %v8660, 7
      %v8663 = vshll.u32 %v8455, 16
      %v8665 = vor.u32 %v8662, %v8663
      %v8666 = vsel %vm414, %v8658, %v8665
      %v8667 = vrot.slane %v8662, 4
      %v8669 = vshrl.u32 %v8456, 16
      %v8671 = vrot.slane %v8669, 7
      %v8672 = vshll.u32 %v8456, 16
      %v8674 = vor.u32 %v8671, %v8672
      %v8675 = vsel %vm414, %v8667, %v8674
      %v8677 = vshrl.u32 %v8457, 16
      %v8679 = vrot.slane %v8677, 7
      %v8680 = vrot.slane %v8679, 4
      %v8682 = vshrl.u32 %v8458, 16
      %v8684 = vrot.slane %v8682, 7
      %v8685 = vshll.u32 %v8458, 16
      %v8687 = vor.u32 %v8684, %v8685
      %v8688 = vsel %vm414, %v8680, %v8687
      %v8689 = vrot.slane %v8684, 4
      %v8691 = vshrl.u32 %v8459, 16
      %v8693 = vrot.slane %v8691, 7
      %v8694 = vshll.u32 %v8459, 16
      %v8696 = vor.u32 %v8693, %v8694
      %v8697 = vsel %vm414, %v8689, %v8696
      %v8699 = vshrl.u32 %v8460, 16
      %v8701 = vrot.slane %v8699, 7
      %v8702 = vrot.slane %v8701, 4
      %v8704 = vshrl.u32 %v8461, 16
      %v8706 = vrot.slane %v8704, 7
      %v8707 = vshll.u32 %v8461, 16
      %v8709 = vor.u32 %v8706, %v8707
      %v8710 = vsel %vm414, %v8702, %v8709
      %v8711 = vrot.slane %v8706, 4
      %v8713 = vshrl.u32 %v8462, 16
      %v8715 = vrot.slane %v8713, 7
      %v8716 = vshll.u32 %v8462, 16
      %v8718 = vor.u32 %v8715, %v8716
      %v8719 = vsel %vm414, %v8711, %v8718
      %v8721 = vshrl.u32 %v8463, 16
      %v8723 = vrot.slane %v8721, 7
      %v8724 = vrot.slane %v8723, 4
      %v8726 = vshrl.u32 %v8464, 16
      %v8728 = vrot.slane %v8726, 7
      %v8729 = vshll.u32 %v8464, 16
      %v8731 = vor.u32 %v8728, %v8729
      %v8732 = vsel %vm414, %v8724, %v8731
      %v8733 = vrot.slane %v8728, 4
      %v8735 = vshrl.u32 %v8465, 16
      %v8737 = vrot.slane %v8735, 7
      %v8738 = vshll.u32 %v8465, 16
      %v8740 = vor.u32 %v8737, %v8738
      %v8741 = vsel %vm414, %v8733, %v8740
      %v8743 = vshrl.u32 %v8466, 16
      %v8745 = vrot.slane %v8743, 7
      %v8746 = vrot.slane %v8745, 4
      %v8748 = vshrl.u32 %v8467, 16
      %v8750 = vrot.slane %v8748, 7
      %v8751 = vshll.u32 %v8467, 16
      %v8753 = vor.u32 %v8750, %v8751
      %v8754 = vsel %vm414, %v8746, %v8753
      %v8755 = vrot.slane %v8750, 4
      %v8757 = vshrl.u32 %v8468, 16
      %v8759 = vrot.slane %v8757, 7
      %v8760 = vshll.u32 %v8468, 16
      %v8762 = vor.u32 %v8759, %v8760
      %v8763 = vsel %vm414, %v8755, %v8762
      %v8765 = vshrl.u32 %v8469, 16
      %v8767 = vrot.slane %v8765, 7
      %v8768 = vrot.slane %v8767, 4
      %v8770 = vshrl.u32 %v8470, 16
      %v8772 = vrot.slane %v8770, 7
      %v8773 = vshll.u32 %v8470, 16
      %v8775 = vor.u32 %v8772, %v8773
      %v8776 = vsel %vm414, %v8768, %v8775
      %v8777 = vrot.slane %v8772, 4
      %v8779 = vshrl.u32 %v8471, 16
      %v8781 = vrot.slane %v8779, 7
      %v8782 = vshll.u32 %v8471, 16
      %v8784 = vor.u32 %v8781, %v8782
      %v8785 = vsel %vm414, %v8777, %v8784
      %v8787 = vshrl.u32 %v8472, 16
      %v8789 = vrot.slane %v8787, 7
      %v8790 = vrot.slane %v8789, 4
      %v8792 = vshrl.u32 %v8473, 16
      %v8794 = vrot.slane %v8792, 7
      %v8795 = vshll.u32 %v8473, 16
      %v8797 = vor.u32 %v8794, %v8795
      %v8798 = vsel %vm414, %v8790, %v8797
      %v8799 = vrot.slane %v8794, 4
      %v8801 = vshrl.u32 %v8474, 16
      %v8803 = vrot.slane %v8801, 7
      %v8804 = vshll.u32 %v8474, 16
      %v8806 = vor.u32 %v8803, %v8804
      %v8807 = vsel %vm414, %v8799, %v8806
      %v8809 = vshrl.u32 %v8475, 16
      %v8811 = vrot.slane %v8809, 7
      %v8812 = vrot.slane %v8811, 4
      %v8814 = vshrl.u32 %v8476, 16
      %v8816 = vrot.slane %v8814, 7
      %v8817 = vshll.u32 %v8476, 16
      %v8819 = vor.u32 %v8816, %v8817
      %v8820 = vsel %vm414, %v8812, %v8819
      %v8821 = vrot.slane %v8816, 4
      %v8823 = vshrl.u32 %v8477, 16
      %v8825 = vrot.slane %v8823, 7
      %v8826 = vshll.u32 %v8477, 16
      %v8828 = vor.u32 %v8825, %v8826
      %v8829 = vsel %vm414, %v8821, %v8828
      %v8830 = vld [vmem:[%s3 + $0x180] sm:$0xf]
      %v8831 = vld [vmem:[%s3 + $0x184] sm:$0xf]
      %v8832 = vld [vmem:[%s3 + $0x188] sm:$0xf]
      %v8833 = vld [vmem:[%s3 + $0x18c] sm:$0xf]
      %v8834 = vld [vmem:[%s3 + $0x190] sm:$0xf]
      %v8835 = vld [vmem:[%s3 + $0x194] sm:$0xf]
      %v8836 = vld [vmem:[%s3 + $0x198] sm:$0xf]
      %v8837 = vld [vmem:[%s3 + $0x19c] sm:$0xf]
      %v8838 = vld [vmem:[%s3 + $0x1a0] sm:$0xf]
      %v8839 = vld [vmem:[%s3 + $0x1a4] sm:$0xf]
      %v8840 = vld [vmem:[%s3 + $0x1a8] sm:$0xf]
      %v8841 = vld [vmem:[%s3 + $0x1ac] sm:$0xf]
      %v8842 = vld [vmem:[%s3 + $0x1b0] sm:$0xf]
      %v8843 = vld [vmem:[%s3 + $0x1b4] sm:$0xf]
      %v8844 = vld [vmem:[%s3 + $0x1b8] sm:$0xf]
      %v8845 = vld [vmem:[%s3 + $0x1bc] sm:$0xf]
      %v8846 = vunpack.c.l.b16 %v8490
      %v8847 = vunpack.c.l.b16 %v8499
      %v8848 = vunpack.c.l.b16 %v8512
      %v8849 = vunpack.c.l.b16 %v8521
      %v8850 = vunpack.c.l.b16 %v8534
      %v8851 = vunpack.c.l.b16 %v8543
      %v8852 = vunpack.c.l.b16 %v8556
      %v8853 = vunpack.c.l.b16 %v8565
      %v8854 = vunpack.c.l.b16 %v8578
      %v8855 = vunpack.c.l.b16 %v8587
      %v8856 = vunpack.c.l.b16 %v8600
      %v8857 = vunpack.c.l.b16 %v8609
      %v8858 = vunpack.c.l.b16 %v8622
      %v8859 = vunpack.c.l.b16 %v8631
      %v8860 = vunpack.c.l.b16 %v8644
      %v8861 = vunpack.c.l.b16 %v8653
      %v8862 = vunpack.c.l.b16 %v8666
      %v8863 = vunpack.c.l.b16 %v8675
      %v8864 = vunpack.c.l.b16 %v8688
      %v8865 = vunpack.c.l.b16 %v8697
      %v8866 = vunpack.c.l.b16 %v8710
      %v8867 = vunpack.c.l.b16 %v8719
      %v8868 = vunpack.c.l.b16 %v8732
      %v8869 = vunpack.c.l.b16 %v8741
      %v8870 = vunpack.c.l.b16 %v8754
      %v8871 = vunpack.c.l.b16 %v8763
      %v8872 = vunpack.c.l.b16 %v8776
      %v8873 = vunpack.c.l.b16 %v8785
      %v8874 = vunpack.c.l.b16 %v8798
      %v8875 = vunpack.c.l.b16 %v8807
      %v8876 = vunpack.c.l.b16 %v8820
      %v8877 = vunpack.c.l.b16 %v8829
      %v8878 = vpack.c.b16 %v8847, %v8846
      %v8879 = vpack.c.b16 %v8849, %v8848
      %v8880 = vpack.c.b16 %v8851, %v8850
      %v8881 = vpack.c.b16 %v8853, %v8852
      %v8882 = vpack.c.b16 %v8855, %v8854
      %v8883 = vpack.c.b16 %v8857, %v8856
      %v8884 = vpack.c.b16 %v8859, %v8858
      %v8885 = vpack.c.b16 %v8861, %v8860
      %v8886 = vpack.c.b16 %v8863, %v8862
      %v8887 = vpack.c.b16 %v8865, %v8864
      %v8888 = vpack.c.b16 %v8867, %v8866
      %v8889 = vpack.c.b16 %v8869, %v8868
      %v8890 = vpack.c.b16 %v8871, %v8870
      %v8891 = vpack.c.b16 %v8873, %v8872
      %v8892 = vpack.c.b16 %v8875, %v8874
      %v8893 = vpack.c.b16 %v8877, %v8876
      %v8926 = vunpack.c.l.b16 %v8830
      %v8927 = vunpack.c.l.b16 %v8831
      %v8928 = vunpack.c.l.b16 %v8832
      %v8929 = vunpack.c.l.b16 %v8833
      %v8930 = vunpack.c.l.b16 %v8834
      %v8931 = vunpack.c.l.b16 %v8835
      %v8932 = vunpack.c.l.b16 %v8836
      %v8933 = vunpack.c.l.b16 %v8837
      %v8934 = vunpack.c.l.b16 %v8838
      %v8935 = vunpack.c.l.b16 %v8839
      %v8936 = vunpack.c.l.b16 %v8840
      %v8937 = vunpack.c.l.b16 %v8841
      %v8938 = vunpack.c.l.b16 %v8842
      %v8939 = vunpack.c.l.b16 %v8843
      %v8940 = vunpack.c.l.b16 %v8844
      %v8941 = vunpack.c.l.b16 %v8845
      %v8942 = vpack.c.b16 %v8927, %v8926
      %v8943 = vpack.c.b16 %v8929, %v8928
      %v8944 = vpack.c.b16 %v8931, %v8930
      %v8945 = vpack.c.b16 %v8933, %v8932
      %v8946 = vpack.c.b16 %v8935, %v8934
      %v8947 = vpack.c.b16 %v8937, %v8936
      %v8948 = vpack.c.b16 %v8939, %v8938
      %v8949 = vpack.c.b16 %v8941, %v8940
      %8958 = vmatpush.bf16.msra.mxu0 %v8949
      %8959 = vmatpush.bf16.msra.mxu0 %v8948
      %8960 = vmatpush.bf16.msra.mxu0 %v8947
      %8961 = vmatpush.bf16.msra.mxu0 %v8946
      %8962 = vmatpush.bf16.msra.mxu0 %v8945
      %8963 = vmatpush.bf16.msra.mxu0 %v8944
      %8964 = vmatpush.bf16.msra.mxu0 %v8943
      %8965 = vmatpush.bf16.msra.mxu0 %v8942
      %8966 = vmatmul.bf16.gmra.mxu0 %v8878
      %v8967 = vpop.f32.mrf.mxu0
      %v8968 = vadd.f32 0.0, %v8967
      %v8969 = vpop.f32.mrf.mxu0
      %v8970 = vadd.f32 0.0, %v8969
      %8971 = vmatmul.bf16.gmra.mxu0 %v8879
      %v8972 = vpop.f32.mrf.mxu0
      %v8973 = vadd.f32 0.0, %v8972
      %v8974 = vpop.f32.mrf.mxu0
      %v8975 = vadd.f32 0.0, %v8974
      %8976 = vmatmul.bf16.gmra.mxu0 %v8880
      %v8977 = vpop.f32.mrf.mxu0
      %v8978 = vadd.f32 0.0, %v8977
      %v8979 = vpop.f32.mrf.mxu0
      %v8980 = vadd.f32 0.0, %v8979
      %8981 = vmatmul.bf16.gmra.mxu0 %v8881
      %v8982 = vpop.f32.mrf.mxu0
      %v8983 = vadd.f32 0.0, %v8982
      %v8984 = vpop.f32.mrf.mxu0
      %v8985 = vadd.f32 0.0, %v8984
      %8986 = vmatmul.bf16.gmra.mxu0 %v8882
      %v8987 = vpop.f32.mrf.mxu0
      %v8988 = vadd.f32 0.0, %v8987
      %v8989 = vpop.f32.mrf.mxu0
      %v8990 = vadd.f32 0.0, %v8989
      %8991 = vmatmul.bf16.gmra.mxu0 %v8883
      %v8992 = vpop.f32.mrf.mxu0
      %v8993 = vadd.f32 0.0, %v8992
      %v8994 = vpop.f32.mrf.mxu0
      %v8995 = vadd.f32 0.0, %v8994
      %8996 = vmatmul.bf16.gmra.mxu0 %v8884
      %v8997 = vpop.f32.mrf.mxu0
      %v8998 = vadd.f32 0.0, %v8997
      %v8999 = vpop.f32.mrf.mxu0
      %v9000 = vadd.f32 0.0, %v8999
      %9001 = vmatmul.bf16.gmra.mxu0 %v8885
      %v9002 = vpop.f32.mrf.mxu0
      %v9003 = vadd.f32 0.0, %v9002
      %v9004 = vpop.f32.mrf.mxu0
      %v9005 = vadd.f32 0.0, %v9004
      %9006 = vmatmul.bf16.gmra.mxu0 %v8886
      %v9007 = vpop.f32.mrf.mxu0
      %v9008 = vadd.f32 0.0, %v9007
      %v9009 = vpop.f32.mrf.mxu0
      %v9010 = vadd.f32 0.0, %v9009
      %9011 = vmatmul.bf16.gmra.mxu0 %v8887
      %v9012 = vpop.f32.mrf.mxu0
      %v9013 = vadd.f32 0.0, %v9012
      %v9014 = vpop.f32.mrf.mxu0
      %v9015 = vadd.f32 0.0, %v9014
      %9016 = vmatmul.bf16.gmra.mxu0 %v8888
      %v9017 = vpop.f32.mrf.mxu0
      %v9018 = vadd.f32 0.0, %v9017
      %v9019 = vpop.f32.mrf.mxu0
      %v9020 = vadd.f32 0.0, %v9019
      %9021 = vmatmul.bf16.gmra.mxu0 %v8889
      %v9022 = vpop.f32.mrf.mxu0
      %v9023 = vadd.f32 0.0, %v9022
      %v9024 = vpop.f32.mrf.mxu0
      %v9025 = vadd.f32 0.0, %v9024
      %9026 = vmatmul.bf16.gmra.mxu0 %v8890
      %v9027 = vpop.f32.mrf.mxu0
      %v9028 = vadd.f32 0.0, %v9027
      %v9029 = vpop.f32.mrf.mxu0
      %v9030 = vadd.f32 0.0, %v9029
      %9031 = vmatmul.bf16.gmra.mxu0 %v8891
      %v9032 = vpop.f32.mrf.mxu0
      %v9033 = vadd.f32 0.0, %v9032
      %v9034 = vpop.f32.mrf.mxu0
      %v9035 = vadd.f32 0.0, %v9034
      %9036 = vmatmul.bf16.gmra.mxu0 %v8892
      %v9037 = vpop.f32.mrf.mxu0
      %v9038 = vadd.f32 0.0, %v9037
      %v9039 = vpop.f32.mrf.mxu0
      %v9040 = vadd.f32 0.0, %v9039
      %9041 = vmatmul.bf16.gmra.mxu0 %v8893
      %v9042 = vpop.f32.mrf.mxu0
      %v9043 = vadd.f32 0.0, %v9042
      %v9044 = vpop.f32.mrf.mxu0
      %v9045 = vadd.f32 0.0, %v9044
      %9046 = vdwg.mxu0
      %v9047 = vadd.f32 %v8398, %v8968
      %v9048 = vadd.f32 %v8399, %v8970
      %v9049 = vadd.f32 %v8400, %v8973
      %v9050 = vadd.f32 %v8401, %v8975
      %v9051 = vadd.f32 %v8402, %v8978
      %v9052 = vadd.f32 %v8403, %v8980
      %v9053 = vadd.f32 %v8404, %v8983
      %v9054 = vadd.f32 %v8405, %v8985
      %v9055 = vadd.f32 %v8406, %v8988
      %v9056 = vadd.f32 %v8407, %v8990
      %v9057 = vadd.f32 %v8408, %v8993
      %v9058 = vadd.f32 %v8409, %v8995
      %v9059 = vadd.f32 %v8410, %v8998
      %v9060 = vadd.f32 %v8411, %v9000
      %v9061 = vadd.f32 %v8412, %v9003
      %v9062 = vadd.f32 %v8413, %v9005
      %v9063 = vadd.f32 %v8414, %v9008
      %v9064 = vadd.f32 %v8415, %v9010
      %v9065 = vadd.f32 %v8416, %v9013
      %v9066 = vadd.f32 %v8417, %v9015
      %v9067 = vadd.f32 %v8418, %v9018
      %v9068 = vadd.f32 %v8419, %v9020
      %v9069 = vadd.f32 %v8420, %v9023
      %v9070 = vadd.f32 %v8421, %v9025
      %v9071 = vadd.f32 %v8422, %v9028
      %v9072 = vadd.f32 %v8423, %v9030
      %v9073 = vadd.f32 %v8424, %v9033
      %v9074 = vadd.f32 %v8425, %v9035
      %v9075 = vadd.f32 %v8426, %v9038
      %v9076 = vadd.f32 %v8427, %v9040
      %v9077 = vadd.f32 %v8428, %v9043
      %v9078 = vadd.f32 %v8429, %v9045
      %v9079 = vld [vmem:[%s3 + $0x1c0] sm:$0xf]
      %v9080 = vld [vmem:[%s3 + $0x1c4] sm:$0xf]
      %v9081 = vld [vmem:[%s3 + $0x1c8] sm:$0xf]
      %v9082 = vld [vmem:[%s3 + $0x1cc] sm:$0xf]
      %v9083 = vld [vmem:[%s3 + $0x1d0] sm:$0xf]
      %v9084 = vld [vmem:[%s3 + $0x1d4] sm:$0xf]
      %v9085 = vld [vmem:[%s3 + $0x1d8] sm:$0xf]
      %v9086 = vld [vmem:[%s3 + $0x1dc] sm:$0xf]
      %v9087 = vld [vmem:[%s3 + $0x1e0] sm:$0xf]
      %v9088 = vld [vmem:[%s3 + $0x1e4] sm:$0xf]
      %v9089 = vld [vmem:[%s3 + $0x1e8] sm:$0xf]
      %v9090 = vld [vmem:[%s3 + $0x1ec] sm:$0xf]
      %v9091 = vld [vmem:[%s3 + $0x1f0] sm:$0xf]
      %v9092 = vld [vmem:[%s3 + $0x1f4] sm:$0xf]
      %v9093 = vld [vmem:[%s3 + $0x1f8] sm:$0xf]
      %v9094 = vld [vmem:[%s3 + $0x1fc] sm:$0xf]
      %v9127 = vunpack.c.l.b16 %v8431
      %v9128 = vunpack.c.l.b16 %v8432
      %v9129 = vunpack.c.l.b16 %v8434
      %v9130 = vunpack.c.l.b16 %v8435
      %v9131 = vunpack.c.l.b16 %v8437
      %v9132 = vunpack.c.l.b16 %v8438
      %v9133 = vunpack.c.l.b16 %v8440
      %v9134 = vunpack.c.l.b16 %v8441
      %v9135 = vunpack.c.l.b16 %v8443
      %v9136 = vunpack.c.l.b16 %v8444
      %v9137 = vunpack.c.l.b16 %v8446
      %v9138 = vunpack.c.l.b16 %v8447
      %v9139 = vunpack.c.l.b16 %v8449
      %v9140 = vunpack.c.l.b16 %v8450
      %v9141 = vunpack.c.l.b16 %v8452
      %v9142 = vunpack.c.l.b16 %v8453
      %v9143 = vunpack.c.l.b16 %v8455
      %v9144 = vunpack.c.l.b16 %v8456
      %v9145 = vunpack.c.l.b16 %v8458
      %v9146 = vunpack.c.l.b16 %v8459
      %v9147 = vunpack.c.l.b16 %v8461
      %v9148 = vunpack.c.l.b16 %v8462
      %v9149 = vunpack.c.l.b16 %v8464
      %v9150 = vunpack.c.l.b16 %v8465
      %v9151 = vunpack.c.l.b16 %v8467
      %v9152 = vunpack.c.l.b16 %v8468
      %v9153 = vunpack.c.l.b16 %v8470
      %v9154 = vunpack.c.l.b16 %v8471
      %v9155 = vunpack.c.l.b16 %v8473
      %v9156 = vunpack.c.l.b16 %v8474
      %v9157 = vunpack.c.l.b16 %v8476
      %v9158 = vunpack.c.l.b16 %v8477
      %v9159 = vpack.c.b16 %v9128, %v9127
      %v9160 = vpack.c.b16 %v9130, %v9129
      %v9161 = vpack.c.b16 %v9132, %v9131
      %v9162 = vpack.c.b16 %v9134, %v9133
      %v9163 = vpack.c.b16 %v9136, %v9135
      %v9164 = vpack.c.b16 %v9138, %v9137
      %v9165 = vpack.c.b16 %v9140, %v9139
      %v9166 = vpack.c.b16 %v9142, %v9141
      %v9167 = vpack.c.b16 %v9144, %v9143
      %v9168 = vpack.c.b16 %v9146, %v9145
      %v9169 = vpack.c.b16 %v9148, %v9147
      %v9170 = vpack.c.b16 %v9150, %v9149
      %v9171 = vpack.c.b16 %v9152, %v9151
      %v9172 = vpack.c.b16 %v9154, %v9153
      %v9173 = vpack.c.b16 %v9156, %v9155
      %v9174 = vpack.c.b16 %v9158, %v9157
      %v9207 = vunpack.c.l.b16 %v9079
      %v9208 = vunpack.c.l.b16 %v9080
      %v9209 = vunpack.c.l.b16 %v9081
      %v9210 = vunpack.c.l.b16 %v9082
      %v9211 = vunpack.c.l.b16 %v9083
      %v9212 = vunpack.c.l.b16 %v9084
      %v9213 = vunpack.c.l.b16 %v9085
      %v9214 = vunpack.c.l.b16 %v9086
      %v9215 = vunpack.c.l.b16 %v9087
      %v9216 = vunpack.c.l.b16 %v9088
      %v9217 = vunpack.c.l.b16 %v9089
      %v9218 = vunpack.c.l.b16 %v9090
      %v9219 = vunpack.c.l.b16 %v9091
      %v9220 = vunpack.c.l.b16 %v9092
      %v9221 = vunpack.c.l.b16 %v9093
      %v9222 = vunpack.c.l.b16 %v9094
      %v9223 = vpack.c.b16 %v9208, %v9207
      %v9224 = vpack.c.b16 %v9210, %v9209
      %v9225 = vpack.c.b16 %v9212, %v9211
      %v9226 = vpack.c.b16 %v9214, %v9213
      %v9227 = vpack.c.b16 %v9216, %v9215
      %v9228 = vpack.c.b16 %v9218, %v9217
      %v9229 = vpack.c.b16 %v9220, %v9219
      %v9230 = vpack.c.b16 %v9222, %v9221
      %9239 = vmatpush.bf16.msra.mxu0 %v9230
      %9240 = vmatpush.bf16.msra.mxu0 %v9229
      %9241 = vmatpush.bf16.msra.mxu0 %v9228
      %9242 = vmatpush.bf16.msra.mxu0 %v9227
      %9243 = vmatpush.bf16.msra.mxu0 %v9226
      %9244 = vmatpush.bf16.msra.mxu0 %v9225
      %9245 = vmatpush.bf16.msra.mxu0 %v9224
      %9246 = vmatpush.bf16.msra.mxu0 %v9223
      %9247 = vmatmul.bf16.gmra.mxu0 %v9159
      %v9248 = vpop.f32.mrf.mxu0
      %v9249 = vadd.f32 0.0, %v9248
      %v9250 = vpop.f32.mrf.mxu0
      %v9251 = vadd.f32 0.0, %v9250
      %9252 = vmatmul.bf16.gmra.mxu0 %v9160
      %v9253 = vpop.f32.mrf.mxu0
      %v9254 = vadd.f32 0.0, %v9253
      %v9255 = vpop.f32.mrf.mxu0
      %v9256 = vadd.f32 0.0, %v9255
      %9257 = vmatmul.bf16.gmra.mxu0 %v9161
      %v9258 = vpop.f32.mrf.mxu0
      %v9259 = vadd.f32 0.0, %v9258
      %v9260 = vpop.f32.mrf.mxu0
      %v9261 = vadd.f32 0.0, %v9260
      %9262 = vmatmul.bf16.gmra.mxu0 %v9162
      %v9263 = vpop.f32.mrf.mxu0
      %v9264 = vadd.f32 0.0, %v9263
      %v9265 = vpop.f32.mrf.mxu0
      %v9266 = vadd.f32 0.0, %v9265
      %9267 = vmatmul.bf16.gmra.mxu0 %v9163
      %v9268 = vpop.f32.mrf.mxu0
      %v9269 = vadd.f32 0.0, %v9268
      %v9270 = vpop.f32.mrf.mxu0
      %v9271 = vadd.f32 0.0, %v9270
      %9272 = vmatmul.bf16.gmra.mxu0 %v9164
      %v9273 = vpop.f32.mrf.mxu0
      %v9274 = vadd.f32 0.0, %v9273
      %v9275 = vpop.f32.mrf.mxu0
      %v9276 = vadd.f32 0.0, %v9275
      %9277 = vmatmul.bf16.gmra.mxu0 %v9165
      %v9278 = vpop.f32.mrf.mxu0
      %v9279 = vadd.f32 0.0, %v9278
      %v9280 = vpop.f32.mrf.mxu0
      %v9281 = vadd.f32 0.0, %v9280
      %9282 = vmatmul.bf16.gmra.mxu0 %v9166
      %v9283 = vpop.f32.mrf.mxu0
      %v9284 = vadd.f32 0.0, %v9283
      %v9285 = vpop.f32.mrf.mxu0
      %v9286 = vadd.f32 0.0, %v9285
      %9287 = vmatmul.bf16.gmra.mxu0 %v9167
      %v9288 = vpop.f32.mrf.mxu0
      %v9289 = vadd.f32 0.0, %v9288
      %v9290 = vpop.f32.mrf.mxu0
      %v9291 = vadd.f32 0.0, %v9290
      %9292 = vmatmul.bf16.gmra.mxu0 %v9168
      %v9293 = vpop.f32.mrf.mxu0
      %v9294 = vadd.f32 0.0, %v9293
      %v9295 = vpop.f32.mrf.mxu0
      %v9296 = vadd.f32 0.0, %v9295
      %9297 = vmatmul.bf16.gmra.mxu0 %v9169
      %v9298 = vpop.f32.mrf.mxu0
      %v9299 = vadd.f32 0.0, %v9298
      %v9300 = vpop.f32.mrf.mxu0
      %v9301 = vadd.f32 0.0, %v9300
      %9302 = vmatmul.bf16.gmra.mxu0 %v9170
      %v9303 = vpop.f32.mrf.mxu0
      %v9304 = vadd.f32 0.0, %v9303
      %v9305 = vpop.f32.mrf.mxu0
      %v9306 = vadd.f32 0.0, %v9305
      %9307 = vmatmul.bf16.gmra.mxu0 %v9171
      %v9308 = vpop.f32.mrf.mxu0
      %v9309 = vadd.f32 0.0, %v9308
      %v9310 = vpop.f32.mrf.mxu0
      %v9311 = vadd.f32 0.0, %v9310
      %9312 = vmatmul.bf16.gmra.mxu0 %v9172
      %v9313 = vpop.f32.mrf.mxu0
      %v9314 = vadd.f32 0.0, %v9313
      %v9315 = vpop.f32.mrf.mxu0
      %v9316 = vadd.f32 0.0, %v9315
      %9317 = vmatmul.bf16.gmra.mxu0 %v9173
      %v9318 = vpop.f32.mrf.mxu0
      %v9319 = vadd.f32 0.0, %v9318
      %v9320 = vpop.f32.mrf.mxu0
      %v9321 = vadd.f32 0.0, %v9320
      %9322 = vmatmul.bf16.gmra.mxu0 %v9174
      %v9323 = vpop.f32.mrf.mxu0
      %v9324 = vadd.f32 0.0, %v9323
      %v9325 = vpop.f32.mrf.mxu0
      %v9326 = vadd.f32 0.0, %v9325
      %9327 = vdwg.mxu0
      %v9328 = vadd.f32 %v9047, %v9249
      %v9329 = vadd.f32 %v9048, %v9251
      %v9330 = vadd.f32 %v9049, %v9254
      %v9331 = vadd.f32 %v9050, %v9256
      %v9332 = vadd.f32 %v9051, %v9259
      %v9333 = vadd.f32 %v9052, %v9261
      %v9334 = vadd.f32 %v9053, %v9264
      %v9335 = vadd.f32 %v9054, %v9266
      %v9336 = vadd.f32 %v9055, %v9269
      %v9337 = vadd.f32 %v9056, %v9271
      %v9338 = vadd.f32 %v9057, %v9274
      %v9339 = vadd.f32 %v9058, %v9276
      %v9340 = vadd.f32 %v9059, %v9279
      %v9341 = vadd.f32 %v9060, %v9281
      %v9342 = vadd.f32 %v9061, %v9284
      %v9343 = vadd.f32 %v9062, %v9286
      %v9344 = vadd.f32 %v9063, %v9289
      %v9345 = vadd.f32 %v9064, %v9291
      %v9346 = vadd.f32 %v9065, %v9294
      %v9347 = vadd.f32 %v9066, %v9296
      %v9348 = vadd.f32 %v9067, %v9299
      %v9349 = vadd.f32 %v9068, %v9301
      %v9350 = vadd.f32 %v9069, %v9304
      %v9351 = vadd.f32 %v9070, %v9306
      %v9352 = vadd.f32 %v9071, %v9309
      %v9353 = vadd.f32 %v9072, %v9311
      %v9354 = vadd.f32 %v9073, %v9314
      %v9355 = vadd.f32 %v9074, %v9316
      %v9356 = vadd.f32 %v9075, %v9319
      %v9357 = vadd.f32 %v9076, %v9321
      %v9358 = vadd.f32 %v9077, %v9324
      %v9359 = vadd.f32 %v9078, %v9326
      %v9360 = vld [vmem:[%s3528 + $0x8] sm:$0xf]
      %v9361 = vld [vmem:[%s3528 + $0xc] sm:$0xf]
      %v9362 = vld [vmem:[%s3528 + $0x10] sm:$0x1]
      %v9363 = vld [vmem:[%s3528 + $0x20] sm:$0xf]
      %v9364 = vld [vmem:[%s3528 + $0x24] sm:$0xf]
      %v9365 = vld [vmem:[%s3528 + $0x28] sm:$0x1]
      %v9366 = vld [vmem:[%s3528 + $0x38] sm:$0xf]
      %v9367 = vld [vmem:[%s3528 + $0x3c] sm:$0xf]
      %v9368 = vld [vmem:[%s3528 + $0x40] sm:$0x1]
      %v9369 = vld [vmem:[%s3528 + $0x50] sm:$0xf]
      %v9370 = vld [vmem:[%s3528 + $0x54] sm:$0xf]
      %v9371 = vld [vmem:[%s3528 + $0x58] sm:$0x1]
      %v9372 = vld [vmem:[%s3528 + $0x68] sm:$0xf]
      %v9373 = vld [vmem:[%s3528 + $0x6c] sm:$0xf]
      %v9374 = vld [vmem:[%s3528 + $0x70] sm:$0x1]
      %v9375 = vld [vmem:[%s3528 + $0x80] sm:$0xf]
      %v9376 = vld [vmem:[%s3528 + $0x84] sm:$0xf]
      %v9377 = vld [vmem:[%s3528 + $0x88] sm:$0x1]
      %v9378 = vld [vmem:[%s3528 + $0x98] sm:$0xf]
      %v9379 = vld [vmem:[%s3528 + $0x9c] sm:$0xf]
      %v9380 = vld [vmem:[%s3528 + $0xa0] sm:$0x1]
      %v9381 = vld [vmem:[%s3528 + $0xb0] sm:$0xf]
      %v9382 = vld [vmem:[%s3528 + $0xb4] sm:$0xf]
      %v9383 = vld [vmem:[%s3528 + $0xb8] sm:$0x1]
      %v9384 = vld [vmem:[%s3528 + $0xc8] sm:$0xf]
      %v9385 = vld [vmem:[%s3528 + $0xcc] sm:$0xf]
      %v9386 = vld [vmem:[%s3528 + $0xd0] sm:$0x1]
      %v9387 = vld [vmem:[%s3528 + $0xe0] sm:$0xf]
      %v9388 = vld [vmem:[%s3528 + $0xe4] sm:$0xf]
      %v9389 = vld [vmem:[%s3528 + $0xe8] sm:$0x1]
      %v9390 = vld [vmem:[%s3528 + $0xf8] sm:$0xf]
      %v9391 = vld [vmem:[%s3528 + $0xfc] sm:$0xf]
      %v9392 = vld [vmem:[%s3528 + $0x100] sm:$0x1]
      %v9393 = vld [vmem:[%s3528 + $0x110] sm:$0xf]
      %v9394 = vld [vmem:[%s3528 + $0x114] sm:$0xf]
      %v9395 = vld [vmem:[%s3528 + $0x118] sm:$0x1]
      %v9396 = vld [vmem:[%s3528 + $0x128] sm:$0xf]
      %v9397 = vld [vmem:[%s3528 + $0x12c] sm:$0xf]
      %v9398 = vld [vmem:[%s3528 + $0x130] sm:$0x1]
      %v9399 = vld [vmem:[%s3528 + $0x140] sm:$0xf]
      %v9400 = vld [vmem:[%s3528 + $0x144] sm:$0xf]
      %v9401 = vld [vmem:[%s3528 + $0x148] sm:$0x1]
      %v9402 = vld [vmem:[%s3528 + $0x158] sm:$0xf]
      %v9403 = vld [vmem:[%s3528 + $0x15c] sm:$0xf]
      %v9404 = vld [vmem:[%s3528 + $0x160] sm:$0x1]
      %v9405 = vld [vmem:[%s3528 + $0x170] sm:$0xf]
      %v9406 = vld [vmem:[%s3528 + $0x174] sm:$0xf]
      %v9407 = vld [vmem:[%s3528 + $0x178] sm:$0x1]
      %v9409 = vshrl.u32 %v9360, 16
      %v9411 = vrot.slane %v9409, 4
      %v9412 = vshll.u32 %v9360, 16
      %v9414 = vrot.slane %v9412, 5
      %v9415 = vor.u32 %v9411, %v9414
      %v9416 = vrot.slane %v9415, 4
      %v9418 = vshll.u32 %v9361, 16
      %v9420 = vrot.slane %v9418, 5
      %v9421 = vsel %vm1283, %v9416, %v9420
      %v9422 = vshrl.u32 %v9361, 16
      %v9424 = vrot.slane %v9422, 4
      %v9425 = vor.u32 %v9424, %v9420
      %v9426 = vrot.slane %v9425, 4
      %v9428 = vshll.u32 %v9362, 16
      %v9430 = vrot.slane %v9428, 5
      %v9431 = vsel %vm1283, %v9426, %v9430
      %v9433 = vshrl.u32 %v9363, 16
      %v9435 = vrot.slane %v9433, 4
      %v9436 = vshll.u32 %v9363, 16
      %v9438 = vrot.slane %v9436, 5
      %v9439 = vor.u32 %v9435, %v9438
      %v9440 = vrot.slane %v9439, 4
      %v9442 = vshll.u32 %v9364, 16
      %v9444 = vrot.slane %v9442, 5
      %v9445 = vsel %vm1283, %v9440, %v9444
      %v9446 = vshrl.u32 %v9364, 16
      %v9448 = vrot.slane %v9446, 4
      %v9449 = vor.u32 %v9448, %v9444
      %v9450 = vrot.slane %v9449, 4
      %v9452 = vshll.u32 %v9365, 16
      %v9454 = vrot.slane %v9452, 5
      %v9455 = vsel %vm1283, %v9450, %v9454
      %v9457 = vshrl.u32 %v9366, 16
      %v9459 = vrot.slane %v9457, 4
      %v9460 = vshll.u32 %v9366, 16
      %v9462 = vrot.slane %v9460, 5
      %v9463 = vor.u32 %v9459, %v9462
      %v9464 = vrot.slane %v9463, 4
      %v9466 = vshll.u32 %v9367, 16
      %v9468 = vrot.slane %v9466, 5
      %v9469 = vsel %vm1283, %v9464, %v9468
      %v9470 = vshrl.u32 %v9367, 16
      %v9472 = vrot.slane %v9470, 4
      %v9473 = vor.u32 %v9472, %v9468
      %v9474 = vrot.slane %v9473, 4
      %v9476 = vshll.u32 %v9368, 16
      %v9478 = vrot.slane %v9476, 5
      %v9479 = vsel %vm1283, %v9474, %v9478
      %v9481 = vshrl.u32 %v9369, 16
      %v9483 = vrot.slane %v9481, 4
      %v9484 = vshll.u32 %v9369, 16
      %v9486 = vrot.slane %v9484, 5
      %v9487 = vor.u32 %v9483, %v9486
      %v9488 = vrot.slane %v9487, 4
      %v9490 = vshll.u32 %v9370, 16
      %v9492 = vrot.slane %v9490, 5
      %v9493 = vsel %vm1283, %v9488, %v9492
      %v9494 = vshrl.u32 %v9370, 16
      %v9496 = vrot.slane %v9494, 4
      %v9497 = vor.u32 %v9496, %v9492
      %v9498 = vrot.slane %v9497, 4
      %v9500 = vshll.u32 %v9371, 16
      %v9502 = vrot.slane %v9500, 5
      %v9503 = vsel %vm1283, %v9498, %v9502
      %v9505 = vshrl.u32 %v9372, 16
      %v9507 = vrot.slane %v9505, 4
      %v9508 = vshll.u32 %v9372, 16
      %v9510 = vrot.slane %v9508, 5
      %v9511 = vor.u32 %v9507, %v9510
      %v9512 = vrot.slane %v9511, 4
      %v9514 = vshll.u32 %v9373, 16
      %v9516 = vrot.slane %v9514, 5
      %v9517 = vsel %vm1283, %v9512, %v9516
      %v9518 = vshrl.u32 %v9373, 16
      %v9520 = vrot.slane %v9518, 4
      %v9521 = vor.u32 %v9520, %v9516
      %v9522 = vrot.slane %v9521, 4
      %v9524 = vshll.u32 %v9374, 16
      %v9526 = vrot.slane %v9524, 5
      %v9527 = vsel %vm1283, %v9522, %v9526
      %v9529 = vshrl.u32 %v9375, 16
      %v9531 = vrot.slane %v9529, 4
      %v9532 = vshll.u32 %v9375, 16
      %v9534 = vrot.slane %v9532, 5
      %v9535 = vor.u32 %v9531, %v9534
      %v9536 = vrot.slane %v9535, 4
      %v9538 = vshll.u32 %v9376, 16
      %v9540 = vrot.slane %v9538, 5
      %v9541 = vsel %vm1283, %v9536, %v9540
      %v9542 = vshrl.u32 %v9376, 16
      %v9544 = vrot.slane %v9542, 4
      %v9545 = vor.u32 %v9544, %v9540
      %v9546 = vrot.slane %v9545, 4
      %v9548 = vshll.u32 %v9377, 16
      %v9550 = vrot.slane %v9548, 5
      %v9551 = vsel %vm1283, %v9546, %v9550
      %v9553 = vshrl.u32 %v9378, 16
      %v9555 = vrot.slane %v9553, 4
      %v9556 = vshll.u32 %v9378, 16
      %v9558 = vrot.slane %v9556, 5
      %v9559 = vor.u32 %v9555, %v9558
      %v9560 = vrot.slane %v9559, 4
      %v9562 = vshll.u32 %v9379, 16
      %v9564 = vrot.slane %v9562, 5
      %v9565 = vsel %vm1283, %v9560, %v9564
      %v9566 = vshrl.u32 %v9379, 16
      %v9568 = vrot.slane %v9566, 4
      %v9569 = vor.u32 %v9568, %v9564
      %v9570 = vrot.slane %v9569, 4
      %v9572 = vshll.u32 %v9380, 16
      %v9574 = vrot.slane %v9572, 5
      %v9575 = vsel %vm1283, %v9570, %v9574
      %v9577 = vshrl.u32 %v9381, 16
      %v9579 = vrot.slane %v9577, 4
      %v9580 = vshll.u32 %v9381, 16
      %v9582 = vrot.slane %v9580, 5
      %v9583 = vor.u32 %v9579, %v9582
      %v9584 = vrot.slane %v9583, 4
      %v9586 = vshll.u32 %v9382, 16
      %v9588 = vrot.slane %v9586, 5
      %v9589 = vsel %vm1283, %v9584, %v9588
      %v9590 = vshrl.u32 %v9382, 16
      %v9592 = vrot.slane %v9590, 4
      %v9593 = vor.u32 %v9592, %v9588
      %v9594 = vrot.slane %v9593, 4
      %v9596 = vshll.u32 %v9383, 16
      %v9598 = vrot.slane %v9596, 5
      %v9599 = vsel %vm1283, %v9594, %v9598
      %v9601 = vshrl.u32 %v9384, 16
      %v9603 = vrot.slane %v9601, 4
      %v9604 = vshll.u32 %v9384, 16
      %v9606 = vrot.slane %v9604, 5
      %v9607 = vor.u32 %v9603, %v9606
      %v9608 = vrot.slane %v9607, 4
      %v9610 = vshll.u32 %v9385, 16
      %v9612 = vrot.slane %v9610, 5
      %v9613 = vsel %vm1283, %v9608, %v9612
      %v9614 = vshrl.u32 %v9385, 16
      %v9616 = vrot.slane %v9614, 4
      %v9617 = vor.u32 %v9616, %v9612
      %v9618 = vrot.slane %v9617, 4
      %v9620 = vshll.u32 %v9386, 16
      %v9622 = vrot.slane %v9620, 5
      %v9623 = vsel %vm1283, %v9618, %v9622
      %v9625 = vshrl.u32 %v9387, 16
      %v9627 = vrot.slane %v9625, 4
      %v9628 = vshll.u32 %v9387, 16
      %v9630 = vrot.slane %v9628, 5
      %v9631 = vor.u32 %v9627, %v9630
      %v9632 = vrot.slane %v9631, 4
      %v9634 = vshll.u32 %v9388, 16
      %v9636 = vrot.slane %v9634, 5
      %v9637 = vsel %vm1283, %v9632, %v9636
      %v9638 = vshrl.u32 %v9388, 16
      %v9640 = vrot.slane %v9638, 4
      %v9641 = vor.u32 %v9640, %v9636
      %v9642 = vrot.slane %v9641, 4
      %v9644 = vshll.u32 %v9389, 16
      %v9646 = vrot.slane %v9644, 5
      %v9647 = vsel %vm1283, %v9642, %v9646
      %v9649 = vshrl.u32 %v9390, 16
      %v9651 = vrot.slane %v9649, 4
      %v9652 = vshll.u32 %v9390, 16
      %v9654 = vrot.slane %v9652, 5
      %v9655 = vor.u32 %v9651, %v9654
      %v9656 = vrot.slane %v9655, 4
      %v9658 = vshll.u32 %v9391, 16
      %v9660 = vrot.slane %v9658, 5
      %v9661 = vsel %vm1283, %v9656, %v9660
      %v9662 = vshrl.u32 %v9391, 16
      %v9664 = vrot.slane %v9662, 4
      %v9665 = vor.u32 %v9664, %v9660
      %v9666 = vrot.slane %v9665, 4
      %v9668 = vshll.u32 %v9392, 16
      %v9670 = vrot.slane %v9668, 5
      %v9671 = vsel %vm1283, %v9666, %v9670
      %v9673 = vshrl.u32 %v9393, 16
      %v9675 = vrot.slane %v9673, 4
      %v9676 = vshll.u32 %v9393, 16
      %v9678 = vrot.slane %v9676, 5
      %v9679 = vor.u32 %v9675, %v9678
      %v9680 = vrot.slane %v9679, 4
      %v9682 = vshll.u32 %v9394, 16
      %v9684 = vrot.slane %v9682, 5
      %v9685 = vsel %vm1283, %v9680, %v9684
      %v9686 = vshrl.u32 %v9394, 16
      %v9688 = vrot.slane %v9686, 4
      %v9689 = vor.u32 %v9688, %v9684
      %v9690 = vrot.slane %v9689, 4
      %v9692 = vshll.u32 %v9395, 16
      %v9694 = vrot.slane %v9692, 5
      %v9695 = vsel %vm1283, %v9690, %v9694
      %v9697 = vshrl.u32 %v9396, 16
      %v9699 = vrot.slane %v9697, 4
      %v9700 = vshll.u32 %v9396, 16
      %v9702 = vrot.slane %v9700, 5
      %v9703 = vor.u32 %v9699, %v9702
      %v9704 = vrot.slane %v9703, 4
      %v9706 = vshll.u32 %v9397, 16
      %v9708 = vrot.slane %v9706, 5
      %v9709 = vsel %vm1283, %v9704, %v9708
      %v9710 = vshrl.u32 %v9397, 16
      %v9712 = vrot.slane %v9710, 4
      %v9713 = vor.u32 %v9712, %v9708
      %v9714 = vrot.slane %v9713, 4
      %v9716 = vshll.u32 %v9398, 16
      %v9718 = vrot.slane %v9716, 5
      %v9719 = vsel %vm1283, %v9714, %v9718
      %v9721 = vshrl.u32 %v9399, 16
      %v9723 = vrot.slane %v9721, 4
      %v9724 = vshll.u32 %v9399, 16
      %v9726 = vrot.slane %v9724, 5
      %v9727 = vor.u32 %v9723, %v9726
      %v9728 = vrot.slane %v9727, 4
      %v9730 = vshll.u32 %v9400, 16
      %v9732 = vrot.slane %v9730, 5
      %v9733 = vsel %vm1283, %v9728, %v9732
      %v9734 = vshrl.u32 %v9400, 16
      %v9736 = vrot.slane %v9734, 4
      %v9737 = vor.u32 %v9736, %v9732
      %v9738 = vrot.slane %v9737, 4
      %v9740 = vshll.u32 %v9401, 16
      %v9742 = vrot.slane %v9740, 5
      %v9743 = vsel %vm1283, %v9738, %v9742
      %v9745 = vshrl.u32 %v9402, 16
      %v9747 = vrot.slane %v9745, 4
      %v9748 = vshll.u32 %v9402, 16
      %v9750 = vrot.slane %v9748, 5
      %v9751 = vor.u32 %v9747, %v9750
      %v9752 = vrot.slane %v9751, 4
      %v9754 = vshll.u32 %v9403, 16
      %v9756 = vrot.slane %v9754, 5
      %v9757 = vsel %vm1283, %v9752, %v9756
      %v9758 = vshrl.u32 %v9403, 16
      %v9760 = vrot.slane %v9758, 4
      %v9761 = vor.u32 %v9760, %v9756
      %v9762 = vrot.slane %v9761, 4
      %v9764 = vshll.u32 %v9404, 16
      %v9766 = vrot.slane %v9764, 5
      %v9767 = vsel %vm1283, %v9762, %v9766
      %v9769 = vshrl.u32 %v9405, 16
      %v9771 = vrot.slane %v9769, 4
      %v9772 = vshll.u32 %v9405, 16
      %v9774 = vrot.slane %v9772, 5
      %v9775 = vor.u32 %v9771, %v9774
      %v9776 = vrot.slane %v9775, 4
      %v9778 = vshll.u32 %v9406, 16
      %v9780 = vrot.slane %v9778, 5
      %v9781 = vsel %vm1283, %v9776, %v9780
      %v9782 = vshrl.u32 %v9406, 16
      %v9784 = vrot.slane %v9782, 4
      %v9785 = vor.u32 %v9784, %v9780
      %v9786 = vrot.slane %v9785, 4
      %v9788 = vshll.u32 %v9407, 16
      %v9790 = vrot.slane %v9788, 5
      %v9791 = vsel %vm1283, %v9786, %v9790
      %v9792 = vld [vmem:[%s3 + $0x200] sm:$0xf]
      %v9793 = vld [vmem:[%s3 + $0x204] sm:$0xf]
      %v9794 = vld [vmem:[%s3 + $0x208] sm:$0xf]
      %v9795 = vld [vmem:[%s3 + $0x20c] sm:$0xf]
      %v9796 = vld [vmem:[%s3 + $0x210] sm:$0xf]
      %v9797 = vld [vmem:[%s3 + $0x214] sm:$0xf]
      %v9798 = vld [vmem:[%s3 + $0x218] sm:$0xf]
      %v9799 = vld [vmem:[%s3 + $0x21c] sm:$0xf]
      %v9800 = vld [vmem:[%s3 + $0x220] sm:$0xf]
      %v9801 = vld [vmem:[%s3 + $0x224] sm:$0xf]
      %v9802 = vld [vmem:[%s3 + $0x228] sm:$0xf]
      %v9803 = vld [vmem:[%s3 + $0x22c] sm:$0xf]
      %v9804 = vld [vmem:[%s3 + $0x230] sm:$0xf]
      %v9805 = vld [vmem:[%s3 + $0x234] sm:$0xf]
      %v9806 = vld [vmem:[%s3 + $0x238] sm:$0xf]
      %v9807 = vld [vmem:[%s3 + $0x23c] sm:$0xf]
      %v9808 = vunpack.c.l.b16 %v9421
      %v9809 = vunpack.c.l.b16 %v9431
      %v9810 = vunpack.c.l.b16 %v9445
      %v9811 = vunpack.c.l.b16 %v9455
      %v9812 = vunpack.c.l.b16 %v9469
      %v9813 = vunpack.c.l.b16 %v9479
      %v9814 = vunpack.c.l.b16 %v9493
      %v9815 = vunpack.c.l.b16 %v9503
      %v9816 = vunpack.c.l.b16 %v9517
      %v9817 = vunpack.c.l.b16 %v9527
      %v9818 = vunpack.c.l.b16 %v9541
      %v9819 = vunpack.c.l.b16 %v9551
      %v9820 = vunpack.c.l.b16 %v9565
      %v9821 = vunpack.c.l.b16 %v9575
      %v9822 = vunpack.c.l.b16 %v9589
      %v9823 = vunpack.c.l.b16 %v9599
      %v9824 = vunpack.c.l.b16 %v9613
      %v9825 = vunpack.c.l.b16 %v9623
      %v9826 = vunpack.c.l.b16 %v9637
      %v9827 = vunpack.c.l.b16 %v9647
      %v9828 = vunpack.c.l.b16 %v9661
      %v9829 = vunpack.c.l.b16 %v9671
      %v9830 = vunpack.c.l.b16 %v9685
      %v9831 = vunpack.c.l.b16 %v9695
      %v9832 = vunpack.c.l.b16 %v9709
      %v9833 = vunpack.c.l.b16 %v9719
      %v9834 = vunpack.c.l.b16 %v9733
      %v9835 = vunpack.c.l.b16 %v9743
      %v9836 = vunpack.c.l.b16 %v9757
      %v9837 = vunpack.c.l.b16 %v9767
      %v9838 = vunpack.c.l.b16 %v9781
      %v9839 = vunpack.c.l.b16 %v9791
      %v9840 = vpack.c.b16 %v9809, %v9808
      %v9841 = vpack.c.b16 %v9811, %v9810
      %v9842 = vpack.c.b16 %v9813, %v9812
      %v9843 = vpack.c.b16 %v9815, %v9814
      %v9844 = vpack.c.b16 %v9817, %v9816
      %v9845 = vpack.c.b16 %v9819, %v9818
      %v9846 = vpack.c.b16 %v9821, %v9820
      %v9847 = vpack.c.b16 %v9823, %v9822
      %v9848 = vpack.c.b16 %v9825, %v9824
      %v9849 = vpack.c.b16 %v9827, %v9826
      %v9850 = vpack.c.b16 %v9829, %v9828
      %v9851 = vpack.c.b16 %v9831, %v9830
      %v9852 = vpack.c.b16 %v9833, %v9832
      %v9853 = vpack.c.b16 %v9835, %v9834
      %v9854 = vpack.c.b16 %v9837, %v9836
      %v9855 = vpack.c.b16 %v9839, %v9838
      %v9888 = vunpack.c.l.b16 %v9792
      %v9889 = vunpack.c.l.b16 %v9793
      %v9890 = vunpack.c.l.b16 %v9794
      %v9891 = vunpack.c.l.b16 %v9795
      %v9892 = vunpack.c.l.b16 %v9796
      %v9893 = vunpack.c.l.b16 %v9797
      %v9894 = vunpack.c.l.b16 %v9798
      %v9895 = vunpack.c.l.b16 %v9799
      %v9896 = vunpack.c.l.b16 %v9800
      %v9897 = vunpack.c.l.b16 %v9801
      %v9898 = vunpack.c.l.b16 %v9802
      %v9899 = vunpack.c.l.b16 %v9803
      %v9900 = vunpack.c.l.b16 %v9804
      %v9901 = vunpack.c.l.b16 %v9805
      %v9902 = vunpack.c.l.b16 %v9806
      %v9903 = vunpack.c.l.b16 %v9807
      %v9904 = vpack.c.b16 %v9889, %v9888
      %v9905 = vpack.c.b16 %v9891, %v9890
      %v9906 = vpack.c.b16 %v9893, %v9892
      %v9907 = vpack.c.b16 %v9895, %v9894
      %v9908 = vpack.c.b16 %v9897, %v9896
      %v9909 = vpack.c.b16 %v9899, %v9898
      %v9910 = vpack.c.b16 %v9901, %v9900
      %v9911 = vpack.c.b16 %v9903, %v9902
      %9920 = vmatpush.bf16.msra.mxu0 %v9911
      %9921 = vmatpush.bf16.msra.mxu0 %v9910
      %9922 = vmatpush.bf16.msra.mxu0 %v9909
      %9923 = vmatpush.bf16.msra.mxu0 %v9908
      %9924 = vmatpush.bf16.msra.mxu0 %v9907
      %9925 = vmatpush.bf16.msra.mxu0 %v9906
      %9926 = vmatpush.bf16.msra.mxu0 %v9905
      %9927 = vmatpush.bf16.msra.mxu0 %v9904
      %9928 = vmatmul.bf16.gmra.mxu0 %v9840
      %v9929 = vpop.f32.mrf.mxu0
      %v9930 = vadd.f32 0.0, %v9929
      %v9931 = vpop.f32.mrf.mxu0
      %v9932 = vadd.f32 0.0, %v9931
      %9933 = vmatmul.bf16.gmra.mxu0 %v9841
      %v9934 = vpop.f32.mrf.mxu0
      %v9935 = vadd.f32 0.0, %v9934
      %v9936 = vpop.f32.mrf.mxu0
      %v9937 = vadd.f32 0.0, %v9936
      %9938 = vmatmul.bf16.gmra.mxu0 %v9842
      %v9939 = vpop.f32.mrf.mxu0
      %v9940 = vadd.f32 0.0, %v9939
      %v9941 = vpop.f32.mrf.mxu0
      %v9942 = vadd.f32 0.0, %v9941
      %9943 = vmatmul.bf16.gmra.mxu0 %v9843
      %v9944 = vpop.f32.mrf.mxu0
      %v9945 = vadd.f32 0.0, %v9944
      %v9946 = vpop.f32.mrf.mxu0
      %v9947 = vadd.f32 0.0, %v9946
      %9948 = vmatmul.bf16.gmra.mxu0 %v9844
      %v9949 = vpop.f32.mrf.mxu0
      %v9950 = vadd.f32 0.0, %v9949
      %v9951 = vpop.f32.mrf.mxu0
      %v9952 = vadd.f32 0.0, %v9951
      %9953 = vmatmul.bf16.gmra.mxu0 %v9845
      %v9954 = vpop.f32.mrf.mxu0
      %v9955 = vadd.f32 0.0, %v9954
      %v9956 = vpop.f32.mrf.mxu0
      %v9957 = vadd.f32 0.0, %v9956
      %9958 = vmatmul.bf16.gmra.mxu0 %v9846
      %v9959 = vpop.f32.mrf.mxu0
      %v9960 = vadd.f32 0.0, %v9959
      %v9961 = vpop.f32.mrf.mxu0
      %v9962 = vadd.f32 0.0, %v9961
      %9963 = vmatmul.bf16.gmra.mxu0 %v9847
      %v9964 = vpop.f32.mrf.mxu0
      %v9965 = vadd.f32 0.0, %v9964
      %v9966 = vpop.f32.mrf.mxu0
      %v9967 = vadd.f32 0.0, %v9966
      %9968 = vmatmul.bf16.gmra.mxu0 %v9848
      %v9969 = vpop.f32.mrf.mxu0
      %v9970 = vadd.f32 0.0, %v9969
      %v9971 = vpop.f32.mrf.mxu0
      %v9972 = vadd.f32 0.0, %v9971
      %9973 = vmatmul.bf16.gmra.mxu0 %v9849
      %v9974 = vpop.f32.mrf.mxu0
      %v9975 = vadd.f32 0.0, %v9974
      %v9976 = vpop.f32.mrf.mxu0
      %v9977 = vadd.f32 0.0, %v9976
      %9978 = vmatmul.bf16.gmra.mxu0 %v9850
      %v9979 = vpop.f32.mrf.mxu0
      %v9980 = vadd.f32 0.0, %v9979
      %v9981 = vpop.f32.mrf.mxu0
      %v9982 = vadd.f32 0.0, %v9981
      %9983 = vmatmul.bf16.gmra.mxu0 %v9851
      %v9984 = vpop.f32.mrf.mxu0
      %v9985 = vadd.f32 0.0, %v9984
      %v9986 = vpop.f32.mrf.mxu0
      %v9987 = vadd.f32 0.0, %v9986
      %9988 = vmatmul.bf16.gmra.mxu0 %v9852
      %v9989 = vpop.f32.mrf.mxu0
      %v9990 = vadd.f32 0.0, %v9989
      %v9991 = vpop.f32.mrf.mxu0
      %v9992 = vadd.f32 0.0, %v9991
      %9993 = vmatmul.bf16.gmra.mxu0 %v9853
      %v9994 = vpop.f32.mrf.mxu0
      %v9995 = vadd.f32 0.0, %v9994
      %v9996 = vpop.f32.mrf.mxu0
      %v9997 = vadd.f32 0.0, %v9996
      %9998 = vmatmul.bf16.gmra.mxu0 %v9854
      %v9999 = vpop.f32.mrf.mxu0
      %v10000 = vadd.f32 0.0, %v9999
      %v10001 = vpop.f32.mrf.mxu0
      %v10002 = vadd.f32 0.0, %v10001
      %10003 = vmatmul.bf16.gmra.mxu0 %v9855
      %v10004 = vpop.f32.mrf.mxu0
      %v10005 = vadd.f32 0.0, %v10004
      %v10006 = vpop.f32.mrf.mxu0
      %v10007 = vadd.f32 0.0, %v10006
      %10008 = vdwg.mxu0
      %v10009 = vadd.f32 %v9328, %v9930
      %v10010 = vadd.f32 %v9329, %v9932
      %v10011 = vadd.f32 %v9330, %v9935
      %v10012 = vadd.f32 %v9331, %v9937
      %v10013 = vadd.f32 %v9332, %v9940
      %v10014 = vadd.f32 %v9333, %v9942
      %v10015 = vadd.f32 %v9334, %v9945
      %v10016 = vadd.f32 %v9335, %v9947
      %v10017 = vadd.f32 %v9336, %v9950
      %v10018 = vadd.f32 %v9337, %v9952
      %v10019 = vadd.f32 %v9338, %v9955
      %v10020 = vadd.f32 %v9339, %v9957
      %v10021 = vadd.f32 %v9340, %v9960
      %v10022 = vadd.f32 %v9341, %v9962
      %v10023 = vadd.f32 %v9342, %v9965
      %v10024 = vadd.f32 %v9343, %v9967
      %v10025 = vadd.f32 %v9344, %v9970
      %v10026 = vadd.f32 %v9345, %v9972
      %v10027 = vadd.f32 %v9346, %v9975
      %v10028 = vadd.f32 %v9347, %v9977
      %v10029 = vadd.f32 %v9348, %v9980
      %v10030 = vadd.f32 %v9349, %v9982
      %v10031 = vadd.f32 %v9350, %v9985
      %v10032 = vadd.f32 %v9351, %v9987
      %v10033 = vadd.f32 %v9352, %v9990
      %v10034 = vadd.f32 %v9353, %v9992
      %v10035 = vadd.f32 %v9354, %v9995
      %v10036 = vadd.f32 %v9355, %v9997
      %v10037 = vadd.f32 %v9356, %v10000
      %v10038 = vadd.f32 %v9357, %v10002
      %v10039 = vadd.f32 %v9358, %v10005
      %v10040 = vadd.f32 %v9359, %v10007
      %v10041 = vld [vmem:[%s4] sm:$0x1]
      %v10043 = vperm.slane %v10041, 0
      %v10045 = vadd.f32 %v10009, %v10043
      %v10046 = vadd.f32 %v10010, %v10043
      %v10047 = vadd.f32 %v10011, %v10043
      %v10048 = vadd.f32 %v10012, %v10043
      %v10049 = vadd.f32 %v10013, %v10043
      %v10050 = vadd.f32 %v10014, %v10043
      %v10051 = vadd.f32 %v10015, %v10043
      %v10052 = vadd.f32 %v10016, %v10043
      %v10053 = vadd.f32 %v10017, %v10043
      %v10054 = vadd.f32 %v10018, %v10043
      %v10055 = vadd.f32 %v10019, %v10043
      %v10056 = vadd.f32 %v10020, %v10043
      %v10057 = vadd.f32 %v10021, %v10043
      %v10058 = vadd.f32 %v10022, %v10043
      %v10059 = vadd.f32 %v10023, %v10043
      %v10060 = vadd.f32 %v10024, %v10043
      %v10061 = vadd.f32 %v10025, %v10043
      %v10062 = vadd.f32 %v10026, %v10043
      %v10063 = vadd.f32 %v10027, %v10043
      %v10064 = vadd.f32 %v10028, %v10043
      %v10065 = vadd.f32 %v10029, %v10043
      %v10066 = vadd.f32 %v10030, %v10043
      %v10067 = vadd.f32 %v10031, %v10043
      %v10068 = vadd.f32 %v10032, %v10043
      %v10069 = vadd.f32 %v10033, %v10043
      %v10070 = vadd.f32 %v10034, %v10043
      %v10071 = vadd.f32 %v10035, %v10043
      %v10072 = vadd.f32 %v10036, %v10043
      %v10073 = vadd.f32 %v10037, %v10043
      %v10074 = vadd.f32 %v10038, %v10043
      %v10075 = vadd.f32 %v10039, %v10043
      %v10076 = vadd.f32 %v10040, %v10043
      %v10077 = vld [vmem:[%s219] sm:$0xff]
      %v10078 = vld [vmem:[%s219 + $0x8] sm:$0xff]
      %v10079 = vld [vmem:[%s219 + $0x10] sm:$0xff]
      %v10080 = vld [vmem:[%s219 + $0x18] sm:$0xff]
      %v10081 = vld [vmem:[%s219 + $0x20] sm:$0xff]
      %v10082 = vld [vmem:[%s219 + $0x28] sm:$0xff]
      %v10083 = vld [vmem:[%s219 + $0x30] sm:$0xff]
      %v10084 = vld [vmem:[%s219 + $0x38] sm:$0xff]
      %v10085 = vld [vmem:[%s219 + $0x40] sm:$0xff]
      %v10086 = vld [vmem:[%s219 + $0x48] sm:$0xff]
      %v10087 = vld [vmem:[%s219 + $0x50] sm:$0xff]
      %v10088 = vld [vmem:[%s219 + $0x58] sm:$0xff]
      %v10089 = vld [vmem:[%s219 + $0x60] sm:$0xff]
      %v10090 = vld [vmem:[%s219 + $0x68] sm:$0xff]
      %v10091 = vld [vmem:[%s219 + $0x70] sm:$0xff]
      %v10092 = vld [vmem:[%s219 + $0x78] sm:$0xff]
      %v10093 = vld [vmem:[%s219 + $0x80] sm:$0xff]
      %v10094 = vld [vmem:[%s219 + $0x88] sm:$0xff]
      %v10095 = vld [vmem:[%s219 + $0x90] sm:$0xff]
      %v10096 = vld [vmem:[%s219 + $0x98] sm:$0xff]
      %v10097 = vld [vmem:[%s219 + $0xa0] sm:$0xff]
      %v10098 = vld [vmem:[%s219 + $0xa8] sm:$0xff]
      %v10099 = vld [vmem:[%s219 + $0xb0] sm:$0xff]
      %v10100 = vld [vmem:[%s219 + $0xb8] sm:$0xff]
      %v10101 = vld [vmem:[%s219 + $0xc0] sm:$0xff]
      %v10102 = vld [vmem:[%s219 + $0xc8] sm:$0xff]
      %v10103 = vld [vmem:[%s219 + $0xd0] sm:$0xff]
      %v10104 = vld [vmem:[%s219 + $0xd8] sm:$0xff]
      %v10105 = vld [vmem:[%s219 + $0xe0] sm:$0xff]
      %v10106 = vld [vmem:[%s219 + $0xe8] sm:$0xff]
      %v10107 = vld [vmem:[%s219 + $0xf0] sm:$0xff]
      %v10108 = vld [vmem:[%s219 + $0xf8] sm:$0xff]
      %v10109 = vadd.f32 %v10045, %v10077
      %v10110 = vadd.f32 %v10046, %v10078
      %v10111 = vadd.f32 %v10047, %v10079
      %v10112 = vadd.f32 %v10048, %v10080
      %v10113 = vadd.f32 %v10049, %v10081
      %v10114 = vadd.f32 %v10050, %v10082
      %v10115 = vadd.f32 %v10051, %v10083
      %v10116 = vadd.f32 %v10052, %v10084
      %v10117 = vadd.f32 %v10053, %v10085
      %v10118 = vadd.f32 %v10054, %v10086
      %v10119 = vadd.f32 %v10055, %v10087
      %v10120 = vadd.f32 %v10056, %v10088
      %v10121 = vadd.f32 %v10057, %v10089
      %v10122 = vadd.f32 %v10058, %v10090
      %v10123 = vadd.f32 %v10059, %v10091
      %v10124 = vadd.f32 %v10060, %v10092
      %v10125 = vadd.f32 %v10061, %v10093
      %v10126 = vadd.f32 %v10062, %v10094
      %v10127 = vadd.f32 %v10063, %v10095
      %v10128 = vadd.f32 %v10064, %v10096
      %v10129 = vadd.f32 %v10065, %v10097
      %v10130 = vadd.f32 %v10066, %v10098
      %v10131 = vadd.f32 %v10067, %v10099
      %v10132 = vadd.f32 %v10068, %v10100
      %v10133 = vadd.f32 %v10069, %v10101
      %v10134 = vadd.f32 %v10070, %v10102
      %v10135 = vadd.f32 %v10071, %v10103
      %v10136 = vadd.f32 %v10072, %v10104
      %v10137 = vadd.f32 %v10073, %v10105
      %v10138 = vadd.f32 %v10074, %v10106
      %v10139 = vadd.f32 %v10075, %v10107
      %v10140 = vadd.f32 %v10076, %v10108
      %v10141 = vmax.f32 %v10109, 0.0
      %v10142 = vmax.f32 %v10110, 0.0
      %v10143 = vmax.f32 %v10111, 0.0
      %v10144 = vmax.f32 %v10112, 0.0
      %v10145 = vmax.f32 %v10113, 0.0
      %v10146 = vmax.f32 %v10114, 0.0
      %v10147 = vmax.f32 %v10115, 0.0
      %v10148 = vmax.f32 %v10116, 0.0
      %v10149 = vmax.f32 %v10117, 0.0
      %v10150 = vmax.f32 %v10118, 0.0
      %v10151 = vmax.f32 %v10119, 0.0
      %v10152 = vmax.f32 %v10120, 0.0
      %v10153 = vmax.f32 %v10121, 0.0
      %v10154 = vmax.f32 %v10122, 0.0
      %v10155 = vmax.f32 %v10123, 0.0
      %v10156 = vmax.f32 %v10124, 0.0
      %v10157 = vmax.f32 %v10125, 0.0
      %v10158 = vmax.f32 %v10126, 0.0
      %v10159 = vmax.f32 %v10127, 0.0
      %v10160 = vmax.f32 %v10128, 0.0
      %v10161 = vmax.f32 %v10129, 0.0
      %v10162 = vmax.f32 %v10130, 0.0
      %v10163 = vmax.f32 %v10131, 0.0
      %v10164 = vmax.f32 %v10132, 0.0
      %v10165 = vmax.f32 %v10133, 0.0
      %v10166 = vmax.f32 %v10134, 0.0
      %v10167 = vmax.f32 %v10135, 0.0
      %v10168 = vmax.f32 %v10136, 0.0
      %v10169 = vmax.f32 %v10137, 0.0
      %v10170 = vmax.f32 %v10138, 0.0
      %v10171 = vmax.f32 %v10139, 0.0
      %v10172 = vmax.f32 %v10140, 0.0
      %10173 = vst [vmem:[%s224] sm:$0xff] %v10141
      %10174 = vst [vmem:[%s224 + $0x8] sm:$0xff] %v10142
      %10175 = vst [vmem:[%s224 + $0x10] sm:$0xff] %v10143
      %10176 = vst [vmem:[%s224 + $0x18] sm:$0xff] %v10144
      %10177 = vst [vmem:[%s224 + $0x20] sm:$0xff] %v10145
      %10178 = vst [vmem:[%s224 + $0x28] sm:$0xff] %v10146
      %10179 = vst [vmem:[%s224 + $0x30] sm:$0xff] %v10147
      %10180 = vst [vmem:[%s224 + $0x38] sm:$0xff] %v10148
      %10181 = vst [vmem:[%s224 + $0x40] sm:$0xff] %v10149
      %10182 = vst [vmem:[%s224 + $0x48] sm:$0xff] %v10150
      %10183 = vst [vmem:[%s224 + $0x50] sm:$0xff] %v10151
      %10184 = vst [vmem:[%s224 + $0x58] sm:$0xff] %v10152
      %10185 = vst [vmem:[%s224 + $0x60] sm:$0xff] %v10153
      %10186 = vst [vmem:[%s224 + $0x68] sm:$0xff] %v10154
      %10187 = vst [vmem:[%s224 + $0x70] sm:$0xff] %v10155
      %10188 = vst [vmem:[%s224 + $0x78] sm:$0xff] %v10156
      %10189 = vst [vmem:[%s224 + $0x80] sm:$0xff] %v10157
      %10190 = vst [vmem:[%s224 + $0x88] sm:$0xff] %v10158
      %10191 = vst [vmem:[%s224 + $0x90] sm:$0xff] %v10159
      %10192 = vst [vmem:[%s224 + $0x98] sm:$0xff] %v10160
      %10193 = vst [vmem:[%s224 + $0xa0] sm:$0xff] %v10161
      %10194 = vst [vmem:[%s224 + $0xa8] sm:$0xff] %v10162
      %10195 = vst [vmem:[%s224 + $0xb0] sm:$0xff] %v10163
      %10196 = vst [vmem:[%s224 + $0xb8] sm:$0xff] %v10164
      %10197 = vst [vmem:[%s224 + $0xc0] sm:$0xff] %v10165
      %10198 = vst [vmem:[%s224 + $0xc8] sm:$0xff] %v10166
      %10199 = vst [vmem:[%s224 + $0xd0] sm:$0xff] %v10167
      %10200 = vst [vmem:[%s224 + $0xd8] sm:$0xff] %v10168
      %10201 = vst [vmem:[%s224 + $0xe0] sm:$0xff] %v10169
      %10202 = vst [vmem:[%s224 + $0xe8] sm:$0xff] %v10170
      %10203 = vst [vmem:[%s224 + $0xf0] sm:$0xff] %v10171
      %10204 = vst [vmem:[%s224 + $0xf8] sm:$0xff] %v10172
      %p10205 = scmp.lt.s32.totalorder %s16, 1
      %s10206 = scalar_select %p10205, %s16, 1
      %s10207 = smul.addr %s10206, 32
      %s10208 = smul.addr %s10207, 8
      %s10209 = scalar_lea.vmem %s5, %s10208
      // Predicated region
      $region41: #{basic_block_forward.1} parent=39 // pred_check
        %p10210 = pneg %p144
      $region42: #{basic_block_forward.1} parent=39 // pred_check_branch
        %10212 = sbr.rel (%p10210) target = $region44
      $region43: #{basic_block_forward.1} parent=39 // pred_region
        _
      $region44: #{basic_block_forward.1} parent=39 // pred_fallthru
        _
    $region40: #{basic_block_forward.1} parent=5 // pred_fallthru
      _
    %p10213 = scmp.le.s32.totalorder 2, %s11
    // Predicated region
    $region45: #{basic_block_forward.1} parent=5 // pred_check
      %p10214 = pneg %p10213
    $region46: #{basic_block_forward.1} parent=5 // pred_check_branch
      %10216 = sbr.rel (%p10214) target = $region48
    $region47: #{basic_block_forward.1} parent=5 // pred_region
      %s10217 = ssub.s32 %s11, 2
      // Predicated region
      $region49: #{basic_block_forward.1} parent=47 // pred_check
        %p10218 = pneg %p150
      $region50: #{basic_block_forward.1} parent=47 // pred_check_branch
        %10220 = sbr.rel (%p10218) target = $region52
      $region51: #{basic_block_forward.1} parent=47 // pred_region
        %p10221 = scmp.lt.s32.totalorder %s17, 1
        %s10222 = scalar_select %p10221, %s17, 1
        %s10223 = smul.addr %s10222, 32
        %s10224 = smul.addr %s10223, 8
        %s10225 = scalar_lea.vmem %s5, %s10224
      $region52: #{basic_block_forward.1} parent=47 // pred_fallthru
        _
    $region48: #{basic_block_forward.1} parent=5 // pred_fallthru
      _
  $region6: #{basic_block_forward.1} parent=0 // loop_footer
    %s15 = sadd.s32 1, %s11
  $region7: #{basic_block_forward.1} parent=0 // loop_footer_branch
    %10 = sbr.rel target = $region3
  $region8: #{basic_block_forward.1} parent=0 // loop_exit
    _

</llo_original>
